<compile_context>
chip_gen: v5e
topology: v5e:2x2
jax: 0.10.0
libtpu: 0.0.40
codegen_flags: <defaults>
</compile_context>

<pallas_src>
import functools

import numpy as np

import jax
import jax.numpy as jnp
from jax.experimental import pallas as pl
from jax.experimental.pallas import tpu as pltpu


# ---------------------------------------------------------------------------
# Tiny host-side constant builders (shape-only, cached).
# ---------------------------------------------------------------------------
@functools.lru_cache(maxsize=None)
def _shift_mats(h, w):
    """(9, h*w, h*w) one-hot per-tap stride-1 shift matrices (zero padded)."""
    s = np.zeros((9, h * w, h * w), np.float32)
    for kh in range(3):
        for kw in range(3):
            t = kh * 3 + kw
            dh, dw = kh - 1, kw - 1
            for ho in range(h):
                ih = ho + dh
                if not 0 <= ih < h:
                    continue
                for wo in range(w):
                    iw = wo + dw
                    if not 0 <= iw < w:
                        continue
                    s[t, ih * w + iw, ho * w + wo] = 1.0
    return s


@functools.lru_cache(maxsize=None)
def _down_mat(h, w):
    """(h*w, (h//2)*(w//2)) one-hot even-pixel selection (stride-2 sampling)."""
    h2, w2 = h // 2, w // 2
    d = np.zeros((h * w, h2 * w2), np.float32)
    for ho in range(h2):
        for wo in range(w2):
            d[(2 * ho) * w + 2 * wo, ho * w2 + wo] = 1.0
    return d


@functools.lru_cache(maxsize=None)
def _up_mat(h, w):
    """(h*w, (2h)*(2w)) one-hot nearest 2x upsample."""
    H, W = 2 * h, 2 * w
    u = np.zeros((h * w, H * W), np.float32)
    for HO in range(H):
        for WO in range(W):
            u[(HO // 2) * w + WO // 2, HO * W + WO] = 1.0
    return u


@functools.lru_cache(maxsize=None)
def _tap_masks(h, w):
    """(9, 1, h*w) validity masks for roll-based stride-1 taps (zero padding)."""
    m = np.zeros((9, 1, h * w), np.float32)
    for kh in range(3):
        for kw in range(3):
            t = kh * 3 + kw
            dh, dw = kh - 1, kw - 1
            for ho in range(h):
                for wo in range(w):
                    if 0 <= ho + dh < h and 0 <= wo + dw < w:
                        m[t, 0, ho * w + wo] = 1.0
    return m


def _tap_shifts(h, w):
    """Static lane-roll amounts so rolled[:, m] == act[:, m + dh*w + dw]."""
    n = h * w
    return tuple((-((kh - 1) * w + (kw - 1))) % n
                 for kh in range(3) for kw in range(3))


# ---------------------------------------------------------------------------
# The fused kernel.  ONE grid step == whole batch (unrolled inside the body).
# ---------------------------------------------------------------------------
def _unet_kernel(shifts16,
                 x_ref,
                 w_e0, b_e0, w_e1, b_e1, w_nk, b_nk,
                 w_d1u, w_d1s, b_d1, w_d0u, w_d0s, b_d0,
                 s8_ref, s4_ref, d16_ref, d8_ref, u4_ref, u8_ref, m16_ref,
                 out_ref):
    bf16 = jnp.bfloat16

    def mm(a, b):
        return jnp.dot(a, b, preferred_element_type=jnp.float32)

    def taps_roll(act_f32):
        # 9 tap-shifted, zero-padded copies of a full-res (C, H*W) slab:
        # lane roll (XLU slot) + 0/1 edge mask (VPU).  No gather constants.
        taps = []
        for t in range(9):
            if shifts16[t] == 0:                     # centre tap, mask == 1
                taps.append(act_f32.astype(bf16))
            else:
                r = pltpu.roll(act_f32, shifts16[t], 1)
                taps.append((r * m16_ref[t]).astype(bf16))
        return taps

    def taps_mat(act_b, s_ref):
        # 9 tap-shifted copies via tiny one-hot shift matrices (exact in bf16).
        return [act_b if t == 4 else mm(act_b, s_ref[t]).astype(bf16)
                for t in range(9)]

    def conv(taps, w_ref):
        # 3x3 conv as 9 accumulated per-tap matmuls into one f32 accumulator.
        acc = mm(w_ref[0], taps[0])
        for t in range(1, 9):
            acc = acc + mm(w_ref[t], taps[t])
        return acc

    def relu_bias(acc, b_ref):
        return jnp.maximum(acc + b_ref[...], 0.0)

    n_batch = x_ref.shape[0]
    for b in range(n_batch):                         # whole batch, one grid step
        x = x_ref[b]                                 # (4, 256) f32

        x_taps = taps_roll(x)                        # reused: enc0 + dec0 skip

        # encoder 0: stride-2 conv == stride-1 conv then even-pixel selection.
        e1 = relu_bias(mm(conv(x_taps, w_e0), d16_ref[...]), b_e0)      # (8, 64)
        e1_b = e1.astype(bf16)
        e1_taps = taps_mat(e1_b, s8_ref)             # reused: enc1 + dec1 skip

        # encoder 1: 8 -> 16 channels, 8x8 -> 4x4.
        e2 = relu_bias(mm(conv(e1_taps, w_e1), d8_ref[...]), b_e1)      # (16, 16)

        # neck: 16 -> 16 channels at 4x4.
        nk = relu_bias(conv(taps_mat(e2.astype(bf16), s4_ref), w_nk), b_nk)

        # decoder[1]: 2x nearest upsample (one-hot matmul) ++ skip(e1) -> 8 ch.
        up1 = mm(nk.astype(bf16), u4_ref[...]).astype(bf16)             # (16, 64)
        d1 = relu_bias(conv(taps_mat(up1, s8_ref), w_d1u)
                       + conv(e1_taps, w_d1s), b_d1)                    # (8, 64)

        # decoder[0]: 2x nearest upsample ++ skip(input), full-res rolls -> 4 ch.
        up0 = mm(d1.astype(bf16), u8_ref[...])                          # (8, 256)
        d0 = relu_bias(conv(taps_roll(up0), w_d0u)
                       + conv(x_taps, w_d0s), b_d0)                     # (4, 256)

        out_ref[b] = d0.astype(out_ref.dtype)


# ---------------------------------------------------------------------------
# Wrapper: mirrors BaseUNet.forward (skip_first=True, multi_out=False).
# ---------------------------------------------------------------------------
def base_unet_forward(x_nchw, params):
    n, c_in, h, w = x_nchw.shape
    h2, w2 = h // 2, w // 2
    h4, w4 = h // 4, w // 4
    hw = h * w
    bf16 = jnp.bfloat16
    f32 = jnp.float32

    def tap_w(wgt):
        # PyTorch OIHW (Cout, Cin, 3, 3) -> (9, Cout, Cin), tap index t = kh*3+kw.
        cout, cin = wgt.shape[:2]
        return jnp.transpose(wgt, (2, 3, 0, 1)).reshape(9, cout, cin).astype(bf16)

    def col_b(p):
        return p["b"].reshape(-1, 1).astype(f32)

    e0p, e1p = params["encoders"]
    nkp = params["neck"]
    d0p, d1p = params["decoders"]
    cu1 = nkp["w"].shape[0]      # channels of the upsampled branch into decoders[1]
    cu0 = d1p["w"].shape[0]      # channels of the upsampled branch into decoders[0]

    operands = (
        x_nchw.reshape(n, c_in, hw).astype(f32),
        tap_w(e0p["w"]), col_b(e0p),
        tap_w(e1p["w"]), col_b(e1p),
        tap_w(nkp["w"]), col_b(nkp),
        tap_w(d1p["w"][:, :cu1]), tap_w(d1p["w"][:, cu1:]), col_b(d1p),
        tap_w(d0p["w"][:, :cu0]), tap_w(d0p["w"][:, cu0:]), col_b(d0p),
        jnp.asarray(_shift_mats(h2, w2), bf16),     # (9, 64, 64)  ~72 KiB
        jnp.asarray(_shift_mats(h4, w4), bf16),     # (9, 16, 16)
        jnp.asarray(_down_mat(h, w), f32),          # (256, 64)
        jnp.asarray(_down_mat(h2, w2), f32),        # (64, 16)
        jnp.asarray(_up_mat(h4, w4), bf16),         # (16, 64)
        jnp.asarray(_up_mat(h2, w2), bf16),         # (64, 256)
        jnp.asarray(_tap_masks(h, w), f32),         # (9, 1, 256)
    )

    def full_spec(arr):
        zeros = (0,) * arr.ndim
        return pl.BlockSpec(arr.shape, lambda i: zeros)

    kernel = functools.partial(_unet_kernel, _tap_shifts(h, w))

    out = pl.pallas_call(
        kernel,
        out_shape=jax.ShapeDtypeStruct((n, c_in, hw), f32),
        grid=(1,),
        in_specs=[full_spec(a) for a in operands],
        out_specs=pl.BlockSpec((n, c_in, hw), lambda i: (0, 0, 0)),
        compiler_params=pltpu.CompilerParams(
            dimension_semantics=("arbitrary",)),
        cost_estimate=pl.CostEstimate(
            flops=6_000_000, transcendentals=0, bytes_accessed=250_000),
    )(*operands)

    return out.reshape(n, c_in, h, w)


# ---------------------------------------------------------------------------
# Plain-JAX f32 reference of the same module (numerical sanity check).
# ---------------------------------------------------------------------------
def _conv_ref(x, w, b, stride):
    y = jax.lax.conv_general_dilated(
        x, w, window_strides=(stride, stride), padding=((1, 1), (1, 1)),
        dimension_numbers=("NCHW", "OIHW", "NCHW"))
    return jnp.maximum(y + b[None, :, None, None], 0.0)


def base_unet_reference(x, params):
    skips = [x]                                   # skip_first=True
    for p in params["encoders"]:
        x = _conv_ref(x, p["w"], p["b"], 2)
        skips.append(x)
    x = skips.pop()
    x = _conv_ref(x, params["neck"]["w"], params["neck"]["b"], 1)
    results = [x]
    for idx in reversed(range(len(params["decoders"]))):
        skip = skips.pop()
        xu = jnp.repeat(jnp.repeat(x, 2, axis=2), 2, axis=3)
        p = params["decoders"][idx]
        x = _conv_ref(jnp.concatenate([xu, skip], axis=1), p["w"], p["b"], 1)
        results.append(x)
    return results[-1]                            # multi_out=False


# ---------------------------------------------------------------------------
# Deterministic synthetic parameters (PyTorch OIHW layout, no checkpoint).
# ---------------------------------------------------------------------------
def init_params(key):
    def conv_params(k, cin, cout):
        kw_, kb_ = jax.random.split(k)
        w = 0.1 * jax.random.normal(kw_, (cout, cin, 3, 3), jnp.float32)
        b = 0.1 * jax.random.normal(kb_, (cout,), jnp.float32)
        return {"w": w, "b": b}

    keys = jax.random.split(key, 5)
    return {
        "encoders": [
            conv_params(keys[0], 4, 8),      # 16x16 -> 8x8
            conv_params(keys[1], 8, 16),     # 8x8   -> 4x4
        ],
        "neck": conv_params(keys[2], 16, 16),
        "decoders": [
            conv_params(keys[3], 8 + 4, 4),    # decoders[0]: up(8ch) + skip(4ch)
            conv_params(keys[4], 16 + 8, 8),   # decoders[1]: up(16ch) + skip(8ch)
        ],
    }


if __name__ == "__main__":
    key = jax.random.PRNGKey(0)
    k_x, k_p = jax.random.split(key)

    x = jax.random.normal(k_x, (2, 4, 16, 16), jnp.float32)   # NCHW input
    params = init_params(k_p)

    fwd = jax.jit(base_unet_forward)
    y = jax.block_until_ready(fwd(x, params))

    assert y.shape == (2, 4, 16, 16), y.shape
    assert bool(jnp.isfinite(y).all())

    # Sanity check against the f32 reference (kernel uses bf16 MXU operands
    # with f32 accumulation, so a loose absolute tolerance is appropriate).
    y_ref = base_unet_reference(x, params)
    err = float(jnp.max(jnp.abs(y - y_ref)))
    assert err < 1e-1, f"max abs err {err}"

    print("KERNEL_OK")
</pallas_src>

<mosaic_0001>
module attributes {stable_mosaic.version = 11 : i64} {
  func.func @_unet_kernel(%arg0: i32, %arg1: memref<2x4x256xf32, #tpu.memory_space<vmem>>, %arg2: memref<9x8x4xbf16, #tpu.memory_space<vmem>>, %arg3: memref<8x1xf32, #tpu.memory_space<vmem>>, %arg4: memref<9x16x8xbf16, #tpu.memory_space<vmem>>, %arg5: memref<16x1xf32, #tpu.memory_space<vmem>>, %arg6: memref<9x16x16xbf16, #tpu.memory_space<vmem>>, %arg7: memref<16x1xf32, #tpu.memory_space<vmem>>, %arg8: memref<9x8x16xbf16, #tpu.memory_space<vmem>>, %arg9: memref<9x8x8xbf16, #tpu.memory_space<vmem>>, %arg10: memref<8x1xf32, #tpu.memory_space<vmem>>, %arg11: memref<9x4x8xbf16, #tpu.memory_space<vmem>>, %arg12: memref<9x4x4xbf16, #tpu.memory_space<vmem>>, %arg13: memref<4x1xf32, #tpu.memory_space<vmem>>, %arg14: memref<9x64x64xbf16, #tpu.memory_space<vmem>>, %arg15: memref<9x16x16xbf16, #tpu.memory_space<vmem>>, %arg16: memref<256x64xf32, #tpu.memory_space<vmem>>, %arg17: memref<64x16xf32, #tpu.memory_space<vmem>>, %arg18: memref<16x64xbf16, #tpu.memory_space<vmem>>, %arg19: memref<64x256xbf16, #tpu.memory_space<vmem>>, %arg20: memref<9x1x256xf32, #tpu.memory_space<vmem>>, %arg21: memref<2x4x256xf32, #tpu.memory_space<vmem>>) attributes {dimension_semantics = [#tpu.dimension_semantics<arbitrary>], iteration_bounds = array<i64: 1>, scalar_prefetch = 0 : i64, scratch_operands = 0 : i64, tpu.core_type = #tpu.core_type<tc>, window_params = [{pipeline_mode = #tpu.pipeline_mode<synchronous>, transform_indices = @transform_0, window_bounds = array<i64: 2, 4, 256>}, {pipeline_mode = #tpu.pipeline_mode<synchronous>, transform_indices = @transform_1, window_bounds = array<i64: 9, 8, 4>}, {pipeline_mode = #tpu.pipeline_mode<synchronous>, transform_indices = @transform_2, window_bounds = array<i64: 8, 1>}, {pipeline_mode = #tpu.pipeline_mode<synchronous>, transform_indices = @transform_3, window_bounds = array<i64: 9, 16, 8>}, {pipeline_mode = #tpu.pipeline_mode<synchronous>, transform_indices = @transform_4, window_bounds = array<i64: 16, 1>}, {pipeline_mode = #tpu.pipeline_mode<synchronous>, transform_indices = @transform_5, window_bounds = array<i64: 9, 16, 16>}, {pipeline_mode = #tpu.pipeline_mode<synchronous>, transform_indices = @transform_6, window_bounds = array<i64: 16, 1>}, {pipeline_mode = #tpu.pipeline_mode<synchronous>, transform_indices = @transform_7, window_bounds = array<i64: 9, 8, 16>}, {pipeline_mode = #tpu.pipeline_mode<synchronous>, transform_indices = @transform_8, window_bounds = array<i64: 9, 8, 8>}, {pipeline_mode = #tpu.pipeline_mode<synchronous>, transform_indices = @transform_9, window_bounds = array<i64: 8, 1>}, {pipeline_mode = #tpu.pipeline_mode<synchronous>, transform_indices = @transform_10, window_bounds = array<i64: 9, 4, 8>}, {pipeline_mode = #tpu.pipeline_mode<synchronous>, transform_indices = @transform_11, window_bounds = array<i64: 9, 4, 4>}, {pipeline_mode = #tpu.pipeline_mode<synchronous>, transform_indices = @transform_12, window_bounds = array<i64: 4, 1>}, {pipeline_mode = #tpu.pipeline_mode<synchronous>, transform_indices = @transform_13, window_bounds = array<i64: 9, 64, 64>}, {pipeline_mode = #tpu.pipeline_mode<synchronous>, transform_indices = @transform_14, window_bounds = array<i64: 9, 16, 16>}, {pipeline_mode = #tpu.pipeline_mode<synchronous>, transform_indices = @transform_15, window_bounds = array<i64: 256, 64>}, {pipeline_mode = #tpu.pipeline_mode<synchronous>, transform_indices = @transform_16, window_bounds = array<i64: 64, 16>}, {pipeline_mode = #tpu.pipeline_mode<synchronous>, transform_indices = @transform_17, window_bounds = array<i64: 16, 64>}, {pipeline_mode = #tpu.pipeline_mode<synchronous>, transform_indices = @transform_18, window_bounds = array<i64: 64, 256>}, {pipeline_mode = #tpu.pipeline_mode<synchronous>, transform_indices = @transform_19, window_bounds = array<i64: 9, 1, 256>}, {pipeline_mode = #tpu.pipeline_mode<synchronous>, transform_indices = @transform_20, window_bounds = array<i64: 2, 4, 256>}]} {
    %c0 = arith.constant 0 : index
    %c0_0 = arith.constant 0 : index
    %c0_1 = arith.constant 0 : index
    %0 = vector.load %arg1[%c0, %c0_0, %c0_1] : memref<2x4x256xf32, #tpu.memory_space<vmem>>, vector<1x4x256xf32>
    %1 = vector.shape_cast %0 : vector<1x4x256xf32> to vector<4x256xf32>
    %c17_i32 = arith.constant 17 : i32
    %2 = tpu.dynamic_rotate %1 by %c17_i32 dim 1 : vector<4x256xf32>, i32 -> vector<4x256xf32>
    %c0_2 = arith.constant 0 : index
    %c0_3 = arith.constant 0 : index
    %c0_4 = arith.constant 0 : index
    %3 = vector.load %arg20[%c0_2, %c0_3, %c0_4] : memref<9x1x256xf32, #tpu.memory_space<vmem>>, vector<1x1x256xf32>
    %4 = vector.shape_cast %3 : vector<1x1x256xf32> to vector<1x256xf32>
    %5 = vector.broadcast %4 : vector<1x256xf32> to vector<4x256xf32>
    %6 = arith.mulf %2, %5 : vector<4x256xf32>
    %7 = arith.truncf %6 : vector<4x256xf32> to vector<4x256xbf16>
    %c16_i32 = arith.constant 16 : i32
    %8 = tpu.dynamic_rotate %1 by %c16_i32 dim 1 : vector<4x256xf32>, i32 -> vector<4x256xf32>
    %c1 = arith.constant 1 : index
    %c0_5 = arith.constant 0 : index
    %c0_6 = arith.constant 0 : index
    %9 = vector.load %arg20[%c1, %c0_5, %c0_6] : memref<9x1x256xf32, #tpu.memory_space<vmem>>, vector<1x1x256xf32>
    %10 = vector.shape_cast %9 : vector<1x1x256xf32> to vector<1x256xf32>
    %11 = vector.broadcast %10 : vector<1x256xf32> to vector<4x256xf32>
    %12 = arith.mulf %8, %11 : vector<4x256xf32>
    %13 = arith.truncf %12 : vector<4x256xf32> to vector<4x256xbf16>
    %c15_i32 = arith.constant 15 : i32
    %14 = tpu.dynamic_rotate %1 by %c15_i32 dim 1 : vector<4x256xf32>, i32 -> vector<4x256xf32>
    %c2 = arith.constant 2 : index
    %c0_7 = arith.constant 0 : index
    %c0_8 = arith.constant 0 : index
    %15 = vector.load %arg20[%c2, %c0_7, %c0_8] : memref<9x1x256xf32, #tpu.memory_space<vmem>>, vector<1x1x256xf32>
    %16 = vector.shape_cast %15 : vector<1x1x256xf32> to vector<1x256xf32>
    %17 = vector.broadcast %16 : vector<1x256xf32> to vector<4x256xf32>
    %18 = arith.mulf %14, %17 : vector<4x256xf32>
    %19 = arith.truncf %18 : vector<4x256xf32> to vector<4x256xbf16>
    %c1_i32 = arith.constant 1 : i32
    %20 = tpu.dynamic_rotate %1 by %c1_i32 dim 1 : vector<4x256xf32>, i32 -> vector<4x256xf32>
    %c3 = arith.constant 3 : index
    %c0_9 = arith.constant 0 : index
    %c0_10 = arith.constant 0 : index
    %21 = vector.load %arg20[%c3, %c0_9, %c0_10] : memref<9x1x256xf32, #tpu.memory_space<vmem>>, vector<1x1x256xf32>
    %22 = vector.shape_cast %21 : vector<1x1x256xf32> to vector<1x256xf32>
    %23 = vector.broadcast %22 : vector<1x256xf32> to vector<4x256xf32>
    %24 = arith.mulf %20, %23 : vector<4x256xf32>
    %25 = arith.truncf %24 : vector<4x256xf32> to vector<4x256xbf16>
    %26 = arith.truncf %1 : vector<4x256xf32> to vector<4x256xbf16>
    %c255_i32 = arith.constant 255 : i32
    %27 = tpu.dynamic_rotate %1 by %c255_i32 dim 1 : vector<4x256xf32>, i32 -> vector<4x256xf32>
    %c5 = arith.constant 5 : index
    %c0_11 = arith.constant 0 : index
    %c0_12 = arith.constant 0 : index
    %28 = vector.load %arg20[%c5, %c0_11, %c0_12] : memref<9x1x256xf32, #tpu.memory_space<vmem>>, vector<1x1x256xf32>
    %29 = vector.shape_cast %28 : vector<1x1x256xf32> to vector<1x256xf32>
    %30 = vector.broadcast %29 : vector<1x256xf32> to vector<4x256xf32>
    %31 = arith.mulf %27, %30 : vector<4x256xf32>
    %32 = arith.truncf %31 : vector<4x256xf32> to vector<4x256xbf16>
    %c241_i32 = arith.constant 241 : i32
    %33 = tpu.dynamic_rotate %1 by %c241_i32 dim 1 : vector<4x256xf32>, i32 -> vector<4x256xf32>
    %c6 = arith.constant 6 : index
    %c0_13 = arith.constant 0 : index
    %c0_14 = arith.constant 0 : index
    %34 = vector.load %arg20[%c6, %c0_13, %c0_14] : memref<9x1x256xf32, #tpu.memory_space<vmem>>, vector<1x1x256xf32>
    %35 = vector.shape_cast %34 : vector<1x1x256xf32> to vector<1x256xf32>
    %36 = vector.broadcast %35 : vector<1x256xf32> to vector<4x256xf32>
    %37 = arith.mulf %33, %36 : vector<4x256xf32>
    %38 = arith.truncf %37 : vector<4x256xf32> to vector<4x256xbf16>
    %c240_i32 = arith.constant 240 : i32
    %39 = tpu.dynamic_rotate %1 by %c240_i32 dim 1 : vector<4x256xf32>, i32 -> vector<4x256xf32>
    %c7 = arith.constant 7 : index
    %c0_15 = arith.constant 0 : index
    %c0_16 = arith.constant 0 : index
    %40 = vector.load %arg20[%c7, %c0_15, %c0_16] : memref<9x1x256xf32, #tpu.memory_space<vmem>>, vector<1x1x256xf32>
    %41 = vector.shape_cast %40 : vector<1x1x256xf32> to vector<1x256xf32>
    %42 = vector.broadcast %41 : vector<1x256xf32> to vector<4x256xf32>
    %43 = arith.mulf %39, %42 : vector<4x256xf32>
    %44 = arith.truncf %43 : vector<4x256xf32> to vector<4x256xbf16>
    %c239_i32 = arith.constant 239 : i32
    %45 = tpu.dynamic_rotate %1 by %c239_i32 dim 1 : vector<4x256xf32>, i32 -> vector<4x256xf32>
    %c8 = arith.constant 8 : index
    %c0_17 = arith.constant 0 : index
    %c0_18 = arith.constant 0 : index
    %46 = vector.load %arg20[%c8, %c0_17, %c0_18] : memref<9x1x256xf32, #tpu.memory_space<vmem>>, vector<1x1x256xf32>
    %47 = vector.shape_cast %46 : vector<1x1x256xf32> to vector<1x256xf32>
    %48 = vector.broadcast %47 : vector<1x256xf32> to vector<4x256xf32>
    %49 = arith.mulf %45, %48 : vector<4x256xf32>
    %50 = arith.truncf %49 : vector<4x256xf32> to vector<4x256xbf16>
    %c0_19 = arith.constant 0 : index
    %c0_20 = arith.constant 0 : index
    %c0_21 = arith.constant 0 : index
    %51 = vector.load %arg2[%c0_19, %c0_20, %c0_21] : memref<9x8x4xbf16, #tpu.memory_space<vmem>>, vector<1x8x4xbf16>
    %52 = vector.shape_cast %51 : vector<1x8x4xbf16> to vector<8x4xbf16>
    %cst = arith.constant dense<0.000000e+00> : vector<8x256xf32>
    %53 = tpu.matmul %52, %7, %cst {dimension_numbers = #tpu.dot_dimension_numbers<[1], [0], [0], [1], [0, 0, 1, 1], [], []>} : vector<8x4xbf16>, vector<4x256xbf16>, vector<8x256xf32> -> vector<8x256xf32>
    %c1_22 = arith.constant 1 : index
    %c0_23 = arith.constant 0 : index
    %c0_24 = arith.constant 0 : index
    %54 = vector.load %arg2[%c1_22, %c0_23, %c0_24] : memref<9x8x4xbf16, #tpu.memory_space<vmem>>, vector<1x8x4xbf16>
    %55 = vector.shape_cast %54 : vector<1x8x4xbf16> to vector<8x4xbf16>
    %cst_25 = arith.constant dense<0.000000e+00> : vector<8x256xf32>
    %56 = tpu.matmul %55, %13, %cst_25 {dimension_numbers = #tpu.dot_dimension_numbers<[1], [0], [0], [1], [0, 0, 1, 1], [], []>} : vector<8x4xbf16>, vector<4x256xbf16>, vector<8x256xf32> -> vector<8x256xf32>
    %57 = arith.addf %53, %56 : vector<8x256xf32>
    %c2_26 = arith.constant 2 : index
    %c0_27 = arith.constant 0 : index
    %c0_28 = arith.constant 0 : index
    %58 = vector.load %arg2[%c2_26, %c0_27, %c0_28] : memref<9x8x4xbf16, #tpu.memory_space<vmem>>, vector<1x8x4xbf16>
    %59 = vector.shape_cast %58 : vector<1x8x4xbf16> to vector<8x4xbf16>
    %cst_29 = arith.constant dense<0.000000e+00> : vector<8x256xf32>
    %60 = tpu.matmul %59, %19, %cst_29 {dimension_numbers = #tpu.dot_dimension_numbers<[1], [0], [0], [1], [0, 0, 1, 1], [], []>} : vector<8x4xbf16>, vector<4x256xbf16>, vector<8x256xf32> -> vector<8x256xf32>
    %61 = arith.addf %57, %60 : vector<8x256xf32>
    %c3_30 = arith.constant 3 : index
    %c0_31 = arith.constant 0 : index
    %c0_32 = arith.constant 0 : index
    %62 = vector.load %arg2[%c3_30, %c0_31, %c0_32] : memref<9x8x4xbf16, #tpu.memory_space<vmem>>, vector<1x8x4xbf16>
    %63 = vector.shape_cast %62 : vector<1x8x4xbf16> to vector<8x4xbf16>
    %cst_33 = arith.constant dense<0.000000e+00> : vector<8x256xf32>
    %64 = tpu.matmul %63, %25, %cst_33 {dimension_numbers = #tpu.dot_dimension_numbers<[1], [0], [0], [1], [0, 0, 1, 1], [], []>} : vector<8x4xbf16>, vector<4x256xbf16>, vector<8x256xf32> -> vector<8x256xf32>
    %65 = arith.addf %61, %64 : vector<8x256xf32>
    %c4 = arith.constant 4 : index
    %c0_34 = arith.constant 0 : index
    %c0_35 = arith.constant 0 : index
    %66 = vector.load %arg2[%c4, %c0_34, %c0_35] : memref<9x8x4xbf16, #tpu.memory_space<vmem>>, vector<1x8x4xbf16>
    %67 = vector.shape_cast %66 : vector<1x8x4xbf16> to vector<8x4xbf16>
    %cst_36 = arith.constant dense<0.000000e+00> : vector<8x256xf32>
    %68 = tpu.matmul %67, %26, %cst_36 {dimension_numbers = #tpu.dot_dimension_numbers<[1], [0], [0], [1], [0, 0, 1, 1], [], []>} : vector<8x4xbf16>, vector<4x256xbf16>, vector<8x256xf32> -> vector<8x256xf32>
    %69 = arith.addf %65, %68 : vector<8x256xf32>
    %c5_37 = arith.constant 5 : index
    %c0_38 = arith.constant 0 : index
    %c0_39 = arith.constant 0 : index
    %70 = vector.load %arg2[%c5_37, %c0_38, %c0_39] : memref<9x8x4xbf16, #tpu.memory_space<vmem>>, vector<1x8x4xbf16>
    %71 = vector.shape_cast %70 : vector<1x8x4xbf16> to vector<8x4xbf16>
    %cst_40 = arith.constant dense<0.000000e+00> : vector<8x256xf32>
    %72 = tpu.matmul %71, %32, %cst_40 {dimension_numbers = #tpu.dot_dimension_numbers<[1], [0], [0], [1], [0, 0, 1, 1], [], []>} : vector<8x4xbf16>, vector<4x256xbf16>, vector<8x256xf32> -> vector<8x256xf32>
    %73 = arith.addf %69, %72 : vector<8x256xf32>
    %c6_41 = arith.constant 6 : index
    %c0_42 = arith.constant 0 : index
    %c0_43 = arith.constant 0 : index
    %74 = vector.load %arg2[%c6_41, %c0_42, %c0_43] : memref<9x8x4xbf16, #tpu.memory_space<vmem>>, vector<1x8x4xbf16>
    %75 = vector.shape_cast %74 : vector<1x8x4xbf16> to vector<8x4xbf16>
    %cst_44 = arith.constant dense<0.000000e+00> : vector<8x256xf32>
    %76 = tpu.matmul %75, %38, %cst_44 {dimension_numbers = #tpu.dot_dimension_numbers<[1], [0], [0], [1], [0, 0, 1, 1], [], []>} : vector<8x4xbf16>, vector<4x256xbf16>, vector<8x256xf32> -> vector<8x256xf32>
    %77 = arith.addf %73, %76 : vector<8x256xf32>
    %c7_45 = arith.constant 7 : index
    %c0_46 = arith.constant 0 : index
    %c0_47 = arith.constant 0 : index
    %78 = vector.load %arg2[%c7_45, %c0_46, %c0_47] : memref<9x8x4xbf16, #tpu.memory_space<vmem>>, vector<1x8x4xbf16>
    %79 = vector.shape_cast %78 : vector<1x8x4xbf16> to vector<8x4xbf16>
    %cst_48 = arith.constant dense<0.000000e+00> : vector<8x256xf32>
    %80 = tpu.matmul %79, %44, %cst_48 {dimension_numbers = #tpu.dot_dimension_numbers<[1], [0], [0], [1], [0, 0, 1, 1], [], []>} : vector<8x4xbf16>, vector<4x256xbf16>, vector<8x256xf32> -> vector<8x256xf32>
    %81 = arith.addf %77, %80 : vector<8x256xf32>
    %c8_49 = arith.constant 8 : index
    %c0_50 = arith.constant 0 : index
    %c0_51 = arith.constant 0 : index
    %82 = vector.load %arg2[%c8_49, %c0_50, %c0_51] : memref<9x8x4xbf16, #tpu.memory_space<vmem>>, vector<1x8x4xbf16>
    %83 = vector.shape_cast %82 : vector<1x8x4xbf16> to vector<8x4xbf16>
    %cst_52 = arith.constant dense<0.000000e+00> : vector<8x256xf32>
    %84 = tpu.matmul %83, %50, %cst_52 {dimension_numbers = #tpu.dot_dimension_numbers<[1], [0], [0], [1], [0, 0, 1, 1], [], []>} : vector<8x4xbf16>, vector<4x256xbf16>, vector<8x256xf32> -> vector<8x256xf32>
    %85 = arith.addf %81, %84 : vector<8x256xf32>
    %c0_53 = arith.constant 0 : index
    %c0_54 = arith.constant 0 : index
    %86 = vector.load %arg16[%c0_53, %c0_54] : memref<256x64xf32, #tpu.memory_space<vmem>>, vector<256x64xf32>
    %cst_55 = arith.constant dense<0.000000e+00> : vector<8x64xf32>
    %87 = tpu.matmul %85, %86, %cst_55 {dimension_numbers = #tpu.dot_dimension_numbers<[1], [0], [0], [1], [0, 0, 1, 1], [], []>} : vector<8x256xf32>, vector<256x64xf32>, vector<8x64xf32> -> vector<8x64xf32>
    %c0_56 = arith.constant 0 : index
    %c0_57 = arith.constant 0 : index
    %88 = vector.load %arg3[%c0_56, %c0_57] : memref<8x1xf32, #tpu.memory_space<vmem>>, vector<8x1xf32>
    %89 = vector.broadcast %88 : vector<8x1xf32> to vector<8x64xf32>
    %90 = arith.addf %87, %89 : vector<8x64xf32>
    %cst_58 = arith.constant 0.000000e+00 : f32
    %91 = vector.broadcast %cst_58 : f32 to vector<8x64xf32>
    %92 = arith.maximumf %90, %91 : vector<8x64xf32>
    %93 = arith.truncf %92 : vector<8x64xf32> to vector<8x64xbf16>
    %c0_59 = arith.constant 0 : index
    %c0_60 = arith.constant 0 : index
    %c0_61 = arith.constant 0 : index
    %94 = vector.load %arg14[%c0_59, %c0_60, %c0_61] : memref<9x64x64xbf16, #tpu.memory_space<vmem>>, vector<1x64x64xbf16>
    %95 = vector.shape_cast %94 : vector<1x64x64xbf16> to vector<64x64xbf16>
    %cst_62 = arith.constant dense<0.000000e+00> : vector<8x64xf32>
    %96 = tpu.matmul %93, %95, %cst_62 {dimension_numbers = #tpu.dot_dimension_numbers<[1], [0], [0], [1], [0, 0, 1, 1], [], []>} : vector<8x64xbf16>, vector<64x64xbf16>, vector<8x64xf32> -> vector<8x64xf32>
    %97 = arith.truncf %96 : vector<8x64xf32> to vector<8x64xbf16>
    %c1_63 = arith.constant 1 : index
    %c0_64 = arith.constant 0 : index
    %c0_65 = arith.constant 0 : index
    %98 = vector.load %arg14[%c1_63, %c0_64, %c0_65] : memref<9x64x64xbf16, #tpu.memory_space<vmem>>, vector<1x64x64xbf16>
    %99 = vector.shape_cast %98 : vector<1x64x64xbf16> to vector<64x64xbf16>
    %cst_66 = arith.constant dense<0.000000e+00> : vector<8x64xf32>
    %100 = tpu.matmul %93, %99, %cst_66 {dimension_numbers = #tpu.dot_dimension_numbers<[1], [0], [0], [1], [0, 0, 1, 1], [], []>} : vector<8x64xbf16>, vector<64x64xbf16>, vector<8x64xf32> -> vector<8x64xf32>
    %101 = arith.truncf %100 : vector<8x64xf32> to vector<8x64xbf16>
    %c2_67 = arith.constant 2 : index
    %c0_68 = arith.constant 0 : index
    %c0_69 = arith.constant 0 : index
    %102 = vector.load %arg14[%c2_67, %c0_68, %c0_69] : memref<9x64x64xbf16, #tpu.memory_space<vmem>>, vector<1x64x64xbf16>
    %103 = vector.shape_cast %102 : vector<1x64x64xbf16> to vector<64x64xbf16>
    %cst_70 = arith.constant dense<0.000000e+00> : vector<8x64xf32>
    %104 = tpu.matmul %93, %103, %cst_70 {dimension_numbers = #tpu.dot_dimension_numbers<[1], [0], [0], [1], [0, 0, 1, 1], [], []>} : vector<8x64xbf16>, vector<64x64xbf16>, vector<8x64xf32> -> vector<8x64xf32>
    %105 = arith.truncf %104 : vector<8x64xf32> to vector<8x64xbf16>
    %c3_71 = arith.constant 3 : index
    %c0_72 = arith.constant 0 : index
    %c0_73 = arith.constant 0 : index
    %106 = vector.load %arg14[%c3_71, %c0_72, %c0_73] : memref<9x64x64xbf16, #tpu.memory_space<vmem>>, vector<1x64x64xbf16>
    %107 = vector.shape_cast %106 : vector<1x64x64xbf16> to vector<64x64xbf16>
    %cst_74 = arith.constant dense<0.000000e+00> : vector<8x64xf32>
    %108 = tpu.matmul %93, %107, %cst_74 {dimension_numbers = #tpu.dot_dimension_numbers<[1], [0], [0], [1], [0, 0, 1, 1], [], []>} : vector<8x64xbf16>, vector<64x64xbf16>, vector<8x64xf32> -> vector<8x64xf32>
    %109 = arith.truncf %108 : vector<8x64xf32> to vector<8x64xbf16>
    %c5_75 = arith.constant 5 : index
    %c0_76 = arith.constant 0 : index
    %c0_77 = arith.constant 0 : index
    %110 = vector.load %arg14[%c5_75, %c0_76, %c0_77] : memref<9x64x64xbf16, #tpu.memory_space<vmem>>, vector<1x64x64xbf16>
    %111 = vector.shape_cast %110 : vector<1x64x64xbf16> to vector<64x64xbf16>
    %cst_78 = arith.constant dense<0.000000e+00> : vector<8x64xf32>
    %112 = tpu.matmul %93, %111, %cst_78 {dimension_numbers = #tpu.dot_dimension_numbers<[1], [0], [0], [1], [0, 0, 1, 1], [], []>} : vector<8x64xbf16>, vector<64x64xbf16>, vector<8x64xf32> -> vector<8x64xf32>
    %113 = arith.truncf %112 : vector<8x64xf32> to vector<8x64xbf16>
    %c6_79 = arith.constant 6 : index
    %c0_80 = arith.constant 0 : index
    %c0_81 = arith.constant 0 : index
    %114 = vector.load %arg14[%c6_79, %c0_80, %c0_81] : memref<9x64x64xbf16, #tpu.memory_space<vmem>>, vector<1x64x64xbf16>
    %115 = vector.shape_cast %114 : vector<1x64x64xbf16> to vector<64x64xbf16>
    %cst_82 = arith.constant dense<0.000000e+00> : vector<8x64xf32>
    %116 = tpu.matmul %93, %115, %cst_82 {dimension_numbers = #tpu.dot_dimension_numbers<[1], [0], [0], [1], [0, 0, 1, 1], [], []>} : vector<8x64xbf16>, vector<64x64xbf16>, vector<8x64xf32> -> vector<8x64xf32>
    %117 = arith.truncf %116 : vector<8x64xf32> to vector<8x64xbf16>
    %c7_83 = arith.constant 7 : index
    %c0_84 = arith.constant 0 : index
    %c0_85 = arith.constant 0 : index
    %118 = vector.load %arg14[%c7_83, %c0_84, %c0_85] : memref<9x64x64xbf16, #tpu.memory_space<vmem>>, vector<1x64x64xbf16>
    %119 = vector.shape_cast %118 : vector<1x64x64xbf16> to vector<64x64xbf16>
    %cst_86 = arith.constant dense<0.000000e+00> : vector<8x64xf32>
    %120 = tpu.matmul %93, %119, %cst_86 {dimension_numbers = #tpu.dot_dimension_numbers<[1], [0], [0], [1], [0, 0, 1, 1], [], []>} : vector<8x64xbf16>, vector<64x64xbf16>, vector<8x64xf32> -> vector<8x64xf32>
    %121 = arith.truncf %120 : vector<8x64xf32> to vector<8x64xbf16>
    %c8_87 = arith.constant 8 : index
    %c0_88 = arith.constant 0 : index
    %c0_89 = arith.constant 0 : index
    %122 = vector.load %arg14[%c8_87, %c0_88, %c0_89] : memref<9x64x64xbf16, #tpu.memory_space<vmem>>, vector<1x64x64xbf16>
    %123 = vector.shape_cast %122 : vector<1x64x64xbf16> to vector<64x64xbf16>
    %cst_90 = arith.constant dense<0.000000e+00> : vector<8x64xf32>
    %124 = tpu.matmul %93, %123, %cst_90 {dimension_numbers = #tpu.dot_dimension_numbers<[1], [0], [0], [1], [0, 0, 1, 1], [], []>} : vector<8x64xbf16>, vector<64x64xbf16>, vector<8x64xf32> -> vector<8x64xf32>
    %125 = arith.truncf %124 : vector<8x64xf32> to vector<8x64xbf16>
    %c0_91 = arith.constant 0 : index
    %c0_92 = arith.constant 0 : index
    %c0_93 = arith.constant 0 : index
    %126 = vector.load %arg4[%c0_91, %c0_92, %c0_93] : memref<9x16x8xbf16, #tpu.memory_space<vmem>>, vector<1x16x8xbf16>
    %127 = vector.shape_cast %126 : vector<1x16x8xbf16> to vector<16x8xbf16>
    %cst_94 = arith.constant dense<0.000000e+00> : vector<16x64xf32>
    %128 = tpu.matmul %127, %97, %cst_94 {dimension_numbers = #tpu.dot_dimension_numbers<[1], [0], [0], [1], [0, 0, 1, 1], [], []>} : vector<16x8xbf16>, vector<8x64xbf16>, vector<16x64xf32> -> vector<16x64xf32>
    %c1_95 = arith.constant 1 : index
    %c0_96 = arith.constant 0 : index
    %c0_97 = arith.constant 0 : index
    %129 = vector.load %arg4[%c1_95, %c0_96, %c0_97] : memref<9x16x8xbf16, #tpu.memory_space<vmem>>, vector<1x16x8xbf16>
    %130 = vector.shape_cast %129 : vector<1x16x8xbf16> to vector<16x8xbf16>
    %cst_98 = arith.constant dense<0.000000e+00> : vector<16x64xf32>
    %131 = tpu.matmul %130, %101, %cst_98 {dimension_numbers = #tpu.dot_dimension_numbers<[1], [0], [0], [1], [0, 0, 1, 1], [], []>} : vector<16x8xbf16>, vector<8x64xbf16>, vector<16x64xf32> -> vector<16x64xf32>
    %132 = arith.addf %128, %131 : vector<16x64xf32>
    %c2_99 = arith.constant 2 : index
    %c0_100 = arith.constant 0 : index
    %c0_101 = arith.constant 0 : index
    %133 = vector.load %arg4[%c2_99, %c0_100, %c0_101] : memref<9x16x8xbf16, #tpu.memory_space<vmem>>, vector<1x16x8xbf16>
    %134 = vector.shape_cast %133 : vector<1x16x8xbf16> to vector<16x8xbf16>
    %cst_102 = arith.constant dense<0.000000e+00> : vector<16x64xf32>
    %135 = tpu.matmul %134, %105, %cst_102 {dimension_numbers = #tpu.dot_dimension_numbers<[1], [0], [0], [1], [0, 0, 1, 1], [], []>} : vector<16x8xbf16>, vector<8x64xbf16>, vector<16x64xf32> -> vector<16x64xf32>
    %136 = arith.addf %132, %135 : vector<16x64xf32>
    %c3_103 = arith.constant 3 : index
    %c0_104 = arith.constant 0 : index
    %c0_105 = arith.constant 0 : index
    %137 = vector.load %arg4[%c3_103, %c0_104, %c0_105] : memref<9x16x8xbf16, #tpu.memory_space<vmem>>, vector<1x16x8xbf16>
    %138 = vector.shape_cast %137 : vector<1x16x8xbf16> to vector<16x8xbf16>
    %cst_106 = arith.constant dense<0.000000e+00> : vector<16x64xf32>
    %139 = tpu.matmul %138, %109, %cst_106 {dimension_numbers = #tpu.dot_dimension_numbers<[1], [0], [0], [1], [0, 0, 1, 1], [], []>} : vector<16x8xbf16>, vector<8x64xbf16>, vector<16x64xf32> -> vector<16x64xf32>
    %140 = arith.addf %136, %139 : vector<16x64xf32>
    %c4_107 = arith.constant 4 : index
    %c0_108 = arith.constant 0 : index
    %c0_109 = arith.constant 0 : index
    %141 = vector.load %arg4[%c4_107, %c0_108, %c0_109] : memref<9x16x8xbf16, #tpu.memory_space<vmem>>, vector<1x16x8xbf16>
    %142 = vector.shape_cast %141 : vector<1x16x8xbf16> to vector<16x8xbf16>
    %cst_110 = arith.constant dense<0.000000e+00> : vector<16x64xf32>
    %143 = tpu.matmul %142, %93, %cst_110 {dimension_numbers = #tpu.dot_dimension_numbers<[1], [0], [0], [1], [0, 0, 1, 1], [], []>} : vector<16x8xbf16>, vector<8x64xbf16>, vector<16x64xf32> -> vector<16x64xf32>
    %144 = arith.addf %140, %143 : vector<16x64xf32>
    %c5_111 = arith.constant 5 : index
    %c0_112 = arith.constant 0 : index
    %c0_113 = arith.constant 0 : index
    %145 = vector.load %arg4[%c5_111, %c0_112, %c0_113] : memref<9x16x8xbf16, #tpu.memory_space<vmem>>, vector<1x16x8xbf16>
    %146 = vector.shape_cast %145 : vector<1x16x8xbf16> to vector<16x8xbf16>
    %cst_114 = arith.constant dense<0.000000e+00> : vector<16x64xf32>
    %147 = tpu.matmul %146, %113, %cst_114 {dimension_numbers = #tpu.dot_dimension_numbers<[1], [0], [0], [1], [0, 0, 1, 1], [], []>} : vector<16x8xbf16>, vector<8x64xbf16>, vector<16x64xf32> -> vector<16x64xf32>
    %148 = arith.addf %144, %147 : vector<16x64xf32>
    %c6_115 = arith.constant 6 : index
    %c0_116 = arith.constant 0 : index
    %c0_117 = arith.constant 0 : index
    %149 = vector.load %arg4[%c6_115, %c0_116, %c0_117] : memref<9x16x8xbf16, #tpu.memory_space<vmem>>, vector<1x16x8xbf16>
    %150 = vector.shape_cast %149 : vector<1x16x8xbf16> to vector<16x8xbf16>
    %cst_118 = arith.constant dense<0.000000e+00> : vector<16x64xf32>
    %151 = tpu.matmul %150, %117, %cst_118 {dimension_numbers = #tpu.dot_dimension_numbers<[1], [0], [0], [1], [0, 0, 1, 1], [], []>} : vector<16x8xbf16>, vector<8x64xbf16>, vector<16x64xf32> -> vector<16x64xf32>
    %152 = arith.addf %148, %151 : vector<16x64xf32>
    %c7_119 = arith.constant 7 : index
    %c0_120 = arith.constant 0 : index
    %c0_121 = arith.constant 0 : index
    %153 = vector.load %arg4[%c7_119, %c0_120, %c0_121] : memref<9x16x8xbf16, #tpu.memory_space<vmem>>, vector<1x16x8xbf16>
    %154 = vector.shape_cast %153 : vector<1x16x8xbf16> to vector<16x8xbf16>
    %cst_122 = arith.constant dense<0.000000e+00> : vector<16x64xf32>
    %155 = tpu.matmul %154, %121, %cst_122 {dimension_numbers = #tpu.dot_dimension_numbers<[1], [0], [0], [1], [0, 0, 1, 1], [], []>} : vector<16x8xbf16>, vector<8x64xbf16>, vector<16x64xf32> -> vector<16x64xf32>
    %156 = arith.addf %152, %155 : vector<16x64xf32>
    %c8_123 = arith.constant 8 : index
    %c0_124 = arith.constant 0 : index
    %c0_125 = arith.constant 0 : index
    %157 = vector.load %arg4[%c8_123, %c0_124, %c0_125] : memref<9x16x8xbf16, #tpu.memory_space<vmem>>, vector<1x16x8xbf16>
    %158 = vector.shape_cast %157 : vector<1x16x8xbf16> to vector<16x8xbf16>
    %cst_126 = arith.constant dense<0.000000e+00> : vector<16x64xf32>
    %159 = tpu.matmul %158, %125, %cst_126 {dimension_numbers = #tpu.dot_dimension_numbers<[1], [0], [0], [1], [0, 0, 1, 1], [], []>} : vector<16x8xbf16>, vector<8x64xbf16>, vector<16x64xf32> -> vector<16x64xf32>
    %160 = arith.addf %156, %159 : vector<16x64xf32>
    %c0_127 = arith.constant 0 : index
    %c0_128 = arith.constant 0 : index
    %161 = vector.load %arg17[%c0_127, %c0_128] : memref<64x16xf32, #tpu.memory_space<vmem>>, vector<64x16xf32>
    %cst_129 = arith.constant dense<0.000000e+00> : vector<16x16xf32>
    %162 = tpu.matmul %160, %161, %cst_129 {dimension_numbers = #tpu.dot_dimension_numbers<[1], [0], [0], [1], [0, 0, 1, 1], [], []>} : vector<16x64xf32>, vector<64x16xf32>, vector<16x16xf32> -> vector<16x16xf32>
    %c0_130 = arith.constant 0 : index
    %c0_131 = arith.constant 0 : index
    %163 = vector.load %arg5[%c0_130, %c0_131] : memref<16x1xf32, #tpu.memory_space<vmem>>, vector<16x1xf32>
    %164 = vector.broadcast %163 : vector<16x1xf32> to vector<16x16xf32>
    %165 = arith.addf %162, %164 : vector<16x16xf32>
    %cst_132 = arith.constant 0.000000e+00 : f32
    %166 = vector.broadcast %cst_132 : f32 to vector<16x16xf32>
    %167 = arith.maximumf %165, %166 : vector<16x16xf32>
    %168 = arith.truncf %167 : vector<16x16xf32> to vector<16x16xbf16>
    %c0_133 = arith.constant 0 : index
    %c0_134 = arith.constant 0 : index
    %c0_135 = arith.constant 0 : index
    %169 = vector.load %arg15[%c0_133, %c0_134, %c0_135] : memref<9x16x16xbf16, #tpu.memory_space<vmem>>, vector<1x16x16xbf16>
    %170 = vector.shape_cast %169 : vector<1x16x16xbf16> to vector<16x16xbf16>
    %cst_136 = arith.constant dense<0.000000e+00> : vector<16x16xf32>
    %171 = tpu.matmul %168, %170, %cst_136 {dimension_numbers = #tpu.dot_dimension_numbers<[1], [0], [0], [1], [0, 0, 1, 1], [], []>} : vector<16x16xbf16>, vector<16x16xbf16>, vector<16x16xf32> -> vector<16x16xf32>
    %172 = arith.truncf %171 : vector<16x16xf32> to vector<16x16xbf16>
    %c1_137 = arith.constant 1 : index
    %c0_138 = arith.constant 0 : index
    %c0_139 = arith.constant 0 : index
    %173 = vector.load %arg15[%c1_137, %c0_138, %c0_139] : memref<9x16x16xbf16, #tpu.memory_space<vmem>>, vector<1x16x16xbf16>
    %174 = vector.shape_cast %173 : vector<1x16x16xbf16> to vector<16x16xbf16>
    %cst_140 = arith.constant dense<0.000000e+00> : vector<16x16xf32>
    %175 = tpu.matmul %168, %174, %cst_140 {dimension_numbers = #tpu.dot_dimension_numbers<[1], [0], [0], [1], [0, 0, 1, 1], [], []>} : vector<16x16xbf16>, vector<16x16xbf16>, vector<16x16xf32> -> vector<16x16xf32>
    %176 = arith.truncf %175 : vector<16x16xf32> to vector<16x16xbf16>
    %c2_141 = arith.constant 2 : index
    %c0_142 = arith.constant 0 : index
    %c0_143 = arith.constant 0 : index
    %177 = vector.load %arg15[%c2_141, %c0_142, %c0_143] : memref<9x16x16xbf16, #tpu.memory_space<vmem>>, vector<1x16x16xbf16>
    %178 = vector.shape_cast %177 : vector<1x16x16xbf16> to vector<16x16xbf16>
    %cst_144 = arith.constant dense<0.000000e+00> : vector<16x16xf32>
    %179 = tpu.matmul %168, %178, %cst_144 {dimension_numbers = #tpu.dot_dimension_numbers<[1], [0], [0], [1], [0, 0, 1, 1], [], []>} : vector<16x16xbf16>, vector<16x16xbf16>, vector<16x16xf32> -> vector<16x16xf32>
    %180 = arith.truncf %179 : vector<16x16xf32> to vector<16x16xbf16>
    %c3_145 = arith.constant 3 : index
    %c0_146 = arith.constant 0 : index
    %c0_147 = arith.constant 0 : index
    %181 = vector.load %arg15[%c3_145, %c0_146, %c0_147] : memref<9x16x16xbf16, #tpu.memory_space<vmem>>, vector<1x16x16xbf16>
    %182 = vector.shape_cast %181 : vector<1x16x16xbf16> to vector<16x16xbf16>
    %cst_148 = arith.constant dense<0.000000e+00> : vector<16x16xf32>
    %183 = tpu.matmul %168, %182, %cst_148 {dimension_numbers = #tpu.dot_dimension_numbers<[1], [0], [0], [1], [0, 0, 1, 1], [], []>} : vector<16x16xbf16>, vector<16x16xbf16>, vector<16x16xf32> -> vector<16x16xf32>
    %184 = arith.truncf %183 : vector<16x16xf32> to vector<16x16xbf16>
    %c5_149 = arith.constant 5 : index
    %c0_150 = arith.constant 0 : index
    %c0_151 = arith.constant 0 : index
    %185 = vector.load %arg15[%c5_149, %c0_150, %c0_151] : memref<9x16x16xbf16, #tpu.memory_space<vmem>>, vector<1x16x16xbf16>
    %186 = vector.shape_cast %185 : vector<1x16x16xbf16> to vector<16x16xbf16>
    %cst_152 = arith.constant dense<0.000000e+00> : vector<16x16xf32>
    %187 = tpu.matmul %168, %186, %cst_152 {dimension_numbers = #tpu.dot_dimension_numbers<[1], [0], [0], [1], [0, 0, 1, 1], [], []>} : vector<16x16xbf16>, vector<16x16xbf16>, vector<16x16xf32> -> vector<16x16xf32>
    %188 = arith.truncf %187 : vector<16x16xf32> to vector<16x16xbf16>
    %c6_153 = arith.constant 6 : index
    %c0_154 = arith.constant 0 : index
    %c0_155 = arith.constant 0 : index
    %189 = vector.load %arg15[%c6_153, %c0_154, %c0_155] : memref<9x16x16xbf16, #tpu.memory_space<vmem>>, vector<1x16x16xbf16>
    %190 = vector.shape_cast %189 : vector<1x16x16xbf16> to vector<16x16xbf16>
    %cst_156 = arith.constant dense<0.000000e+00> : vector<16x16xf32>
    %191 = tpu.matmul %168, %190, %cst_156 {dimension_numbers = #tpu.dot_dimension_numbers<[1], [0], [0], [1], [0, 0, 1, 1], [], []>} : vector<16x16xbf16>, vector<16x16xbf16>, vector<16x16xf32> -> vector<16x16xf32>
    %192 = arith.truncf %191 : vector<16x16xf32> to vector<16x16xbf16>
    %c7_157 = arith.constant 7 : index
    %c0_158 = arith.constant 0 : index
    %c0_159 = arith.constant 0 : index
    %193 = vector.load %arg15[%c7_157, %c0_158, %c0_159] : memref<9x16x16xbf16, #tpu.memory_space<vmem>>, vector<1x16x16xbf16>
    %194 = vector.shape_cast %193 : vector<1x16x16xbf16> to vector<16x16xbf16>
    %cst_160 = arith.constant dense<0.000000e+00> : vector<16x16xf32>
    %195 = tpu.matmul %168, %194, %cst_160 {dimension_numbers = #tpu.dot_dimension_numbers<[1], [0], [0], [1], [0, 0, 1, 1], [], []>} : vector<16x16xbf16>, vector<16x16xbf16>, vector<16x16xf32> -> vector<16x16xf32>
    %196 = arith.truncf %195 : vector<16x16xf32> to vector<16x16xbf16>
    %c8_161 = arith.constant 8 : index
    %c0_162 = arith.constant 0 : index
    %c0_163 = arith.constant 0 : index
    %197 = vector.load %arg15[%c8_161, %c0_162, %c0_163] : memref<9x16x16xbf16, #tpu.memory_space<vmem>>, vector<1x16x16xbf16>
    %198 = vector.shape_cast %197 : vector<1x16x16xbf16> to vector<16x16xbf16>
    %cst_164 = arith.constant dense<0.000000e+00> : vector<16x16xf32>
    %199 = tpu.matmul %168, %198, %cst_164 {dimension_numbers = #tpu.dot_dimension_numbers<[1], [0], [0], [1], [0, 0, 1, 1], [], []>} : vector<16x16xbf16>, vector<16x16xbf16>, vector<16x16xf32> -> vector<16x16xf32>
    %200 = arith.truncf %199 : vector<16x16xf32> to vector<16x16xbf16>
    %c0_165 = arith.constant 0 : index
    %c0_166 = arith.constant 0 : index
    %c0_167 = arith.constant 0 : index
    %201 = vector.load %arg6[%c0_165, %c0_166, %c0_167] : memref<9x16x16xbf16, #tpu.memory_space<vmem>>, vector<1x16x16xbf16>
    %202 = vector.shape_cast %201 : vector<1x16x16xbf16> to vector<16x16xbf16>
    %cst_168 = arith.constant dense<0.000000e+00> : vector<16x16xf32>
    %203 = tpu.matmul %202, %172, %cst_168 {dimension_numbers = #tpu.dot_dimension_numbers<[1], [0], [0], [1], [0, 0, 1, 1], [], []>} : vector<16x16xbf16>, vector<16x16xbf16>, vector<16x16xf32> -> vector<16x16xf32>
    %c1_169 = arith.constant 1 : index
    %c0_170 = arith.constant 0 : index
    %c0_171 = arith.constant 0 : index
    %204 = vector.load %arg6[%c1_169, %c0_170, %c0_171] : memref<9x16x16xbf16, #tpu.memory_space<vmem>>, vector<1x16x16xbf16>
    %205 = vector.shape_cast %204 : vector<1x16x16xbf16> to vector<16x16xbf16>
    %cst_172 = arith.constant dense<0.000000e+00> : vector<16x16xf32>
    %206 = tpu.matmul %205, %176, %cst_172 {dimension_numbers = #tpu.dot_dimension_numbers<[1], [0], [0], [1], [0, 0, 1, 1], [], []>} : vector<16x16xbf16>, vector<16x16xbf16>, vector<16x16xf32> -> vector<16x16xf32>
    %207 = arith.addf %203, %206 : vector<16x16xf32>
    %c2_173 = arith.constant 2 : index
    %c0_174 = arith.constant 0 : index
    %c0_175 = arith.constant 0 : index
    %208 = vector.load %arg6[%c2_173, %c0_174, %c0_175] : memref<9x16x16xbf16, #tpu.memory_space<vmem>>, vector<1x16x16xbf16>
    %209 = vector.shape_cast %208 : vector<1x16x16xbf16> to vector<16x16xbf16>
    %cst_176 = arith.constant dense<0.000000e+00> : vector<16x16xf32>
    %210 = tpu.matmul %209, %180, %cst_176 {dimension_numbers = #tpu.dot_dimension_numbers<[1], [0], [0], [1], [0, 0, 1, 1], [], []>} : vector<16x16xbf16>, vector<16x16xbf16>, vector<16x16xf32> -> vector<16x16xf32>
    %211 = arith.addf %207, %210 : vector<16x16xf32>
    %c3_177 = arith.constant 3 : index
    %c0_178 = arith.constant 0 : index
    %c0_179 = arith.constant 0 : index
    %212 = vector.load %arg6[%c3_177, %c0_178, %c0_179] : memref<9x16x16xbf16, #tpu.memory_space<vmem>>, vector<1x16x16xbf16>
    %213 = vector.shape_cast %212 : vector<1x16x16xbf16> to vector<16x16xbf16>
    %cst_180 = arith.constant dense<0.000000e+00> : vector<16x16xf32>
    %214 = tpu.matmul %213, %184, %cst_180 {dimension_numbers = #tpu.dot_dimension_numbers<[1], [0], [0], [1], [0, 0, 1, 1], [], []>} : vector<16x16xbf16>, vector<16x16xbf16>, vector<16x16xf32> -> vector<16x16xf32>
    %215 = arith.addf %211, %214 : vector<16x16xf32>
    %c4_181 = arith.constant 4 : index
    %c0_182 = arith.constant 0 : index
    %c0_183 = arith.constant 0 : index
    %216 = vector.load %arg6[%c4_181, %c0_182, %c0_183] : memref<9x16x16xbf16, #tpu.memory_space<vmem>>, vector<1x16x16xbf16>
    %217 = vector.shape_cast %216 : vector<1x16x16xbf16> to vector<16x16xbf16>
    %cst_184 = arith.constant dense<0.000000e+00> : vector<16x16xf32>
    %218 = tpu.matmul %217, %168, %cst_184 {dimension_numbers = #tpu.dot_dimension_numbers<[1], [0], [0], [1], [0, 0, 1, 1], [], []>} : vector<16x16xbf16>, vector<16x16xbf16>, vector<16x16xf32> -> vector<16x16xf32>
    %219 = arith.addf %215, %218 : vector<16x16xf32>
    %c5_185 = arith.constant 5 : index
    %c0_186 = arith.constant 0 : index
    %c0_187 = arith.constant 0 : index
    %220 = vector.load %arg6[%c5_185, %c0_186, %c0_187] : memref<9x16x16xbf16, #tpu.memory_space<vmem>>, vector<1x16x16xbf16>
    %221 = vector.shape_cast %220 : vector<1x16x16xbf16> to vector<16x16xbf16>
    %cst_188 = arith.constant dense<0.000000e+00> : vector<16x16xf32>
    %222 = tpu.matmul %221, %188, %cst_188 {dimension_numbers = #tpu.dot_dimension_numbers<[1], [0], [0], [1], [0, 0, 1, 1], [], []>} : vector<16x16xbf16>, vector<16x16xbf16>, vector<16x16xf32> -> vector<16x16xf32>
    %223 = arith.addf %219, %222 : vector<16x16xf32>
    %c6_189 = arith.constant 6 : index
    %c0_190 = arith.constant 0 : index
    %c0_191 = arith.constant 0 : index
    %224 = vector.load %arg6[%c6_189, %c0_190, %c0_191] : memref<9x16x16xbf16, #tpu.memory_space<vmem>>, vector<1x16x16xbf16>
    %225 = vector.shape_cast %224 : vector<1x16x16xbf16> to vector<16x16xbf16>
    %cst_192 = arith.constant dense<0.000000e+00> : vector<16x16xf32>
    %226 = tpu.matmul %225, %192, %cst_192 {dimension_numbers = #tpu.dot_dimension_numbers<[1], [0], [0], [1], [0, 0, 1, 1], [], []>} : vector<16x16xbf16>, vector<16x16xbf16>, vector<16x16xf32> -> vector<16x16xf32>
    %227 = arith.addf %223, %226 : vector<16x16xf32>
    %c7_193 = arith.constant 7 : index
    %c0_194 = arith.constant 0 : index
    %c0_195 = arith.constant 0 : index
    %228 = vector.load %arg6[%c7_193, %c0_194, %c0_195] : memref<9x16x16xbf16, #tpu.memory_space<vmem>>, vector<1x16x16xbf16>
    %229 = vector.shape_cast %228 : vector<1x16x16xbf16> to vector<16x16xbf16>
    %cst_196 = arith.constant dense<0.000000e+00> : vector<16x16xf32>
    %230 = tpu.matmul %229, %196, %cst_196 {dimension_numbers = #tpu.dot_dimension_numbers<[1], [0], [0], [1], [0, 0, 1, 1], [], []>} : vector<16x16xbf16>, vector<16x16xbf16>, vector<16x16xf32> -> vector<16x16xf32>
    %231 = arith.addf %227, %230 : vector<16x16xf32>
    %c8_197 = arith.constant 8 : index
    %c0_198 = arith.constant 0 : index
    %c0_199 = arith.constant 0 : index
    %232 = vector.load %arg6[%c8_197, %c0_198, %c0_199] : memref<9x16x16xbf16, #tpu.memory_space<vmem>>, vector<1x16x16xbf16>
    %233 = vector.shape_cast %232 : vector<1x16x16xbf16> to vector<16x16xbf16>
    %cst_200 = arith.constant dense<0.000000e+00> : vector<16x16xf32>
    %234 = tpu.matmul %233, %200, %cst_200 {dimension_numbers = #tpu.dot_dimension_numbers<[1], [0], [0], [1], [0, 0, 1, 1], [], []>} : vector<16x16xbf16>, vector<16x16xbf16>, vector<16x16xf32> -> vector<16x16xf32>
    %235 = arith.addf %231, %234 : vector<16x16xf32>
    %c0_201 = arith.constant 0 : index
    %c0_202 = arith.constant 0 : index
    %236 = vector.load %arg7[%c0_201, %c0_202] : memref<16x1xf32, #tpu.memory_space<vmem>>, vector<16x1xf32>
    %237 = vector.broadcast %236 : vector<16x1xf32> to vector<16x16xf32>
    %238 = arith.addf %235, %237 : vector<16x16xf32>
    %cst_203 = arith.constant 0.000000e+00 : f32
    %239 = vector.broadcast %cst_203 : f32 to vector<16x16xf32>
    %240 = arith.maximumf %238, %239 : vector<16x16xf32>
    %241 = arith.truncf %240 : vector<16x16xf32> to vector<16x16xbf16>
    %c0_204 = arith.constant 0 : index
    %c0_205 = arith.constant 0 : index
    %242 = vector.load %arg18[%c0_204, %c0_205] : memref<16x64xbf16, #tpu.memory_space<vmem>>, vector<16x64xbf16>
    %cst_206 = arith.constant dense<0.000000e+00> : vector<16x64xf32>
    %243 = tpu.matmul %241, %242, %cst_206 {dimension_numbers = #tpu.dot_dimension_numbers<[1], [0], [0], [1], [0, 0, 1, 1], [], []>} : vector<16x16xbf16>, vector<16x64xbf16>, vector<16x64xf32> -> vector<16x64xf32>
    %244 = arith.truncf %243 : vector<16x64xf32> to vector<16x64xbf16>
    %c0_207 = arith.constant 0 : index
    %c0_208 = arith.constant 0 : index
    %c0_209 = arith.constant 0 : index
    %245 = vector.load %arg14[%c0_207, %c0_208, %c0_209] : memref<9x64x64xbf16, #tpu.memory_space<vmem>>, vector<1x64x64xbf16>
    %246 = vector.shape_cast %245 : vector<1x64x64xbf16> to vector<64x64xbf16>
    %cst_210 = arith.constant dense<0.000000e+00> : vector<16x64xf32>
    %247 = tpu.matmul %244, %246, %cst_210 {dimension_numbers = #tpu.dot_dimension_numbers<[1], [0], [0], [1], [0, 0, 1, 1], [], []>} : vector<16x64xbf16>, vector<64x64xbf16>, vector<16x64xf32> -> vector<16x64xf32>
    %248 = arith.truncf %247 : vector<16x64xf32> to vector<16x64xbf16>
    %c1_211 = arith.constant 1 : index
    %c0_212 = arith.constant 0 : index
    %c0_213 = arith.constant 0 : index
    %249 = vector.load %arg14[%c1_211, %c0_212, %c0_213] : memref<9x64x64xbf16, #tpu.memory_space<vmem>>, vector<1x64x64xbf16>
    %250 = vector.shape_cast %249 : vector<1x64x64xbf16> to vector<64x64xbf16>
    %cst_214 = arith.constant dense<0.000000e+00> : vector<16x64xf32>
    %251 = tpu.matmul %244, %250, %cst_214 {dimension_numbers = #tpu.dot_dimension_numbers<[1], [0], [0], [1], [0, 0, 1, 1], [], []>} : vector<16x64xbf16>, vector<64x64xbf16>, vector<16x64xf32> -> vector<16x64xf32>
    %252 = arith.truncf %251 : vector<16x64xf32> to vector<16x64xbf16>
    %c2_215 = arith.constant 2 : index
    %c0_216 = arith.constant 0 : index
    %c0_217 = arith.constant 0 : index
    %253 = vector.load %arg14[%c2_215, %c0_216, %c0_217] : memref<9x64x64xbf16, #tpu.memory_space<vmem>>, vector<1x64x64xbf16>
    %254 = vector.shape_cast %253 : vector<1x64x64xbf16> to vector<64x64xbf16>
    %cst_218 = arith.constant dense<0.000000e+00> : vector<16x64xf32>
    %255 = tpu.matmul %244, %254, %cst_218 {dimension_numbers = #tpu.dot_dimension_numbers<[1], [0], [0], [1], [0, 0, 1, 1], [], []>} : vector<16x64xbf16>, vector<64x64xbf16>, vector<16x64xf32> -> vector<16x64xf32>
    %256 = arith.truncf %255 : vector<16x64xf32> to vector<16x64xbf16>
    %c3_219 = arith.constant 3 : index
    %c0_220 = arith.constant 0 : index
    %c0_221 = arith.constant 0 : index
    %257 = vector.load %arg14[%c3_219, %c0_220, %c0_221] : memref<9x64x64xbf16, #tpu.memory_space<vmem>>, vector<1x64x64xbf16>
    %258 = vector.shape_cast %257 : vector<1x64x64xbf16> to vector<64x64xbf16>
    %cst_222 = arith.constant dense<0.000000e+00> : vector<16x64xf32>
    %259 = tpu.matmul %244, %258, %cst_222 {dimension_numbers = #tpu.dot_dimension_numbers<[1], [0], [0], [1], [0, 0, 1, 1], [], []>} : vector<16x64xbf16>, vector<64x64xbf16>, vector<16x64xf32> -> vector<16x64xf32>
    %260 = arith.truncf %259 : vector<16x64xf32> to vector<16x64xbf16>
    %c5_223 = arith.constant 5 : index
    %c0_224 = arith.constant 0 : index
    %c0_225 = arith.constant 0 : index
    %261 = vector.load %arg14[%c5_223, %c0_224, %c0_225] : memref<9x64x64xbf16, #tpu.memory_space<vmem>>, vector<1x64x64xbf16>
    %262 = vector.shape_cast %261 : vector<1x64x64xbf16> to vector<64x64xbf16>
    %cst_226 = arith.constant dense<0.000000e+00> : vector<16x64xf32>
    %263 = tpu.matmul %244, %262, %cst_226 {dimension_numbers = #tpu.dot_dimension_numbers<[1], [0], [0], [1], [0, 0, 1, 1], [], []>} : vector<16x64xbf16>, vector<64x64xbf16>, vector<16x64xf32> -> vector<16x64xf32>
    %264 = arith.truncf %263 : vector<16x64xf32> to vector<16x64xbf16>
    %c6_227 = arith.constant 6 : index
    %c0_228 = arith.constant 0 : index
    %c0_229 = arith.constant 0 : index
    %265 = vector.load %arg14[%c6_227, %c0_228, %c0_229] : memref<9x64x64xbf16, #tpu.memory_space<vmem>>, vector<1x64x64xbf16>
    %266 = vector.shape_cast %265 : vector<1x64x64xbf16> to vector<64x64xbf16>
    %cst_230 = arith.constant dense<0.000000e+00> : vector<16x64xf32>
    %267 = tpu.matmul %244, %266, %cst_230 {dimension_numbers = #tpu.dot_dimension_numbers<[1], [0], [0], [1], [0, 0, 1, 1], [], []>} : vector<16x64xbf16>, vector<64x64xbf16>, vector<16x64xf32> -> vector<16x64xf32>
    %268 = arith.truncf %267 : vector<16x64xf32> to vector<16x64xbf16>
    %c7_231 = arith.constant 7 : index
    %c0_232 = arith.constant 0 : index
    %c0_233 = arith.constant 0 : index
    %269 = vector.load %arg14[%c7_231, %c0_232, %c0_233] : memref<9x64x64xbf16, #tpu.memory_space<vmem>>, vector<1x64x64xbf16>
    %270 = vector.shape_cast %269 : vector<1x64x64xbf16> to vector<64x64xbf16>
    %cst_234 = arith.constant dense<0.000000e+00> : vector<16x64xf32>
    %271 = tpu.matmul %244, %270, %cst_234 {dimension_numbers = #tpu.dot_dimension_numbers<[1], [0], [0], [1], [0, 0, 1, 1], [], []>} : vector<16x64xbf16>, vector<64x64xbf16>, vector<16x64xf32> -> vector<16x64xf32>
    %272 = arith.truncf %271 : vector<16x64xf32> to vector<16x64xbf16>
    %c8_235 = arith.constant 8 : index
    %c0_236 = arith.constant 0 : index
    %c0_237 = arith.constant 0 : index
    %273 = vector.load %arg14[%c8_235, %c0_236, %c0_237] : memref<9x64x64xbf16, #tpu.memory_space<vmem>>, vector<1x64x64xbf16>
    %274 = vector.shape_cast %273 : vector<1x64x64xbf16> to vector<64x64xbf16>
    %cst_238 = arith.constant dense<0.000000e+00> : vector<16x64xf32>
    %275 = tpu.matmul %244, %274, %cst_238 {dimension_numbers = #tpu.dot_dimension_numbers<[1], [0], [0], [1], [0, 0, 1, 1], [], []>} : vector<16x64xbf16>, vector<64x64xbf16>, vector<16x64xf32> -> vector<16x64xf32>
    %276 = arith.truncf %275 : vector<16x64xf32> to vector<16x64xbf16>
    %c0_239 = arith.constant 0 : index
    %c0_240 = arith.constant 0 : index
    %c0_241 = arith.constant 0 : index
    %277 = vector.load %arg8[%c0_239, %c0_240, %c0_241] : memref<9x8x16xbf16, #tpu.memory_space<vmem>>, vector<1x8x16xbf16>
    %278 = vector.shape_cast %277 : vector<1x8x16xbf16> to vector<8x16xbf16>
    %cst_242 = arith.constant dense<0.000000e+00> : vector<8x64xf32>
    %279 = tpu.matmul %278, %248, %cst_242 {dimension_numbers = #tpu.dot_dimension_numbers<[1], [0], [0], [1], [0, 0, 1, 1], [], []>} : vector<8x16xbf16>, vector<16x64xbf16>, vector<8x64xf32> -> vector<8x64xf32>
    %c1_243 = arith.constant 1 : index
    %c0_244 = arith.constant 0 : index
    %c0_245 = arith.constant 0 : index
    %280 = vector.load %arg8[%c1_243, %c0_244, %c0_245] : memref<9x8x16xbf16, #tpu.memory_space<vmem>>, vector<1x8x16xbf16>
    %281 = vector.shape_cast %280 : vector<1x8x16xbf16> to vector<8x16xbf16>
    %cst_246 = arith.constant dense<0.000000e+00> : vector<8x64xf32>
    %282 = tpu.matmul %281, %252, %cst_246 {dimension_numbers = #tpu.dot_dimension_numbers<[1], [0], [0], [1], [0, 0, 1, 1], [], []>} : vector<8x16xbf16>, vector<16x64xbf16>, vector<8x64xf32> -> vector<8x64xf32>
    %283 = arith.addf %279, %282 : vector<8x64xf32>
    %c2_247 = arith.constant 2 : index
    %c0_248 = arith.constant 0 : index
    %c0_249 = arith.constant 0 : index
    %284 = vector.load %arg8[%c2_247, %c0_248, %c0_249] : memref<9x8x16xbf16, #tpu.memory_space<vmem>>, vector<1x8x16xbf16>
    %285 = vector.shape_cast %284 : vector<1x8x16xbf16> to vector<8x16xbf16>
    %cst_250 = arith.constant dense<0.000000e+00> : vector<8x64xf32>
    %286 = tpu.matmul %285, %256, %cst_250 {dimension_numbers = #tpu.dot_dimension_numbers<[1], [0], [0], [1], [0, 0, 1, 1], [], []>} : vector<8x16xbf16>, vector<16x64xbf16>, vector<8x64xf32> -> vector<8x64xf32>
    %287 = arith.addf %283, %286 : vector<8x64xf32>
    %c3_251 = arith.constant 3 : index
    %c0_252 = arith.constant 0 : index
    %c0_253 = arith.constant 0 : index
    %288 = vector.load %arg8[%c3_251, %c0_252, %c0_253] : memref<9x8x16xbf16, #tpu.memory_space<vmem>>, vector<1x8x16xbf16>
    %289 = vector.shape_cast %288 : vector<1x8x16xbf16> to vector<8x16xbf16>
    %cst_254 = arith.constant dense<0.000000e+00> : vector<8x64xf32>
    %290 = tpu.matmul %289, %260, %cst_254 {dimension_numbers = #tpu.dot_dimension_numbers<[1], [0], [0], [1], [0, 0, 1, 1], [], []>} : vector<8x16xbf16>, vector<16x64xbf16>, vector<8x64xf32> -> vector<8x64xf32>
    %291 = arith.addf %287, %290 : vector<8x64xf32>
    %c4_255 = arith.constant 4 : index
    %c0_256 = arith.constant 0 : index
    %c0_257 = arith.constant 0 : index
    %292 = vector.load %arg8[%c4_255, %c0_256, %c0_257] : memref<9x8x16xbf16, #tpu.memory_space<vmem>>, vector<1x8x16xbf16>
    %293 = vector.shape_cast %292 : vector<1x8x16xbf16> to vector<8x16xbf16>
    %cst_258 = arith.constant dense<0.000000e+00> : vector<8x64xf32>
    %294 = tpu.matmul %293, %244, %cst_258 {dimension_numbers = #tpu.dot_dimension_numbers<[1], [0], [0], [1], [0, 0, 1, 1], [], []>} : vector<8x16xbf16>, vector<16x64xbf16>, vector<8x64xf32> -> vector<8x64xf32>
    %295 = arith.addf %291, %294 : vector<8x64xf32>
    %c5_259 = arith.constant 5 : index
    %c0_260 = arith.constant 0 : index
    %c0_261 = arith.constant 0 : index
    %296 = vector.load %arg8[%c5_259, %c0_260, %c0_261] : memref<9x8x16xbf16, #tpu.memory_space<vmem>>, vector<1x8x16xbf16>
    %297 = vector.shape_cast %296 : vector<1x8x16xbf16> to vector<8x16xbf16>
    %cst_262 = arith.constant dense<0.000000e+00> : vector<8x64xf32>
    %298 = tpu.matmul %297, %264, %cst_262 {dimension_numbers = #tpu.dot_dimension_numbers<[1], [0], [0], [1], [0, 0, 1, 1], [], []>} : vector<8x16xbf16>, vector<16x64xbf16>, vector<8x64xf32> -> vector<8x64xf32>
    %299 = arith.addf %295, %298 : vector<8x64xf32>
    %c6_263 = arith.constant 6 : index
    %c0_264 = arith.constant 0 : index
    %c0_265 = arith.constant 0 : index
    %300 = vector.load %arg8[%c6_263, %c0_264, %c0_265] : memref<9x8x16xbf16, #tpu.memory_space<vmem>>, vector<1x8x16xbf16>
    %301 = vector.shape_cast %300 : vector<1x8x16xbf16> to vector<8x16xbf16>
    %cst_266 = arith.constant dense<0.000000e+00> : vector<8x64xf32>
    %302 = tpu.matmul %301, %268, %cst_266 {dimension_numbers = #tpu.dot_dimension_numbers<[1], [0], [0], [1], [0, 0, 1, 1], [], []>} : vector<8x16xbf16>, vector<16x64xbf16>, vector<8x64xf32> -> vector<8x64xf32>
    %303 = arith.addf %299, %302 : vector<8x64xf32>
    %c7_267 = arith.constant 7 : index
    %c0_268 = arith.constant 0 : index
    %c0_269 = arith.constant 0 : index
    %304 = vector.load %arg8[%c7_267, %c0_268, %c0_269] : memref<9x8x16xbf16, #tpu.memory_space<vmem>>, vector<1x8x16xbf16>
    %305 = vector.shape_cast %304 : vector<1x8x16xbf16> to vector<8x16xbf16>
    %cst_270 = arith.constant dense<0.000000e+00> : vector<8x64xf32>
    %306 = tpu.matmul %305, %272, %cst_270 {dimension_numbers = #tpu.dot_dimension_numbers<[1], [0], [0], [1], [0, 0, 1, 1], [], []>} : vector<8x16xbf16>, vector<16x64xbf16>, vector<8x64xf32> -> vector<8x64xf32>
    %307 = arith.addf %303, %306 : vector<8x64xf32>
    %c8_271 = arith.constant 8 : index
    %c0_272 = arith.constant 0 : index
    %c0_273 = arith.constant 0 : index
    %308 = vector.load %arg8[%c8_271, %c0_272, %c0_273] : memref<9x8x16xbf16, #tpu.memory_space<vmem>>, vector<1x8x16xbf16>
    %309 = vector.shape_cast %308 : vector<1x8x16xbf16> to vector<8x16xbf16>
    %cst_274 = arith.constant dense<0.000000e+00> : vector<8x64xf32>
    %310 = tpu.matmul %309, %276, %cst_274 {dimension_numbers = #tpu.dot_dimension_numbers<[1], [0], [0], [1], [0, 0, 1, 1], [], []>} : vector<8x16xbf16>, vector<16x64xbf16>, vector<8x64xf32> -> vector<8x64xf32>
    %311 = arith.addf %307, %310 : vector<8x64xf32>
    %c0_275 = arith.constant 0 : index
    %c0_276 = arith.constant 0 : index
    %c0_277 = arith.constant 0 : index
    %312 = vector.load %arg9[%c0_275, %c0_276, %c0_277] : memref<9x8x8xbf16, #tpu.memory_space<vmem>>, vector<1x8x8xbf16>
    %313 = vector.shape_cast %312 : vector<1x8x8xbf16> to vector<8x8xbf16>
    %cst_278 = arith.constant dense<0.000000e+00> : vector<8x64xf32>
    %314 = tpu.matmul %313, %97, %cst_278 {dimension_numbers = #tpu.dot_dimension_numbers<[1], [0], [0], [1], [0, 0, 1, 1], [], []>} : vector<8x8xbf16>, vector<8x64xbf16>, vector<8x64xf32> -> vector<8x64xf32>
    %c1_279 = arith.constant 1 : index
    %c0_280 = arith.constant 0 : index
    %c0_281 = arith.constant 0 : index
    %315 = vector.load %arg9[%c1_279, %c0_280, %c0_281] : memref<9x8x8xbf16, #tpu.memory_space<vmem>>, vector<1x8x8xbf16>
    %316 = vector.shape_cast %315 : vector<1x8x8xbf16> to vector<8x8xbf16>
    %cst_282 = arith.constant dense<0.000000e+00> : vector<8x64xf32>
    %317 = tpu.matmul %316, %101, %cst_282 {dimension_numbers = #tpu.dot_dimension_numbers<[1], [0], [0], [1], [0, 0, 1, 1], [], []>} : vector<8x8xbf16>, vector<8x64xbf16>, vector<8x64xf32> -> vector<8x64xf32>
    %318 = arith.addf %314, %317 : vector<8x64xf32>
    %c2_283 = arith.constant 2 : index
    %c0_284 = arith.constant 0 : index
    %c0_285 = arith.constant 0 : index
    %319 = vector.load %arg9[%c2_283, %c0_284, %c0_285] : memref<9x8x8xbf16, #tpu.memory_space<vmem>>, vector<1x8x8xbf16>
    %320 = vector.shape_cast %319 : vector<1x8x8xbf16> to vector<8x8xbf16>
    %cst_286 = arith.constant dense<0.000000e+00> : vector<8x64xf32>
    %321 = tpu.matmul %320, %105, %cst_286 {dimension_numbers = #tpu.dot_dimension_numbers<[1], [0], [0], [1], [0, 0, 1, 1], [], []>} : vector<8x8xbf16>, vector<8x64xbf16>, vector<8x64xf32> -> vector<8x64xf32>
    %322 = arith.addf %318, %321 : vector<8x64xf32>
    %c3_287 = arith.constant 3 : index
    %c0_288 = arith.constant 0 : index
    %c0_289 = arith.constant 0 : index
    %323 = vector.load %arg9[%c3_287, %c0_288, %c0_289] : memref<9x8x8xbf16, #tpu.memory_space<vmem>>, vector<1x8x8xbf16>
    %324 = vector.shape_cast %323 : vector<1x8x8xbf16> to vector<8x8xbf16>
    %cst_290 = arith.constant dense<0.000000e+00> : vector<8x64xf32>
    %325 = tpu.matmul %324, %109, %cst_290 {dimension_numbers = #tpu.dot_dimension_numbers<[1], [0], [0], [1], [0, 0, 1, 1], [], []>} : vector<8x8xbf16>, vector<8x64xbf16>, vector<8x64xf32> -> vector<8x64xf32>
    %326 = arith.addf %322, %325 : vector<8x64xf32>
    %c4_291 = arith.constant 4 : index
    %c0_292 = arith.constant 0 : index
    %c0_293 = arith.constant 0 : index
    %327 = vector.load %arg9[%c4_291, %c0_292, %c0_293] : memref<9x8x8xbf16, #tpu.memory_space<vmem>>, vector<1x8x8xbf16>
    %328 = vector.shape_cast %327 : vector<1x8x8xbf16> to vector<8x8xbf16>
    %cst_294 = arith.constant dense<0.000000e+00> : vector<8x64xf32>
    %329 = tpu.matmul %328, %93, %cst_294 {dimension_numbers = #tpu.dot_dimension_numbers<[1], [0], [0], [1], [0, 0, 1, 1], [], []>} : vector<8x8xbf16>, vector<8x64xbf16>, vector<8x64xf32> -> vector<8x64xf32>
    %330 = arith.addf %326, %329 : vector<8x64xf32>
    %c5_295 = arith.constant 5 : index
    %c0_296 = arith.constant 0 : index
    %c0_297 = arith.constant 0 : index
    %331 = vector.load %arg9[%c5_295, %c0_296, %c0_297] : memref<9x8x8xbf16, #tpu.memory_space<vmem>>, vector<1x8x8xbf16>
    %332 = vector.shape_cast %331 : vector<1x8x8xbf16> to vector<8x8xbf16>
    %cst_298 = arith.constant dense<0.000000e+00> : vector<8x64xf32>
    %333 = tpu.matmul %332, %113, %cst_298 {dimension_numbers = #tpu.dot_dimension_numbers<[1], [0], [0], [1], [0, 0, 1, 1], [], []>} : vector<8x8xbf16>, vector<8x64xbf16>, vector<8x64xf32> -> vector<8x64xf32>
    %334 = arith.addf %330, %333 : vector<8x64xf32>
    %c6_299 = arith.constant 6 : index
    %c0_300 = arith.constant 0 : index
    %c0_301 = arith.constant 0 : index
    %335 = vector.load %arg9[%c6_299, %c0_300, %c0_301] : memref<9x8x8xbf16, #tpu.memory_space<vmem>>, vector<1x8x8xbf16>
    %336 = vector.shape_cast %335 : vector<1x8x8xbf16> to vector<8x8xbf16>
    %cst_302 = arith.constant dense<0.000000e+00> : vector<8x64xf32>
    %337 = tpu.matmul %336, %117, %cst_302 {dimension_numbers = #tpu.dot_dimension_numbers<[1], [0], [0], [1], [0, 0, 1, 1], [], []>} : vector<8x8xbf16>, vector<8x64xbf16>, vector<8x64xf32> -> vector<8x64xf32>
    %338 = arith.addf %334, %337 : vector<8x64xf32>
    %c7_303 = arith.constant 7 : index
    %c0_304 = arith.constant 0 : index
    %c0_305 = arith.constant 0 : index
    %339 = vector.load %arg9[%c7_303, %c0_304, %c0_305] : memref<9x8x8xbf16, #tpu.memory_space<vmem>>, vector<1x8x8xbf16>
    %340 = vector.shape_cast %339 : vector<1x8x8xbf16> to vector<8x8xbf16>
    %cst_306 = arith.constant dense<0.000000e+00> : vector<8x64xf32>
    %341 = tpu.matmul %340, %121, %cst_306 {dimension_numbers = #tpu.dot_dimension_numbers<[1], [0], [0], [1], [0, 0, 1, 1], [], []>} : vector<8x8xbf16>, vector<8x64xbf16>, vector<8x64xf32> -> vector<8x64xf32>
    %342 = arith.addf %338, %341 : vector<8x64xf32>
    %c8_307 = arith.constant 8 : index
    %c0_308 = arith.constant 0 : index
    %c0_309 = arith.constant 0 : index
    %343 = vector.load %arg9[%c8_307, %c0_308, %c0_309] : memref<9x8x8xbf16, #tpu.memory_space<vmem>>, vector<1x8x8xbf16>
    %344 = vector.shape_cast %343 : vector<1x8x8xbf16> to vector<8x8xbf16>
    %cst_310 = arith.constant dense<0.000000e+00> : vector<8x64xf32>
    %345 = tpu.matmul %344, %125, %cst_310 {dimension_numbers = #tpu.dot_dimension_numbers<[1], [0], [0], [1], [0, 0, 1, 1], [], []>} : vector<8x8xbf16>, vector<8x64xbf16>, vector<8x64xf32> -> vector<8x64xf32>
    %346 = arith.addf %342, %345 : vector<8x64xf32>
    %347 = arith.addf %311, %346 : vector<8x64xf32>
    %c0_311 = arith.constant 0 : index
    %c0_312 = arith.constant 0 : index
    %348 = vector.load %arg10[%c0_311, %c0_312] : memref<8x1xf32, #tpu.memory_space<vmem>>, vector<8x1xf32>
    %349 = vector.broadcast %348 : vector<8x1xf32> to vector<8x64xf32>
    %350 = arith.addf %347, %349 : vector<8x64xf32>
    %cst_313 = arith.constant 0.000000e+00 : f32
    %351 = vector.broadcast %cst_313 : f32 to vector<8x64xf32>
    %352 = arith.maximumf %350, %351 : vector<8x64xf32>
    %353 = arith.truncf %352 : vector<8x64xf32> to vector<8x64xbf16>
    %c0_314 = arith.constant 0 : index
    %c0_315 = arith.constant 0 : index
    %354 = vector.load %arg19[%c0_314, %c0_315] : memref<64x256xbf16, #tpu.memory_space<vmem>>, vector<64x256xbf16>
    %cst_316 = arith.constant dense<0.000000e+00> : vector<8x256xf32>
    %355 = tpu.matmul %353, %354, %cst_316 {dimension_numbers = #tpu.dot_dimension_numbers<[1], [0], [0], [1], [0, 0, 1, 1], [], []>} : vector<8x64xbf16>, vector<64x256xbf16>, vector<8x256xf32> -> vector<8x256xf32>
    %c17_i32_317 = arith.constant 17 : i32
    %356 = tpu.dynamic_rotate %355 by %c17_i32_317 dim 1 : vector<8x256xf32>, i32 -> vector<8x256xf32>
    %c0_318 = arith.constant 0 : index
    %c0_319 = arith.constant 0 : index
    %c0_320 = arith.constant 0 : index
    %357 = vector.load %arg20[%c0_318, %c0_319, %c0_320] : memref<9x1x256xf32, #tpu.memory_space<vmem>>, vector<1x1x256xf32>
    %358 = vector.shape_cast %357 : vector<1x1x256xf32> to vector<1x256xf32>
    %359 = vector.broadcast %358 : vector<1x256xf32> to vector<8x256xf32>
    %360 = arith.mulf %356, %359 : vector<8x256xf32>
    %361 = arith.truncf %360 : vector<8x256xf32> to vector<8x256xbf16>
    %c16_i32_321 = arith.constant 16 : i32
    %362 = tpu.dynamic_rotate %355 by %c16_i32_321 dim 1 : vector<8x256xf32>, i32 -> vector<8x256xf32>
    %c1_322 = arith.constant 1 : index
    %c0_323 = arith.constant 0 : index
    %c0_324 = arith.constant 0 : index
    %363 = vector.load %arg20[%c1_322, %c0_323, %c0_324] : memref<9x1x256xf32, #tpu.memory_space<vmem>>, vector<1x1x256xf32>
    %364 = vector.shape_cast %363 : vector<1x1x256xf32> to vector<1x256xf32>
    %365 = vector.broadcast %364 : vector<1x256xf32> to vector<8x256xf32>
    %366 = arith.mulf %362, %365 : vector<8x256xf32>
    %367 = arith.truncf %366 : vector<8x256xf32> to vector<8x256xbf16>
    %c15_i32_325 = arith.constant 15 : i32
    %368 = tpu.dynamic_rotate %355 by %c15_i32_325 dim 1 : vector<8x256xf32>, i32 -> vector<8x256xf32>
    %c2_326 = arith.constant 2 : index
    %c0_327 = arith.constant 0 : index
    %c0_328 = arith.constant 0 : index
    %369 = vector.load %arg20[%c2_326, %c0_327, %c0_328] : memref<9x1x256xf32, #tpu.memory_space<vmem>>, vector<1x1x256xf32>
    %370 = vector.shape_cast %369 : vector<1x1x256xf32> to vector<1x256xf32>
    %371 = vector.broadcast %370 : vector<1x256xf32> to vector<8x256xf32>
    %372 = arith.mulf %368, %371 : vector<8x256xf32>
    %373 = arith.truncf %372 : vector<8x256xf32> to vector<8x256xbf16>
    %c1_i32_329 = arith.constant 1 : i32
    %374 = tpu.dynamic_rotate %355 by %c1_i32_329 dim 1 : vector<8x256xf32>, i32 -> vector<8x256xf32>
    %c3_330 = arith.constant 3 : index
    %c0_331 = arith.constant 0 : index
    %c0_332 = arith.constant 0 : index
    %375 = vector.load %arg20[%c3_330, %c0_331, %c0_332] : memref<9x1x256xf32, #tpu.memory_space<vmem>>, vector<1x1x256xf32>
    %376 = vector.shape_cast %375 : vector<1x1x256xf32> to vector<1x256xf32>
    %377 = vector.broadcast %376 : vector<1x256xf32> to vector<8x256xf32>
    %378 = arith.mulf %374, %377 : vector<8x256xf32>
    %379 = arith.truncf %378 : vector<8x256xf32> to vector<8x256xbf16>
    %380 = arith.truncf %355 : vector<8x256xf32> to vector<8x256xbf16>
    %c255_i32_333 = arith.constant 255 : i32
    %381 = tpu.dynamic_rotate %355 by %c255_i32_333 dim 1 : vector<8x256xf32>, i32 -> vector<8x256xf32>
    %c5_334 = arith.constant 5 : index
    %c0_335 = arith.constant 0 : index
    %c0_336 = arith.constant 0 : index
    %382 = vector.load %arg20[%c5_334, %c0_335, %c0_336] : memref<9x1x256xf32, #tpu.memory_space<vmem>>, vector<1x1x256xf32>
    %383 = vector.shape_cast %382 : vector<1x1x256xf32> to vector<1x256xf32>
    %384 = vector.broadcast %383 : vector<1x256xf32> to vector<8x256xf32>
    %385 = arith.mulf %381, %384 : vector<8x256xf32>
    %386 = arith.truncf %385 : vector<8x256xf32> to vector<8x256xbf16>
    %c241_i32_337 = arith.constant 241 : i32
    %387 = tpu.dynamic_rotate %355 by %c241_i32_337 dim 1 : vector<8x256xf32>, i32 -> vector<8x256xf32>
    %c6_338 = arith.constant 6 : index
    %c0_339 = arith.constant 0 : index
    %c0_340 = arith.constant 0 : index
    %388 = vector.load %arg20[%c6_338, %c0_339, %c0_340] : memref<9x1x256xf32, #tpu.memory_space<vmem>>, vector<1x1x256xf32>
    %389 = vector.shape_cast %388 : vector<1x1x256xf32> to vector<1x256xf32>
    %390 = vector.broadcast %389 : vector<1x256xf32> to vector<8x256xf32>
    %391 = arith.mulf %387, %390 : vector<8x256xf32>
    %392 = arith.truncf %391 : vector<8x256xf32> to vector<8x256xbf16>
    %c240_i32_341 = arith.constant 240 : i32
    %393 = tpu.dynamic_rotate %355 by %c240_i32_341 dim 1 : vector<8x256xf32>, i32 -> vector<8x256xf32>
    %c7_342 = arith.constant 7 : index
    %c0_343 = arith.constant 0 : index
    %c0_344 = arith.constant 0 : index
    %394 = vector.load %arg20[%c7_342, %c0_343, %c0_344] : memref<9x1x256xf32, #tpu.memory_space<vmem>>, vector<1x1x256xf32>
    %395 = vector.shape_cast %394 : vector<1x1x256xf32> to vector<1x256xf32>
    %396 = vector.broadcast %395 : vector<1x256xf32> to vector<8x256xf32>
    %397 = arith.mulf %393, %396 : vector<8x256xf32>
    %398 = arith.truncf %397 : vector<8x256xf32> to vector<8x256xbf16>
    %c239_i32_345 = arith.constant 239 : i32
    %399 = tpu.dynamic_rotate %355 by %c239_i32_345 dim 1 : vector<8x256xf32>, i32 -> vector<8x256xf32>
    %c8_346 = arith.constant 8 : index
    %c0_347 = arith.constant 0 : index
    %c0_348 = arith.constant 0 : index
    %400 = vector.load %arg20[%c8_346, %c0_347, %c0_348] : memref<9x1x256xf32, #tpu.memory_space<vmem>>, vector<1x1x256xf32>
    %401 = vector.shape_cast %400 : vector<1x1x256xf32> to vector<1x256xf32>
    %402 = vector.broadcast %401 : vector<1x256xf32> to vector<8x256xf32>
    %403 = arith.mulf %399, %402 : vector<8x256xf32>
    %404 = arith.truncf %403 : vector<8x256xf32> to vector<8x256xbf16>
    %c0_349 = arith.constant 0 : index
    %c0_350 = arith.constant 0 : index
    %c0_351 = arith.constant 0 : index
    %405 = vector.load %arg11[%c0_349, %c0_350, %c0_351] : memref<9x4x8xbf16, #tpu.memory_space<vmem>>, vector<1x4x8xbf16>
    %406 = vector.shape_cast %405 : vector<1x4x8xbf16> to vector<4x8xbf16>
    %cst_352 = arith.constant dense<0.000000e+00> : vector<4x256xf32>
    %407 = tpu.matmul %406, %361, %cst_352 {dimension_numbers = #tpu.dot_dimension_numbers<[1], [0], [0], [1], [0, 0, 1, 1], [], []>} : vector<4x8xbf16>, vector<8x256xbf16>, vector<4x256xf32> -> vector<4x256xf32>
    %c1_353 = arith.constant 1 : index
    %c0_354 = arith.constant 0 : index
    %c0_355 = arith.constant 0 : index
    %408 = vector.load %arg11[%c1_353, %c0_354, %c0_355] : memref<9x4x8xbf16, #tpu.memory_space<vmem>>, vector<1x4x8xbf16>
    %409 = vector.shape_cast %408 : vector<1x4x8xbf16> to vector<4x8xbf16>
    %cst_356 = arith.constant dense<0.000000e+00> : vector<4x256xf32>
    %410 = tpu.matmul %409, %367, %cst_356 {dimension_numbers = #tpu.dot_dimension_numbers<[1], [0], [0], [1], [0, 0, 1, 1], [], []>} : vector<4x8xbf16>, vector<8x256xbf16>, vector<4x256xf32> -> vector<4x256xf32>
    %411 = arith.addf %407, %410 : vector<4x256xf32>
    %c2_357 = arith.constant 2 : index
    %c0_358 = arith.constant 0 : index
    %c0_359 = arith.constant 0 : index
    %412 = vector.load %arg11[%c2_357, %c0_358, %c0_359] : memref<9x4x8xbf16, #tpu.memory_space<vmem>>, vector<1x4x8xbf16>
    %413 = vector.shape_cast %412 : vector<1x4x8xbf16> to vector<4x8xbf16>
    %cst_360 = arith.constant dense<0.000000e+00> : vector<4x256xf32>
    %414 = tpu.matmul %413, %373, %cst_360 {dimension_numbers = #tpu.dot_dimension_numbers<[1], [0], [0], [1], [0, 0, 1, 1], [], []>} : vector<4x8xbf16>, vector<8x256xbf16>, vector<4x256xf32> -> vector<4x256xf32>
    %415 = arith.addf %411, %414 : vector<4x256xf32>
    %c3_361 = arith.constant 3 : index
    %c0_362 = arith.constant 0 : index
    %c0_363 = arith.constant 0 : index
    %416 = vector.load %arg11[%c3_361, %c0_362, %c0_363] : memref<9x4x8xbf16, #tpu.memory_space<vmem>>, vector<1x4x8xbf16>
    %417 = vector.shape_cast %416 : vector<1x4x8xbf16> to vector<4x8xbf16>
    %cst_364 = arith.constant dense<0.000000e+00> : vector<4x256xf32>
    %418 = tpu.matmul %417, %379, %cst_364 {dimension_numbers = #tpu.dot_dimension_numbers<[1], [0], [0], [1], [0, 0, 1, 1], [], []>} : vector<4x8xbf16>, vector<8x256xbf16>, vector<4x256xf32> -> vector<4x256xf32>
    %419 = arith.addf %415, %418 : vector<4x256xf32>
    %c4_365 = arith.constant 4 : index
    %c0_366 = arith.constant 0 : index
    %c0_367 = arith.constant 0 : index
    %420 = vector.load %arg11[%c4_365, %c0_366, %c0_367] : memref<9x4x8xbf16, #tpu.memory_space<vmem>>, vector<1x4x8xbf16>
    %421 = vector.shape_cast %420 : vector<1x4x8xbf16> to vector<4x8xbf16>
    %cst_368 = arith.constant dense<0.000000e+00> : vector<4x256xf32>
    %422 = tpu.matmul %421, %380, %cst_368 {dimension_numbers = #tpu.dot_dimension_numbers<[1], [0], [0], [1], [0, 0, 1, 1], [], []>} : vector<4x8xbf16>, vector<8x256xbf16>, vector<4x256xf32> -> vector<4x256xf32>
    %423 = arith.addf %419, %422 : vector<4x256xf32>
    %c5_369 = arith.constant 5 : index
    %c0_370 = arith.constant 0 : index
    %c0_371 = arith.constant 0 : index
    %424 = vector.load %arg11[%c5_369, %c0_370, %c0_371] : memref<9x4x8xbf16, #tpu.memory_space<vmem>>, vector<1x4x8xbf16>
    %425 = vector.shape_cast %424 : vector<1x4x8xbf16> to vector<4x8xbf16>
    %cst_372 = arith.constant dense<0.000000e+00> : vector<4x256xf32>
    %426 = tpu.matmul %425, %386, %cst_372 {dimension_numbers = #tpu.dot_dimension_numbers<[1], [0], [0], [1], [0, 0, 1, 1], [], []>} : vector<4x8xbf16>, vector<8x256xbf16>, vector<4x256xf32> -> vector<4x256xf32>
    %427 = arith.addf %423, %426 : vector<4x256xf32>
    %c6_373 = arith.constant 6 : index
    %c0_374 = arith.constant 0 : index
    %c0_375 = arith.constant 0 : index
    %428 = vector.load %arg11[%c6_373, %c0_374, %c0_375] : memref<9x4x8xbf16, #tpu.memory_space<vmem>>, vector<1x4x8xbf16>
    %429 = vector.shape_cast %428 : vector<1x4x8xbf16> to vector<4x8xbf16>
    %cst_376 = arith.constant dense<0.000000e+00> : vector<4x256xf32>
    %430 = tpu.matmul %429, %392, %cst_376 {dimension_numbers = #tpu.dot_dimension_numbers<[1], [0], [0], [1], [0, 0, 1, 1], [], []>} : vector<4x8xbf16>, vector<8x256xbf16>, vector<4x256xf32> -> vector<4x256xf32>
    %431 = arith.addf %427, %430 : vector<4x256xf32>
    %c7_377 = arith.constant 7 : index
    %c0_378 = arith.constant 0 : index
    %c0_379 = arith.constant 0 : index
    %432 = vector.load %arg11[%c7_377, %c0_378, %c0_379] : memref<9x4x8xbf16, #tpu.memory_space<vmem>>, vector<1x4x8xbf16>
    %433 = vector.shape_cast %432 : vector<1x4x8xbf16> to vector<4x8xbf16>
    %cst_380 = arith.constant dense<0.000000e+00> : vector<4x256xf32>
    %434 = tpu.matmul %433, %398, %cst_380 {dimension_numbers = #tpu.dot_dimension_numbers<[1], [0], [0], [1], [0, 0, 1, 1], [], []>} : vector<4x8xbf16>, vector<8x256xbf16>, vector<4x256xf32> -> vector<4x256xf32>
    %435 = arith.addf %431, %434 : vector<4x256xf32>
    %c8_381 = arith.constant 8 : index
    %c0_382 = arith.constant 0 : index
    %c0_383 = arith.constant 0 : index
    %436 = vector.load %arg11[%c8_381, %c0_382, %c0_383] : memref<9x4x8xbf16, #tpu.memory_space<vmem>>, vector<1x4x8xbf16>
    %437 = vector.shape_cast %436 : vector<1x4x8xbf16> to vector<4x8xbf16>
    %cst_384 = arith.constant dense<0.000000e+00> : vector<4x256xf32>
    %438 = tpu.matmul %437, %404, %cst_384 {dimension_numbers = #tpu.dot_dimension_numbers<[1], [0], [0], [1], [0, 0, 1, 1], [], []>} : vector<4x8xbf16>, vector<8x256xbf16>, vector<4x256xf32> -> vector<4x256xf32>
    %439 = arith.addf %435, %438 : vector<4x256xf32>
    %c0_385 = arith.constant 0 : index
    %c0_386 = arith.constant 0 : index
    %c0_387 = arith.constant 0 : index
    %440 = vector.load %arg12[%c0_385, %c0_386, %c0_387] : memref<9x4x4xbf16, #tpu.memory_space<vmem>>, vector<1x4x4xbf16>
    %441 = vector.shape_cast %440 : vector<1x4x4xbf16> to vector<4x4xbf16>
    %cst_388 = arith.constant dense<0.000000e+00> : vector<4x256xf32>
    %442 = tpu.matmul %441, %7, %cst_388 {dimension_numbers = #tpu.dot_dimension_numbers<[1], [0], [0], [1], [0, 0, 1, 1], [], []>} : vector<4x4xbf16>, vector<4x256xbf16>, vector<4x256xf32> -> vector<4x256xf32>
    %c1_389 = arith.constant 1 : index
    %c0_390 = arith.constant 0 : index
    %c0_391 = arith.constant 0 : index
    %443 = vector.load %arg12[%c1_389, %c0_390, %c0_391] : memref<9x4x4xbf16, #tpu.memory_space<vmem>>, vector<1x4x4xbf16>
    %444 = vector.shape_cast %443 : vector<1x4x4xbf16> to vector<4x4xbf16>
    %cst_392 = arith.constant dense<0.000000e+00> : vector<4x256xf32>
    %445 = tpu.matmul %444, %13, %cst_392 {dimension_numbers = #tpu.dot_dimension_numbers<[1], [0], [0], [1], [0, 0, 1, 1], [], []>} : vector<4x4xbf16>, vector<4x256xbf16>, vector<4x256xf32> -> vector<4x256xf32>
    %446 = arith.addf %442, %445 : vector<4x256xf32>
    %c2_393 = arith.constant 2 : index
    %c0_394 = arith.constant 0 : index
    %c0_395 = arith.constant 0 : index
    %447 = vector.load %arg12[%c2_393, %c0_394, %c0_395] : memref<9x4x4xbf16, #tpu.memory_space<vmem>>, vector<1x4x4xbf16>
    %448 = vector.shape_cast %447 : vector<1x4x4xbf16> to vector<4x4xbf16>
    %cst_396 = arith.constant dense<0.000000e+00> : vector<4x256xf32>
    %449 = tpu.matmul %448, %19, %cst_396 {dimension_numbers = #tpu.dot_dimension_numbers<[1], [0], [0], [1], [0, 0, 1, 1], [], []>} : vector<4x4xbf16>, vector<4x256xbf16>, vector<4x256xf32> -> vector<4x256xf32>
    %450 = arith.addf %446, %449 : vector<4x256xf32>
    %c3_397 = arith.constant 3 : index
    %c0_398 = arith.constant 0 : index
    %c0_399 = arith.constant 0 : index
    %451 = vector.load %arg12[%c3_397, %c0_398, %c0_399] : memref<9x4x4xbf16, #tpu.memory_space<vmem>>, vector<1x4x4xbf16>
    %452 = vector.shape_cast %451 : vector<1x4x4xbf16> to vector<4x4xbf16>
    %cst_400 = arith.constant dense<0.000000e+00> : vector<4x256xf32>
    %453 = tpu.matmul %452, %25, %cst_400 {dimension_numbers = #tpu.dot_dimension_numbers<[1], [0], [0], [1], [0, 0, 1, 1], [], []>} : vector<4x4xbf16>, vector<4x256xbf16>, vector<4x256xf32> -> vector<4x256xf32>
    %454 = arith.addf %450, %453 : vector<4x256xf32>
    %c4_401 = arith.constant 4 : index
    %c0_402 = arith.constant 0 : index
    %c0_403 = arith.constant 0 : index
    %455 = vector.load %arg12[%c4_401, %c0_402, %c0_403] : memref<9x4x4xbf16, #tpu.memory_space<vmem>>, vector<1x4x4xbf16>
    %456 = vector.shape_cast %455 : vector<1x4x4xbf16> to vector<4x4xbf16>
    %cst_404 = arith.constant dense<0.000000e+00> : vector<4x256xf32>
    %457 = tpu.matmul %456, %26, %cst_404 {dimension_numbers = #tpu.dot_dimension_numbers<[1], [0], [0], [1], [0, 0, 1, 1], [], []>} : vector<4x4xbf16>, vector<4x256xbf16>, vector<4x256xf32> -> vector<4x256xf32>
    %458 = arith.addf %454, %457 : vector<4x256xf32>
    %c5_405 = arith.constant 5 : index
    %c0_406 = arith.constant 0 : index
    %c0_407 = arith.constant 0 : index
    %459 = vector.load %arg12[%c5_405, %c0_406, %c0_407] : memref<9x4x4xbf16, #tpu.memory_space<vmem>>, vector<1x4x4xbf16>
    %460 = vector.shape_cast %459 : vector<1x4x4xbf16> to vector<4x4xbf16>
    %cst_408 = arith.constant dense<0.000000e+00> : vector<4x256xf32>
    %461 = tpu.matmul %460, %32, %cst_408 {dimension_numbers = #tpu.dot_dimension_numbers<[1], [0], [0], [1], [0, 0, 1, 1], [], []>} : vector<4x4xbf16>, vector<4x256xbf16>, vector<4x256xf32> -> vector<4x256xf32>
    %462 = arith.addf %458, %461 : vector<4x256xf32>
    %c6_409 = arith.constant 6 : index
    %c0_410 = arith.constant 0 : index
    %c0_411 = arith.constant 0 : index
    %463 = vector.load %arg12[%c6_409, %c0_410, %c0_411] : memref<9x4x4xbf16, #tpu.memory_space<vmem>>, vector<1x4x4xbf16>
    %464 = vector.shape_cast %463 : vector<1x4x4xbf16> to vector<4x4xbf16>
    %cst_412 = arith.constant dense<0.000000e+00> : vector<4x256xf32>
    %465 = tpu.matmul %464, %38, %cst_412 {dimension_numbers = #tpu.dot_dimension_numbers<[1], [0], [0], [1], [0, 0, 1, 1], [], []>} : vector<4x4xbf16>, vector<4x256xbf16>, vector<4x256xf32> -> vector<4x256xf32>
    %466 = arith.addf %462, %465 : vector<4x256xf32>
    %c7_413 = arith.constant 7 : index
    %c0_414 = arith.constant 0 : index
    %c0_415 = arith.constant 0 : index
    %467 = vector.load %arg12[%c7_413, %c0_414, %c0_415] : memref<9x4x4xbf16, #tpu.memory_space<vmem>>, vector<1x4x4xbf16>
    %468 = vector.shape_cast %467 : vector<1x4x4xbf16> to vector<4x4xbf16>
    %cst_416 = arith.constant dense<0.000000e+00> : vector<4x256xf32>
    %469 = tpu.matmul %468, %44, %cst_416 {dimension_numbers = #tpu.dot_dimension_numbers<[1], [0], [0], [1], [0, 0, 1, 1], [], []>} : vector<4x4xbf16>, vector<4x256xbf16>, vector<4x256xf32> -> vector<4x256xf32>
    %470 = arith.addf %466, %469 : vector<4x256xf32>
    %c8_417 = arith.constant 8 : index
    %c0_418 = arith.constant 0 : index
    %c0_419 = arith.constant 0 : index
    %471 = vector.load %arg12[%c8_417, %c0_418, %c0_419] : memref<9x4x4xbf16, #tpu.memory_space<vmem>>, vector<1x4x4xbf16>
    %472 = vector.shape_cast %471 : vector<1x4x4xbf16> to vector<4x4xbf16>
    %cst_420 = arith.constant dense<0.000000e+00> : vector<4x256xf32>
    %473 = tpu.matmul %472, %50, %cst_420 {dimension_numbers = #tpu.dot_dimension_numbers<[1], [0], [0], [1], [0, 0, 1, 1], [], []>} : vector<4x4xbf16>, vector<4x256xbf16>, vector<4x256xf32> -> vector<4x256xf32>
    %474 = arith.addf %470, %473 : vector<4x256xf32>
    %475 = arith.addf %439, %474 : vector<4x256xf32>
    %c0_421 = arith.constant 0 : index
    %c0_422 = arith.constant 0 : index
    %476 = vector.load %arg13[%c0_421, %c0_422] : memref<4x1xf32, #tpu.memory_space<vmem>>, vector<4x1xf32>
    %477 = vector.broadcast %476 : vector<4x1xf32> to vector<4x256xf32>
    %478 = arith.addf %475, %477 : vector<4x256xf32>
    %cst_423 = arith.constant 0.000000e+00 : f32
    %479 = vector.broadcast %cst_423 : f32 to vector<4x256xf32>
    %480 = arith.maximumf %478, %479 : vector<4x256xf32>
    %c0_424 = arith.constant 0 : index
    %c0_425 = arith.constant 0 : index
    %c0_426 = arith.constant 0 : index
    %481 = vector.load %arg21[%c0_424, %c0_425, %c0_426] : memref<2x4x256xf32, #tpu.memory_space<vmem>>, vector<1x4x256xf32>
    %482 = vector.shape_cast %481 : vector<1x4x256xf32> to vector<4x256xf32>
    %483 = vector.shape_cast %480 : vector<4x256xf32> to vector<1x4x256xf32>
    tpu.vector_store %arg21[%c0_424, %c0_425, %c0_426], %483 {strides = array<i32>} : memref<2x4x256xf32, #tpu.memory_space<vmem>>, vector<1x4x256xf32>,
    %c1_427 = arith.constant 1 : index
    %c0_428 = arith.constant 0 : index
    %c0_429 = arith.constant 0 : index
    %484 = vector.load %arg1[%c1_427, %c0_428, %c0_429] : memref<2x4x256xf32, #tpu.memory_space<vmem>>, vector<1x4x256xf32>
    %485 = vector.shape_cast %484 : vector<1x4x256xf32> to vector<4x256xf32>
    %c17_i32_430 = arith.constant 17 : i32
    %486 = tpu.dynamic_rotate %485 by %c17_i32_430 dim 1 : vector<4x256xf32>, i32 -> vector<4x256xf32>
    %c0_431 = arith.constant 0 : index
    %c0_432 = arith.constant 0 : index
    %c0_433 = arith.constant 0 : index
    %487 = vector.load %arg20[%c0_431, %c0_432, %c0_433] : memref<9x1x256xf32, #tpu.memory_space<vmem>>, vector<1x1x256xf32>
    %488 = vector.shape_cast %487 : vector<1x1x256xf32> to vector<1x256xf32>
    %489 = vector.broadcast %488 : vector<1x256xf32> to vector<4x256xf32>
    %490 = arith.mulf %486, %489 : vector<4x256xf32>
    %491 = arith.truncf %490 : vector<4x256xf32> to vector<4x256xbf16>
    %c16_i32_434 = arith.constant 16 : i32
    %492 = tpu.dynamic_rotate %485 by %c16_i32_434 dim 1 : vector<4x256xf32>, i32 -> vector<4x256xf32>
    %c1_435 = arith.constant 1 : index
    %c0_436 = arith.constant 0 : index
    %c0_437 = arith.constant 0 : index
    %493 = vector.load %arg20[%c1_435, %c0_436, %c0_437] : memref<9x1x256xf32, #tpu.memory_space<vmem>>, vector<1x1x256xf32>
    %494 = vector.shape_cast %493 : vector<1x1x256xf32> to vector<1x256xf32>
    %495 = vector.broadcast %494 : vector<1x256xf32> to vector<4x256xf32>
    %496 = arith.mulf %492, %495 : vector<4x256xf32>
    %497 = arith.truncf %496 : vector<4x256xf32> to vector<4x256xbf16>
    %c15_i32_438 = arith.constant 15 : i32
    %498 = tpu.dynamic_rotate %485 by %c15_i32_438 dim 1 : vector<4x256xf32>, i32 -> vector<4x256xf32>
    %c2_439 = arith.constant 2 : index
    %c0_440 = arith.constant 0 : index
    %c0_441 = arith.constant 0 : index
    %499 = vector.load %arg20[%c2_439, %c0_440, %c0_441] : memref<9x1x256xf32, #tpu.memory_space<vmem>>, vector<1x1x256xf32>
    %500 = vector.shape_cast %499 : vector<1x1x256xf32> to vector<1x256xf32>
    %501 = vector.broadcast %500 : vector<1x256xf32> to vector<4x256xf32>
    %502 = arith.mulf %498, %501 : vector<4x256xf32>
    %503 = arith.truncf %502 : vector<4x256xf32> to vector<4x256xbf16>
    %c1_i32_442 = arith.constant 1 : i32
    %504 = tpu.dynamic_rotate %485 by %c1_i32_442 dim 1 : vector<4x256xf32>, i32 -> vector<4x256xf32>
    %c3_443 = arith.constant 3 : index
    %c0_444 = arith.constant 0 : index
    %c0_445 = arith.constant 0 : index
    %505 = vector.load %arg20[%c3_443, %c0_444, %c0_445] : memref<9x1x256xf32, #tpu.memory_space<vmem>>, vector<1x1x256xf32>
    %506 = vector.shape_cast %505 : vector<1x1x256xf32> to vector<1x256xf32>
    %507 = vector.broadcast %506 : vector<1x256xf32> to vector<4x256xf32>
    %508 = arith.mulf %504, %507 : vector<4x256xf32>
    %509 = arith.truncf %508 : vector<4x256xf32> to vector<4x256xbf16>
    %510 = arith.truncf %485 : vector<4x256xf32> to vector<4x256xbf16>
    %c255_i32_446 = arith.constant 255 : i32
    %511 = tpu.dynamic_rotate %485 by %c255_i32_446 dim 1 : vector<4x256xf32>, i32 -> vector<4x256xf32>
    %c5_447 = arith.constant 5 : index
    %c0_448 = arith.constant 0 : index
    %c0_449 = arith.constant 0 : index
    %512 = vector.load %arg20[%c5_447, %c0_448, %c0_449] : memref<9x1x256xf32, #tpu.memory_space<vmem>>, vector<1x1x256xf32>
    %513 = vector.shape_cast %512 : vector<1x1x256xf32> to vector<1x256xf32>
    %514 = vector.broadcast %513 : vector<1x256xf32> to vector<4x256xf32>
    %515 = arith.mulf %511, %514 : vector<4x256xf32>
    %516 = arith.truncf %515 : vector<4x256xf32> to vector<4x256xbf16>
    %c241_i32_450 = arith.constant 241 : i32
    %517 = tpu.dynamic_rotate %485 by %c241_i32_450 dim 1 : vector<4x256xf32>, i32 -> vector<4x256xf32>
    %c6_451 = arith.constant 6 : index
    %c0_452 = arith.constant 0 : index
    %c0_453 = arith.constant 0 : index
    %518 = vector.load %arg20[%c6_451, %c0_452, %c0_453] : memref<9x1x256xf32, #tpu.memory_space<vmem>>, vector<1x1x256xf32>
    %519 = vector.shape_cast %518 : vector<1x1x256xf32> to vector<1x256xf32>
    %520 = vector.broadcast %519 : vector<1x256xf32> to vector<4x256xf32>
    %521 = arith.mulf %517, %520 : vector<4x256xf32>
    %522 = arith.truncf %521 : vector<4x256xf32> to vector<4x256xbf16>
    %c240_i32_454 = arith.constant 240 : i32
    %523 = tpu.dynamic_rotate %485 by %c240_i32_454 dim 1 : vector<4x256xf32>, i32 -> vector<4x256xf32>
    %c7_455 = arith.constant 7 : index
    %c0_456 = arith.constant 0 : index
    %c0_457 = arith.constant 0 : index
    %524 = vector.load %arg20[%c7_455, %c0_456, %c0_457] : memref<9x1x256xf32, #tpu.memory_space<vmem>>, vector<1x1x256xf32>
    %525 = vector.shape_cast %524 : vector<1x1x256xf32> to vector<1x256xf32>
    %526 = vector.broadcast %525 : vector<1x256xf32> to vector<4x256xf32>
    %527 = arith.mulf %523, %526 : vector<4x256xf32>
    %528 = arith.truncf %527 : vector<4x256xf32> to vector<4x256xbf16>
    %c239_i32_458 = arith.constant 239 : i32
    %529 = tpu.dynamic_rotate %485 by %c239_i32_458 dim 1 : vector<4x256xf32>, i32 -> vector<4x256xf32>
    %c8_459 = arith.constant 8 : index
    %c0_460 = arith.constant 0 : index
    %c0_461 = arith.constant 0 : index
    %530 = vector.load %arg20[%c8_459, %c0_460, %c0_461] : memref<9x1x256xf32, #tpu.memory_space<vmem>>, vector<1x1x256xf32>
    %531 = vector.shape_cast %530 : vector<1x1x256xf32> to vector<1x256xf32>
    %532 = vector.broadcast %531 : vector<1x256xf32> to vector<4x256xf32>
    %533 = arith.mulf %529, %532 : vector<4x256xf32>
    %534 = arith.truncf %533 : vector<4x256xf32> to vector<4x256xbf16>
    %c0_462 = arith.constant 0 : index
    %c0_463 = arith.constant 0 : index
    %c0_464 = arith.constant 0 : index
    %535 = vector.load %arg2[%c0_462, %c0_463, %c0_464] : memref<9x8x4xbf16, #tpu.memory_space<vmem>>, vector<1x8x4xbf16>
    %536 = vector.shape_cast %535 : vector<1x8x4xbf16> to vector<8x4xbf16>
    %cst_465 = arith.constant dense<0.000000e+00> : vector<8x256xf32>
    %537 = tpu.matmul %536, %491, %cst_465 {dimension_numbers = #tpu.dot_dimension_numbers<[1], [0], [0], [1], [0, 0, 1, 1], [], []>} : vector<8x4xbf16>, vector<4x256xbf16>, vector<8x256xf32> -> vector<8x256xf32>
    %c1_466 = arith.constant 1 : index
    %c0_467 = arith.constant 0 : index
    %c0_468 = arith.constant 0 : index
    %538 = vector.load %arg2[%c1_466, %c0_467, %c0_468] : memref<9x8x4xbf16, #tpu.memory_space<vmem>>, vector<1x8x4xbf16>
    %539 = vector.shape_cast %538 : vector<1x8x4xbf16> to vector<8x4xbf16>
    %cst_469 = arith.constant dense<0.000000e+00> : vector<8x256xf32>
    %540 = tpu.matmul %539, %497, %cst_469 {dimension_numbers = #tpu.dot_dimension_numbers<[1], [0], [0], [1], [0, 0, 1, 1], [], []>} : vector<8x4xbf16>, vector<4x256xbf16>, vector<8x256xf32> -> vector<8x256xf32>
    %541 = arith.addf %537, %540 : vector<8x256xf32>
    %c2_470 = arith.constant 2 : index
    %c0_471 = arith.constant 0 : index
    %c0_472 = arith.constant 0 : index
    %542 = vector.load %arg2[%c2_470, %c0_471, %c0_472] : memref<9x8x4xbf16, #tpu.memory_space<vmem>>, vector<1x8x4xbf16>
    %543 = vector.shape_cast %542 : vector<1x8x4xbf16> to vector<8x4xbf16>
    %cst_473 = arith.constant dense<0.000000e+00> : vector<8x256xf32>
    %544 = tpu.matmul %543, %503, %cst_473 {dimension_numbers = #tpu.dot_dimension_numbers<[1], [0], [0], [1], [0, 0, 1, 1], [], []>} : vector<8x4xbf16>, vector<4x256xbf16>, vector<8x256xf32> -> vector<8x256xf32>
    %545 = arith.addf %541, %544 : vector<8x256xf32>
    %c3_474 = arith.constant 3 : index
    %c0_475 = arith.constant 0 : index
    %c0_476 = arith.constant 0 : index
    %546 = vector.load %arg2[%c3_474, %c0_475, %c0_476] : memref<9x8x4xbf16, #tpu.memory_space<vmem>>, vector<1x8x4xbf16>
    %547 = vector.shape_cast %546 : vector<1x8x4xbf16> to vector<8x4xbf16>
    %cst_477 = arith.constant dense<0.000000e+00> : vector<8x256xf32>
    %548 = tpu.matmul %547, %509, %cst_477 {dimension_numbers = #tpu.dot_dimension_numbers<[1], [0], [0], [1], [0, 0, 1, 1], [], []>} : vector<8x4xbf16>, vector<4x256xbf16>, vector<8x256xf32> -> vector<8x256xf32>
    %549 = arith.addf %545, %548 : vector<8x256xf32>
    %c4_478 = arith.constant 4 : index
    %c0_479 = arith.constant 0 : index
    %c0_480 = arith.constant 0 : index
    %550 = vector.load %arg2[%c4_478, %c0_479, %c0_480] : memref<9x8x4xbf16, #tpu.memory_space<vmem>>, vector<1x8x4xbf16>
    %551 = vector.shape_cast %550 : vector<1x8x4xbf16> to vector<8x4xbf16>
    %cst_481 = arith.constant dense<0.000000e+00> : vector<8x256xf32>
    %552 = tpu.matmul %551, %510, %cst_481 {dimension_numbers = #tpu.dot_dimension_numbers<[1], [0], [0], [1], [0, 0, 1, 1], [], []>} : vector<8x4xbf16>, vector<4x256xbf16>, vector<8x256xf32> -> vector<8x256xf32>
    %553 = arith.addf %549, %552 : vector<8x256xf32>
    %c5_482 = arith.constant 5 : index
    %c0_483 = arith.constant 0 : index
    %c0_484 = arith.constant 0 : index
    %554 = vector.load %arg2[%c5_482, %c0_483, %c0_484] : memref<9x8x4xbf16, #tpu.memory_space<vmem>>, vector<1x8x4xbf16>
    %555 = vector.shape_cast %554 : vector<1x8x4xbf16> to vector<8x4xbf16>
    %cst_485 = arith.constant dense<0.000000e+00> : vector<8x256xf32>
    %556 = tpu.matmul %555, %516, %cst_485 {dimension_numbers = #tpu.dot_dimension_numbers<[1], [0], [0], [1], [0, 0, 1, 1], [], []>} : vector<8x4xbf16>, vector<4x256xbf16>, vector<8x256xf32> -> vector<8x256xf32>
    %557 = arith.addf %553, %556 : vector<8x256xf32>
    %c6_486 = arith.constant 6 : index
    %c0_487 = arith.constant 0 : index
    %c0_488 = arith.constant 0 : index
    %558 = vector.load %arg2[%c6_486, %c0_487, %c0_488] : memref<9x8x4xbf16, #tpu.memory_space<vmem>>, vector<1x8x4xbf16>
    %559 = vector.shape_cast %558 : vector<1x8x4xbf16> to vector<8x4xbf16>
    %cst_489 = arith.constant dense<0.000000e+00> : vector<8x256xf32>
    %560 = tpu.matmul %559, %522, %cst_489 {dimension_numbers = #tpu.dot_dimension_numbers<[1], [0], [0], [1], [0, 0, 1, 1], [], []>} : vector<8x4xbf16>, vector<4x256xbf16>, vector<8x256xf32> -> vector<8x256xf32>
    %561 = arith.addf %557, %560 : vector<8x256xf32>
    %c7_490 = arith.constant 7 : index
    %c0_491 = arith.constant 0 : index
    %c0_492 = arith.constant 0 : index
    %562 = vector.load %arg2[%c7_490, %c0_491, %c0_492] : memref<9x8x4xbf16, #tpu.memory_space<vmem>>, vector<1x8x4xbf16>
    %563 = vector.shape_cast %562 : vector<1x8x4xbf16> to vector<8x4xbf16>
    %cst_493 = arith.constant dense<0.000000e+00> : vector<8x256xf32>
    %564 = tpu.matmul %563, %528, %cst_493 {dimension_numbers = #tpu.dot_dimension_numbers<[1], [0], [0], [1], [0, 0, 1, 1], [], []>} : vector<8x4xbf16>, vector<4x256xbf16>, vector<8x256xf32> -> vector<8x256xf32>
    %565 = arith.addf %561, %564 : vector<8x256xf32>
    %c8_494 = arith.constant 8 : index
    %c0_495 = arith.constant 0 : index
    %c0_496 = arith.constant 0 : index
    %566 = vector.load %arg2[%c8_494, %c0_495, %c0_496] : memref<9x8x4xbf16, #tpu.memory_space<vmem>>, vector<1x8x4xbf16>
    %567 = vector.shape_cast %566 : vector<1x8x4xbf16> to vector<8x4xbf16>
    %cst_497 = arith.constant dense<0.000000e+00> : vector<8x256xf32>
    %568 = tpu.matmul %567, %534, %cst_497 {dimension_numbers = #tpu.dot_dimension_numbers<[1], [0], [0], [1], [0, 0, 1, 1], [], []>} : vector<8x4xbf16>, vector<4x256xbf16>, vector<8x256xf32> -> vector<8x256xf32>
    %569 = arith.addf %565, %568 : vector<8x256xf32>
    %c0_498 = arith.constant 0 : index
    %c0_499 = arith.constant 0 : index
    %570 = vector.load %arg16[%c0_498, %c0_499] : memref<256x64xf32, #tpu.memory_space<vmem>>, vector<256x64xf32>
    %cst_500 = arith.constant dense<0.000000e+00> : vector<8x64xf32>
    %571 = tpu.matmul %569, %570, %cst_500 {dimension_numbers = #tpu.dot_dimension_numbers<[1], [0], [0], [1], [0, 0, 1, 1], [], []>} : vector<8x256xf32>, vector<256x64xf32>, vector<8x64xf32> -> vector<8x64xf32>
    %c0_501 = arith.constant 0 : index
    %c0_502 = arith.constant 0 : index
    %572 = vector.load %arg3[%c0_501, %c0_502] : memref<8x1xf32, #tpu.memory_space<vmem>>, vector<8x1xf32>
    %573 = vector.broadcast %572 : vector<8x1xf32> to vector<8x64xf32>
    %574 = arith.addf %571, %573 : vector<8x64xf32>
    %cst_503 = arith.constant 0.000000e+00 : f32
    %575 = vector.broadcast %cst_503 : f32 to vector<8x64xf32>
    %576 = arith.maximumf %574, %575 : vector<8x64xf32>
    %577 = arith.truncf %576 : vector<8x64xf32> to vector<8x64xbf16>
    %c0_504 = arith.constant 0 : index
    %c0_505 = arith.constant 0 : index
    %c0_506 = arith.constant 0 : index
    %578 = vector.load %arg14[%c0_504, %c0_505, %c0_506] : memref<9x64x64xbf16, #tpu.memory_space<vmem>>, vector<1x64x64xbf16>
    %579 = vector.shape_cast %578 : vector<1x64x64xbf16> to vector<64x64xbf16>
    %cst_507 = arith.constant dense<0.000000e+00> : vector<8x64xf32>
    %580 = tpu.matmul %577, %579, %cst_507 {dimension_numbers = #tpu.dot_dimension_numbers<[1], [0], [0], [1], [0, 0, 1, 1], [], []>} : vector<8x64xbf16>, vector<64x64xbf16>, vector<8x64xf32> -> vector<8x64xf32>
    %581 = arith.truncf %580 : vector<8x64xf32> to vector<8x64xbf16>
    %c1_508 = arith.constant 1 : index
    %c0_509 = arith.constant 0 : index
    %c0_510 = arith.constant 0 : index
    %582 = vector.load %arg14[%c1_508, %c0_509, %c0_510] : memref<9x64x64xbf16, #tpu.memory_space<vmem>>, vector<1x64x64xbf16>
    %583 = vector.shape_cast %582 : vector<1x64x64xbf16> to vector<64x64xbf16>
    %cst_511 = arith.constant dense<0.000000e+00> : vector<8x64xf32>
    %584 = tpu.matmul %577, %583, %cst_511 {dimension_numbers = #tpu.dot_dimension_numbers<[1], [0], [0], [1], [0, 0, 1, 1], [], []>} : vector<8x64xbf16>, vector<64x64xbf16>, vector<8x64xf32> -> vector<8x64xf32>
    %585 = arith.truncf %584 : vector<8x64xf32> to vector<8x64xbf16>
    %c2_512 = arith.constant 2 : index
    %c0_513 = arith.constant 0 : index
    %c0_514 = arith.constant 0 : index
    %586 = vector.load %arg14[%c2_512, %c0_513, %c0_514] : memref<9x64x64xbf16, #tpu.memory_space<vmem>>, vector<1x64x64xbf16>
    %587 = vector.shape_cast %586 : vector<1x64x64xbf16> to vector<64x64xbf16>
    %cst_515 = arith.constant dense<0.000000e+00> : vector<8x64xf32>
    %588 = tpu.matmul %577, %587, %cst_515 {dimension_numbers = #tpu.dot_dimension_numbers<[1], [0], [0], [1], [0, 0, 1, 1], [], []>} : vector<8x64xbf16>, vector<64x64xbf16>, vector<8x64xf32> -> vector<8x64xf32>
    %589 = arith.truncf %588 : vector<8x64xf32> to vector<8x64xbf16>
    %c3_516 = arith.constant 3 : index
    %c0_517 = arith.constant 0 : index
    %c0_518 = arith.constant 0 : index
    %590 = vector.load %arg14[%c3_516, %c0_517, %c0_518] : memref<9x64x64xbf16, #tpu.memory_space<vmem>>, vector<1x64x64xbf16>
    %591 = vector.shape_cast %590 : vector<1x64x64xbf16> to vector<64x64xbf16>
    %cst_519 = arith.constant dense<0.000000e+00> : vector<8x64xf32>
    %592 = tpu.matmul %577, %591, %cst_519 {dimension_numbers = #tpu.dot_dimension_numbers<[1], [0], [0], [1], [0, 0, 1, 1], [], []>} : vector<8x64xbf16>, vector<64x64xbf16>, vector<8x64xf32> -> vector<8x64xf32>
    %593 = arith.truncf %592 : vector<8x64xf32> to vector<8x64xbf16>
    %c5_520 = arith.constant 5 : index
    %c0_521 = arith.constant 0 : index
    %c0_522 = arith.constant 0 : index
    %594 = vector.load %arg14[%c5_520, %c0_521, %c0_522] : memref<9x64x64xbf16, #tpu.memory_space<vmem>>, vector<1x64x64xbf16>
    %595 = vector.shape_cast %594 : vector<1x64x64xbf16> to vector<64x64xbf16>
    %cst_523 = arith.constant dense<0.000000e+00> : vector<8x64xf32>
    %596 = tpu.matmul %577, %595, %cst_523 {dimension_numbers = #tpu.dot_dimension_numbers<[1], [0], [0], [1], [0, 0, 1, 1], [], []>} : vector<8x64xbf16>, vector<64x64xbf16>, vector<8x64xf32> -> vector<8x64xf32>
    %597 = arith.truncf %596 : vector<8x64xf32> to vector<8x64xbf16>
    %c6_524 = arith.constant 6 : index
    %c0_525 = arith.constant 0 : index
    %c0_526 = arith.constant 0 : index
    %598 = vector.load %arg14[%c6_524, %c0_525, %c0_526] : memref<9x64x64xbf16, #tpu.memory_space<vmem>>, vector<1x64x64xbf16>
    %599 = vector.shape_cast %598 : vector<1x64x64xbf16> to vector<64x64xbf16>
    %cst_527 = arith.constant dense<0.000000e+00> : vector<8x64xf32>
    %600 = tpu.matmul %577, %599, %cst_527 {dimension_numbers = #tpu.dot_dimension_numbers<[1], [0], [0], [1], [0, 0, 1, 1], [], []>} : vector<8x64xbf16>, vector<64x64xbf16>, vector<8x64xf32> -> vector<8x64xf32>
    %601 = arith.truncf %600 : vector<8x64xf32> to vector<8x64xbf16>
    %c7_528 = arith.constant 7 : index
    %c0_529 = arith.constant 0 : index
    %c0_530 = arith.constant 0 : index
    %602 = vector.load %arg14[%c7_528, %c0_529, %c0_530] : memref<9x64x64xbf16, #tpu.memory_space<vmem>>, vector<1x64x64xbf16>
    %603 = vector.shape_cast %602 : vector<1x64x64xbf16> to vector<64x64xbf16>
    %cst_531 = arith.constant dense<0.000000e+00> : vector<8x64xf32>
    %604 = tpu.matmul %577, %603, %cst_531 {dimension_numbers = #tpu.dot_dimension_numbers<[1], [0], [0], [1], [0, 0, 1, 1], [], []>} : vector<8x64xbf16>, vector<64x64xbf16>, vector<8x64xf32> -> vector<8x64xf32>
    %605 = arith.truncf %604 : vector<8x64xf32> to vector<8x64xbf16>
    %c8_532 = arith.constant 8 : index
    %c0_533 = arith.constant 0 : index
    %c0_534 = arith.constant 0 : index
    %606 = vector.load %arg14[%c8_532, %c0_533, %c0_534] : memref<9x64x64xbf16, #tpu.memory_space<vmem>>, vector<1x64x64xbf16>
    %607 = vector.shape_cast %606 : vector<1x64x64xbf16> to vector<64x64xbf16>
    %cst_535 = arith.constant dense<0.000000e+00> : vector<8x64xf32>
    %608 = tpu.matmul %577, %607, %cst_535 {dimension_numbers = #tpu.dot_dimension_numbers<[1], [0], [0], [1], [0, 0, 1, 1], [], []>} : vector<8x64xbf16>, vector<64x64xbf16>, vector<8x64xf32> -> vector<8x64xf32>
    %609 = arith.truncf %608 : vector<8x64xf32> to vector<8x64xbf16>
    %c0_536 = arith.constant 0 : index
    %c0_537 = arith.constant 0 : index
    %c0_538 = arith.constant 0 : index
    %610 = vector.load %arg4[%c0_536, %c0_537, %c0_538] : memref<9x16x8xbf16, #tpu.memory_space<vmem>>, vector<1x16x8xbf16>
    %611 = vector.shape_cast %610 : vector<1x16x8xbf16> to vector<16x8xbf16>
    %cst_539 = arith.constant dense<0.000000e+00> : vector<16x64xf32>
    %612 = tpu.matmul %611, %581, %cst_539 {dimension_numbers = #tpu.dot_dimension_numbers<[1], [0], [0], [1], [0, 0, 1, 1], [], []>} : vector<16x8xbf16>, vector<8x64xbf16>, vector<16x64xf32> -> vector<16x64xf32>
    %c1_540 = arith.constant 1 : index
    %c0_541 = arith.constant 0 : index
    %c0_542 = arith.constant 0 : index
    %613 = vector.load %arg4[%c1_540, %c0_541, %c0_542] : memref<9x16x8xbf16, #tpu.memory_space<vmem>>, vector<1x16x8xbf16>
    %614 = vector.shape_cast %613 : vector<1x16x8xbf16> to vector<16x8xbf16>
    %cst_543 = arith.constant dense<0.000000e+00> : vector<16x64xf32>
    %615 = tpu.matmul %614, %585, %cst_543 {dimension_numbers = #tpu.dot_dimension_numbers<[1], [0], [0], [1], [0, 0, 1, 1], [], []>} : vector<16x8xbf16>, vector<8x64xbf16>, vector<16x64xf32> -> vector<16x64xf32>
    %616 = arith.addf %612, %615 : vector<16x64xf32>
    %c2_544 = arith.constant 2 : index
    %c0_545 = arith.constant 0 : index
    %c0_546 = arith.constant 0 : index
    %617 = vector.load %arg4[%c2_544, %c0_545, %c0_546] : memref<9x16x8xbf16, #tpu.memory_space<vmem>>, vector<1x16x8xbf16>
    %618 = vector.shape_cast %617 : vector<1x16x8xbf16> to vector<16x8xbf16>
    %cst_547 = arith.constant dense<0.000000e+00> : vector<16x64xf32>
    %619 = tpu.matmul %618, %589, %cst_547 {dimension_numbers = #tpu.dot_dimension_numbers<[1], [0], [0], [1], [0, 0, 1, 1], [], []>} : vector<16x8xbf16>, vector<8x64xbf16>, vector<16x64xf32> -> vector<16x64xf32>
    %620 = arith.addf %616, %619 : vector<16x64xf32>
    %c3_548 = arith.constant 3 : index
    %c0_549 = arith.constant 0 : index
    %c0_550 = arith.constant 0 : index
    %621 = vector.load %arg4[%c3_548, %c0_549, %c0_550] : memref<9x16x8xbf16, #tpu.memory_space<vmem>>, vector<1x16x8xbf16>
    %622 = vector.shape_cast %621 : vector<1x16x8xbf16> to vector<16x8xbf16>
    %cst_551 = arith.constant dense<0.000000e+00> : vector<16x64xf32>
    %623 = tpu.matmul %622, %593, %cst_551 {dimension_numbers = #tpu.dot_dimension_numbers<[1], [0], [0], [1], [0, 0, 1, 1], [], []>} : vector<16x8xbf16>, vector<8x64xbf16>, vector<16x64xf32> -> vector<16x64xf32>
    %624 = arith.addf %620, %623 : vector<16x64xf32>
    %c4_552 = arith.constant 4 : index
    %c0_553 = arith.constant 0 : index
    %c0_554 = arith.constant 0 : index
    %625 = vector.load %arg4[%c4_552, %c0_553, %c0_554] : memref<9x16x8xbf16, #tpu.memory_space<vmem>>, vector<1x16x8xbf16>
    %626 = vector.shape_cast %625 : vector<1x16x8xbf16> to vector<16x8xbf16>
    %cst_555 = arith.constant dense<0.000000e+00> : vector<16x64xf32>
    %627 = tpu.matmul %626, %577, %cst_555 {dimension_numbers = #tpu.dot_dimension_numbers<[1], [0], [0], [1], [0, 0, 1, 1], [], []>} : vector<16x8xbf16>, vector<8x64xbf16>, vector<16x64xf32> -> vector<16x64xf32>
    %628 = arith.addf %624, %627 : vector<16x64xf32>
    %c5_556 = arith.constant 5 : index
    %c0_557 = arith.constant 0 : index
    %c0_558 = arith.constant 0 : index
    %629 = vector.load %arg4[%c5_556, %c0_557, %c0_558] : memref<9x16x8xbf16, #tpu.memory_space<vmem>>, vector<1x16x8xbf16>
    %630 = vector.shape_cast %629 : vector<1x16x8xbf16> to vector<16x8xbf16>
    %cst_559 = arith.constant dense<0.000000e+00> : vector<16x64xf32>
    %631 = tpu.matmul %630, %597, %cst_559 {dimension_numbers = #tpu.dot_dimension_numbers<[1], [0], [0], [1], [0, 0, 1, 1], [], []>} : vector<16x8xbf16>, vector<8x64xbf16>, vector<16x64xf32> -> vector<16x64xf32>
    %632 = arith.addf %628, %631 : vector<16x64xf32>
    %c6_560 = arith.constant 6 : index
    %c0_561 = arith.constant 0 : index
    %c0_562 = arith.constant 0 : index
    %633 = vector.load %arg4[%c6_560, %c0_561, %c0_562] : memref<9x16x8xbf16, #tpu.memory_space<vmem>>, vector<1x16x8xbf16>
    %634 = vector.shape_cast %633 : vector<1x16x8xbf16> to vector<16x8xbf16>
    %cst_563 = arith.constant dense<0.000000e+00> : vector<16x64xf32>
    %635 = tpu.matmul %634, %601, %cst_563 {dimension_numbers = #tpu.dot_dimension_numbers<[1], [0], [0], [1], [0, 0, 1, 1], [], []>} : vector<16x8xbf16>, vector<8x64xbf16>, vector<16x64xf32> -> vector<16x64xf32>
    %636 = arith.addf %632, %635 : vector<16x64xf32>
    %c7_564 = arith.constant 7 : index
    %c0_565 = arith.constant 0 : index
    %c0_566 = arith.constant 0 : index
    %637 = vector.load %arg4[%c7_564, %c0_565, %c0_566] : memref<9x16x8xbf16, #tpu.memory_space<vmem>>, vector<1x16x8xbf16>
    %638 = vector.shape_cast %637 : vector<1x16x8xbf16> to vector<16x8xbf16>
    %cst_567 = arith.constant dense<0.000000e+00> : vector<16x64xf32>
    %639 = tpu.matmul %638, %605, %cst_567 {dimension_numbers = #tpu.dot_dimension_numbers<[1], [0], [0], [1], [0, 0, 1, 1], [], []>} : vector<16x8xbf16>, vector<8x64xbf16>, vector<16x64xf32> -> vector<16x64xf32>
    %640 = arith.addf %636, %639 : vector<16x64xf32>
    %c8_568 = arith.constant 8 : index
    %c0_569 = arith.constant 0 : index
    %c0_570 = arith.constant 0 : index
    %641 = vector.load %arg4[%c8_568, %c0_569, %c0_570] : memref<9x16x8xbf16, #tpu.memory_space<vmem>>, vector<1x16x8xbf16>
    %642 = vector.shape_cast %641 : vector<1x16x8xbf16> to vector<16x8xbf16>
    %cst_571 = arith.constant dense<0.000000e+00> : vector<16x64xf32>
    %643 = tpu.matmul %642, %609, %cst_571 {dimension_numbers = #tpu.dot_dimension_numbers<[1], [0], [0], [1], [0, 0, 1, 1], [], []>} : vector<16x8xbf16>, vector<8x64xbf16>, vector<16x64xf32> -> vector<16x64xf32>
    %644 = arith.addf %640, %643 : vector<16x64xf32>
    %c0_572 = arith.constant 0 : index
    %c0_573 = arith.constant 0 : index
    %645 = vector.load %arg17[%c0_572, %c0_573] : memref<64x16xf32, #tpu.memory_space<vmem>>, vector<64x16xf32>
    %cst_574 = arith.constant dense<0.000000e+00> : vector<16x16xf32>
    %646 = tpu.matmul %644, %645, %cst_574 {dimension_numbers = #tpu.dot_dimension_numbers<[1], [0], [0], [1], [0, 0, 1, 1], [], []>} : vector<16x64xf32>, vector<64x16xf32>, vector<16x16xf32> -> vector<16x16xf32>
    %c0_575 = arith.constant 0 : index
    %c0_576 = arith.constant 0 : index
    %647 = vector.load %arg5[%c0_575, %c0_576] : memref<16x1xf32, #tpu.memory_space<vmem>>, vector<16x1xf32>
    %648 = vector.broadcast %647 : vector<16x1xf32> to vector<16x16xf32>
    %649 = arith.addf %646, %648 : vector<16x16xf32>
    %cst_577 = arith.constant 0.000000e+00 : f32
    %650 = vector.broadcast %cst_577 : f32 to vector<16x16xf32>
    %651 = arith.maximumf %649, %650 : vector<16x16xf32>
    %652 = arith.truncf %651 : vector<16x16xf32> to vector<16x16xbf16>
    %c0_578 = arith.constant 0 : index
    %c0_579 = arith.constant 0 : index
    %c0_580 = arith.constant 0 : index
    %653 = vector.load %arg15[%c0_578, %c0_579, %c0_580] : memref<9x16x16xbf16, #tpu.memory_space<vmem>>, vector<1x16x16xbf16>
    %654 = vector.shape_cast %653 : vector<1x16x16xbf16> to vector<16x16xbf16>
    %cst_581 = arith.constant dense<0.000000e+00> : vector<16x16xf32>
    %655 = tpu.matmul %652, %654, %cst_581 {dimension_numbers = #tpu.dot_dimension_numbers<[1], [0], [0], [1], [0, 0, 1, 1], [], []>} : vector<16x16xbf16>, vector<16x16xbf16>, vector<16x16xf32> -> vector<16x16xf32>
    %656 = arith.truncf %655 : vector<16x16xf32> to vector<16x16xbf16>
    %c1_582 = arith.constant 1 : index
    %c0_583 = arith.constant 0 : index
    %c0_584 = arith.constant 0 : index
    %657 = vector.load %arg15[%c1_582, %c0_583, %c0_584] : memref<9x16x16xbf16, #tpu.memory_space<vmem>>, vector<1x16x16xbf16>
    %658 = vector.shape_cast %657 : vector<1x16x16xbf16> to vector<16x16xbf16>
    %cst_585 = arith.constant dense<0.000000e+00> : vector<16x16xf32>
    %659 = tpu.matmul %652, %658, %cst_585 {dimension_numbers = #tpu.dot_dimension_numbers<[1], [0], [0], [1], [0, 0, 1, 1], [], []>} : vector<16x16xbf16>, vector<16x16xbf16>, vector<16x16xf32> -> vector<16x16xf32>
    %660 = arith.truncf %659 : vector<16x16xf32> to vector<16x16xbf16>
    %c2_586 = arith.constant 2 : index
    %c0_587 = arith.constant 0 : index
    %c0_588 = arith.constant 0 : index
    %661 = vector.load %arg15[%c2_586, %c0_587, %c0_588] : memref<9x16x16xbf16, #tpu.memory_space<vmem>>, vector<1x16x16xbf16>
    %662 = vector.shape_cast %661 : vector<1x16x16xbf16> to vector<16x16xbf16>
    %cst_589 = arith.constant dense<0.000000e+00> : vector<16x16xf32>
    %663 = tpu.matmul %652, %662, %cst_589 {dimension_numbers = #tpu.dot_dimension_numbers<[1], [0], [0], [1], [0, 0, 1, 1], [], []>} : vector<16x16xbf16>, vector<16x16xbf16>, vector<16x16xf32> -> vector<16x16xf32>
    %664 = arith.truncf %663 : vector<16x16xf32> to vector<16x16xbf16>
    %c3_590 = arith.constant 3 : index
    %c0_591 = arith.constant 0 : index
    %c0_592 = arith.constant 0 : index
    %665 = vector.load %arg15[%c3_590, %c0_591, %c0_592] : memref<9x16x16xbf16, #tpu.memory_space<vmem>>, vector<1x16x16xbf16>
    %666 = vector.shape_cast %665 : vector<1x16x16xbf16> to vector<16x16xbf16>
    %cst_593 = arith.constant dense<0.000000e+00> : vector<16x16xf32>
    %667 = tpu.matmul %652, %666, %cst_593 {dimension_numbers = #tpu.dot_dimension_numbers<[1], [0], [0], [1], [0, 0, 1, 1], [], []>} : vector<16x16xbf16>, vector<16x16xbf16>, vector<16x16xf32> -> vector<16x16xf32>
    %668 = arith.truncf %667 : vector<16x16xf32> to vector<16x16xbf16>
    %c5_594 = arith.constant 5 : index
    %c0_595 = arith.constant 0 : index
    %c0_596 = arith.constant 0 : index
    %669 = vector.load %arg15[%c5_594, %c0_595, %c0_596] : memref<9x16x16xbf16, #tpu.memory_space<vmem>>, vector<1x16x16xbf16>
    %670 = vector.shape_cast %669 : vector<1x16x16xbf16> to vector<16x16xbf16>
    %cst_597 = arith.constant dense<0.000000e+00> : vector<16x16xf32>
    %671 = tpu.matmul %652, %670, %cst_597 {dimension_numbers = #tpu.dot_dimension_numbers<[1], [0], [0], [1], [0, 0, 1, 1], [], []>} : vector<16x16xbf16>, vector<16x16xbf16>, vector<16x16xf32> -> vector<16x16xf32>
    %672 = arith.truncf %671 : vector<16x16xf32> to vector<16x16xbf16>
    %c6_598 = arith.constant 6 : index
    %c0_599 = arith.constant 0 : index
    %c0_600 = arith.constant 0 : index
    %673 = vector.load %arg15[%c6_598, %c0_599, %c0_600] : memref<9x16x16xbf16, #tpu.memory_space<vmem>>, vector<1x16x16xbf16>
    %674 = vector.shape_cast %673 : vector<1x16x16xbf16> to vector<16x16xbf16>
    %cst_601 = arith.constant dense<0.000000e+00> : vector<16x16xf32>
    %675 = tpu.matmul %652, %674, %cst_601 {dimension_numbers = #tpu.dot_dimension_numbers<[1], [0], [0], [1], [0, 0, 1, 1], [], []>} : vector<16x16xbf16>, vector<16x16xbf16>, vector<16x16xf32> -> vector<16x16xf32>
    %676 = arith.truncf %675 : vector<16x16xf32> to vector<16x16xbf16>
    %c7_602 = arith.constant 7 : index
    %c0_603 = arith.constant 0 : index
    %c0_604 = arith.constant 0 : index
    %677 = vector.load %arg15[%c7_602, %c0_603, %c0_604] : memref<9x16x16xbf16, #tpu.memory_space<vmem>>, vector<1x16x16xbf16>
    %678 = vector.shape_cast %677 : vector<1x16x16xbf16> to vector<16x16xbf16>
    %cst_605 = arith.constant dense<0.000000e+00> : vector<16x16xf32>
    %679 = tpu.matmul %652, %678, %cst_605 {dimension_numbers = #tpu.dot_dimension_numbers<[1], [0], [0], [1], [0, 0, 1, 1], [], []>} : vector<16x16xbf16>, vector<16x16xbf16>, vector<16x16xf32> -> vector<16x16xf32>
    %680 = arith.truncf %679 : vector<16x16xf32> to vector<16x16xbf16>
    %c8_606 = arith.constant 8 : index
    %c0_607 = arith.constant 0 : index
    %c0_608 = arith.constant 0 : index
    %681 = vector.load %arg15[%c8_606, %c0_607, %c0_608] : memref<9x16x16xbf16, #tpu.memory_space<vmem>>, vector<1x16x16xbf16>
    %682 = vector.shape_cast %681 : vector<1x16x16xbf16> to vector<16x16xbf16>
    %cst_609 = arith.constant dense<0.000000e+00> : vector<16x16xf32>
    %683 = tpu.matmul %652, %682, %cst_609 {dimension_numbers = #tpu.dot_dimension_numbers<[1], [0], [0], [1], [0, 0, 1, 1], [], []>} : vector<16x16xbf16>, vector<16x16xbf16>, vector<16x16xf32> -> vector<16x16xf32>
    %684 = arith.truncf %683 : vector<16x16xf32> to vector<16x16xbf16>
    %c0_610 = arith.constant 0 : index
    %c0_611 = arith.constant 0 : index
    %c0_612 = arith.constant 0 : index
    %685 = vector.load %arg6[%c0_610, %c0_611, %c0_612] : memref<9x16x16xbf16, #tpu.memory_space<vmem>>, vector<1x16x16xbf16>
    %686 = vector.shape_cast %685 : vector<1x16x16xbf16> to vector<16x16xbf16>
    %cst_613 = arith.constant dense<0.000000e+00> : vector<16x16xf32>
    %687 = tpu.matmul %686, %656, %cst_613 {dimension_numbers = #tpu.dot_dimension_numbers<[1], [0], [0], [1], [0, 0, 1, 1], [], []>} : vector<16x16xbf16>, vector<16x16xbf16>, vector<16x16xf32> -> vector<16x16xf32>
    %c1_614 = arith.constant 1 : index
    %c0_615 = arith.constant 0 : index
    %c0_616 = arith.constant 0 : index
    %688 = vector.load %arg6[%c1_614, %c0_615, %c0_616] : memref<9x16x16xbf16, #tpu.memory_space<vmem>>, vector<1x16x16xbf16>
    %689 = vector.shape_cast %688 : vector<1x16x16xbf16> to vector<16x16xbf16>
    %cst_617 = arith.constant dense<0.000000e+00> : vector<16x16xf32>
    %690 = tpu.matmul %689, %660, %cst_617 {dimension_numbers = #tpu.dot_dimension_numbers<[1], [0], [0], [1], [0, 0, 1, 1], [], []>} : vector<16x16xbf16>, vector<16x16xbf16>, vector<16x16xf32> -> vector<16x16xf32>
    %691 = arith.addf %687, %690 : vector<16x16xf32>
    %c2_618 = arith.constant 2 : index
    %c0_619 = arith.constant 0 : index
    %c0_620 = arith.constant 0 : index
    %692 = vector.load %arg6[%c2_618, %c0_619, %c0_620] : memref<9x16x16xbf16, #tpu.memory_space<vmem>>, vector<1x16x16xbf16>
    %693 = vector.shape_cast %692 : vector<1x16x16xbf16> to vector<16x16xbf16>
    %cst_621 = arith.constant dense<0.000000e+00> : vector<16x16xf32>
    %694 = tpu.matmul %693, %664, %cst_621 {dimension_numbers = #tpu.dot_dimension_numbers<[1], [0], [0], [1], [0, 0, 1, 1], [], []>} : vector<16x16xbf16>, vector<16x16xbf16>, vector<16x16xf32> -> vector<16x16xf32>
    %695 = arith.addf %691, %694 : vector<16x16xf32>
    %c3_622 = arith.constant 3 : index
    %c0_623 = arith.constant 0 : index
    %c0_624 = arith.constant 0 : index
    %696 = vector.load %arg6[%c3_622, %c0_623, %c0_624] : memref<9x16x16xbf16, #tpu.memory_space<vmem>>, vector<1x16x16xbf16>
    %697 = vector.shape_cast %696 : vector<1x16x16xbf16> to vector<16x16xbf16>
    %cst_625 = arith.constant dense<0.000000e+00> : vector<16x16xf32>
    %698 = tpu.matmul %697, %668, %cst_625 {dimension_numbers = #tpu.dot_dimension_numbers<[1], [0], [0], [1], [0, 0, 1, 1], [], []>} : vector<16x16xbf16>, vector<16x16xbf16>, vector<16x16xf32> -> vector<16x16xf32>
    %699 = arith.addf %695, %698 : vector<16x16xf32>
    %c4_626 = arith.constant 4 : index
    %c0_627 = arith.constant 0 : index
    %c0_628 = arith.constant 0 : index
    %700 = vector.load %arg6[%c4_626, %c0_627, %c0_628] : memref<9x16x16xbf16, #tpu.memory_space<vmem>>, vector<1x16x16xbf16>
    %701 = vector.shape_cast %700 : vector<1x16x16xbf16> to vector<16x16xbf16>
    %cst_629 = arith.constant dense<0.000000e+00> : vector<16x16xf32>
    %702 = tpu.matmul %701, %652, %cst_629 {dimension_numbers = #tpu.dot_dimension_numbers<[1], [0], [0], [1], [0, 0, 1, 1], [], []>} : vector<16x16xbf16>, vector<16x16xbf16>, vector<16x16xf32> -> vector<16x16xf32>
    %703 = arith.addf %699, %702 : vector<16x16xf32>
    %c5_630 = arith.constant 5 : index
    %c0_631 = arith.constant 0 : index
    %c0_632 = arith.constant 0 : index
    %704 = vector.load %arg6[%c5_630, %c0_631, %c0_632] : memref<9x16x16xbf16, #tpu.memory_space<vmem>>, vector<1x16x16xbf16>
    %705 = vector.shape_cast %704 : vector<1x16x16xbf16> to vector<16x16xbf16>
    %cst_633 = arith.constant dense<0.000000e+00> : vector<16x16xf32>
    %706 = tpu.matmul %705, %672, %cst_633 {dimension_numbers = #tpu.dot_dimension_numbers<[1], [0], [0], [1], [0, 0, 1, 1], [], []>} : vector<16x16xbf16>, vector<16x16xbf16>, vector<16x16xf32> -> vector<16x16xf32>
    %707 = arith.addf %703, %706 : vector<16x16xf32>
    %c6_634 = arith.constant 6 : index
    %c0_635 = arith.constant 0 : index
    %c0_636 = arith.constant 0 : index
    %708 = vector.load %arg6[%c6_634, %c0_635, %c0_636] : memref<9x16x16xbf16, #tpu.memory_space<vmem>>, vector<1x16x16xbf16>
    %709 = vector.shape_cast %708 : vector<1x16x16xbf16> to vector<16x16xbf16>
    %cst_637 = arith.constant dense<0.000000e+00> : vector<16x16xf32>
    %710 = tpu.matmul %709, %676, %cst_637 {dimension_numbers = #tpu.dot_dimension_numbers<[1], [0], [0], [1], [0, 0, 1, 1], [], []>} : vector<16x16xbf16>, vector<16x16xbf16>, vector<16x16xf32> -> vector<16x16xf32>
    %711 = arith.addf %707, %710 : vector<16x16xf32>
    %c7_638 = arith.constant 7 : index
    %c0_639 = arith.constant 0 : index
    %c0_640 = arith.constant 0 : index
    %712 = vector.load %arg6[%c7_638, %c0_639, %c0_640] : memref<9x16x16xbf16, #tpu.memory_space<vmem>>, vector<1x16x16xbf16>
    %713 = vector.shape_cast %712 : vector<1x16x16xbf16> to vector<16x16xbf16>
    %cst_641 = arith.constant dense<0.000000e+00> : vector<16x16xf32>
    %714 = tpu.matmul %713, %680, %cst_641 {dimension_numbers = #tpu.dot_dimension_numbers<[1], [0], [0], [1], [0, 0, 1, 1], [], []>} : vector<16x16xbf16>, vector<16x16xbf16>, vector<16x16xf32> -> vector<16x16xf32>
    %715 = arith.addf %711, %714 : vector<16x16xf32>
    %c8_642 = arith.constant 8 : index
    %c0_643 = arith.constant 0 : index
    %c0_644 = arith.constant 0 : index
    %716 = vector.load %arg6[%c8_642, %c0_643, %c0_644] : memref<9x16x16xbf16, #tpu.memory_space<vmem>>, vector<1x16x16xbf16>
    %717 = vector.shape_cast %716 : vector<1x16x16xbf16> to vector<16x16xbf16>
    %cst_645 = arith.constant dense<0.000000e+00> : vector<16x16xf32>
    %718 = tpu.matmul %717, %684, %cst_645 {dimension_numbers = #tpu.dot_dimension_numbers<[1], [0], [0], [1], [0, 0, 1, 1], [], []>} : vector<16x16xbf16>, vector<16x16xbf16>, vector<16x16xf32> -> vector<16x16xf32>
    %719 = arith.addf %715, %718 : vector<16x16xf32>
    %c0_646 = arith.constant 0 : index
    %c0_647 = arith.constant 0 : index
    %720 = vector.load %arg7[%c0_646, %c0_647] : memref<16x1xf32, #tpu.memory_space<vmem>>, vector<16x1xf32>
    %721 = vector.broadcast %720 : vector<16x1xf32> to vector<16x16xf32>
    %722 = arith.addf %719, %721 : vector<16x16xf32>
    %cst_648 = arith.constant 0.000000e+00 : f32
    %723 = vector.broadcast %cst_648 : f32 to vector<16x16xf32>
    %724 = arith.maximumf %722, %723 : vector<16x16xf32>
    %725 = arith.truncf %724 : vector<16x16xf32> to vector<16x16xbf16>
    %c0_649 = arith.constant 0 : index
    %c0_650 = arith.constant 0 : index
    %726 = vector.load %arg18[%c0_649, %c0_650] : memref<16x64xbf16, #tpu.memory_space<vmem>>, vector<16x64xbf16>
    %cst_651 = arith.constant dense<0.000000e+00> : vector<16x64xf32>
    %727 = tpu.matmul %725, %726, %cst_651 {dimension_numbers = #tpu.dot_dimension_numbers<[1], [0], [0], [1], [0, 0, 1, 1], [], []>} : vector<16x16xbf16>, vector<16x64xbf16>, vector<16x64xf32> -> vector<16x64xf32>
    %728 = arith.truncf %727 : vector<16x64xf32> to vector<16x64xbf16>
    %c0_652 = arith.constant 0 : index
    %c0_653 = arith.constant 0 : index
    %c0_654 = arith.constant 0 : index
    %729 = vector.load %arg14[%c0_652, %c0_653, %c0_654] : memref<9x64x64xbf16, #tpu.memory_space<vmem>>, vector<1x64x64xbf16>
    %730 = vector.shape_cast %729 : vector<1x64x64xbf16> to vector<64x64xbf16>
    %cst_655 = arith.constant dense<0.000000e+00> : vector<16x64xf32>
    %731 = tpu.matmul %728, %730, %cst_655 {dimension_numbers = #tpu.dot_dimension_numbers<[1], [0], [0], [1], [0, 0, 1, 1], [], []>} : vector<16x64xbf16>, vector<64x64xbf16>, vector<16x64xf32> -> vector<16x64xf32>
    %732 = arith.truncf %731 : vector<16x64xf32> to vector<16x64xbf16>
    %c1_656 = arith.constant 1 : index
    %c0_657 = arith.constant 0 : index
    %c0_658 = arith.constant 0 : index
    %733 = vector.load %arg14[%c1_656, %c0_657, %c0_658] : memref<9x64x64xbf16, #tpu.memory_space<vmem>>, vector<1x64x64xbf16>
    %734 = vector.shape_cast %733 : vector<1x64x64xbf16> to vector<64x64xbf16>
    %cst_659 = arith.constant dense<0.000000e+00> : vector<16x64xf32>
    %735 = tpu.matmul %728, %734, %cst_659 {dimension_numbers = #tpu.dot_dimension_numbers<[1], [0], [0], [1], [0, 0, 1, 1], [], []>} : vector<16x64xbf16>, vector<64x64xbf16>, vector<16x64xf32> -> vector<16x64xf32>
    %736 = arith.truncf %735 : vector<16x64xf32> to vector<16x64xbf16>
    %c2_660 = arith.constant 2 : index
    %c0_661 = arith.constant 0 : index
    %c0_662 = arith.constant 0 : index
    %737 = vector.load %arg14[%c2_660, %c0_661, %c0_662] : memref<9x64x64xbf16, #tpu.memory_space<vmem>>, vector<1x64x64xbf16>
    %738 = vector.shape_cast %737 : vector<1x64x64xbf16> to vector<64x64xbf16>
    %cst_663 = arith.constant dense<0.000000e+00> : vector<16x64xf32>
    %739 = tpu.matmul %728, %738, %cst_663 {dimension_numbers = #tpu.dot_dimension_numbers<[1], [0], [0], [1], [0, 0, 1, 1], [], []>} : vector<16x64xbf16>, vector<64x64xbf16>, vector<16x64xf32> -> vector<16x64xf32>
    %740 = arith.truncf %739 : vector<16x64xf32> to vector<16x64xbf16>
    %c3_664 = arith.constant 3 : index
    %c0_665 = arith.constant 0 : index
    %c0_666 = arith.constant 0 : index
    %741 = vector.load %arg14[%c3_664, %c0_665, %c0_666] : memref<9x64x64xbf16, #tpu.memory_space<vmem>>, vector<1x64x64xbf16>
    %742 = vector.shape_cast %741 : vector<1x64x64xbf16> to vector<64x64xbf16>
    %cst_667 = arith.constant dense<0.000000e+00> : vector<16x64xf32>
    %743 = tpu.matmul %728, %742, %cst_667 {dimension_numbers = #tpu.dot_dimension_numbers<[1], [0], [0], [1], [0, 0, 1, 1], [], []>} : vector<16x64xbf16>, vector<64x64xbf16>, vector<16x64xf32> -> vector<16x64xf32>
    %744 = arith.truncf %743 : vector<16x64xf32> to vector<16x64xbf16>
    %c5_668 = arith.constant 5 : index
    %c0_669 = arith.constant 0 : index
    %c0_670 = arith.constant 0 : index
    %745 = vector.load %arg14[%c5_668, %c0_669, %c0_670] : memref<9x64x64xbf16, #tpu.memory_space<vmem>>, vector<1x64x64xbf16>
    %746 = vector.shape_cast %745 : vector<1x64x64xbf16> to vector<64x64xbf16>
    %cst_671 = arith.constant dense<0.000000e+00> : vector<16x64xf32>
    %747 = tpu.matmul %728, %746, %cst_671 {dimension_numbers = #tpu.dot_dimension_numbers<[1], [0], [0], [1], [0, 0, 1, 1], [], []>} : vector<16x64xbf16>, vector<64x64xbf16>, vector<16x64xf32> -> vector<16x64xf32>
    %748 = arith.truncf %747 : vector<16x64xf32> to vector<16x64xbf16>
    %c6_672 = arith.constant 6 : index
    %c0_673 = arith.constant 0 : index
    %c0_674 = arith.constant 0 : index
    %749 = vector.load %arg14[%c6_672, %c0_673, %c0_674] : memref<9x64x64xbf16, #tpu.memory_space<vmem>>, vector<1x64x64xbf16>
    %750 = vector.shape_cast %749 : vector<1x64x64xbf16> to vector<64x64xbf16>
    %cst_675 = arith.constant dense<0.000000e+00> : vector<16x64xf32>
    %751 = tpu.matmul %728, %750, %cst_675 {dimension_numbers = #tpu.dot_dimension_numbers<[1], [0], [0], [1], [0, 0, 1, 1], [], []>} : vector<16x64xbf16>, vector<64x64xbf16>, vector<16x64xf32> -> vector<16x64xf32>
    %752 = arith.truncf %751 : vector<16x64xf32> to vector<16x64xbf16>
    %c7_676 = arith.constant 7 : index
    %c0_677 = arith.constant 0 : index
    %c0_678 = arith.constant 0 : index
    %753 = vector.load %arg14[%c7_676, %c0_677, %c0_678] : memref<9x64x64xbf16, #tpu.memory_space<vmem>>, vector<1x64x64xbf16>
    %754 = vector.shape_cast %753 : vector<1x64x64xbf16> to vector<64x64xbf16>
    %cst_679 = arith.constant dense<0.000000e+00> : vector<16x64xf32>
    %755 = tpu.matmul %728, %754, %cst_679 {dimension_numbers = #tpu.dot_dimension_numbers<[1], [0], [0], [1], [0, 0, 1, 1], [], []>} : vector<16x64xbf16>, vector<64x64xbf16>, vector<16x64xf32> -> vector<16x64xf32>
    %756 = arith.truncf %755 : vector<16x64xf32> to vector<16x64xbf16>
    %c8_680 = arith.constant 8 : index
    %c0_681 = arith.constant 0 : index
    %c0_682 = arith.constant 0 : index
    %757 = vector.load %arg14[%c8_680, %c0_681, %c0_682] : memref<9x64x64xbf16, #tpu.memory_space<vmem>>, vector<1x64x64xbf16>
    %758 = vector.shape_cast %757 : vector<1x64x64xbf16> to vector<64x64xbf16>
    %cst_683 = arith.constant dense<0.000000e+00> : vector<16x64xf32>
    %759 = tpu.matmul %728, %758, %cst_683 {dimension_numbers = #tpu.dot_dimension_numbers<[1], [0], [0], [1], [0, 0, 1, 1], [], []>} : vector<16x64xbf16>, vector<64x64xbf16>, vector<16x64xf32> -> vector<16x64xf32>
    %760 = arith.truncf %759 : vector<16x64xf32> to vector<16x64xbf16>
    %c0_684 = arith.constant 0 : index
    %c0_685 = arith.constant 0 : index
    %c0_686 = arith.constant 0 : index
    %761 = vector.load %arg8[%c0_684, %c0_685, %c0_686] : memref<9x8x16xbf16, #tpu.memory_space<vmem>>, vector<1x8x16xbf16>
    %762 = vector.shape_cast %761 : vector<1x8x16xbf16> to vector<8x16xbf16>
    %cst_687 = arith.constant dense<0.000000e+00> : vector<8x64xf32>
    %763 = tpu.matmul %762, %732, %cst_687 {dimension_numbers = #tpu.dot_dimension_numbers<[1], [0], [0], [1], [0, 0, 1, 1], [], []>} : vector<8x16xbf16>, vector<16x64xbf16>, vector<8x64xf32> -> vector<8x64xf32>
    %c1_688 = arith.constant 1 : index
    %c0_689 = arith.constant 0 : index
    %c0_690 = arith.constant 0 : index
    %764 = vector.load %arg8[%c1_688, %c0_689, %c0_690] : memref<9x8x16xbf16, #tpu.memory_space<vmem>>, vector<1x8x16xbf16>
    %765 = vector.shape_cast %764 : vector<1x8x16xbf16> to vector<8x16xbf16>
    %cst_691 = arith.constant dense<0.000000e+00> : vector<8x64xf32>
    %766 = tpu.matmul %765, %736, %cst_691 {dimension_numbers = #tpu.dot_dimension_numbers<[1], [0], [0], [1], [0, 0, 1, 1], [], []>} : vector<8x16xbf16>, vector<16x64xbf16>, vector<8x64xf32> -> vector<8x64xf32>
    %767 = arith.addf %763, %766 : vector<8x64xf32>
    %c2_692 = arith.constant 2 : index
    %c0_693 = arith.constant 0 : index
    %c0_694 = arith.constant 0 : index
    %768 = vector.load %arg8[%c2_692, %c0_693, %c0_694] : memref<9x8x16xbf16, #tpu.memory_space<vmem>>, vector<1x8x16xbf16>
    %769 = vector.shape_cast %768 : vector<1x8x16xbf16> to vector<8x16xbf16>
    %cst_695 = arith.constant dense<0.000000e+00> : vector<8x64xf32>
    %770 = tpu.matmul %769, %740, %cst_695 {dimension_numbers = #tpu.dot_dimension_numbers<[1], [0], [0], [1], [0, 0, 1, 1], [], []>} : vector<8x16xbf16>, vector<16x64xbf16>, vector<8x64xf32> -> vector<8x64xf32>
    %771 = arith.addf %767, %770 : vector<8x64xf32>
    %c3_696 = arith.constant 3 : index
    %c0_697 = arith.constant 0 : index
    %c0_698 = arith.constant 0 : index
    %772 = vector.load %arg8[%c3_696, %c0_697, %c0_698] : memref<9x8x16xbf16, #tpu.memory_space<vmem>>, vector<1x8x16xbf16>
    %773 = vector.shape_cast %772 : vector<1x8x16xbf16> to vector<8x16xbf16>
    %cst_699 = arith.constant dense<0.000000e+00> : vector<8x64xf32>
    %774 = tpu.matmul %773, %744, %cst_699 {dimension_numbers = #tpu.dot_dimension_numbers<[1], [0], [0], [1], [0, 0, 1, 1], [], []>} : vector<8x16xbf16>, vector<16x64xbf16>, vector<8x64xf32> -> vector<8x64xf32>
    %775 = arith.addf %771, %774 : vector<8x64xf32>
    %c4_700 = arith.constant 4 : index
    %c0_701 = arith.constant 0 : index
    %c0_702 = arith.constant 0 : index
    %776 = vector.load %arg8[%c4_700, %c0_701, %c0_702] : memref<9x8x16xbf16, #tpu.memory_space<vmem>>, vector<1x8x16xbf16>
    %777 = vector.shape_cast %776 : vector<1x8x16xbf16> to vector<8x16xbf16>
    %cst_703 = arith.constant dense<0.000000e+00> : vector<8x64xf32>
    %778 = tpu.matmul %777, %728, %cst_703 {dimension_numbers = #tpu.dot_dimension_numbers<[1], [0], [0], [1], [0, 0, 1, 1], [], []>} : vector<8x16xbf16>, vector<16x64xbf16>, vector<8x64xf32> -> vector<8x64xf32>
    %779 = arith.addf %775, %778 : vector<8x64xf32>
    %c5_704 = arith.constant 5 : index
    %c0_705 = arith.constant 0 : index
    %c0_706 = arith.constant 0 : index
    %780 = vector.load %arg8[%c5_704, %c0_705, %c0_706] : memref<9x8x16xbf16, #tpu.memory_space<vmem>>, vector<1x8x16xbf16>
    %781 = vector.shape_cast %780 : vector<1x8x16xbf16> to vector<8x16xbf16>
    %cst_707 = arith.constant dense<0.000000e+00> : vector<8x64xf32>
    %782 = tpu.matmul %781, %748, %cst_707 {dimension_numbers = #tpu.dot_dimension_numbers<[1], [0], [0], [1], [0, 0, 1, 1], [], []>} : vector<8x16xbf16>, vector<16x64xbf16>, vector<8x64xf32> -> vector<8x64xf32>
    %783 = arith.addf %779, %782 : vector<8x64xf32>
    %c6_708 = arith.constant 6 : index
    %c0_709 = arith.constant 0 : index
    %c0_710 = arith.constant 0 : index
    %784 = vector.load %arg8[%c6_708, %c0_709, %c0_710] : memref<9x8x16xbf16, #tpu.memory_space<vmem>>, vector<1x8x16xbf16>
    %785 = vector.shape_cast %784 : vector<1x8x16xbf16> to vector<8x16xbf16>
    %cst_711 = arith.constant dense<0.000000e+00> : vector<8x64xf32>
    %786 = tpu.matmul %785, %752, %cst_711 {dimension_numbers = #tpu.dot_dimension_numbers<[1], [0], [0], [1], [0, 0, 1, 1], [], []>} : vector<8x16xbf16>, vector<16x64xbf16>, vector<8x64xf32> -> vector<8x64xf32>
    %787 = arith.addf %783, %786 : vector<8x64xf32>
    %c7_712 = arith.constant 7 : index
    %c0_713 = arith.constant 0 : index
    %c0_714 = arith.constant 0 : index
    %788 = vector.load %arg8[%c7_712, %c0_713, %c0_714] : memref<9x8x16xbf16, #tpu.memory_space<vmem>>, vector<1x8x16xbf16>
    %789 = vector.shape_cast %788 : vector<1x8x16xbf16> to vector<8x16xbf16>
    %cst_715 = arith.constant dense<0.000000e+00> : vector<8x64xf32>
    %790 = tpu.matmul %789, %756, %cst_715 {dimension_numbers = #tpu.dot_dimension_numbers<[1], [0], [0], [1], [0, 0, 1, 1], [], []>} : vector<8x16xbf16>, vector<16x64xbf16>, vector<8x64xf32> -> vector<8x64xf32>
    %791 = arith.addf %787, %790 : vector<8x64xf32>
    %c8_716 = arith.constant 8 : index
    %c0_717 = arith.constant 0 : index
    %c0_718 = arith.constant 0 : index
    %792 = vector.load %arg8[%c8_716, %c0_717, %c0_718] : memref<9x8x16xbf16, #tpu.memory_space<vmem>>, vector<1x8x16xbf16>
    %793 = vector.shape_cast %792 : vector<1x8x16xbf16> to vector<8x16xbf16>
    %cst_719 = arith.constant dense<0.000000e+00> : vector<8x64xf32>
    %794 = tpu.matmul %793, %760, %cst_719 {dimension_numbers = #tpu.dot_dimension_numbers<[1], [0], [0], [1], [0, 0, 1, 1], [], []>} : vector<8x16xbf16>, vector<16x64xbf16>, vector<8x64xf32> -> vector<8x64xf32>
    %795 = arith.addf %791, %794 : vector<8x64xf32>
    %c0_720 = arith.constant 0 : index
    %c0_721 = arith.constant 0 : index
    %c0_722 = arith.constant 0 : index
    %796 = vector.load %arg9[%c0_720, %c0_721, %c0_722] : memref<9x8x8xbf16, #tpu.memory_space<vmem>>, vector<1x8x8xbf16>
    %797 = vector.shape_cast %796 : vector<1x8x8xbf16> to vector<8x8xbf16>
    %cst_723 = arith.constant dense<0.000000e+00> : vector<8x64xf32>
    %798 = tpu.matmul %797, %581, %cst_723 {dimension_numbers = #tpu.dot_dimension_numbers<[1], [0], [0], [1], [0, 0, 1, 1], [], []>} : vector<8x8xbf16>, vector<8x64xbf16>, vector<8x64xf32> -> vector<8x64xf32>
    %c1_724 = arith.constant 1 : index
    %c0_725 = arith.constant 0 : index
    %c0_726 = arith.constant 0 : index
    %799 = vector.load %arg9[%c1_724, %c0_725, %c0_726] : memref<9x8x8xbf16, #tpu.memory_space<vmem>>, vector<1x8x8xbf16>
    %800 = vector.shape_cast %799 : vector<1x8x8xbf16> to vector<8x8xbf16>
    %cst_727 = arith.constant dense<0.000000e+00> : vector<8x64xf32>
    %801 = tpu.matmul %800, %585, %cst_727 {dimension_numbers = #tpu.dot_dimension_numbers<[1], [0], [0], [1], [0, 0, 1, 1], [], []>} : vector<8x8xbf16>, vector<8x64xbf16>, vector<8x64xf32> -> vector<8x64xf32>
    %802 = arith.addf %798, %801 : vector<8x64xf32>
    %c2_728 = arith.constant 2 : index
    %c0_729 = arith.constant 0 : index
    %c0_730 = arith.constant 0 : index
    %803 = vector.load %arg9[%c2_728, %c0_729, %c0_730] : memref<9x8x8xbf16, #tpu.memory_space<vmem>>, vector<1x8x8xbf16>
    %804 = vector.shape_cast %803 : vector<1x8x8xbf16> to vector<8x8xbf16>
    %cst_731 = arith.constant dense<0.000000e+00> : vector<8x64xf32>
    %805 = tpu.matmul %804, %589, %cst_731 {dimension_numbers = #tpu.dot_dimension_numbers<[1], [0], [0], [1], [0, 0, 1, 1], [], []>} : vector<8x8xbf16>, vector<8x64xbf16>, vector<8x64xf32> -> vector<8x64xf32>
    %806 = arith.addf %802, %805 : vector<8x64xf32>
    %c3_732 = arith.constant 3 : index
    %c0_733 = arith.constant 0 : index
    %c0_734 = arith.constant 0 : index
    %807 = vector.load %arg9[%c3_732, %c0_733, %c0_734] : memref<9x8x8xbf16, #tpu.memory_space<vmem>>, vector<1x8x8xbf16>
    %808 = vector.shape_cast %807 : vector<1x8x8xbf16> to vector<8x8xbf16>
    %cst_735 = arith.constant dense<0.000000e+00> : vector<8x64xf32>
    %809 = tpu.matmul %808, %593, %cst_735 {dimension_numbers = #tpu.dot_dimension_numbers<[1], [0], [0], [1], [0, 0, 1, 1], [], []>} : vector<8x8xbf16>, vector<8x64xbf16>, vector<8x64xf32> -> vector<8x64xf32>
    %810 = arith.addf %806, %809 : vector<8x64xf32>
    %c4_736 = arith.constant 4 : index
    %c0_737 = arith.constant 0 : index
    %c0_738 = arith.constant 0 : index
    %811 = vector.load %arg9[%c4_736, %c0_737, %c0_738] : memref<9x8x8xbf16, #tpu.memory_space<vmem>>, vector<1x8x8xbf16>
    %812 = vector.shape_cast %811 : vector<1x8x8xbf16> to vector<8x8xbf16>
    %cst_739 = arith.constant dense<0.000000e+00> : vector<8x64xf32>
    %813 = tpu.matmul %812, %577, %cst_739 {dimension_numbers = #tpu.dot_dimension_numbers<[1], [0], [0], [1], [0, 0, 1, 1], [], []>} : vector<8x8xbf16>, vector<8x64xbf16>, vector<8x64xf32> -> vector<8x64xf32>
    %814 = arith.addf %810, %813 : vector<8x64xf32>
    %c5_740 = arith.constant 5 : index
    %c0_741 = arith.constant 0 : index
    %c0_742 = arith.constant 0 : index
    %815 = vector.load %arg9[%c5_740, %c0_741, %c0_742] : memref<9x8x8xbf16, #tpu.memory_space<vmem>>, vector<1x8x8xbf16>
    %816 = vector.shape_cast %815 : vector<1x8x8xbf16> to vector<8x8xbf16>
    %cst_743 = arith.constant dense<0.000000e+00> : vector<8x64xf32>
    %817 = tpu.matmul %816, %597, %cst_743 {dimension_numbers = #tpu.dot_dimension_numbers<[1], [0], [0], [1], [0, 0, 1, 1], [], []>} : vector<8x8xbf16>, vector<8x64xbf16>, vector<8x64xf32> -> vector<8x64xf32>
    %818 = arith.addf %814, %817 : vector<8x64xf32>
    %c6_744 = arith.constant 6 : index
    %c0_745 = arith.constant 0 : index
    %c0_746 = arith.constant 0 : index
    %819 = vector.load %arg9[%c6_744, %c0_745, %c0_746] : memref<9x8x8xbf16, #tpu.memory_space<vmem>>, vector<1x8x8xbf16>
    %820 = vector.shape_cast %819 : vector<1x8x8xbf16> to vector<8x8xbf16>
    %cst_747 = arith.constant dense<0.000000e+00> : vector<8x64xf32>
    %821 = tpu.matmul %820, %601, %cst_747 {dimension_numbers = #tpu.dot_dimension_numbers<[1], [0], [0], [1], [0, 0, 1, 1], [], []>} : vector<8x8xbf16>, vector<8x64xbf16>, vector<8x64xf32> -> vector<8x64xf32>
    %822 = arith.addf %818, %821 : vector<8x64xf32>
    %c7_748 = arith.constant 7 : index
    %c0_749 = arith.constant 0 : index
    %c0_750 = arith.constant 0 : index
    %823 = vector.load %arg9[%c7_748, %c0_749, %c0_750] : memref<9x8x8xbf16, #tpu.memory_space<vmem>>, vector<1x8x8xbf16>
    %824 = vector.shape_cast %823 : vector<1x8x8xbf16> to vector<8x8xbf16>
    %cst_751 = arith.constant dense<0.000000e+00> : vector<8x64xf32>
    %825 = tpu.matmul %824, %605, %cst_751 {dimension_numbers = #tpu.dot_dimension_numbers<[1], [0], [0], [1], [0, 0, 1, 1], [], []>} : vector<8x8xbf16>, vector<8x64xbf16>, vector<8x64xf32> -> vector<8x64xf32>
    %826 = arith.addf %822, %825 : vector<8x64xf32>
    %c8_752 = arith.constant 8 : index
    %c0_753 = arith.constant 0 : index
    %c0_754 = arith.constant 0 : index
    %827 = vector.load %arg9[%c8_752, %c0_753, %c0_754] : memref<9x8x8xbf16, #tpu.memory_space<vmem>>, vector<1x8x8xbf16>
    %828 = vector.shape_cast %827 : vector<1x8x8xbf16> to vector<8x8xbf16>
    %cst_755 = arith.constant dense<0.000000e+00> : vector<8x64xf32>
    %829 = tpu.matmul %828, %609, %cst_755 {dimension_numbers = #tpu.dot_dimension_numbers<[1], [0], [0], [1], [0, 0, 1, 1], [], []>} : vector<8x8xbf16>, vector<8x64xbf16>, vector<8x64xf32> -> vector<8x64xf32>
    %830 = arith.addf %826, %829 : vector<8x64xf32>
    %831 = arith.addf %795, %830 : vector<8x64xf32>
    %c0_756 = arith.constant 0 : index
    %c0_757 = arith.constant 0 : index
    %832 = vector.load %arg10[%c0_756, %c0_757] : memref<8x1xf32, #tpu.memory_space<vmem>>, vector<8x1xf32>
    %833 = vector.broadcast %832 : vector<8x1xf32> to vector<8x64xf32>
    %834 = arith.addf %831, %833 : vector<8x64xf32>
    %cst_758 = arith.constant 0.000000e+00 : f32
    %835 = vector.broadcast %cst_758 : f32 to vector<8x64xf32>
    %836 = arith.maximumf %834, %835 : vector<8x64xf32>
    %837 = arith.truncf %836 : vector<8x64xf32> to vector<8x64xbf16>
    %c0_759 = arith.constant 0 : index
    %c0_760 = arith.constant 0 : index
    %838 = vector.load %arg19[%c0_759, %c0_760] : memref<64x256xbf16, #tpu.memory_space<vmem>>, vector<64x256xbf16>
    %cst_761 = arith.constant dense<0.000000e+00> : vector<8x256xf32>
    %839 = tpu.matmul %837, %838, %cst_761 {dimension_numbers = #tpu.dot_dimension_numbers<[1], [0], [0], [1], [0, 0, 1, 1], [], []>} : vector<8x64xbf16>, vector<64x256xbf16>, vector<8x256xf32> -> vector<8x256xf32>
    %c17_i32_762 = arith.constant 17 : i32
    %840 = tpu.dynamic_rotate %839 by %c17_i32_762 dim 1 : vector<8x256xf32>, i32 -> vector<8x256xf32>
    %c0_763 = arith.constant 0 : index
    %c0_764 = arith.constant 0 : index
    %c0_765 = arith.constant 0 : index
    %841 = vector.load %arg20[%c0_763, %c0_764, %c0_765] : memref<9x1x256xf32, #tpu.memory_space<vmem>>, vector<1x1x256xf32>
    %842 = vector.shape_cast %841 : vector<1x1x256xf32> to vector<1x256xf32>
    %843 = vector.broadcast %842 : vector<1x256xf32> to vector<8x256xf32>
    %844 = arith.mulf %840, %843 : vector<8x256xf32>
    %845 = arith.truncf %844 : vector<8x256xf32> to vector<8x256xbf16>
    %c16_i32_766 = arith.constant 16 : i32
    %846 = tpu.dynamic_rotate %839 by %c16_i32_766 dim 1 : vector<8x256xf32>, i32 -> vector<8x256xf32>
    %c1_767 = arith.constant 1 : index
    %c0_768 = arith.constant 0 : index
    %c0_769 = arith.constant 0 : index
    %847 = vector.load %arg20[%c1_767, %c0_768, %c0_769] : memref<9x1x256xf32, #tpu.memory_space<vmem>>, vector<1x1x256xf32>
    %848 = vector.shape_cast %847 : vector<1x1x256xf32> to vector<1x256xf32>
    %849 = vector.broadcast %848 : vector<1x256xf32> to vector<8x256xf32>
    %850 = arith.mulf %846, %849 : vector<8x256xf32>
    %851 = arith.truncf %850 : vector<8x256xf32> to vector<8x256xbf16>
    %c15_i32_770 = arith.constant 15 : i32
    %852 = tpu.dynamic_rotate %839 by %c15_i32_770 dim 1 : vector<8x256xf32>, i32 -> vector<8x256xf32>
    %c2_771 = arith.constant 2 : index
    %c0_772 = arith.constant 0 : index
    %c0_773 = arith.constant 0 : index
    %853 = vector.load %arg20[%c2_771, %c0_772, %c0_773] : memref<9x1x256xf32, #tpu.memory_space<vmem>>, vector<1x1x256xf32>
    %854 = vector.shape_cast %853 : vector<1x1x256xf32> to vector<1x256xf32>
    %855 = vector.broadcast %854 : vector<1x256xf32> to vector<8x256xf32>
    %856 = arith.mulf %852, %855 : vector<8x256xf32>
    %857 = arith.truncf %856 : vector<8x256xf32> to vector<8x256xbf16>
    %c1_i32_774 = arith.constant 1 : i32
    %858 = tpu.dynamic_rotate %839 by %c1_i32_774 dim 1 : vector<8x256xf32>, i32 -> vector<8x256xf32>
    %c3_775 = arith.constant 3 : index
    %c0_776 = arith.constant 0 : index
    %c0_777 = arith.constant 0 : index
    %859 = vector.load %arg20[%c3_775, %c0_776, %c0_777] : memref<9x1x256xf32, #tpu.memory_space<vmem>>, vector<1x1x256xf32>
    %860 = vector.shape_cast %859 : vector<1x1x256xf32> to vector<1x256xf32>
    %861 = vector.broadcast %860 : vector<1x256xf32> to vector<8x256xf32>
    %862 = arith.mulf %858, %861 : vector<8x256xf32>
    %863 = arith.truncf %862 : vector<8x256xf32> to vector<8x256xbf16>
    %864 = arith.truncf %839 : vector<8x256xf32> to vector<8x256xbf16>
    %c255_i32_778 = arith.constant 255 : i32
    %865 = tpu.dynamic_rotate %839 by %c255_i32_778 dim 1 : vector<8x256xf32>, i32 -> vector<8x256xf32>
    %c5_779 = arith.constant 5 : index
    %c0_780 = arith.constant 0 : index
    %c0_781 = arith.constant 0 : index
    %866 = vector.load %arg20[%c5_779, %c0_780, %c0_781] : memref<9x1x256xf32, #tpu.memory_space<vmem>>, vector<1x1x256xf32>
    %867 = vector.shape_cast %866 : vector<1x1x256xf32> to vector<1x256xf32>
    %868 = vector.broadcast %867 : vector<1x256xf32> to vector<8x256xf32>
    %869 = arith.mulf %865, %868 : vector<8x256xf32>
    %870 = arith.truncf %869 : vector<8x256xf32> to vector<8x256xbf16>
    %c241_i32_782 = arith.constant 241 : i32
    %871 = tpu.dynamic_rotate %839 by %c241_i32_782 dim 1 : vector<8x256xf32>, i32 -> vector<8x256xf32>
    %c6_783 = arith.constant 6 : index
    %c0_784 = arith.constant 0 : index
    %c0_785 = arith.constant 0 : index
    %872 = vector.load %arg20[%c6_783, %c0_784, %c0_785] : memref<9x1x256xf32, #tpu.memory_space<vmem>>, vector<1x1x256xf32>
    %873 = vector.shape_cast %872 : vector<1x1x256xf32> to vector<1x256xf32>
    %874 = vector.broadcast %873 : vector<1x256xf32> to vector<8x256xf32>
    %875 = arith.mulf %871, %874 : vector<8x256xf32>
    %876 = arith.truncf %875 : vector<8x256xf32> to vector<8x256xbf16>
    %c240_i32_786 = arith.constant 240 : i32
    %877 = tpu.dynamic_rotate %839 by %c240_i32_786 dim 1 : vector<8x256xf32>, i32 -> vector<8x256xf32>
    %c7_787 = arith.constant 7 : index
    %c0_788 = arith.constant 0 : index
    %c0_789 = arith.constant 0 : index
    %878 = vector.load %arg20[%c7_787, %c0_788, %c0_789] : memref<9x1x256xf32, #tpu.memory_space<vmem>>, vector<1x1x256xf32>
    %879 = vector.shape_cast %878 : vector<1x1x256xf32> to vector<1x256xf32>
    %880 = vector.broadcast %879 : vector<1x256xf32> to vector<8x256xf32>
    %881 = arith.mulf %877, %880 : vector<8x256xf32>
    %882 = arith.truncf %881 : vector<8x256xf32> to vector<8x256xbf16>
    %c239_i32_790 = arith.constant 239 : i32
    %883 = tpu.dynamic_rotate %839 by %c239_i32_790 dim 1 : vector<8x256xf32>, i32 -> vector<8x256xf32>
    %c8_791 = arith.constant 8 : index
    %c0_792 = arith.constant 0 : index
    %c0_793 = arith.constant 0 : index
    %884 = vector.load %arg20[%c8_791, %c0_792, %c0_793] : memref<9x1x256xf32, #tpu.memory_space<vmem>>, vector<1x1x256xf32>
    %885 = vector.shape_cast %884 : vector<1x1x256xf32> to vector<1x256xf32>
    %886 = vector.broadcast %885 : vector<1x256xf32> to vector<8x256xf32>
    %887 = arith.mulf %883, %886 : vector<8x256xf32>
    %888 = arith.truncf %887 : vector<8x256xf32> to vector<8x256xbf16>
    %c0_794 = arith.constant 0 : index
    %c0_795 = arith.constant 0 : index
    %c0_796 = arith.constant 0 : index
    %889 = vector.load %arg11[%c0_794, %c0_795, %c0_796] : memref<9x4x8xbf16, #tpu.memory_space<vmem>>, vector<1x4x8xbf16>
    %890 = vector.shape_cast %889 : vector<1x4x8xbf16> to vector<4x8xbf16>
    %cst_797 = arith.constant dense<0.000000e+00> : vector<4x256xf32>
    %891 = tpu.matmul %890, %845, %cst_797 {dimension_numbers = #tpu.dot_dimension_numbers<[1], [0], [0], [1], [0, 0, 1, 1], [], []>} : vector<4x8xbf16>, vector<8x256xbf16>, vector<4x256xf32> -> vector<4x256xf32>
    %c1_798 = arith.constant 1 : index
    %c0_799 = arith.constant 0 : index
    %c0_800 = arith.constant 0 : index
    %892 = vector.load %arg11[%c1_798, %c0_799, %c0_800] : memref<9x4x8xbf16, #tpu.memory_space<vmem>>, vector<1x4x8xbf16>
    %893 = vector.shape_cast %892 : vector<1x4x8xbf16> to vector<4x8xbf16>
    %cst_801 = arith.constant dense<0.000000e+00> : vector<4x256xf32>
    %894 = tpu.matmul %893, %851, %cst_801 {dimension_numbers = #tpu.dot_dimension_numbers<[1], [0], [0], [1], [0, 0, 1, 1], [], []>} : vector<4x8xbf16>, vector<8x256xbf16>, vector<4x256xf32> -> vector<4x256xf32>
    %895 = arith.addf %891, %894 : vector<4x256xf32>
    %c2_802 = arith.constant 2 : index
    %c0_803 = arith.constant 0 : index
    %c0_804 = arith.constant 0 : index
    %896 = vector.load %arg11[%c2_802, %c0_803, %c0_804] : memref<9x4x8xbf16, #tpu.memory_space<vmem>>, vector<1x4x8xbf16>
    %897 = vector.shape_cast %896 : vector<1x4x8xbf16> to vector<4x8xbf16>
    %cst_805 = arith.constant dense<0.000000e+00> : vector<4x256xf32>
    %898 = tpu.matmul %897, %857, %cst_805 {dimension_numbers = #tpu.dot_dimension_numbers<[1], [0], [0], [1], [0, 0, 1, 1], [], []>} : vector<4x8xbf16>, vector<8x256xbf16>, vector<4x256xf32> -> vector<4x256xf32>
    %899 = arith.addf %895, %898 : vector<4x256xf32>
    %c3_806 = arith.constant 3 : index
    %c0_807 = arith.constant 0 : index
    %c0_808 = arith.constant 0 : index
    %900 = vector.load %arg11[%c3_806, %c0_807, %c0_808] : memref<9x4x8xbf16, #tpu.memory_space<vmem>>, vector<1x4x8xbf16>
    %901 = vector.shape_cast %900 : vector<1x4x8xbf16> to vector<4x8xbf16>
    %cst_809 = arith.constant dense<0.000000e+00> : vector<4x256xf32>
    %902 = tpu.matmul %901, %863, %cst_809 {dimension_numbers = #tpu.dot_dimension_numbers<[1], [0], [0], [1], [0, 0, 1, 1], [], []>} : vector<4x8xbf16>, vector<8x256xbf16>, vector<4x256xf32> -> vector<4x256xf32>
    %903 = arith.addf %899, %902 : vector<4x256xf32>
    %c4_810 = arith.constant 4 : index
    %c0_811 = arith.constant 0 : index
    %c0_812 = arith.constant 0 : index
    %904 = vector.load %arg11[%c4_810, %c0_811, %c0_812] : memref<9x4x8xbf16, #tpu.memory_space<vmem>>, vector<1x4x8xbf16>
    %905 = vector.shape_cast %904 : vector<1x4x8xbf16> to vector<4x8xbf16>
    %cst_813 = arith.constant dense<0.000000e+00> : vector<4x256xf32>
    %906 = tpu.matmul %905, %864, %cst_813 {dimension_numbers = #tpu.dot_dimension_numbers<[1], [0], [0], [1], [0, 0, 1, 1], [], []>} : vector<4x8xbf16>, vector<8x256xbf16>, vector<4x256xf32> -> vector<4x256xf32>
    %907 = arith.addf %903, %906 : vector<4x256xf32>
    %c5_814 = arith.constant 5 : index
    %c0_815 = arith.constant 0 : index
    %c0_816 = arith.constant 0 : index
    %908 = vector.load %arg11[%c5_814, %c0_815, %c0_816] : memref<9x4x8xbf16, #tpu.memory_space<vmem>>, vector<1x4x8xbf16>
    %909 = vector.shape_cast %908 : vector<1x4x8xbf16> to vector<4x8xbf16>
    %cst_817 = arith.constant dense<0.000000e+00> : vector<4x256xf32>
    %910 = tpu.matmul %909, %870, %cst_817 {dimension_numbers = #tpu.dot_dimension_numbers<[1], [0], [0], [1], [0, 0, 1, 1], [], []>} : vector<4x8xbf16>, vector<8x256xbf16>, vector<4x256xf32> -> vector<4x256xf32>
    %911 = arith.addf %907, %910 : vector<4x256xf32>
    %c6_818 = arith.constant 6 : index
    %c0_819 = arith.constant 0 : index
    %c0_820 = arith.constant 0 : index
    %912 = vector.load %arg11[%c6_818, %c0_819, %c0_820] : memref<9x4x8xbf16, #tpu.memory_space<vmem>>, vector<1x4x8xbf16>
    %913 = vector.shape_cast %912 : vector<1x4x8xbf16> to vector<4x8xbf16>
    %cst_821 = arith.constant dense<0.000000e+00> : vector<4x256xf32>
    %914 = tpu.matmul %913, %876, %cst_821 {dimension_numbers = #tpu.dot_dimension_numbers<[1], [0], [0], [1], [0, 0, 1, 1], [], []>} : vector<4x8xbf16>, vector<8x256xbf16>, vector<4x256xf32> -> vector<4x256xf32>
    %915 = arith.addf %911, %914 : vector<4x256xf32>
    %c7_822 = arith.constant 7 : index
    %c0_823 = arith.constant 0 : index
    %c0_824 = arith.constant 0 : index
    %916 = vector.load %arg11[%c7_822, %c0_823, %c0_824] : memref<9x4x8xbf16, #tpu.memory_space<vmem>>, vector<1x4x8xbf16>
    %917 = vector.shape_cast %916 : vector<1x4x8xbf16> to vector<4x8xbf16>
    %cst_825 = arith.constant dense<0.000000e+00> : vector<4x256xf32>
    %918 = tpu.matmul %917, %882, %cst_825 {dimension_numbers = #tpu.dot_dimension_numbers<[1], [0], [0], [1], [0, 0, 1, 1], [], []>} : vector<4x8xbf16>, vector<8x256xbf16>, vector<4x256xf32> -> vector<4x256xf32>
    %919 = arith.addf %915, %918 : vector<4x256xf32>
    %c8_826 = arith.constant 8 : index
    %c0_827 = arith.constant 0 : index
    %c0_828 = arith.constant 0 : index
    %920 = vector.load %arg11[%c8_826, %c0_827, %c0_828] : memref<9x4x8xbf16, #tpu.memory_space<vmem>>, vector<1x4x8xbf16>
    %921 = vector.shape_cast %920 : vector<1x4x8xbf16> to vector<4x8xbf16>
    %cst_829 = arith.constant dense<0.000000e+00> : vector<4x256xf32>
    %922 = tpu.matmul %921, %888, %cst_829 {dimension_numbers = #tpu.dot_dimension_numbers<[1], [0], [0], [1], [0, 0, 1, 1], [], []>} : vector<4x8xbf16>, vector<8x256xbf16>, vector<4x256xf32> -> vector<4x256xf32>
    %923 = arith.addf %919, %922 : vector<4x256xf32>
    %c0_830 = arith.constant 0 : index
    %c0_831 = arith.constant 0 : index
    %c0_832 = arith.constant 0 : index
    %924 = vector.load %arg12[%c0_830, %c0_831, %c0_832] : memref<9x4x4xbf16, #tpu.memory_space<vmem>>, vector<1x4x4xbf16>
    %925 = vector.shape_cast %924 : vector<1x4x4xbf16> to vector<4x4xbf16>
    %cst_833 = arith.constant dense<0.000000e+00> : vector<4x256xf32>
    %926 = tpu.matmul %925, %491, %cst_833 {dimension_numbers = #tpu.dot_dimension_numbers<[1], [0], [0], [1], [0, 0, 1, 1], [], []>} : vector<4x4xbf16>, vector<4x256xbf16>, vector<4x256xf32> -> vector<4x256xf32>
    %c1_834 = arith.constant 1 : index
    %c0_835 = arith.constant 0 : index
    %c0_836 = arith.constant 0 : index
    %927 = vector.load %arg12[%c1_834, %c0_835, %c0_836] : memref<9x4x4xbf16, #tpu.memory_space<vmem>>, vector<1x4x4xbf16>
    %928 = vector.shape_cast %927 : vector<1x4x4xbf16> to vector<4x4xbf16>
    %cst_837 = arith.constant dense<0.000000e+00> : vector<4x256xf32>
    %929 = tpu.matmul %928, %497, %cst_837 {dimension_numbers = #tpu.dot_dimension_numbers<[1], [0], [0], [1], [0, 0, 1, 1], [], []>} : vector<4x4xbf16>, vector<4x256xbf16>, vector<4x256xf32> -> vector<4x256xf32>
    %930 = arith.addf %926, %929 : vector<4x256xf32>
    %c2_838 = arith.constant 2 : index
    %c0_839 = arith.constant 0 : index
    %c0_840 = arith.constant 0 : index
    %931 = vector.load %arg12[%c2_838, %c0_839, %c0_840] : memref<9x4x4xbf16, #tpu.memory_space<vmem>>, vector<1x4x4xbf16>
    %932 = vector.shape_cast %931 : vector<1x4x4xbf16> to vector<4x4xbf16>
    %cst_841 = arith.constant dense<0.000000e+00> : vector<4x256xf32>
    %933 = tpu.matmul %932, %503, %cst_841 {dimension_numbers = #tpu.dot_dimension_numbers<[1], [0], [0], [1], [0, 0, 1, 1], [], []>} : vector<4x4xbf16>, vector<4x256xbf16>, vector<4x256xf32> -> vector<4x256xf32>
    %934 = arith.addf %930, %933 : vector<4x256xf32>
    %c3_842 = arith.constant 3 : index
    %c0_843 = arith.constant 0 : index
    %c0_844 = arith.constant 0 : index
    %935 = vector.load %arg12[%c3_842, %c0_843, %c0_844] : memref<9x4x4xbf16, #tpu.memory_space<vmem>>, vector<1x4x4xbf16>
    %936 = vector.shape_cast %935 : vector<1x4x4xbf16> to vector<4x4xbf16>
    %cst_845 = arith.constant dense<0.000000e+00> : vector<4x256xf32>
    %937 = tpu.matmul %936, %509, %cst_845 {dimension_numbers = #tpu.dot_dimension_numbers<[1], [0], [0], [1], [0, 0, 1, 1], [], []>} : vector<4x4xbf16>, vector<4x256xbf16>, vector<4x256xf32> -> vector<4x256xf32>
    %938 = arith.addf %934, %937 : vector<4x256xf32>
    %c4_846 = arith.constant 4 : index
    %c0_847 = arith.constant 0 : index
    %c0_848 = arith.constant 0 : index
    %939 = vector.load %arg12[%c4_846, %c0_847, %c0_848] : memref<9x4x4xbf16, #tpu.memory_space<vmem>>, vector<1x4x4xbf16>
    %940 = vector.shape_cast %939 : vector<1x4x4xbf16> to vector<4x4xbf16>
    %cst_849 = arith.constant dense<0.000000e+00> : vector<4x256xf32>
    %941 = tpu.matmul %940, %510, %cst_849 {dimension_numbers = #tpu.dot_dimension_numbers<[1], [0], [0], [1], [0, 0, 1, 1], [], []>} : vector<4x4xbf16>, vector<4x256xbf16>, vector<4x256xf32> -> vector<4x256xf32>
    %942 = arith.addf %938, %941 : vector<4x256xf32>
    %c5_850 = arith.constant 5 : index
    %c0_851 = arith.constant 0 : index
    %c0_852 = arith.constant 0 : index
    %943 = vector.load %arg12[%c5_850, %c0_851, %c0_852] : memref<9x4x4xbf16, #tpu.memory_space<vmem>>, vector<1x4x4xbf16>
    %944 = vector.shape_cast %943 : vector<1x4x4xbf16> to vector<4x4xbf16>
    %cst_853 = arith.constant dense<0.000000e+00> : vector<4x256xf32>
    %945 = tpu.matmul %944, %516, %cst_853 {dimension_numbers = #tpu.dot_dimension_numbers<[1], [0], [0], [1], [0, 0, 1, 1], [], []>} : vector<4x4xbf16>, vector<4x256xbf16>, vector<4x256xf32> -> vector<4x256xf32>
    %946 = arith.addf %942, %945 : vector<4x256xf32>
    %c6_854 = arith.constant 6 : index
    %c0_855 = arith.constant 0 : index
    %c0_856 = arith.constant 0 : index
    %947 = vector.load %arg12[%c6_854, %c0_855, %c0_856] : memref<9x4x4xbf16, #tpu.memory_space<vmem>>, vector<1x4x4xbf16>
    %948 = vector.shape_cast %947 : vector<1x4x4xbf16> to vector<4x4xbf16>
    %cst_857 = arith.constant dense<0.000000e+00> : vector<4x256xf32>
    %949 = tpu.matmul %948, %522, %cst_857 {dimension_numbers = #tpu.dot_dimension_numbers<[1], [0], [0], [1], [0, 0, 1, 1], [], []>} : vector<4x4xbf16>, vector<4x256xbf16>, vector<4x256xf32> -> vector<4x256xf32>
    %950 = arith.addf %946, %949 : vector<4x256xf32>
    %c7_858 = arith.constant 7 : index
    %c0_859 = arith.constant 0 : index
    %c0_860 = arith.constant 0 : index
    %951 = vector.load %arg12[%c7_858, %c0_859, %c0_860] : memref<9x4x4xbf16, #tpu.memory_space<vmem>>, vector<1x4x4xbf16>
    %952 = vector.shape_cast %951 : vector<1x4x4xbf16> to vector<4x4xbf16>
    %cst_861 = arith.constant dense<0.000000e+00> : vector<4x256xf32>
    %953 = tpu.matmul %952, %528, %cst_861 {dimension_numbers = #tpu.dot_dimension_numbers<[1], [0], [0], [1], [0, 0, 1, 1], [], []>} : vector<4x4xbf16>, vector<4x256xbf16>, vector<4x256xf32> -> vector<4x256xf32>
    %954 = arith.addf %950, %953 : vector<4x256xf32>
    %c8_862 = arith.constant 8 : index
    %c0_863 = arith.constant 0 : index
    %c0_864 = arith.constant 0 : index
    %955 = vector.load %arg12[%c8_862, %c0_863, %c0_864] : memref<9x4x4xbf16, #tpu.memory_space<vmem>>, vector<1x4x4xbf16>
    %956 = vector.shape_cast %955 : vector<1x4x4xbf16> to vector<4x4xbf16>
    %cst_865 = arith.constant dense<0.000000e+00> : vector<4x256xf32>
    %957 = tpu.matmul %956, %534, %cst_865 {dimension_numbers = #tpu.dot_dimension_numbers<[1], [0], [0], [1], [0, 0, 1, 1], [], []>} : vector<4x4xbf16>, vector<4x256xbf16>, vector<4x256xf32> -> vector<4x256xf32>
    %958 = arith.addf %954, %957 : vector<4x256xf32>
    %959 = arith.addf %923, %958 : vector<4x256xf32>
    %c0_866 = arith.constant 0 : index
    %c0_867 = arith.constant 0 : index
    %960 = vector.load %arg13[%c0_866, %c0_867] : memref<4x1xf32, #tpu.memory_space<vmem>>, vector<4x1xf32>
    %961 = vector.broadcast %960 : vector<4x1xf32> to vector<4x256xf32>
    %962 = arith.addf %959, %961 : vector<4x256xf32>
    %cst_868 = arith.constant 0.000000e+00 : f32
    %963 = vector.broadcast %cst_868 : f32 to vector<4x256xf32>
    %964 = arith.maximumf %962, %963 : vector<4x256xf32>
    %c1_869 = arith.constant 1 : index
    %c0_870 = arith.constant 0 : index
    %c0_871 = arith.constant 0 : index
    %965 = vector.load %arg21[%c1_869, %c0_870, %c0_871] : memref<2x4x256xf32, #tpu.memory_space<vmem>>, vector<1x4x256xf32>
    %966 = vector.shape_cast %965 : vector<1x4x256xf32> to vector<4x256xf32>
    %967 = vector.shape_cast %964 : vector<4x256xf32> to vector<1x4x256xf32>
    tpu.vector_store %arg21[%c1_869, %c0_870, %c0_871], %967 {strides = array<i32>} : memref<2x4x256xf32, #tpu.memory_space<vmem>>, vector<1x4x256xf32>,
    return
  }
  func.func @transform_0(%arg0: i32) -> (i32, i32, i32) {
    %c0_i32 = arith.constant 0 : i32
    %c0_i32_0 = arith.constant 0 : i32
    %c0_i32_1 = arith.constant 0 : i32
    %c0_i32_2 = arith.constant 0 : i32
    return %c0_i32, %c0_i32_0, %c0_i32_1 : i32, i32, i32
  }
  func.func @transform_1(%arg0: i32) -> (i32, i32, i32) {
    %c0_i32 = arith.constant 0 : i32
    %c0_i32_0 = arith.constant 0 : i32
    %c0_i32_1 = arith.constant 0 : i32
    %c0_i32_2 = arith.constant 0 : i32
    return %c0_i32, %c0_i32_0, %c0_i32_1 : i32, i32, i32
  }
  func.func @transform_2(%arg0: i32) -> (i32, i32) {
    %c0_i32 = arith.constant 0 : i32
    %c0_i32_0 = arith.constant 0 : i32
    %c0_i32_1 = arith.constant 0 : i32
    return %c0_i32, %c0_i32_0 : i32, i32
  }
  func.func @transform_3(%arg0: i32) -> (i32, i32, i32) {
    %c0_i32 = arith.constant 0 : i32
    %c0_i32_0 = arith.constant 0 : i32
    %c0_i32_1 = arith.constant 0 : i32
    %c0_i32_2 = arith.constant 0 : i32
    return %c0_i32, %c0_i32_0, %c0_i32_1 : i32, i32, i32
  }
  func.func @transform_4(%arg0: i32) -> (i32, i32) {
    %c0_i32 = arith.constant 0 : i32
    %c0_i32_0 = arith.constant 0 : i32
    %c0_i32_1 = arith.constant 0 : i32
    return %c0_i32, %c0_i32_0 : i32, i32
  }
  func.func @transform_5(%arg0: i32) -> (i32, i32, i32) {
    %c0_i32 = arith.constant 0 : i32
    %c0_i32_0 = arith.constant 0 : i32
    %c0_i32_1 = arith.constant 0 : i32
    %c0_i32_2 = arith.constant 0 : i32
    return %c0_i32, %c0_i32_0, %c0_i32_1 : i32, i32, i32
  }
  func.func @transform_6(%arg0: i32) -> (i32, i32) {
    %c0_i32 = arith.constant 0 : i32
    %c0_i32_0 = arith.constant 0 : i32
    %c0_i32_1 = arith.constant 0 : i32
    return %c0_i32, %c0_i32_0 : i32, i32
  }
  func.func @transform_7(%arg0: i32) -> (i32, i32, i32) {
    %c0_i32 = arith.constant 0 : i32
    %c0_i32_0 = arith.constant 0 : i32
    %c0_i32_1 = arith.constant 0 : i32
    %c0_i32_2 = arith.constant 0 : i32
    return %c0_i32, %c0_i32_0, %c0_i32_1 : i32, i32, i32
  }
  func.func @transform_8(%arg0: i32) -> (i32, i32, i32) {
    %c0_i32 = arith.constant 0 : i32
    %c0_i32_0 = arith.constant 0 : i32
    %c0_i32_1 = arith.constant 0 : i32
    %c0_i32_2 = arith.constant 0 : i32
    return %c0_i32, %c0_i32_0, %c0_i32_1 : i32, i32, i32
  }
  func.func @transform_9(%arg0: i32) -> (i32, i32) {
    %c0_i32 = arith.constant 0 : i32
    %c0_i32_0 = arith.constant 0 : i32
    %c0_i32_1 = arith.constant 0 : i32
    return %c0_i32, %c0_i32_0 : i32, i32
  }
  func.func @transform_10(%arg0: i32) -> (i32, i32, i32) {
    %c0_i32 = arith.constant 0 : i32
    %c0_i32_0 = arith.constant 0 : i32
    %c0_i32_1 = arith.constant 0 : i32
    %c0_i32_2 = arith.constant 0 : i32
    return %c0_i32, %c0_i32_0, %c0_i32_1 : i32, i32, i32
  }
  func.func @transform_11(%arg0: i32) -> (i32, i32, i32) {
    %c0_i32 = arith.constant 0 : i32
    %c0_i32_0 = arith.constant 0 : i32
    %c0_i32_1 = arith.constant 0 : i32
    %c0_i32_2 = arith.constant 0 : i32
    return %c0_i32, %c0_i32_0, %c0_i32_1 : i32, i32, i32
  }
  func.func @transform_12(%arg0: i32) -> (i32, i32) {
    %c0_i32 = arith.constant 0 : i32
    %c0_i32_0 = arith.constant 0 : i32
    %c0_i32_1 = arith.constant 0 : i32
    return %c0_i32, %c0_i32_0 : i32, i32
  }
  func.func @transform_13(%arg0: i32) -> (i32, i32, i32) {
    %c0_i32 = arith.constant 0 : i32
    %c0_i32_0 = arith.constant 0 : i32
    %c0_i32_1 = arith.constant 0 : i32
    %c0_i32_2 = arith.constant 0 : i32
    return %c0_i32, %c0_i32_0, %c0_i32_1 : i32, i32, i32
  }
  func.func @transform_14(%arg0: i32) -> (i32, i32, i32) {
    %c0_i32 = arith.constant 0 : i32
    %c0_i32_0 = arith.constant 0 : i32
    %c0_i32_1 = arith.constant 0 : i32
    %c0_i32_2 = arith.constant 0 : i32
    return %c0_i32, %c0_i32_0, %c0_i32_1 : i32, i32, i32
  }
  func.func @transform_15(%arg0: i32) -> (i32, i32) {
    %c0_i32 = arith.constant 0 : i32
    %c0_i32_0 = arith.constant 0 : i32
    %c0_i32_1 = arith.constant 0 : i32
    return %c0_i32, %c0_i32_0 : i32, i32
  }
  func.func @transform_16(%arg0: i32) -> (i32, i32) {
    %c0_i32 = arith.constant 0 : i32
    %c0_i32_0 = arith.constant 0 : i32
    %c0_i32_1 = arith.constant 0 : i32
    return %c0_i32, %c0_i32_0 : i32, i32
  }
  func.func @transform_17(%arg0: i32) -> (i32, i32) {
    %c0_i32 = arith.constant 0 : i32
    %c0_i32_0 = arith.constant 0 : i32
    %c0_i32_1 = arith.constant 0 : i32
    return %c0_i32, %c0_i32_0 : i32, i32
  }
  func.func @transform_18(%arg0: i32) -> (i32, i32) {
    %c0_i32 = arith.constant 0 : i32
    %c0_i32_0 = arith.constant 0 : i32
    %c0_i32_1 = arith.constant 0 : i32
    return %c0_i32, %c0_i32_0 : i32, i32
  }
  func.func @transform_19(%arg0: i32) -> (i32, i32, i32) {
    %c0_i32 = arith.constant 0 : i32
    %c0_i32_0 = arith.constant 0 : i32
    %c0_i32_1 = arith.constant 0 : i32
    %c0_i32_2 = arith.constant 0 : i32
    return %c0_i32, %c0_i32_0, %c0_i32_1 : i32, i32, i32
  }
  func.func @transform_20(%arg0: i32) -> (i32, i32, i32) {
    %c0_i32 = arith.constant 0 : i32
    %c0_i32_0 = arith.constant 0 : i32
    %c0_i32_1 = arith.constant 0 : i32
    %c0_i32_2 = arith.constant 0 : i32
    return %c0_i32, %c0_i32_0, %c0_i32_1 : i32, i32, i32
  }
}

</mosaic_0001>

<llo_original>
// kernel: base_unet_forward.1
$region0: #{base_unet_forward.1}
  #allocation0 [shape = 'u32[]', space=smem, size = 0x4, offset = 0x4, fixed_abs, tag = 'smem constant byte address 0x4 - core index']
  #allocation1 [shape = 'u32[72,128]{1,0:T(1,128)}', space=vmem, size = 0x9000, scoped, tag = 'internal scratch']
  %s0 = inlined_call_operand.vmem [shape: f32[2,4,256], index: 0, kind: input, shape index: {}]
  %s1 = inlined_call_operand.vmem [shape: bf16[9,8,4], index: 1, kind: input, shape index: {}]
  %s2 = inlined_call_operand.vmem [shape: f32[8,1], index: 2, kind: input, shape index: {}]
  %s3 = inlined_call_operand.vmem [shape: bf16[9,16,8], index: 3, kind: input, shape index: {}]
  %s4 = inlined_call_operand.vmem [shape: f32[16,1], index: 4, kind: input, shape index: {}]
  %s5 = inlined_call_operand.vmem [shape: bf16[9,16,16], index: 5, kind: input, shape index: {}]
  %s6 = inlined_call_operand.vmem [shape: f32[16,1], index: 6, kind: input, shape index: {}]
  %s7 = inlined_call_operand.vmem [shape: bf16[9,8,16], index: 7, kind: input, shape index: {}]
  %s8 = inlined_call_operand.vmem [shape: bf16[9,8,8], index: 8, kind: input, shape index: {}]
  %s9 = inlined_call_operand.vmem [shape: f32[8,1], index: 9, kind: input, shape index: {}]
  %s10 = inlined_call_operand.vmem [shape: bf16[9,4,8], index: 10, kind: input, shape index: {}]
  %s11 = inlined_call_operand.vmem [shape: bf16[9,4,4], index: 11, kind: input, shape index: {}]
  %s12 = inlined_call_operand.vmem [shape: f32[4,1], index: 12, kind: input, shape index: {}]
  %s13 = inlined_call_operand.vmem [shape: bf16[9,64,64], index: 13, kind: input, shape index: {}]
  %s14 = inlined_call_operand.vmem [shape: bf16[9,16,16], index: 14, kind: input, shape index: {}]
  %s15 = inlined_call_operand.vmem [shape: f32[256,64], index: 15, kind: input, shape index: {}]
  %s16 = inlined_call_operand.vmem [shape: f32[64,16], index: 16, kind: input, shape index: {}]
  %s17 = inlined_call_operand.hbm [shape: bf16[16,64], index: 17, kind: input, shape index: {}]
  %s18 = inlined_call_operand.vmem [shape: bf16[64,256], index: 18, kind: input, shape index: {}]
  %s19 = inlined_call_operand.hbm [shape: f32[9,1,256], index: 19, kind: input, shape index: {}]
  %s20 = inlined_call_operand.vmem [shape: f32[2,4,256], index: 20, kind: output, shape index: {}]
  %s21 = sld [smem:[#allocation0]]
  $region98: #{base_unet_forward.1} parent=0
    _
  %s23 = ssub.s32 1, %s21
  %s24 = scalar_select 0, %s23, %s21
  $region1: #{base_unet_forward.1} parent=0
    #allocation2 [shape = 'u8[4096]{0}', space=vmem, size = 0x1000, scoped, tag = 'input window, operand 17, single buffered']
    #allocation3 [shape = 's32[1]{0}', space=sflag, size = 0x4, scoped, tag = 'scoped memory for base_unet_forward.1']
    #allocation4 [shape = 'u8[9216]{0}', space=vmem, size = 0x2400, scoped, tag = 'input window, operand 19, single buffered']
    #allocation5 [shape = 's32[1]{0}', space=sflag, size = 0x4, scoped, tag = 'scoped memory for base_unet_forward.1']
    %25 = vsyncpa [#allocation3], 0
    %26 = vsyncpa [#allocation5], 0
    // Predicated region
    $region2: #{base_unet_forward.1} parent=1 // pred_check
      _
    $region3: #{base_unet_forward.1} parent=1 // pred_check_branch
      %28 = sbr.rel (0) target = $region5
    $region4: #{base_unet_forward.1} parent=1 // pred_region
      _
    $region5: #{base_unet_forward.1} parent=1 // pred_fallthru
      _
    // Predicated region
    $region6: #{base_unet_forward.1} parent=1 // pred_check
      _
    $region7: #{base_unet_forward.1} parent=1 // pred_check_branch
      %30 = sbr.rel (0) target = $region9
    $region8: #{base_unet_forward.1} parent=1 // pred_region
      _
    $region9: #{base_unet_forward.1} parent=1 // pred_fallthru
      _
    // Predicated region
    $region10: #{base_unet_forward.1} parent=1 // pred_check
      _
    $region11: #{base_unet_forward.1} parent=1 // pred_check_branch
      %32 = sbr.rel (0) target = $region13
    $region12: #{base_unet_forward.1} parent=1 // pred_region
      _
    $region13: #{base_unet_forward.1} parent=1 // pred_fallthru
      _
    // Predicated region
    $region14: #{base_unet_forward.1} parent=1 // pred_check
      _
    $region15: #{base_unet_forward.1} parent=1 // pred_check_branch
      %34 = sbr.rel (0) target = $region17
    $region16: #{base_unet_forward.1} parent=1 // pred_region
      _
    $region17: #{base_unet_forward.1} parent=1 // pred_fallthru
      _
    // Predicated region
    $region18: #{base_unet_forward.1} parent=1 // pred_check
      _
    $region19: #{base_unet_forward.1} parent=1 // pred_check_branch
      %36 = sbr.rel (0) target = $region21
    $region20: #{base_unet_forward.1} parent=1 // pred_region
      _
    $region21: #{base_unet_forward.1} parent=1 // pred_fallthru
      _
    // Predicated region
    $region22: #{base_unet_forward.1} parent=1 // pred_check
      _
    $region23: #{base_unet_forward.1} parent=1 // pred_check_branch
      %38 = sbr.rel (0) target = $region25
    $region24: #{base_unet_forward.1} parent=1 // pred_region
      _
    $region25: #{base_unet_forward.1} parent=1 // pred_fallthru
      _
    // Predicated region
    $region26: #{base_unet_forward.1} parent=1 // pred_check
      _
    $region27: #{base_unet_forward.1} parent=1 // pred_check_branch
      %40 = sbr.rel (0) target = $region29
    $region28: #{base_unet_forward.1} parent=1 // pred_region
      _
    $region29: #{base_unet_forward.1} parent=1 // pred_fallthru
      _
    // Predicated region
    $region30: #{base_unet_forward.1} parent=1 // pred_check
      _
    $region31: #{base_unet_forward.1} parent=1 // pred_check_branch
      %42 = sbr.rel (0) target = $region33
    $region32: #{base_unet_forward.1} parent=1 // pred_region
      _
    $region33: #{base_unet_forward.1} parent=1 // pred_fallthru
      _
    // Predicated region
    $region34: #{base_unet_forward.1} parent=1 // pred_check
      _
    $region35: #{base_unet_forward.1} parent=1 // pred_check_branch
      %44 = sbr.rel (0) target = $region37
    $region36: #{base_unet_forward.1} parent=1 // pred_region
      _
    $region37: #{base_unet_forward.1} parent=1 // pred_fallthru
      _
    // Predicated region
    $region38: #{base_unet_forward.1} parent=1 // pred_check
      _
    $region39: #{base_unet_forward.1} parent=1 // pred_check_branch
      %46 = sbr.rel (0) target = $region41
    $region40: #{base_unet_forward.1} parent=1 // pred_region
      _
    $region41: #{base_unet_forward.1} parent=1 // pred_fallthru
      _
    // Predicated region
    $region42: #{base_unet_forward.1} parent=1 // pred_check
      _
    $region43: #{base_unet_forward.1} parent=1 // pred_check_branch
      %48 = sbr.rel (0) target = $region45
    $region44: #{base_unet_forward.1} parent=1 // pred_region
      _
    $region45: #{base_unet_forward.1} parent=1 // pred_fallthru
      _
    // Predicated region
    $region46: #{base_unet_forward.1} parent=1 // pred_check
      _
    $region47: #{base_unet_forward.1} parent=1 // pred_check_branch
      %50 = sbr.rel (0) target = $region49
    $region48: #{base_unet_forward.1} parent=1 // pred_region
      _
    $region49: #{base_unet_forward.1} parent=1 // pred_fallthru
      _
    // Predicated region
    $region50: #{base_unet_forward.1} parent=1 // pred_check
      _
    $region51: #{base_unet_forward.1} parent=1 // pred_check_branch
      %52 = sbr.rel (0) target = $region53
    $region52: #{base_unet_forward.1} parent=1 // pred_region
      _
    $region53: #{base_unet_forward.1} parent=1 // pred_fallthru
      _
    // Predicated region
    $region54: #{base_unet_forward.1} parent=1 // pred_check
      _
    $region55: #{base_unet_forward.1} parent=1 // pred_check_branch
      %54 = sbr.rel (0) target = $region57
    $region56: #{base_unet_forward.1} parent=1 // pred_region
      _
    $region57: #{base_unet_forward.1} parent=1 // pred_fallthru
      _
    // Predicated region
    $region58: #{base_unet_forward.1} parent=1 // pred_check
      _
    $region59: #{base_unet_forward.1} parent=1 // pred_check_branch
      %56 = sbr.rel (0) target = $region61
    $region60: #{base_unet_forward.1} parent=1 // pred_region
      _
    $region61: #{base_unet_forward.1} parent=1 // pred_fallthru
      _
    // Predicated region
    $region62: #{base_unet_forward.1} parent=1 // pred_check
      _
    $region63: #{base_unet_forward.1} parent=1 // pred_check_branch
      %58 = sbr.rel (0) target = $region65
    $region64: #{base_unet_forward.1} parent=1 // pred_region
      _
    $region65: #{base_unet_forward.1} parent=1 // pred_fallthru
      _
    // Predicated region
    $region66: #{base_unet_forward.1} parent=1 // pred_check
      _
    $region67: #{base_unet_forward.1} parent=1 // pred_check_branch
      %60 = sbr.rel (0) target = $region69
    $region68: #{base_unet_forward.1} parent=1 // pred_region
      _
    $region69: #{base_unet_forward.1} parent=1 // pred_fallthru
      _
    // Predicated region
    $region70: #{base_unet_forward.1} parent=1 // pred_check
      _
    $region71: #{base_unet_forward.1} parent=1 // pred_check_branch
      %62 = sbr.rel (0) target = $region73
    $region72: #{base_unet_forward.1} parent=1 // pred_region
      %64 = vsyncadd [#allocation3], 0
      %s65 = sshll.u32 %s17, 4
      %s66 = int_to_ptr.hbm [resolvable:$true] %s65
      %s67 = sshll.u32 [#allocation2], 4
      %s68 = int_to_ptr.vmem [resolvable:$true] %s67
      %73 = dma.hbm_to_vmem [thread:$0]  %s66, 128, %s68, [#allocation3], 64, 64, 4
    $region73: #{base_unet_forward.1} parent=1 // pred_fallthru
      _
    // Predicated region
    $region74: #{base_unet_forward.1} parent=1 // pred_check
      _
    $region75: #{base_unet_forward.1} parent=1 // pred_check_branch
      %75 = sbr.rel (0) target = $region77
    $region76: #{base_unet_forward.1} parent=1 // pred_region
      _
    $region77: #{base_unet_forward.1} parent=1 // pred_fallthru
      _
    // Predicated region
    $region78: #{base_unet_forward.1} parent=1 // pred_check
      _
    $region79: #{base_unet_forward.1} parent=1 // pred_check_branch
      %77 = sbr.rel (0) target = $region81
    $region80: #{base_unet_forward.1} parent=1 // pred_region
      %79 = vsyncadd [#allocation5], 0
      %s80 = sshll.u32 %s19, 4
      %s81 = int_to_ptr.hbm [resolvable:$true] %s80
      %s82 = sshll.u32 [#allocation4], 4
      %s83 = int_to_ptr.vmem [resolvable:$true] %s82
      %88 = dma.hbm_to_vmem [thread:$0]  %s81, 288, %s83, [#allocation5], 32, 32, 2
    $region81: #{base_unet_forward.1} parent=1 // pred_fallthru
      _
    // Predicated region
    $region82: #{base_unet_forward.1} parent=1 // pred_check
      _
    $region83: #{base_unet_forward.1} parent=1 // pred_check_branch
      %90 = sbr.rel (0) target = $region85
    $region84: #{base_unet_forward.1} parent=1 // pred_region
      %92 = dma.done [#allocation3], 128
    $region85: #{base_unet_forward.1} parent=1 // pred_fallthru
      _
    // Predicated region
    $region86: #{base_unet_forward.1} parent=1 // pred_check
      _
    $region87: #{base_unet_forward.1} parent=1 // pred_check_branch
      %94 = sbr.rel (0) target = $region89
    $region88: #{base_unet_forward.1} parent=1 // pred_region
      %96 = dma.done [#allocation5], 288
    $region89: #{base_unet_forward.1} parent=1 // pred_fallthru
      _
    %v98 = vld [vmem:[%s0] sm:$0xff]
    %100 = vst [vmem:[#allocation1] ss:$2 sm:$0xff] %v98
    %v101 = vld.sshfl [vmem:[#allocation1] sm:$0xff pattern:$0x75316420]
    %v102 = vld.sshfl [vmem:[#allocation1 + $0x8] sm:$0xff pattern:$0x75316420]
    %105 = vrot.lane.b32.xlu0 %v101, 17
    %v106 = vpop.permute.xlu0 %105
    %107 = vrot.lane.b32.xlu0 %v102, 17
    %v108 = vpop.permute.xlu0 %107
    %v109 = vlaneseq
    %v110 = vand.u32 %v109, 127
    %vm111 = vcmp.lt.s32.totalorder %v110, 17
    %v112 = vsel %vm111, %v106, %v108
    %v113 = vsel %vm111, %v108, %v106
    %v114 = vld [vmem:[#allocation4] sm:$0x3]
    %v116 = vperm.slane %v114, 0
    %v117 = vperm.slane %v114, 1
    %v120 = vmul.f32 %v113, %v116
    %v121 = vmul.f32 %v112, %v117
    %v122 = vpack.c.bf16 %v120, %v120
    %v123 = vpack.c.bf16 %v121, %v121
    %124 = vst [vmem:[#allocation1] ss:$2 sm:$0xff] %v98
    %v125 = vld.sshfl [vmem:[#allocation1] sm:$0xff pattern:$0x75316420]
    %v126 = vld.sshfl [vmem:[#allocation1 + $0x8] sm:$0xff pattern:$0x75316420]
    %129 = vrot.lane.b32.xlu0 %v125, 16
    %v130 = vpop.permute.xlu0 %129
    %131 = vrot.lane.b32.xlu0 %v126, 16
    %v132 = vpop.permute.xlu0 %131
    %vm133 = vcmp.lt.s32.totalorder %v110, 16
    %v134 = vsel %vm133, %v130, %v132
    %v135 = vsel %vm133, %v132, %v130
    %s136 = scalar_lea.vmem [#allocation4], 2
    %v137 = vld [vmem:[%s136] sm:$0x3]
    %v139 = vperm.slane %v137, 0
    %v140 = vperm.slane %v137, 1
    %v143 = vmul.f32 %v135, %v139
    %v144 = vmul.f32 %v134, %v140
    %v145 = vpack.c.bf16 %v143, %v143
    %v146 = vpack.c.bf16 %v144, %v144
    %147 = vst [vmem:[#allocation1] ss:$2 sm:$0xff] %v98
    %v148 = vld.sshfl [vmem:[#allocation1] sm:$0xff pattern:$0x75316420]
    %v149 = vld.sshfl [vmem:[#allocation1 + $0x8] sm:$0xff pattern:$0x75316420]
    %152 = vrot.lane.b32.xlu0 %v148, 15
    %v153 = vpop.permute.xlu0 %152
    %154 = vrot.lane.b32.xlu0 %v149, 15
    %v155 = vpop.permute.xlu0 %154
    %vm156 = vcmp.lt.s32.totalorder %v110, 15
    %v157 = vsel %vm156, %v153, %v155
    %v158 = vsel %vm156, %v155, %v153
    %s159 = scalar_lea.vmem [#allocation4], 4
    %v160 = vld [vmem:[%s159] sm:$0x3]
    %v162 = vperm.slane %v160, 0
    %v163 = vperm.slane %v160, 1
    %v166 = vmul.f32 %v158, %v162
    %v167 = vmul.f32 %v157, %v163
    %v168 = vpack.c.bf16 %v166, %v166
    %v169 = vpack.c.bf16 %v167, %v167
    %170 = vst [vmem:[#allocation1] ss:$2 sm:$0xff] %v98
    %v171 = vld.sshfl [vmem:[#allocation1] sm:$0xff pattern:$0x75316420]
    %v172 = vld.sshfl [vmem:[#allocation1 + $0x8] sm:$0xff pattern:$0x75316420]
    %175 = vrot.lane.b32.xlu0 %v171, 1
    %v176 = vpop.permute.xlu0 %175
    %177 = vrot.lane.b32.xlu0 %v172, 1
    %v178 = vpop.permute.xlu0 %177
    %vm179 = vcmp.lt.s32.totalorder %v110, 1
    %v180 = vsel %vm179, %v176, %v178
    %v181 = vsel %vm179, %v178, %v176
    %s182 = scalar_lea.vmem [#allocation4], 6
    %v183 = vld [vmem:[%s182] sm:$0x3]
    %v185 = vperm.slane %v183, 0
    %v186 = vperm.slane %v183, 1
    %v189 = vmul.f32 %v181, %v185
    %v190 = vmul.f32 %v180, %v186
    %v191 = vpack.c.bf16 %v189, %v189
    %v192 = vpack.c.bf16 %v190, %v190
    %193 = vst [vmem:[#allocation1] ss:$2 sm:$0xff] %v98
    %v194 = vld.sshfl [vmem:[#allocation1] sm:$0xff pattern:$0x75316420]
    %v195 = vld.sshfl [vmem:[#allocation1 + $0x8] sm:$0xff pattern:$0x75316420]
    %v198 = vpack.c.bf16 %v194, %v194
    %v199 = vpack.c.bf16 %v195, %v195
    %200 = vst [vmem:[#allocation1] ss:$2 sm:$0xff] %v98
    %v201 = vld.sshfl [vmem:[#allocation1] sm:$0xff pattern:$0x75316420]
    %v202 = vld.sshfl [vmem:[#allocation1 + $0x8] sm:$0xff pattern:$0x75316420]
    %205 = vrot.lane.b32.xlu0 %v201, 127
    %v206 = vpop.permute.xlu0 %205
    %207 = vrot.lane.b32.xlu0 %v202, 127
    %v208 = vpop.permute.xlu0 %207
    %vm209 = vcmp.lt.s32.totalorder %v110, 127
    %v210 = vsel %vm209, %v206, %v208
    %v211 = vsel %vm209, %v208, %v206
    %s212 = scalar_lea.vmem [#allocation4], 10
    %v213 = vld [vmem:[%s212] sm:$0x3]
    %v215 = vperm.slane %v213, 0
    %v216 = vperm.slane %v213, 1
    %v219 = vmul.f32 %v210, %v215
    %v220 = vmul.f32 %v211, %v216
    %v221 = vpack.c.bf16 %v219, %v219
    %v222 = vpack.c.bf16 %v220, %v220
    %223 = vst [vmem:[#allocation1] ss:$2 sm:$0xff] %v98
    %v224 = vld.sshfl [vmem:[#allocation1] sm:$0xff pattern:$0x75316420]
    %v225 = vld.sshfl [vmem:[#allocation1 + $0x8] sm:$0xff pattern:$0x75316420]
    %228 = vrot.lane.b32.xlu0 %v224, 113
    %v229 = vpop.permute.xlu0 %228
    %230 = vrot.lane.b32.xlu0 %v225, 113
    %v231 = vpop.permute.xlu0 %230
    %vm232 = vcmp.lt.s32.totalorder %v110, 113
    %v233 = vsel %vm232, %v229, %v231
    %v234 = vsel %vm232, %v231, %v229
    %s235 = scalar_lea.vmem [#allocation4], 12
    %v236 = vld [vmem:[%s235] sm:$0x3]
    %v238 = vperm.slane %v236, 0
    %v239 = vperm.slane %v236, 1
    %v242 = vmul.f32 %v233, %v238
    %v243 = vmul.f32 %v234, %v239
    %v244 = vpack.c.bf16 %v242, %v242
    %v245 = vpack.c.bf16 %v243, %v243
    %246 = vst [vmem:[#allocation1] ss:$2 sm:$0xff] %v98
    %v247 = vld.sshfl [vmem:[#allocation1] sm:$0xff pattern:$0x75316420]
    %v248 = vld.sshfl [vmem:[#allocation1 + $0x8] sm:$0xff pattern:$0x75316420]
    %251 = vrot.lane.b32.xlu0 %v247, 112
    %v252 = vpop.permute.xlu0 %251
    %253 = vrot.lane.b32.xlu0 %v248, 112
    %v254 = vpop.permute.xlu0 %253
    %vm255 = vcmp.lt.s32.totalorder %v110, 112
    %v256 = vsel %vm255, %v252, %v254
    %v257 = vsel %vm255, %v254, %v252
    %s258 = scalar_lea.vmem [#allocation4], 14
    %v259 = vld [vmem:[%s258] sm:$0x3]
    %v261 = vperm.slane %v259, 0
    %v262 = vperm.slane %v259, 1
    %v265 = vmul.f32 %v256, %v261
    %v266 = vmul.f32 %v257, %v262
    %v267 = vpack.c.bf16 %v265, %v265
    %v268 = vpack.c.bf16 %v266, %v266
    %269 = vst [vmem:[#allocation1] ss:$2 sm:$0xff] %v98
    %v270 = vld.sshfl [vmem:[#allocation1] sm:$0xff pattern:$0x75316420]
    %v271 = vld.sshfl [vmem:[#allocation1 + $0x8] sm:$0xff pattern:$0x75316420]
    %274 = vrot.lane.b32.xlu0 %v270, 111
    %v275 = vpop.permute.xlu0 %274
    %276 = vrot.lane.b32.xlu0 %v271, 111
    %v277 = vpop.permute.xlu0 %276
    %vm278 = vcmp.lt.s32.totalorder %v110, 111
    %v279 = vsel %vm278, %v275, %v277
    %v280 = vsel %vm278, %v277, %v275
    %s281 = scalar_lea.vmem [#allocation4], 16
    %v282 = vld [vmem:[%s281] sm:$0x3]
    %v284 = vperm.slane %v282, 0
    %v285 = vperm.slane %v282, 1
    %v288 = vmul.f32 %v279, %v284
    %v289 = vmul.f32 %v280, %v285
    %v290 = vpack.c.bf16 %v288, %v288
    %v291 = vpack.c.bf16 %v289, %v289
    %v292 = vld [vmem:[%s1] sm:$0xf]
    %s293 = scalar_lea.vmem %s1, 4
    %v294 = vld [vmem:[%s293] sm:$0xf]
    %vm295 = vcmask 31744
    %v297 = vsel %vm295, %v294, 0
    %vm299 = vcmask 1041408
    %v301 = vsel %vm299, %v145, 0
    %v304 = vsel %vm299, %v146, 0
    %306 = vmatpush.bf16.msra.mxu0 0
    %307 = vmatpush.bf16.msra.mxu0 0
    %308 = vmatpush.bf16.msra.mxu0 0
    %309 = vmatpush.bf16.msra.mxu0 0
    %310 = vmatpush.bf16.msra.mxu0 0
    %311 = vmatpush.bf16.msra.mxu0 0
    %312 = vmatpush.bf16.msra.mxu0 0
    %313 = vmatpush.bf16.msra.mxu0 %v301
    %314 = vmatmul.bf16.gmra.mxu0 %v297
    %v315 = vpop.f32.mrf.mxu0
    %v316 = vadd.f32 0.0, %v315
    %v317 = vpop.f32.mrf.mxu0
    %318 = vdwg.mxu0
    %319 = vmatpush.bf16.msra.mxu0 0
    %320 = vmatpush.bf16.msra.mxu0 0
    %321 = vmatpush.bf16.msra.mxu0 0
    %322 = vmatpush.bf16.msra.mxu0 0
    %323 = vmatpush.bf16.msra.mxu0 0
    %324 = vmatpush.bf16.msra.mxu0 0
    %325 = vmatpush.bf16.msra.mxu0 0
    %326 = vmatpush.bf16.msra.mxu0 %v304
    %327 = vmatmul.bf16.gmra.mxu0 %v297
    %v328 = vpop.f32.mrf.mxu0
    %v329 = vadd.f32 0.0, %v328
    %v330 = vpop.f32.mrf.mxu0
    %331 = vdwg.mxu0
    %v333 = vsel %vm295, %v292, 0
    %v336 = vsel %vm299, %v122, 0
    %v339 = vsel %vm299, %v123, 0
    %341 = vmatpush.bf16.msra.mxu0 0
    %342 = vmatpush.bf16.msra.mxu0 0
    %343 = vmatpush.bf16.msra.mxu0 0
    %344 = vmatpush.bf16.msra.mxu0 0
    %345 = vmatpush.bf16.msra.mxu0 0
    %346 = vmatpush.bf16.msra.mxu0 0
    %347 = vmatpush.bf16.msra.mxu0 0
    %348 = vmatpush.bf16.msra.mxu0 %v336
    %349 = vmatmul.bf16.gmra.mxu0 %v333
    %v350 = vpop.f32.mrf.mxu0
    %v351 = vadd.f32 %v316, %v350
    %v352 = vpop.f32.mrf.mxu0
    %353 = vdwg.mxu0
    %354 = vmatpush.bf16.msra.mxu0 0
    %355 = vmatpush.bf16.msra.mxu0 0
    %356 = vmatpush.bf16.msra.mxu0 0
    %357 = vmatpush.bf16.msra.mxu0 0
    %358 = vmatpush.bf16.msra.mxu0 0
    %359 = vmatpush.bf16.msra.mxu0 0
    %360 = vmatpush.bf16.msra.mxu0 0
    %361 = vmatpush.bf16.msra.mxu0 %v339
    %362 = vmatmul.bf16.gmra.mxu0 %v333
    %v363 = vpop.f32.mrf.mxu0
    %v364 = vadd.f32 %v329, %v363
    %v365 = vpop.f32.mrf.mxu0
    %366 = vdwg.mxu0
    %s367 = scalar_lea.vmem %s1, 8
    %v368 = vld [vmem:[%s367] sm:$0xf]
    %v370 = vsel %vm295, %v368, 0
    %v373 = vsel %vm299, %v168, 0
    %v376 = vsel %vm299, %v169, 0
    %378 = vmatpush.bf16.msra.mxu0 0
    %379 = vmatpush.bf16.msra.mxu0 0
    %380 = vmatpush.bf16.msra.mxu0 0
    %381 = vmatpush.bf16.msra.mxu0 0
    %382 = vmatpush.bf16.msra.mxu0 0
    %383 = vmatpush.bf16.msra.mxu0 0
    %384 = vmatpush.bf16.msra.mxu0 0
    %385 = vmatpush.bf16.msra.mxu0 %v373
    %386 = vmatmul.bf16.gmra.mxu0 %v370
    %v387 = vpop.f32.mrf.mxu0
    %v388 = vadd.f32 0.0, %v387
    %v389 = vpop.f32.mrf.mxu0
    %390 = vdwg.mxu0
    %391 = vmatpush.bf16.msra.mxu0 0
    %392 = vmatpush.bf16.msra.mxu0 0
    %393 = vmatpush.bf16.msra.mxu0 0
    %394 = vmatpush.bf16.msra.mxu0 0
    %395 = vmatpush.bf16.msra.mxu0 0
    %396 = vmatpush.bf16.msra.mxu0 0
    %397 = vmatpush.bf16.msra.mxu0 0
    %398 = vmatpush.bf16.msra.mxu0 %v376
    %399 = vmatmul.bf16.gmra.mxu0 %v370
    %v400 = vpop.f32.mrf.mxu0
    %v401 = vadd.f32 0.0, %v400
    %v402 = vpop.f32.mrf.mxu0
    %403 = vdwg.mxu0
    %v404 = vadd.f32 %v351, %v388
    %v405 = vadd.f32 %v364, %v401
    %s406 = scalar_lea.vmem %s1, 12
    %v407 = vld [vmem:[%s406] sm:$0xf]
    %v409 = vsel %vm295, %v407, 0
    %v412 = vsel %vm299, %v191, 0
    %v415 = vsel %vm299, %v192, 0
    %417 = vmatpush.bf16.msra.mxu0 0
    %418 = vmatpush.bf16.msra.mxu0 0
    %419 = vmatpush.bf16.msra.mxu0 0
    %420 = vmatpush.bf16.msra.mxu0 0
    %421 = vmatpush.bf16.msra.mxu0 0
    %422 = vmatpush.bf16.msra.mxu0 0
    %423 = vmatpush.bf16.msra.mxu0 0
    %424 = vmatpush.bf16.msra.mxu0 %v412
    %425 = vmatmul.bf16.gmra.mxu0 %v409
    %v426 = vpop.f32.mrf.mxu0
    %v427 = vadd.f32 0.0, %v426
    %v428 = vpop.f32.mrf.mxu0
    %429 = vdwg.mxu0
    %430 = vmatpush.bf16.msra.mxu0 0
    %431 = vmatpush.bf16.msra.mxu0 0
    %432 = vmatpush.bf16.msra.mxu0 0
    %433 = vmatpush.bf16.msra.mxu0 0
    %434 = vmatpush.bf16.msra.mxu0 0
    %435 = vmatpush.bf16.msra.mxu0 0
    %436 = vmatpush.bf16.msra.mxu0 0
    %437 = vmatpush.bf16.msra.mxu0 %v415
    %438 = vmatmul.bf16.gmra.mxu0 %v409
    %v439 = vpop.f32.mrf.mxu0
    %v440 = vadd.f32 0.0, %v439
    %v441 = vpop.f32.mrf.mxu0
    %442 = vdwg.mxu0
    %v443 = vadd.f32 %v404, %v427
    %v444 = vadd.f32 %v405, %v440
    %s445 = scalar_lea.vmem %s1, 16
    %v446 = vld [vmem:[%s445] sm:$0xf]
    %v448 = vsel %vm295, %v446, 0
    %v451 = vsel %vm299, %v198, 0
    %v454 = vsel %vm299, %v199, 0
    %456 = vmatpush.bf16.msra.mxu0 0
    %457 = vmatpush.bf16.msra.mxu0 0
    %458 = vmatpush.bf16.msra.mxu0 0
    %459 = vmatpush.bf16.msra.mxu0 0
    %460 = vmatpush.bf16.msra.mxu0 0
    %461 = vmatpush.bf16.msra.mxu0 0
    %462 = vmatpush.bf16.msra.mxu0 0
    %463 = vmatpush.bf16.msra.mxu0 %v451
    %464 = vmatmul.bf16.gmra.mxu0 %v448
    %v465 = vpop.f32.mrf.mxu0
    %v466 = vadd.f32 0.0, %v465
    %v467 = vpop.f32.mrf.mxu0
    %468 = vdwg.mxu0
    %469 = vmatpush.bf16.msra.mxu0 0
    %470 = vmatpush.bf16.msra.mxu0 0
    %471 = vmatpush.bf16.msra.mxu0 0
    %472 = vmatpush.bf16.msra.mxu0 0
    %473 = vmatpush.bf16.msra.mxu0 0
    %474 = vmatpush.bf16.msra.mxu0 0
    %475 = vmatpush.bf16.msra.mxu0 0
    %476 = vmatpush.bf16.msra.mxu0 %v454
    %477 = vmatmul.bf16.gmra.mxu0 %v448
    %v478 = vpop.f32.mrf.mxu0
    %v479 = vadd.f32 0.0, %v478
    %v480 = vpop.f32.mrf.mxu0
    %481 = vdwg.mxu0
    %v482 = vadd.f32 %v443, %v466
    %v483 = vadd.f32 %v444, %v479
    %s484 = scalar_lea.vmem %s1, 20
    %v485 = vld [vmem:[%s484] sm:$0xf]
    %v487 = vsel %vm295, %v485, 0
    %v490 = vsel %vm299, %v221, 0
    %v493 = vsel %vm299, %v222, 0
    %495 = vmatpush.bf16.msra.mxu0 0
    %496 = vmatpush.bf16.msra.mxu0 0
    %497 = vmatpush.bf16.msra.mxu0 0
    %498 = vmatpush.bf16.msra.mxu0 0
    %499 = vmatpush.bf16.msra.mxu0 0
    %500 = vmatpush.bf16.msra.mxu0 0
    %501 = vmatpush.bf16.msra.mxu0 0
    %502 = vmatpush.bf16.msra.mxu0 %v490
    %503 = vmatmul.bf16.gmra.mxu0 %v487
    %v504 = vpop.f32.mrf.mxu0
    %v505 = vadd.f32 0.0, %v504
    %v506 = vpop.f32.mrf.mxu0
    %507 = vdwg.mxu0
    %508 = vmatpush.bf16.msra.mxu0 0
    %509 = vmatpush.bf16.msra.mxu0 0
    %510 = vmatpush.bf16.msra.mxu0 0
    %511 = vmatpush.bf16.msra.mxu0 0
    %512 = vmatpush.bf16.msra.mxu0 0
    %513 = vmatpush.bf16.msra.mxu0 0
    %514 = vmatpush.bf16.msra.mxu0 0
    %515 = vmatpush.bf16.msra.mxu0 %v493
    %516 = vmatmul.bf16.gmra.mxu0 %v487
    %v517 = vpop.f32.mrf.mxu0
    %v518 = vadd.f32 0.0, %v517
    %v519 = vpop.f32.mrf.mxu0
    %520 = vdwg.mxu0
    %v521 = vadd.f32 %v482, %v505
    %v522 = vadd.f32 %v483, %v518
    %s523 = scalar_lea.vmem %s1, 24
    %v524 = vld [vmem:[%s523] sm:$0xf]
    %v526 = vsel %vm295, %v524, 0
    %v529 = vsel %vm299, %v244, 0
    %v532 = vsel %vm299, %v245, 0
    %534 = vmatpush.bf16.msra.mxu0 0
    %535 = vmatpush.bf16.msra.mxu0 0
    %536 = vmatpush.bf16.msra.mxu0 0
    %537 = vmatpush.bf16.msra.mxu0 0
    %538 = vmatpush.bf16.msra.mxu0 0
    %539 = vmatpush.bf16.msra.mxu0 0
    %540 = vmatpush.bf16.msra.mxu0 0
    %541 = vmatpush.bf16.msra.mxu0 %v529
    %542 = vmatmul.bf16.gmra.mxu0 %v526
    %v543 = vpop.f32.mrf.mxu0
    %v544 = vadd.f32 0.0, %v543
    %v545 = vpop.f32.mrf.mxu0
    %546 = vdwg.mxu0
    %547 = vmatpush.bf16.msra.mxu0 0
    %548 = vmatpush.bf16.msra.mxu0 0
    %549 = vmatpush.bf16.msra.mxu0 0
    %550 = vmatpush.bf16.msra.mxu0 0
    %551 = vmatpush.bf16.msra.mxu0 0
    %552 = vmatpush.bf16.msra.mxu0 0
    %553 = vmatpush.bf16.msra.mxu0 0
    %554 = vmatpush.bf16.msra.mxu0 %v532
    %555 = vmatmul.bf16.gmra.mxu0 %v526
    %v556 = vpop.f32.mrf.mxu0
    %v557 = vadd.f32 0.0, %v556
    %v558 = vpop.f32.mrf.mxu0
    %559 = vdwg.mxu0
    %v560 = vadd.f32 %v521, %v544
    %v561 = vadd.f32 %v522, %v557
    %s562 = scalar_lea.vmem %s1, 28
    %v563 = vld [vmem:[%s562] sm:$0xf]
    %v565 = vsel %vm295, %v563, 0
    %v568 = vsel %vm299, %v267, 0
    %v571 = vsel %vm299, %v268, 0
    %573 = vmatpush.bf16.msra.mxu0 0
    %574 = vmatpush.bf16.msra.mxu0 0
    %575 = vmatpush.bf16.msra.mxu0 0
    %576 = vmatpush.bf16.msra.mxu0 0
    %577 = vmatpush.bf16.msra.mxu0 0
    %578 = vmatpush.bf16.msra.mxu0 0
    %579 = vmatpush.bf16.msra.mxu0 0
    %580 = vmatpush.bf16.msra.mxu0 %v568
    %581 = vmatmul.bf16.gmra.mxu0 %v565
    %v582 = vpop.f32.mrf.mxu0
    %v583 = vadd.f32 0.0, %v582
    %v584 = vpop.f32.mrf.mxu0
    %585 = vdwg.mxu0
    %586 = vmatpush.bf16.msra.mxu0 0
    %587 = vmatpush.bf16.msra.mxu0 0
    %588 = vmatpush.bf16.msra.mxu0 0
    %589 = vmatpush.bf16.msra.mxu0 0
    %590 = vmatpush.bf16.msra.mxu0 0
    %591 = vmatpush.bf16.msra.mxu0 0
    %592 = vmatpush.bf16.msra.mxu0 0
    %593 = vmatpush.bf16.msra.mxu0 %v571
    %594 = vmatmul.bf16.gmra.mxu0 %v565
    %v595 = vpop.f32.mrf.mxu0
    %v596 = vadd.f32 0.0, %v595
    %v597 = vpop.f32.mrf.mxu0
    %598 = vdwg.mxu0
    %v599 = vadd.f32 %v560, %v583
    %v600 = vadd.f32 %v561, %v596
    %s601 = scalar_lea.vmem %s1, 32
    %v602 = vld [vmem:[%s601] sm:$0xf]
    %v604 = vsel %vm295, %v602, 0
    %v607 = vsel %vm299, %v290, 0
    %v610 = vsel %vm299, %v291, 0
    %612 = vmatpush.bf16.msra.mxu0 0
    %613 = vmatpush.bf16.msra.mxu0 0
    %614 = vmatpush.bf16.msra.mxu0 0
    %615 = vmatpush.bf16.msra.mxu0 0
    %616 = vmatpush.bf16.msra.mxu0 0
    %617 = vmatpush.bf16.msra.mxu0 0
    %618 = vmatpush.bf16.msra.mxu0 0
    %619 = vmatpush.bf16.msra.mxu0 %v607
    %620 = vmatmul.bf16.gmra.mxu0 %v604
    %v621 = vpop.f32.mrf.mxu0
    %v622 = vadd.f32 0.0, %v621
    %v623 = vpop.f32.mrf.mxu0
    %624 = vdwg.mxu0
    %625 = vmatpush.bf16.msra.mxu0 0
    %626 = vmatpush.bf16.msra.mxu0 0
    %627 = vmatpush.bf16.msra.mxu0 0
    %628 = vmatpush.bf16.msra.mxu0 0
    %629 = vmatpush.bf16.msra.mxu0 0
    %630 = vmatpush.bf16.msra.mxu0 0
    %631 = vmatpush.bf16.msra.mxu0 0
    %632 = vmatpush.bf16.msra.mxu0 %v610
    %633 = vmatmul.bf16.gmra.mxu0 %v604
    %v634 = vpop.f32.mrf.mxu0
    %v635 = vadd.f32 0.0, %v634
    %v636 = vpop.f32.mrf.mxu0
    %637 = vdwg.mxu0
    %v638 = vadd.f32 %v599, %v622
    %v639 = vadd.f32 %v600, %v635
    %v640 = vld [vmem:[%s15] sm:$0xff]
    %v641 = vld [vmem:[%s15 + $0x8] sm:$0xff]
    %v642 = vld [vmem:[%s15 + $0x10] sm:$0xff]
    %v643 = vld [vmem:[%s15 + $0x18] sm:$0xff]
    %v644 = vld [vmem:[%s15 + $0x20] sm:$0xff]
    %v645 = vld [vmem:[%s15 + $0x28] sm:$0xff]
    %v646 = vld [vmem:[%s15 + $0x30] sm:$0xff]
    %v647 = vld [vmem:[%s15 + $0x38] sm:$0xff]
    %v648 = vld [vmem:[%s15 + $0x40] sm:$0xff]
    %v649 = vld [vmem:[%s15 + $0x48] sm:$0xff]
    %v650 = vld [vmem:[%s15 + $0x50] sm:$0xff]
    %v651 = vld [vmem:[%s15 + $0x58] sm:$0xff]
    %v652 = vld [vmem:[%s15 + $0x60] sm:$0xff]
    %v653 = vld [vmem:[%s15 + $0x68] sm:$0xff]
    %v654 = vld [vmem:[%s15 + $0x70] sm:$0xff]
    %v655 = vld [vmem:[%s15 + $0x78] sm:$0xff]
    %v656 = vld [vmem:[%s15 + $0x80] sm:$0xff]
    %v657 = vld [vmem:[%s15 + $0x88] sm:$0xff]
    %v658 = vld [vmem:[%s15 + $0x90] sm:$0xff]
    %v659 = vld [vmem:[%s15 + $0x98] sm:$0xff]
    %v660 = vld [vmem:[%s15 + $0xa0] sm:$0xff]
    %v661 = vld [vmem:[%s15 + $0xa8] sm:$0xff]
    %v662 = vld [vmem:[%s15 + $0xb0] sm:$0xff]
    %v663 = vld [vmem:[%s15 + $0xb8] sm:$0xff]
    %v664 = vld [vmem:[%s15 + $0xc0] sm:$0xff]
    %v665 = vld [vmem:[%s15 + $0xc8] sm:$0xff]
    %v666 = vld [vmem:[%s15 + $0xd0] sm:$0xff]
    %v667 = vld [vmem:[%s15 + $0xd8] sm:$0xff]
    %v668 = vld [vmem:[%s15 + $0xe0] sm:$0xff]
    %v669 = vld [vmem:[%s15 + $0xe8] sm:$0xff]
    %v670 = vld [vmem:[%s15 + $0xf0] sm:$0xff]
    %v671 = vld [vmem:[%s15 + $0xf8] sm:$0xff]
    %v672 = vld [vmem:[%s2] sm:$0xff]
    %674 = vset.pattern.permute.xlu0 0
    %675 = vperm.xlu0 %674, %v672
    %v676 = vpop.permute.xlu0 %675
    %678 = vmatpush.msra.mxu0 %v655
    %679 = vmatpush.msra.mxu0 %v654
    %680 = vmatpush.msra.mxu0 %v653
    %681 = vmatpush.msra.mxu0 %v652
    %682 = vmatpush.msra.mxu0 %v651
    %683 = vmatpush.msra.mxu0 %v650
    %684 = vmatpush.msra.mxu0 %v649
    %685 = vmatpush.msra.mxu0 %v648
    %686 = vmatpush.msra.mxu0 %v647
    %687 = vmatpush.msra.mxu0 %v646
    %688 = vmatpush.msra.mxu0 %v645
    %689 = vmatpush.msra.mxu0 %v644
    %690 = vmatpush.msra.mxu0 %v643
    %691 = vmatpush.msra.mxu0 %v642
    %692 = vmatpush.msra.mxu0 %v641
    %693 = vmatpush.msra.mxu0 %v640
    %694 = vmatmul.f32.gmra.mxu0 %v638
    %v695 = vpop.f32.mrf.mxu0
    %v696 = vadd.f32 %v676, %v695
    %697 = vdwg.mxu0
    %698 = vmatpush.msra.mxu0 %v671
    %699 = vmatpush.msra.mxu0 %v670
    %700 = vmatpush.msra.mxu0 %v669
    %701 = vmatpush.msra.mxu0 %v668
    %702 = vmatpush.msra.mxu0 %v667
    %703 = vmatpush.msra.mxu0 %v666
    %704 = vmatpush.msra.mxu0 %v665
    %705 = vmatpush.msra.mxu0 %v664
    %706 = vmatpush.msra.mxu0 %v663
    %707 = vmatpush.msra.mxu0 %v662
    %708 = vmatpush.msra.mxu0 %v661
    %709 = vmatpush.msra.mxu0 %v660
    %710 = vmatpush.msra.mxu0 %v659
    %711 = vmatpush.msra.mxu0 %v658
    %712 = vmatpush.msra.mxu0 %v657
    %713 = vmatpush.msra.mxu0 %v656
    %714 = vmatmul.f32.gmra.mxu0 %v639
    %v715 = vpop.f32.mrf.mxu0
    %v716 = vadd.f32 %v696, %v715
    %717 = vdwg.mxu0
    %v718 = vmax.f32 %v716, 0.0
    %v719 = vpack.c.bf16 %v718, %v718
    %v720 = vld [vmem:[%s13] sm:$0xf]
    %v721 = vld [vmem:[%s13 + $0x4] sm:$0xf]
    %v722 = vld [vmem:[%s13 + $0x8] sm:$0xf]
    %v723 = vld [vmem:[%s13 + $0xc] sm:$0xf]
    %v724 = vld [vmem:[%s13 + $0x10] sm:$0xf]
    %v725 = vld [vmem:[%s13 + $0x14] sm:$0xf]
    %v726 = vld [vmem:[%s13 + $0x18] sm:$0xf]
    %v727 = vld [vmem:[%s13 + $0x1c] sm:$0xf]
    %v736 = vunpack.c.l.b16 %v720
    %v737 = vunpack.c.l.b16 %v721
    %v738 = vunpack.c.l.b16 %v722
    %v739 = vunpack.c.l.b16 %v723
    %v740 = vunpack.c.l.b16 %v724
    %v741 = vunpack.c.l.b16 %v725
    %v742 = vunpack.c.l.b16 %v726
    %v743 = vunpack.c.l.b16 %v727
    %v744 = vpack.c.b16 %v737, %v736
    %v745 = vpack.c.b16 %v739, %v738
    %v746 = vpack.c.b16 %v741, %v740
    %v747 = vpack.c.b16 %v743, %v742
    %vm752 = vcmask 523264
    %v754 = vsel %vm752, %v719, 0
    %756 = vmatpush.bf16.msra.mxu0 0
    %757 = vmatpush.bf16.msra.mxu0 0
    %758 = vmatpush.bf16.msra.mxu0 0
    %759 = vmatpush.bf16.msra.mxu0 0
    %760 = vmatpush.bf16.msra.mxu0 %v747
    %761 = vmatpush.bf16.msra.mxu0 %v746
    %762 = vmatpush.bf16.msra.mxu0 %v745
    %763 = vmatpush.bf16.msra.mxu0 %v744
    %764 = vmatmul.bf16.gmra.mxu0 %v754
    %v765 = vpop.f32.mrf.mxu0
    %v766 = vadd.f32 0.0, %v765
    %v767 = vpop.f32.mrf.mxu0
    %768 = vdwg.mxu0
    %v769 = vpack.c.bf16 %v766, %v766
    %s770 = scalar_lea.vmem %s13, 32
    %v771 = vld [vmem:[%s770] sm:$0xf]
    %v772 = vld [vmem:[%s770 + $0x4] sm:$0xf]
    %v773 = vld [vmem:[%s770 + $0x8] sm:$0xf]
    %v774 = vld [vmem:[%s770 + $0xc] sm:$0xf]
    %v775 = vld [vmem:[%s770 + $0x10] sm:$0xf]
    %v776 = vld [vmem:[%s770 + $0x14] sm:$0xf]
    %v777 = vld [vmem:[%s770 + $0x18] sm:$0xf]
    %v778 = vld [vmem:[%s770 + $0x1c] sm:$0xf]
    %v787 = vunpack.c.l.b16 %v771
    %v788 = vunpack.c.l.b16 %v772
    %v789 = vunpack.c.l.b16 %v773
    %v790 = vunpack.c.l.b16 %v774
    %v791 = vunpack.c.l.b16 %v775
    %v792 = vunpack.c.l.b16 %v776
    %v793 = vunpack.c.l.b16 %v777
    %v794 = vunpack.c.l.b16 %v778
    %v795 = vpack.c.b16 %v788, %v787
    %v796 = vpack.c.b16 %v790, %v789
    %v797 = vpack.c.b16 %v792, %v791
    %v798 = vpack.c.b16 %v794, %v793
    %803 = vmatpush.bf16.msra.mxu0 0
    %804 = vmatpush.bf16.msra.mxu0 0
    %805 = vmatpush.bf16.msra.mxu0 0
    %806 = vmatpush.bf16.msra.mxu0 0
    %807 = vmatpush.bf16.msra.mxu0 %v798
    %808 = vmatpush.bf16.msra.mxu0 %v797
    %809 = vmatpush.bf16.msra.mxu0 %v796
    %810 = vmatpush.bf16.msra.mxu0 %v795
    %811 = vmatmul.bf16.gmra.mxu0 %v754
    %v812 = vpop.f32.mrf.mxu0
    %v813 = vadd.f32 0.0, %v812
    %v814 = vpop.f32.mrf.mxu0
    %815 = vdwg.mxu0
    %v816 = vpack.c.bf16 %v813, %v813
    %s817 = scalar_lea.vmem %s13, 64
    %v818 = vld [vmem:[%s817] sm:$0xf]
    %v819 = vld [vmem:[%s817 + $0x4] sm:$0xf]
    %v820 = vld [vmem:[%s817 + $0x8] sm:$0xf]
    %v821 = vld [vmem:[%s817 + $0xc] sm:$0xf]
    %v822 = vld [vmem:[%s817 + $0x10] sm:$0xf]
    %v823 = vld [vmem:[%s817 + $0x14] sm:$0xf]
    %v824 = vld [vmem:[%s817 + $0x18] sm:$0xf]
    %v825 = vld [vmem:[%s817 + $0x1c] sm:$0xf]
    %v834 = vunpack.c.l.b16 %v818
    %v835 = vunpack.c.l.b16 %v819
    %v836 = vunpack.c.l.b16 %v820
    %v837 = vunpack.c.l.b16 %v821
    %v838 = vunpack.c.l.b16 %v822
    %v839 = vunpack.c.l.b16 %v823
    %v840 = vunpack.c.l.b16 %v824
    %v841 = vunpack.c.l.b16 %v825
    %v842 = vpack.c.b16 %v835, %v834
    %v843 = vpack.c.b16 %v837, %v836
    %v844 = vpack.c.b16 %v839, %v838
    %v845 = vpack.c.b16 %v841, %v840
    %850 = vmatpush.bf16.msra.mxu0 0
    %851 = vmatpush.bf16.msra.mxu0 0
    %852 = vmatpush.bf16.msra.mxu0 0
    %853 = vmatpush.bf16.msra.mxu0 0
    %854 = vmatpush.bf16.msra.mxu0 %v845
    %855 = vmatpush.bf16.msra.mxu0 %v844
    %856 = vmatpush.bf16.msra.mxu0 %v843
    %857 = vmatpush.bf16.msra.mxu0 %v842
    %858 = vmatmul.bf16.gmra.mxu0 %v754
    %v859 = vpop.f32.mrf.mxu0
    %v860 = vadd.f32 0.0, %v859
    %v861 = vpop.f32.mrf.mxu0
    %862 = vdwg.mxu0
    %v863 = vpack.c.bf16 %v860, %v860
    %s864 = scalar_lea.vmem %s13, 96
    %v865 = vld [vmem:[%s864] sm:$0xf]
    %v866 = vld [vmem:[%s864 + $0x4] sm:$0xf]
    %v867 = vld [vmem:[%s864 + $0x8] sm:$0xf]
    %v868 = vld [vmem:[%s864 + $0xc] sm:$0xf]
    %v869 = vld [vmem:[%s864 + $0x10] sm:$0xf]
    %v870 = vld [vmem:[%s864 + $0x14] sm:$0xf]
    %v871 = vld [vmem:[%s864 + $0x18] sm:$0xf]
    %v872 = vld [vmem:[%s864 + $0x1c] sm:$0xf]
    %v881 = vunpack.c.l.b16 %v865
    %v882 = vunpack.c.l.b16 %v866
    %v883 = vunpack.c.l.b16 %v867
    %v884 = vunpack.c.l.b16 %v868
    %v885 = vunpack.c.l.b16 %v869
    %v886 = vunpack.c.l.b16 %v870
    %v887 = vunpack.c.l.b16 %v871
    %v888 = vunpack.c.l.b16 %v872
    %v889 = vpack.c.b16 %v882, %v881
    %v890 = vpack.c.b16 %v884, %v883
    %v891 = vpack.c.b16 %v886, %v885
    %v892 = vpack.c.b16 %v888, %v887
    %897 = vmatpush.bf16.msra.mxu0 0
    %898 = vmatpush.bf16.msra.mxu0 0
    %899 = vmatpush.bf16.msra.mxu0 0
    %900 = vmatpush.bf16.msra.mxu0 0
    %901 = vmatpush.bf16.msra.mxu0 %v892
    %902 = vmatpush.bf16.msra.mxu0 %v891
    %903 = vmatpush.bf16.msra.mxu0 %v890
    %904 = vmatpush.bf16.msra.mxu0 %v889
    %905 = vmatmul.bf16.gmra.mxu0 %v754
    %v906 = vpop.f32.mrf.mxu0
    %v907 = vadd.f32 0.0, %v906
    %v908 = vpop.f32.mrf.mxu0
    %909 = vdwg.mxu0
    %v910 = vpack.c.bf16 %v907, %v907
    %s911 = scalar_lea.vmem %s13, 160
    %v912 = vld [vmem:[%s911] sm:$0xf]
    %v913 = vld [vmem:[%s911 + $0x4] sm:$0xf]
    %v914 = vld [vmem:[%s911 + $0x8] sm:$0xf]
    %v915 = vld [vmem:[%s911 + $0xc] sm:$0xf]
    %v916 = vld [vmem:[%s911 + $0x10] sm:$0xf]
    %v917 = vld [vmem:[%s911 + $0x14] sm:$0xf]
    %v918 = vld [vmem:[%s911 + $0x18] sm:$0xf]
    %v919 = vld [vmem:[%s911 + $0x1c] sm:$0xf]
    %v928 = vunpack.c.l.b16 %v912
    %v929 = vunpack.c.l.b16 %v913
    %v930 = vunpack.c.l.b16 %v914
    %v931 = vunpack.c.l.b16 %v915
    %v932 = vunpack.c.l.b16 %v916
    %v933 = vunpack.c.l.b16 %v917
    %v934 = vunpack.c.l.b16 %v918
    %v935 = vunpack.c.l.b16 %v919
    %v936 = vpack.c.b16 %v929, %v928
    %v937 = vpack.c.b16 %v931, %v930
    %v938 = vpack.c.b16 %v933, %v932
    %v939 = vpack.c.b16 %v935, %v934
    %944 = vmatpush.bf16.msra.mxu0 0
    %945 = vmatpush.bf16.msra.mxu0 0
    %946 = vmatpush.bf16.msra.mxu0 0
    %947 = vmatpush.bf16.msra.mxu0 0
    %948 = vmatpush.bf16.msra.mxu0 %v939
    %949 = vmatpush.bf16.msra.mxu0 %v938
    %950 = vmatpush.bf16.msra.mxu0 %v937
    %951 = vmatpush.bf16.msra.mxu0 %v936
    %952 = vmatmul.bf16.gmra.mxu0 %v754
    %v953 = vpop.f32.mrf.mxu0
    %v954 = vadd.f32 0.0, %v953
    %v955 = vpop.f32.mrf.mxu0
    %956 = vdwg.mxu0
    %v957 = vpack.c.bf16 %v954, %v954
    %s958 = scalar_lea.vmem %s13, 192
    %v959 = vld [vmem:[%s958] sm:$0xf]
    %v960 = vld [vmem:[%s958 + $0x4] sm:$0xf]
    %v961 = vld [vmem:[%s958 + $0x8] sm:$0xf]
    %v962 = vld [vmem:[%s958 + $0xc] sm:$0xf]
    %v963 = vld [vmem:[%s958 + $0x10] sm:$0xf]
    %v964 = vld [vmem:[%s958 + $0x14] sm:$0xf]
    %v965 = vld [vmem:[%s958 + $0x18] sm:$0xf]
    %v966 = vld [vmem:[%s958 + $0x1c] sm:$0xf]
    %v975 = vunpack.c.l.b16 %v959
    %v976 = vunpack.c.l.b16 %v960
    %v977 = vunpack.c.l.b16 %v961
    %v978 = vunpack.c.l.b16 %v962
    %v979 = vunpack.c.l.b16 %v963
    %v980 = vunpack.c.l.b16 %v964
    %v981 = vunpack.c.l.b16 %v965
    %v982 = vunpack.c.l.b16 %v966
    %v983 = vpack.c.b16 %v976, %v975
    %v984 = vpack.c.b16 %v978, %v977
    %v985 = vpack.c.b16 %v980, %v979
    %v986 = vpack.c.b16 %v982, %v981
    %991 = vmatpush.bf16.msra.mxu0 0
    %992 = vmatpush.bf16.msra.mxu0 0
    %993 = vmatpush.bf16.msra.mxu0 0
    %994 = vmatpush.bf16.msra.mxu0 0
    %995 = vmatpush.bf16.msra.mxu0 %v986
    %996 = vmatpush.bf16.msra.mxu0 %v985
    %997 = vmatpush.bf16.msra.mxu0 %v984
    %998 = vmatpush.bf16.msra.mxu0 %v983
    %999 = vmatmul.bf16.gmra.mxu0 %v754
    %v1000 = vpop.f32.mrf.mxu0
    %v1001 = vadd.f32 0.0, %v1000
    %v1002 = vpop.f32.mrf.mxu0
    %1003 = vdwg.mxu0
    %v1004 = vpack.c.bf16 %v1001, %v1001
    %s1005 = scalar_lea.vmem %s13, 224
    %v1006 = vld [vmem:[%s1005] sm:$0xf]
    %v1007 = vld [vmem:[%s1005 + $0x4] sm:$0xf]
    %v1008 = vld [vmem:[%s1005 + $0x8] sm:$0xf]
    %v1009 = vld [vmem:[%s1005 + $0xc] sm:$0xf]
    %v1010 = vld [vmem:[%s1005 + $0x10] sm:$0xf]
    %v1011 = vld [vmem:[%s1005 + $0x14] sm:$0xf]
    %v1012 = vld [vmem:[%s1005 + $0x18] sm:$0xf]
    %v1013 = vld [vmem:[%s1005 + $0x1c] sm:$0xf]
    %v1022 = vunpack.c.l.b16 %v1006
    %v1023 = vunpack.c.l.b16 %v1007
    %v1024 = vunpack.c.l.b16 %v1008
    %v1025 = vunpack.c.l.b16 %v1009
    %v1026 = vunpack.c.l.b16 %v1010
    %v1027 = vunpack.c.l.b16 %v1011
    %v1028 = vunpack.c.l.b16 %v1012
    %v1029 = vunpack.c.l.b16 %v1013
    %v1030 = vpack.c.b16 %v1023, %v1022
    %v1031 = vpack.c.b16 %v1025, %v1024
    %v1032 = vpack.c.b16 %v1027, %v1026
    %v1033 = vpack.c.b16 %v1029, %v1028
    %1038 = vmatpush.bf16.msra.mxu0 0
    %1039 = vmatpush.bf16.msra.mxu0 0
    %1040 = vmatpush.bf16.msra.mxu0 0
    %1041 = vmatpush.bf16.msra.mxu0 0
    %1042 = vmatpush.bf16.msra.mxu0 %v1033
    %1043 = vmatpush.bf16.msra.mxu0 %v1032
    %1044 = vmatpush.bf16.msra.mxu0 %v1031
    %1045 = vmatpush.bf16.msra.mxu0 %v1030
    %1046 = vmatmul.bf16.gmra.mxu0 %v754
    %v1047 = vpop.f32.mrf.mxu0
    %v1048 = vadd.f32 0.0, %v1047
    %v1049 = vpop.f32.mrf.mxu0
    %1050 = vdwg.mxu0
    %v1051 = vpack.c.bf16 %v1048, %v1048
    %s1052 = scalar_lea.vmem %s13, 256
    %v1053 = vld [vmem:[%s1052] sm:$0xf]
    %v1054 = vld [vmem:[%s1052 + $0x4] sm:$0xf]
    %v1055 = vld [vmem:[%s1052 + $0x8] sm:$0xf]
    %v1056 = vld [vmem:[%s1052 + $0xc] sm:$0xf]
    %v1057 = vld [vmem:[%s1052 + $0x10] sm:$0xf]
    %v1058 = vld [vmem:[%s1052 + $0x14] sm:$0xf]
    %v1059 = vld [vmem:[%s1052 + $0x18] sm:$0xf]
    %v1060 = vld [vmem:[%s1052 + $0x1c] sm:$0xf]
    %v1069 = vunpack.c.l.b16 %v1053
    %v1070 = vunpack.c.l.b16 %v1054
    %v1071 = vunpack.c.l.b16 %v1055
    %v1072 = vunpack.c.l.b16 %v1056
    %v1073 = vunpack.c.l.b16 %v1057
    %v1074 = vunpack.c.l.b16 %v1058
    %v1075 = vunpack.c.l.b16 %v1059
    %v1076 = vunpack.c.l.b16 %v1060
    %v1077 = vpack.c.b16 %v1070, %v1069
    %v1078 = vpack.c.b16 %v1072, %v1071
    %v1079 = vpack.c.b16 %v1074, %v1073
    %v1080 = vpack.c.b16 %v1076, %v1075
    %1085 = vmatpush.bf16.msra.mxu0 0
    %1086 = vmatpush.bf16.msra.mxu0 0
    %1087 = vmatpush.bf16.msra.mxu0 0
    %1088 = vmatpush.bf16.msra.mxu0 0
    %1089 = vmatpush.bf16.msra.mxu0 %v1080
    %1090 = vmatpush.bf16.msra.mxu0 %v1079
    %1091 = vmatpush.bf16.msra.mxu0 %v1078
    %1092 = vmatpush.bf16.msra.mxu0 %v1077
    %1093 = vmatmul.bf16.gmra.mxu0 %v754
    %v1094 = vpop.f32.mrf.mxu0
    %v1095 = vadd.f32 0.0, %v1094
    %v1096 = vpop.f32.mrf.mxu0
    %1097 = vdwg.mxu0
    %v1098 = vpack.c.bf16 %v1095, %v1095
    %v1099 = vld [vmem:[%s3] sm:$0xf]
    %v1100 = vld [vmem:[%s3 + $0x4] sm:$0xf]
    %s1101 = scalar_lea.vmem %s3, 8
    %v1102 = vld [vmem:[%s1101] sm:$0xf]
    %v1103 = vld [vmem:[%s1101 + $0x4] sm:$0xf]
    %v1106 = vunpack.c.l.b16 %v1102
    %v1107 = vunpack.c.l.b16 %v1103
    %v1108 = vpack.c.b16 %v1107, %v1106
    %vm1109 = vcmask 64512
    %v1111 = vsel %vm1109, %v1108, 0
    %vm1113 = vcmask 1043456
    %v1115 = vsel %vm1113, %v816, 0
    %1117 = vmatpush.bf16.msra.mxu0 0
    %1118 = vmatpush.bf16.msra.mxu0 0
    %1119 = vmatpush.bf16.msra.mxu0 0
    %1120 = vmatpush.bf16.msra.mxu0 0
    %1121 = vmatpush.bf16.msra.mxu0 0
    %1122 = vmatpush.bf16.msra.mxu0 0
    %1123 = vmatpush.bf16.msra.mxu0 0
    %1124 = vmatpush.bf16.msra.mxu0 %v1115
    %1125 = vmatmul.bf16.gmra.mxu0 %v1111
    %v1126 = vpop.f32.mrf.mxu0
    %v1127 = vadd.f32 0.0, %v1126
    %v1128 = vpop.f32.mrf.mxu0
    %v1129 = vadd.f32 0.0, %v1128
    %1130 = vdwg.mxu0
    %v1133 = vunpack.c.l.b16 %v1099
    %v1134 = vunpack.c.l.b16 %v1100
    %v1135 = vpack.c.b16 %v1134, %v1133
    %v1137 = vsel %vm1109, %v1135, 0
    %v1140 = vsel %vm1113, %v769, 0
    %1142 = vmatpush.bf16.msra.mxu0 0
    %1143 = vmatpush.bf16.msra.mxu0 0
    %1144 = vmatpush.bf16.msra.mxu0 0
    %1145 = vmatpush.bf16.msra.mxu0 0
    %1146 = vmatpush.bf16.msra.mxu0 0
    %1147 = vmatpush.bf16.msra.mxu0 0
    %1148 = vmatpush.bf16.msra.mxu0 0
    %1149 = vmatpush.bf16.msra.mxu0 %v1140
    %1150 = vmatmul.bf16.gmra.mxu0 %v1137
    %v1151 = vpop.f32.mrf.mxu0
    %v1152 = vadd.f32 %v1127, %v1151
    %v1153 = vpop.f32.mrf.mxu0
    %v1154 = vadd.f32 %v1129, %v1153
    %1155 = vdwg.mxu0
    %s1156 = scalar_lea.vmem %s3, 16
    %v1157 = vld [vmem:[%s1156] sm:$0xf]
    %v1158 = vld [vmem:[%s1156 + $0x4] sm:$0xf]
    %v1161 = vunpack.c.l.b16 %v1157
    %v1162 = vunpack.c.l.b16 %v1158
    %v1163 = vpack.c.b16 %v1162, %v1161
    %v1165 = vsel %vm1109, %v1163, 0
    %v1168 = vsel %vm1113, %v863, 0
    %1170 = vmatpush.bf16.msra.mxu0 0
    %1171 = vmatpush.bf16.msra.mxu0 0
    %1172 = vmatpush.bf16.msra.mxu0 0
    %1173 = vmatpush.bf16.msra.mxu0 0
    %1174 = vmatpush.bf16.msra.mxu0 0
    %1175 = vmatpush.bf16.msra.mxu0 0
    %1176 = vmatpush.bf16.msra.mxu0 0
    %1177 = vmatpush.bf16.msra.mxu0 %v1168
    %1178 = vmatmul.bf16.gmra.mxu0 %v1165
    %v1179 = vpop.f32.mrf.mxu0
    %v1180 = vadd.f32 0.0, %v1179
    %v1181 = vpop.f32.mrf.mxu0
    %v1182 = vadd.f32 0.0, %v1181
    %1183 = vdwg.mxu0
    %v1184 = vadd.f32 %v1152, %v1180
    %v1185 = vadd.f32 %v1154, %v1182
    %s1186 = scalar_lea.vmem %s3, 24
    %v1187 = vld [vmem:[%s1186] sm:$0xf]
    %v1188 = vld [vmem:[%s1186 + $0x4] sm:$0xf]
    %v1191 = vunpack.c.l.b16 %v1187
    %v1192 = vunpack.c.l.b16 %v1188
    %v1193 = vpack.c.b16 %v1192, %v1191
    %v1195 = vsel %vm1109, %v1193, 0
    %v1198 = vsel %vm1113, %v910, 0
    %1200 = vmatpush.bf16.msra.mxu0 0
    %1201 = vmatpush.bf16.msra.mxu0 0
    %1202 = vmatpush.bf16.msra.mxu0 0
    %1203 = vmatpush.bf16.msra.mxu0 0
    %1204 = vmatpush.bf16.msra.mxu0 0
    %1205 = vmatpush.bf16.msra.mxu0 0
    %1206 = vmatpush.bf16.msra.mxu0 0
    %1207 = vmatpush.bf16.msra.mxu0 %v1198
    %1208 = vmatmul.bf16.gmra.mxu0 %v1195
    %v1209 = vpop.f32.mrf.mxu0
    %v1210 = vadd.f32 0.0, %v1209
    %v1211 = vpop.f32.mrf.mxu0
    %v1212 = vadd.f32 0.0, %v1211
    %1213 = vdwg.mxu0
    %v1214 = vadd.f32 %v1184, %v1210
    %v1215 = vadd.f32 %v1185, %v1212
    %s1216 = scalar_lea.vmem %s3, 32
    %v1217 = vld [vmem:[%s1216] sm:$0xf]
    %v1218 = vld [vmem:[%s1216 + $0x4] sm:$0xf]
    %v1221 = vunpack.c.l.b16 %v1217
    %v1222 = vunpack.c.l.b16 %v1218
    %v1223 = vpack.c.b16 %v1222, %v1221
    %v1225 = vsel %vm1109, %v1223, 0
    %v1227 = vsel %vm1113, %v719, 0
    %1229 = vmatpush.bf16.msra.mxu0 0
    %1230 = vmatpush.bf16.msra.mxu0 0
    %1231 = vmatpush.bf16.msra.mxu0 0
    %1232 = vmatpush.bf16.msra.mxu0 0
    %1233 = vmatpush.bf16.msra.mxu0 0
    %1234 = vmatpush.bf16.msra.mxu0 0
    %1235 = vmatpush.bf16.msra.mxu0 0
    %1236 = vmatpush.bf16.msra.mxu0 %v1227
    %1237 = vmatmul.bf16.gmra.mxu0 %v1225
    %v1238 = vpop.f32.mrf.mxu0
    %v1239 = vadd.f32 0.0, %v1238
    %v1240 = vpop.f32.mrf.mxu0
    %v1241 = vadd.f32 0.0, %v1240
    %1242 = vdwg.mxu0
    %v1243 = vadd.f32 %v1214, %v1239
    %v1244 = vadd.f32 %v1215, %v1241
    %s1245 = scalar_lea.vmem %s3, 40
    %v1246 = vld [vmem:[%s1245] sm:$0xf]
    %v1247 = vld [vmem:[%s1245 + $0x4] sm:$0xf]
    %v1250 = vunpack.c.l.b16 %v1246
    %v1251 = vunpack.c.l.b16 %v1247
    %v1252 = vpack.c.b16 %v1251, %v1250
    %v1254 = vsel %vm1109, %v1252, 0
    %v1257 = vsel %vm1113, %v957, 0
    %1259 = vmatpush.bf16.msra.mxu0 0
    %1260 = vmatpush.bf16.msra.mxu0 0
    %1261 = vmatpush.bf16.msra.mxu0 0
    %1262 = vmatpush.bf16.msra.mxu0 0
    %1263 = vmatpush.bf16.msra.mxu0 0
    %1264 = vmatpush.bf16.msra.mxu0 0
    %1265 = vmatpush.bf16.msra.mxu0 0
    %1266 = vmatpush.bf16.msra.mxu0 %v1257
    %1267 = vmatmul.bf16.gmra.mxu0 %v1254
    %v1268 = vpop.f32.mrf.mxu0
    %v1269 = vadd.f32 0.0, %v1268
    %v1270 = vpop.f32.mrf.mxu0
    %v1271 = vadd.f32 0.0, %v1270
    %1272 = vdwg.mxu0
    %v1273 = vadd.f32 %v1243, %v1269
    %v1274 = vadd.f32 %v1244, %v1271
    %s1275 = scalar_lea.vmem %s3, 48
    %v1276 = vld [vmem:[%s1275] sm:$0xf]
    %v1277 = vld [vmem:[%s1275 + $0x4] sm:$0xf]
    %v1280 = vunpack.c.l.b16 %v1276
    %v1281 = vunpack.c.l.b16 %v1277
    %v1282 = vpack.c.b16 %v1281, %v1280
    %v1284 = vsel %vm1109, %v1282, 0
    %v1287 = vsel %vm1113, %v1004, 0
    %1289 = vmatpush.bf16.msra.mxu0 0
    %1290 = vmatpush.bf16.msra.mxu0 0
    %1291 = vmatpush.bf16.msra.mxu0 0
    %1292 = vmatpush.bf16.msra.mxu0 0
    %1293 = vmatpush.bf16.msra.mxu0 0
    %1294 = vmatpush.bf16.msra.mxu0 0
    %1295 = vmatpush.bf16.msra.mxu0 0
    %1296 = vmatpush.bf16.msra.mxu0 %v1287
    %1297 = vmatmul.bf16.gmra.mxu0 %v1284
    %v1298 = vpop.f32.mrf.mxu0
    %v1299 = vadd.f32 0.0, %v1298
    %v1300 = vpop.f32.mrf.mxu0
    %v1301 = vadd.f32 0.0, %v1300
    %1302 = vdwg.mxu0
    %v1303 = vadd.f32 %v1273, %v1299
    %v1304 = vadd.f32 %v1274, %v1301
    %s1305 = scalar_lea.vmem %s3, 56
    %v1306 = vld [vmem:[%s1305] sm:$0xf]
    %v1307 = vld [vmem:[%s1305 + $0x4] sm:$0xf]
    %v1310 = vunpack.c.l.b16 %v1306
    %v1311 = vunpack.c.l.b16 %v1307
    %v1312 = vpack.c.b16 %v1311, %v1310
    %v1314 = vsel %vm1109, %v1312, 0
    %v1317 = vsel %vm1113, %v1051, 0
    %1319 = vmatpush.bf16.msra.mxu0 0
    %1320 = vmatpush.bf16.msra.mxu0 0
    %1321 = vmatpush.bf16.msra.mxu0 0
    %1322 = vmatpush.bf16.msra.mxu0 0
    %1323 = vmatpush.bf16.msra.mxu0 0
    %1324 = vmatpush.bf16.msra.mxu0 0
    %1325 = vmatpush.bf16.msra.mxu0 0
    %1326 = vmatpush.bf16.msra.mxu0 %v1317
    %1327 = vmatmul.bf16.gmra.mxu0 %v1314
    %v1328 = vpop.f32.mrf.mxu0
    %v1329 = vadd.f32 0.0, %v1328
    %v1330 = vpop.f32.mrf.mxu0
    %v1331 = vadd.f32 0.0, %v1330
    %1332 = vdwg.mxu0
    %v1333 = vadd.f32 %v1303, %v1329
    %v1334 = vadd.f32 %v1304, %v1331
    %s1335 = scalar_lea.vmem %s3, 64
    %v1336 = vld [vmem:[%s1335] sm:$0xf]
    %v1337 = vld [vmem:[%s1335 + $0x4] sm:$0xf]
    %v1340 = vunpack.c.l.b16 %v1336
    %v1341 = vunpack.c.l.b16 %v1337
    %v1342 = vpack.c.b16 %v1341, %v1340
    %v1344 = vsel %vm1109, %v1342, 0
    %v1347 = vsel %vm1113, %v1098, 0
    %1349 = vmatpush.bf16.msra.mxu0 0
    %1350 = vmatpush.bf16.msra.mxu0 0
    %1351 = vmatpush.bf16.msra.mxu0 0
    %1352 = vmatpush.bf16.msra.mxu0 0
    %1353 = vmatpush.bf16.msra.mxu0 0
    %1354 = vmatpush.bf16.msra.mxu0 0
    %1355 = vmatpush.bf16.msra.mxu0 0
    %1356 = vmatpush.bf16.msra.mxu0 %v1347
    %1357 = vmatmul.bf16.gmra.mxu0 %v1344
    %v1358 = vpop.f32.mrf.mxu0
    %v1359 = vadd.f32 0.0, %v1358
    %v1360 = vpop.f32.mrf.mxu0
    %v1361 = vadd.f32 0.0, %v1360
    %1362 = vdwg.mxu0
    %v1363 = vadd.f32 %v1333, %v1359
    %v1364 = vadd.f32 %v1334, %v1361
    %v1365 = vld [vmem:[%s16] sm:$0xff]
    %v1366 = vld [vmem:[%s16 + $0x8] sm:$0xff]
    %v1367 = vld [vmem:[%s16 + $0x10] sm:$0xff]
    %v1368 = vld [vmem:[%s16 + $0x18] sm:$0xff]
    %v1369 = vld [vmem:[%s16 + $0x20] sm:$0xff]
    %v1370 = vld [vmem:[%s16 + $0x28] sm:$0xff]
    %v1371 = vld [vmem:[%s16 + $0x30] sm:$0xff]
    %v1372 = vld [vmem:[%s16 + $0x38] sm:$0xff]
    %v1373 = vld [vmem:[%s4] sm:$0xff]
    %v1374 = vld [vmem:[%s4 + $0x8] sm:$0xff]
    %1376 = vset.pattern.permute.xlu0 0
    %1377 = vperm.xlu0 %1376, %v1373
    %v1378 = vpop.permute.xlu0 %1377
    %1381 = vset.pattern.permute.xlu0 0
    %1382 = vperm.xlu0 %1381, %v1374
    %v1383 = vpop.permute.xlu0 %1382
    %v1386 = vsel %vm752, %v1363, 0
    %v1389 = vsel %vm752, %v1364, 0
    %1391 = vmatpush.msra.mxu0 0.0
    %1392 = vmatpush.msra.mxu0 0.0
    %1393 = vmatpush.msra.mxu0 0.0
    %1394 = vmatpush.msra.mxu0 0.0
    %1395 = vmatpush.msra.mxu0 0.0
    %1396 = vmatpush.msra.mxu0 0.0
    %1397 = vmatpush.msra.mxu0 0.0
    %1398 = vmatpush.msra.mxu0 0.0
    %1399 = vmatpush.msra.mxu0 %v1372
    %1400 = vmatpush.msra.mxu0 %v1371
    %1401 = vmatpush.msra.mxu0 %v1370
    %1402 = vmatpush.msra.mxu0 %v1369
    %1403 = vmatpush.msra.mxu0 %v1368
    %1404 = vmatpush.msra.mxu0 %v1367
    %1405 = vmatpush.msra.mxu0 %v1366
    %1406 = vmatpush.msra.mxu0 %v1365
    %1407 = vmatmul.f32.gmra.mxu0 %v1386
    %v1408 = vpop.f32.mrf.mxu0
    %v1409 = vadd.f32 %v1378, %v1408
    %1410 = vmatmul.f32.gmra.mxu0 %v1389
    %v1411 = vpop.f32.mrf.mxu0
    %v1412 = vadd.f32 %v1383, %v1411
    %1413 = vdwg.mxu0
    %v1414 = vmax.f32 %v1409, 0.0
    %v1415 = vmax.f32 %v1412, 0.0
    %v1416 = vpack.c.bf16 %v1415, %v1414
    %v1417 = vld [vmem:[%s14] sm:$0xf]
    %v1418 = vld [vmem:[%s14 + $0x4] sm:$0xf]
    %v1421 = vunpack.c.l.b16 %v1417
    %v1422 = vunpack.c.l.b16 %v1418
    %v1423 = vpack.c.b16 %v1422, %v1421
    %vm1425 = vcmask 130048
    %v1427 = vsel %vm1425, %v1416, 0
    %1429 = vmatpush.bf16.msra.mxu0 0
    %1430 = vmatpush.bf16.msra.mxu0 0
    %1431 = vmatpush.bf16.msra.mxu0 0
    %1432 = vmatpush.bf16.msra.mxu0 0
    %1433 = vmatpush.bf16.msra.mxu0 0
    %1434 = vmatpush.bf16.msra.mxu0 0
    %1435 = vmatpush.bf16.msra.mxu0 0
    %1436 = vmatpush.bf16.msra.mxu0 %v1423
    %1437 = vmatmul.bf16.gmra.mxu0 %v1427
    %v1438 = vpop.f32.mrf.mxu0
    %v1439 = vadd.f32 0.0, %v1438
    %v1440 = vpop.f32.mrf.mxu0
    %v1441 = vadd.f32 0.0, %v1440
    %1442 = vdwg.mxu0
    %v1443 = vpack.c.bf16 %v1441, %v1439
    %s1444 = scalar_lea.vmem %s14, 8
    %v1445 = vld [vmem:[%s1444] sm:$0xf]
    %v1446 = vld [vmem:[%s1444 + $0x4] sm:$0xf]
    %v1449 = vunpack.c.l.b16 %v1445
    %v1450 = vunpack.c.l.b16 %v1446
    %v1451 = vpack.c.b16 %v1450, %v1449
    %1453 = vmatpush.bf16.msra.mxu0 0
    %1454 = vmatpush.bf16.msra.mxu0 0
    %1455 = vmatpush.bf16.msra.mxu0 0
    %1456 = vmatpush.bf16.msra.mxu0 0
    %1457 = vmatpush.bf16.msra.mxu0 0
    %1458 = vmatpush.bf16.msra.mxu0 0
    %1459 = vmatpush.bf16.msra.mxu0 0
    %1460 = vmatpush.bf16.msra.mxu0 %v1451
    %1461 = vmatmul.bf16.gmra.mxu0 %v1427
    %v1462 = vpop.f32.mrf.mxu0
    %v1463 = vadd.f32 0.0, %v1462
    %v1464 = vpop.f32.mrf.mxu0
    %v1465 = vadd.f32 0.0, %v1464
    %1466 = vdwg.mxu0
    %v1467 = vpack.c.bf16 %v1465, %v1463
    %s1468 = scalar_lea.vmem %s14, 16
    %v1469 = vld [vmem:[%s1468] sm:$0xf]
    %v1470 = vld [vmem:[%s1468 + $0x4] sm:$0xf]
    %v1473 = vunpack.c.l.b16 %v1469
    %v1474 = vunpack.c.l.b16 %v1470
    %v1475 = vpack.c.b16 %v1474, %v1473
    %1477 = vmatpush.bf16.msra.mxu0 0
    %1478 = vmatpush.bf16.msra.mxu0 0
    %1479 = vmatpush.bf16.msra.mxu0 0
    %1480 = vmatpush.bf16.msra.mxu0 0
    %1481 = vmatpush.bf16.msra.mxu0 0
    %1482 = vmatpush.bf16.msra.mxu0 0
    %1483 = vmatpush.bf16.msra.mxu0 0
    %1484 = vmatpush.bf16.msra.mxu0 %v1475
    %1485 = vmatmul.bf16.gmra.mxu0 %v1427
    %v1486 = vpop.f32.mrf.mxu0
    %v1487 = vadd.f32 0.0, %v1486
    %v1488 = vpop.f32.mrf.mxu0
    %v1489 = vadd.f32 0.0, %v1488
    %1490 = vdwg.mxu0
    %v1491 = vpack.c.bf16 %v1489, %v1487
    %s1492 = scalar_lea.vmem %s14, 24
    %v1493 = vld [vmem:[%s1492] sm:$0xf]
    %v1494 = vld [vmem:[%s1492 + $0x4] sm:$0xf]
    %v1497 = vunpack.c.l.b16 %v1493
    %v1498 = vunpack.c.l.b16 %v1494
    %v1499 = vpack.c.b16 %v1498, %v1497
    %1501 = vmatpush.bf16.msra.mxu0 0
    %1502 = vmatpush.bf16.msra.mxu0 0
    %1503 = vmatpush.bf16.msra.mxu0 0
    %1504 = vmatpush.bf16.msra.mxu0 0
    %1505 = vmatpush.bf16.msra.mxu0 0
    %1506 = vmatpush.bf16.msra.mxu0 0
    %1507 = vmatpush.bf16.msra.mxu0 0
    %1508 = vmatpush.bf16.msra.mxu0 %v1499
    %1509 = vmatmul.bf16.gmra.mxu0 %v1427
    %v1510 = vpop.f32.mrf.mxu0
    %v1511 = vadd.f32 0.0, %v1510
    %v1512 = vpop.f32.mrf.mxu0
    %v1513 = vadd.f32 0.0, %v1512
    %1514 = vdwg.mxu0
    %v1515 = vpack.c.bf16 %v1513, %v1511
    %s1516 = scalar_lea.vmem %s14, 40
    %v1517 = vld [vmem:[%s1516] sm:$0xf]
    %v1518 = vld [vmem:[%s1516 + $0x4] sm:$0xf]
    %v1521 = vunpack.c.l.b16 %v1517
    %v1522 = vunpack.c.l.b16 %v1518
    %v1523 = vpack.c.b16 %v1522, %v1521
    %1525 = vmatpush.bf16.msra.mxu0 0
    %1526 = vmatpush.bf16.msra.mxu0 0
    %1527 = vmatpush.bf16.msra.mxu0 0
    %1528 = vmatpush.bf16.msra.mxu0 0
    %1529 = vmatpush.bf16.msra.mxu0 0
    %1530 = vmatpush.bf16.msra.mxu0 0
    %1531 = vmatpush.bf16.msra.mxu0 0
    %1532 = vmatpush.bf16.msra.mxu0 %v1523
    %1533 = vmatmul.bf16.gmra.mxu0 %v1427
    %v1534 = vpop.f32.mrf.mxu0
    %v1535 = vadd.f32 0.0, %v1534
    %v1536 = vpop.f32.mrf.mxu0
    %v1537 = vadd.f32 0.0, %v1536
    %1538 = vdwg.mxu0
    %v1539 = vpack.c.bf16 %v1537, %v1535
    %s1540 = scalar_lea.vmem %s14, 48
    %v1541 = vld [vmem:[%s1540] sm:$0xf]
    %v1542 = vld [vmem:[%s1540 + $0x4] sm:$0xf]
    %v1545 = vunpack.c.l.b16 %v1541
    %v1546 = vunpack.c.l.b16 %v1542
    %v1547 = vpack.c.b16 %v1546, %v1545
    %1549 = vmatpush.bf16.msra.mxu0 0
    %1550 = vmatpush.bf16.msra.mxu0 0
    %1551 = vmatpush.bf16.msra.mxu0 0
    %1552 = vmatpush.bf16.msra.mxu0 0
    %1553 = vmatpush.bf16.msra.mxu0 0
    %1554 = vmatpush.bf16.msra.mxu0 0
    %1555 = vmatpush.bf16.msra.mxu0 0
    %1556 = vmatpush.bf16.msra.mxu0 %v1547
    %1557 = vmatmul.bf16.gmra.mxu0 %v1427
    %v1558 = vpop.f32.mrf.mxu0
    %v1559 = vadd.f32 0.0, %v1558
    %v1560 = vpop.f32.mrf.mxu0
    %v1561 = vadd.f32 0.0, %v1560
    %1562 = vdwg.mxu0
    %v1563 = vpack.c.bf16 %v1561, %v1559
    %s1564 = scalar_lea.vmem %s14, 56
    %v1565 = vld [vmem:[%s1564] sm:$0xf]
    %v1566 = vld [vmem:[%s1564 + $0x4] sm:$0xf]
    %v1569 = vunpack.c.l.b16 %v1565
    %v1570 = vunpack.c.l.b16 %v1566
    %v1571 = vpack.c.b16 %v1570, %v1569
    %1573 = vmatpush.bf16.msra.mxu0 0
    %1574 = vmatpush.bf16.msra.mxu0 0
    %1575 = vmatpush.bf16.msra.mxu0 0
    %1576 = vmatpush.bf16.msra.mxu0 0
    %1577 = vmatpush.bf16.msra.mxu0 0
    %1578 = vmatpush.bf16.msra.mxu0 0
    %1579 = vmatpush.bf16.msra.mxu0 0
    %1580 = vmatpush.bf16.msra.mxu0 %v1571
    %1581 = vmatmul.bf16.gmra.mxu0 %v1427
    %v1582 = vpop.f32.mrf.mxu0
    %v1583 = vadd.f32 0.0, %v1582
    %v1584 = vpop.f32.mrf.mxu0
    %v1585 = vadd.f32 0.0, %v1584
    %1586 = vdwg.mxu0
    %v1587 = vpack.c.bf16 %v1585, %v1583
    %s1588 = scalar_lea.vmem %s14, 64
    %v1589 = vld [vmem:[%s1588] sm:$0xf]
    %v1590 = vld [vmem:[%s1588 + $0x4] sm:$0xf]
    %v1593 = vunpack.c.l.b16 %v1589
    %v1594 = vunpack.c.l.b16 %v1590
    %v1595 = vpack.c.b16 %v1594, %v1593
    %1597 = vmatpush.bf16.msra.mxu0 0
    %1598 = vmatpush.bf16.msra.mxu0 0
    %1599 = vmatpush.bf16.msra.mxu0 0
    %1600 = vmatpush.bf16.msra.mxu0 0
    %1601 = vmatpush.bf16.msra.mxu0 0
    %1602 = vmatpush.bf16.msra.mxu0 0
    %1603 = vmatpush.bf16.msra.mxu0 0
    %1604 = vmatpush.bf16.msra.mxu0 %v1595
    %1605 = vmatmul.bf16.gmra.mxu0 %v1427
    %v1606 = vpop.f32.mrf.mxu0
    %v1607 = vadd.f32 0.0, %v1606
    %v1608 = vpop.f32.mrf.mxu0
    %v1609 = vadd.f32 0.0, %v1608
    %1610 = vdwg.mxu0
    %v1611 = vpack.c.bf16 %v1609, %v1607
    %v1612 = vld [vmem:[%s5] sm:$0xf]
    %v1613 = vld [vmem:[%s5 + $0x4] sm:$0xf]
    %s1614 = scalar_lea.vmem %s5, 8
    %v1615 = vld [vmem:[%s1614] sm:$0xf]
    %v1616 = vld [vmem:[%s1614 + $0x4] sm:$0xf]
    %v1619 = vunpack.c.l.b16 %v1615
    %v1620 = vunpack.c.l.b16 %v1616
    %v1621 = vpack.c.b16 %v1620, %v1619
    %v1623 = vsel %vm1425, %v1621, 0
    %1625 = vmatpush.bf16.msra.mxu0 0
    %1626 = vmatpush.bf16.msra.mxu0 0
    %1627 = vmatpush.bf16.msra.mxu0 0
    %1628 = vmatpush.bf16.msra.mxu0 0
    %1629 = vmatpush.bf16.msra.mxu0 0
    %1630 = vmatpush.bf16.msra.mxu0 0
    %1631 = vmatpush.bf16.msra.mxu0 0
    %1632 = vmatpush.bf16.msra.mxu0 %v1467
    %1633 = vmatmul.bf16.gmra.mxu0 %v1623
    %v1634 = vpop.f32.mrf.mxu0
    %v1635 = vadd.f32 0.0, %v1634
    %v1636 = vpop.f32.mrf.mxu0
    %v1637 = vadd.f32 0.0, %v1636
    %1638 = vdwg.mxu0
    %v1641 = vunpack.c.l.b16 %v1612
    %v1642 = vunpack.c.l.b16 %v1613
    %v1643 = vpack.c.b16 %v1642, %v1641
    %v1645 = vsel %vm1425, %v1643, 0
    %1647 = vmatpush.bf16.msra.mxu0 0
    %1648 = vmatpush.bf16.msra.mxu0 0
    %1649 = vmatpush.bf16.msra.mxu0 0
    %1650 = vmatpush.bf16.msra.mxu0 0
    %1651 = vmatpush.bf16.msra.mxu0 0
    %1652 = vmatpush.bf16.msra.mxu0 0
    %1653 = vmatpush.bf16.msra.mxu0 0
    %1654 = vmatpush.bf16.msra.mxu0 %v1443
    %1655 = vmatmul.bf16.gmra.mxu0 %v1645
    %v1656 = vpop.f32.mrf.mxu0
    %v1657 = vadd.f32 %v1635, %v1656
    %v1658 = vpop.f32.mrf.mxu0
    %v1659 = vadd.f32 %v1637, %v1658
    %1660 = vdwg.mxu0
    %s1661 = scalar_lea.vmem %s5, 16
    %v1662 = vld [vmem:[%s1661] sm:$0xf]
    %v1663 = vld [vmem:[%s1661 + $0x4] sm:$0xf]
    %v1666 = vunpack.c.l.b16 %v1662
    %v1667 = vunpack.c.l.b16 %v1663
    %v1668 = vpack.c.b16 %v1667, %v1666
    %v1670 = vsel %vm1425, %v1668, 0
    %1672 = vmatpush.bf16.msra.mxu0 0
    %1673 = vmatpush.bf16.msra.mxu0 0
    %1674 = vmatpush.bf16.msra.mxu0 0
    %1675 = vmatpush.bf16.msra.mxu0 0
    %1676 = vmatpush.bf16.msra.mxu0 0
    %1677 = vmatpush.bf16.msra.mxu0 0
    %1678 = vmatpush.bf16.msra.mxu0 0
    %1679 = vmatpush.bf16.msra.mxu0 %v1491
    %1680 = vmatmul.bf16.gmra.mxu0 %v1670
    %v1681 = vpop.f32.mrf.mxu0
    %v1682 = vadd.f32 0.0, %v1681
    %v1683 = vpop.f32.mrf.mxu0
    %v1684 = vadd.f32 0.0, %v1683
    %1685 = vdwg.mxu0
    %v1686 = vadd.f32 %v1657, %v1682
    %v1687 = vadd.f32 %v1659, %v1684
    %s1688 = scalar_lea.vmem %s5, 24
    %v1689 = vld [vmem:[%s1688] sm:$0xf]
    %v1690 = vld [vmem:[%s1688 + $0x4] sm:$0xf]
    %v1693 = vunpack.c.l.b16 %v1689
    %v1694 = vunpack.c.l.b16 %v1690
    %v1695 = vpack.c.b16 %v1694, %v1693
    %v1697 = vsel %vm1425, %v1695, 0
    %1699 = vmatpush.bf16.msra.mxu0 0
    %1700 = vmatpush.bf16.msra.mxu0 0
    %1701 = vmatpush.bf16.msra.mxu0 0
    %1702 = vmatpush.bf16.msra.mxu0 0
    %1703 = vmatpush.bf16.msra.mxu0 0
    %1704 = vmatpush.bf16.msra.mxu0 0
    %1705 = vmatpush.bf16.msra.mxu0 0
    %1706 = vmatpush.bf16.msra.mxu0 %v1515
    %1707 = vmatmul.bf16.gmra.mxu0 %v1697
    %v1708 = vpop.f32.mrf.mxu0
    %v1709 = vadd.f32 0.0, %v1708
    %v1710 = vpop.f32.mrf.mxu0
    %v1711 = vadd.f32 0.0, %v1710
    %1712 = vdwg.mxu0
    %v1713 = vadd.f32 %v1686, %v1709
    %v1714 = vadd.f32 %v1687, %v1711
    %s1715 = scalar_lea.vmem %s5, 32
    %v1716 = vld [vmem:[%s1715] sm:$0xf]
    %v1717 = vld [vmem:[%s1715 + $0x4] sm:$0xf]
    %v1720 = vunpack.c.l.b16 %v1716
    %v1721 = vunpack.c.l.b16 %v1717
    %v1722 = vpack.c.b16 %v1721, %v1720
    %v1724 = vsel %vm1425, %v1722, 0
    %1726 = vmatpush.bf16.msra.mxu0 0
    %1727 = vmatpush.bf16.msra.mxu0 0
    %1728 = vmatpush.bf16.msra.mxu0 0
    %1729 = vmatpush.bf16.msra.mxu0 0
    %1730 = vmatpush.bf16.msra.mxu0 0
    %1731 = vmatpush.bf16.msra.mxu0 0
    %1732 = vmatpush.bf16.msra.mxu0 0
    %1733 = vmatpush.bf16.msra.mxu0 %v1416
    %1734 = vmatmul.bf16.gmra.mxu0 %v1724
    %v1735 = vpop.f32.mrf.mxu0
    %v1736 = vadd.f32 0.0, %v1735
    %v1737 = vpop.f32.mrf.mxu0
    %v1738 = vadd.f32 0.0, %v1737
    %1739 = vdwg.mxu0
    %v1740 = vadd.f32 %v1713, %v1736
    %v1741 = vadd.f32 %v1714, %v1738
    %s1742 = scalar_lea.vmem %s5, 40
    %v1743 = vld [vmem:[%s1742] sm:$0xf]
    %v1744 = vld [vmem:[%s1742 + $0x4] sm:$0xf]
    %v1747 = vunpack.c.l.b16 %v1743
    %v1748 = vunpack.c.l.b16 %v1744
    %v1749 = vpack.c.b16 %v1748, %v1747
    %v1751 = vsel %vm1425, %v1749, 0
    %1753 = vmatpush.bf16.msra.mxu0 0
    %1754 = vmatpush.bf16.msra.mxu0 0
    %1755 = vmatpush.bf16.msra.mxu0 0
    %1756 = vmatpush.bf16.msra.mxu0 0
    %1757 = vmatpush.bf16.msra.mxu0 0
    %1758 = vmatpush.bf16.msra.mxu0 0
    %1759 = vmatpush.bf16.msra.mxu0 0
    %1760 = vmatpush.bf16.msra.mxu0 %v1539
    %1761 = vmatmul.bf16.gmra.mxu0 %v1751
    %v1762 = vpop.f32.mrf.mxu0
    %v1763 = vadd.f32 0.0, %v1762
    %v1764 = vpop.f32.mrf.mxu0
    %v1765 = vadd.f32 0.0, %v1764
    %1766 = vdwg.mxu0
    %v1767 = vadd.f32 %v1740, %v1763
    %v1768 = vadd.f32 %v1741, %v1765
    %s1769 = scalar_lea.vmem %s5, 48
    %v1770 = vld [vmem:[%s1769] sm:$0xf]
    %v1771 = vld [vmem:[%s1769 + $0x4] sm:$0xf]
    %v1774 = vunpack.c.l.b16 %v1770
    %v1775 = vunpack.c.l.b16 %v1771
    %v1776 = vpack.c.b16 %v1775, %v1774
    %v1778 = vsel %vm1425, %v1776, 0
    %1780 = vmatpush.bf16.msra.mxu0 0
    %1781 = vmatpush.bf16.msra.mxu0 0
    %1782 = vmatpush.bf16.msra.mxu0 0
    %1783 = vmatpush.bf16.msra.mxu0 0
    %1784 = vmatpush.bf16.msra.mxu0 0
    %1785 = vmatpush.bf16.msra.mxu0 0
    %1786 = vmatpush.bf16.msra.mxu0 0
    %1787 = vmatpush.bf16.msra.mxu0 %v1563
    %1788 = vmatmul.bf16.gmra.mxu0 %v1778
    %v1789 = vpop.f32.mrf.mxu0
    %v1790 = vadd.f32 0.0, %v1789
    %v1791 = vpop.f32.mrf.mxu0
    %v1792 = vadd.f32 0.0, %v1791
    %1793 = vdwg.mxu0
    %v1794 = vadd.f32 %v1767, %v1790
    %v1795 = vadd.f32 %v1768, %v1792
    %s1796 = scalar_lea.vmem %s5, 56
    %v1797 = vld [vmem:[%s1796] sm:$0xf]
    %v1798 = vld [vmem:[%s1796 + $0x4] sm:$0xf]
    %v1801 = vunpack.c.l.b16 %v1797
    %v1802 = vunpack.c.l.b16 %v1798
    %v1803 = vpack.c.b16 %v1802, %v1801
    %v1805 = vsel %vm1425, %v1803, 0
    %1807 = vmatpush.bf16.msra.mxu0 0
    %1808 = vmatpush.bf16.msra.mxu0 0
    %1809 = vmatpush.bf16.msra.mxu0 0
    %1810 = vmatpush.bf16.msra.mxu0 0
    %1811 = vmatpush.bf16.msra.mxu0 0
    %1812 = vmatpush.bf16.msra.mxu0 0
    %1813 = vmatpush.bf16.msra.mxu0 0
    %1814 = vmatpush.bf16.msra.mxu0 %v1587
    %1815 = vmatmul.bf16.gmra.mxu0 %v1805
    %v1816 = vpop.f32.mrf.mxu0
    %v1817 = vadd.f32 0.0, %v1816
    %v1818 = vpop.f32.mrf.mxu0
    %v1819 = vadd.f32 0.0, %v1818
    %1820 = vdwg.mxu0
    %v1821 = vadd.f32 %v1794, %v1817
    %v1822 = vadd.f32 %v1795, %v1819
    %s1823 = scalar_lea.vmem %s5, 64
    %v1824 = vld [vmem:[%s1823] sm:$0xf]
    %v1825 = vld [vmem:[%s1823 + $0x4] sm:$0xf]
    %v1828 = vunpack.c.l.b16 %v1824
    %v1829 = vunpack.c.l.b16 %v1825
    %v1830 = vpack.c.b16 %v1829, %v1828
    %v1832 = vsel %vm1425, %v1830, 0
    %1834 = vmatpush.bf16.msra.mxu0 0
    %1835 = vmatpush.bf16.msra.mxu0 0
    %1836 = vmatpush.bf16.msra.mxu0 0
    %1837 = vmatpush.bf16.msra.mxu0 0
    %1838 = vmatpush.bf16.msra.mxu0 0
    %1839 = vmatpush.bf16.msra.mxu0 0
    %1840 = vmatpush.bf16.msra.mxu0 0
    %1841 = vmatpush.bf16.msra.mxu0 %v1611
    %1842 = vmatmul.bf16.gmra.mxu0 %v1832
    %v1843 = vpop.f32.mrf.mxu0
    %v1844 = vadd.f32 0.0, %v1843
    %v1845 = vpop.f32.mrf.mxu0
    %v1846 = vadd.f32 0.0, %v1845
    %1847 = vdwg.mxu0
    %v1848 = vadd.f32 %v1821, %v1844
    %v1849 = vadd.f32 %v1822, %v1846
    %v1850 = vld [vmem:[%s6] sm:$0xff]
    %v1851 = vld [vmem:[%s6 + $0x8] sm:$0xff]
    %1853 = vset.pattern.permute.xlu0 0
    %1854 = vperm.xlu0 %1853, %v1850
    %v1855 = vpop.permute.xlu0 %1854
    %1858 = vset.pattern.permute.xlu0 0
    %1859 = vperm.xlu0 %1858, %v1851
    %v1860 = vpop.permute.xlu0 %1859
    %v1862 = vadd.f32 %v1848, %v1855
    %v1863 = vadd.f32 %v1849, %v1860
    %v1864 = vmax.f32 %v1862, 0.0
    %v1865 = vmax.f32 %v1863, 0.0
    %v1866 = vpack.c.bf16 %v1865, %v1864
    %v1867 = vld [vmem:[#allocation2] sm:$0xf]
    %v1868 = vld [vmem:[#allocation2 + $0x4] sm:$0xf]
    %v1871 = vunpack.c.l.b16 %v1867
    %v1872 = vunpack.c.l.b16 %v1868
    %v1873 = vpack.c.b16 %v1872, %v1871
    %v1876 = vsel %vm1425, %v1866, 0
    %1878 = vmatpush.bf16.msra.mxu0 0
    %1879 = vmatpush.bf16.msra.mxu0 0
    %1880 = vmatpush.bf16.msra.mxu0 0
    %1881 = vmatpush.bf16.msra.mxu0 0
    %1882 = vmatpush.bf16.msra.mxu0 0
    %1883 = vmatpush.bf16.msra.mxu0 0
    %1884 = vmatpush.bf16.msra.mxu0 0
    %1885 = vmatpush.bf16.msra.mxu0 %v1873
    %1886 = vmatmul.bf16.gmra.mxu0 %v1876
    %v1887 = vpop.f32.mrf.mxu0
    %v1888 = vadd.f32 0.0, %v1887
    %v1889 = vpop.f32.mrf.mxu0
    %v1890 = vadd.f32 0.0, %v1889
    %1891 = vdwg.mxu0
    %v1892 = vpack.c.bf16 %v1890, %v1888
    %v1894 = vsel %vm752, %v1892, 0
    %1896 = vmatpush.bf16.msra.mxu0 0
    %1897 = vmatpush.bf16.msra.mxu0 0
    %1898 = vmatpush.bf16.msra.mxu0 0
    %1899 = vmatpush.bf16.msra.mxu0 0
    %1900 = vmatpush.bf16.msra.mxu0 %v747
    %1901 = vmatpush.bf16.msra.mxu0 %v746
    %1902 = vmatpush.bf16.msra.mxu0 %v745
    %1903 = vmatpush.bf16.msra.mxu0 %v744
    %1904 = vmatmul.bf16.gmra.mxu0 %v1894
    %v1905 = vpop.f32.mrf.mxu0
    %v1906 = vadd.f32 0.0, %v1905
    %v1907 = vpop.f32.mrf.mxu0
    %v1908 = vadd.f32 0.0, %v1907
    %1909 = vdwg.mxu0
    %v1910 = vpack.c.bf16 %v1908, %v1906
    %1911 = vmatpush.bf16.msra.mxu0 0
    %1912 = vmatpush.bf16.msra.mxu0 0
    %1913 = vmatpush.bf16.msra.mxu0 0
    %1914 = vmatpush.bf16.msra.mxu0 0
    %1915 = vmatpush.bf16.msra.mxu0 %v798
    %1916 = vmatpush.bf16.msra.mxu0 %v797
    %1917 = vmatpush.bf16.msra.mxu0 %v796
    %1918 = vmatpush.bf16.msra.mxu0 %v795
    %1919 = vmatmul.bf16.gmra.mxu0 %v1894
    %v1920 = vpop.f32.mrf.mxu0
    %v1921 = vadd.f32 0.0, %v1920
    %v1922 = vpop.f32.mrf.mxu0
    %v1923 = vadd.f32 0.0, %v1922
    %1924 = vdwg.mxu0
    %v1925 = vpack.c.bf16 %v1923, %v1921
    %1926 = vmatpush.bf16.msra.mxu0 0
    %1927 = vmatpush.bf16.msra.mxu0 0
    %1928 = vmatpush.bf16.msra.mxu0 0
    %1929 = vmatpush.bf16.msra.mxu0 0
    %1930 = vmatpush.bf16.msra.mxu0 %v845
    %1931 = vmatpush.bf16.msra.mxu0 %v844
    %1932 = vmatpush.bf16.msra.mxu0 %v843
    %1933 = vmatpush.bf16.msra.mxu0 %v842
    %1934 = vmatmul.bf16.gmra.mxu0 %v1894
    %v1935 = vpop.f32.mrf.mxu0
    %v1936 = vadd.f32 0.0, %v1935
    %v1937 = vpop.f32.mrf.mxu0
    %v1938 = vadd.f32 0.0, %v1937
    %1939 = vdwg.mxu0
    %v1940 = vpack.c.bf16 %v1938, %v1936
    %1941 = vmatpush.bf16.msra.mxu0 0
    %1942 = vmatpush.bf16.msra.mxu0 0
    %1943 = vmatpush.bf16.msra.mxu0 0
    %1944 = vmatpush.bf16.msra.mxu0 0
    %1945 = vmatpush.bf16.msra.mxu0 %v892
    %1946 = vmatpush.bf16.msra.mxu0 %v891
    %1947 = vmatpush.bf16.msra.mxu0 %v890
    %1948 = vmatpush.bf16.msra.mxu0 %v889
    %1949 = vmatmul.bf16.gmra.mxu0 %v1894
    %v1950 = vpop.f32.mrf.mxu0
    %v1951 = vadd.f32 0.0, %v1950
    %v1952 = vpop.f32.mrf.mxu0
    %v1953 = vadd.f32 0.0, %v1952
    %1954 = vdwg.mxu0
    %v1955 = vpack.c.bf16 %v1953, %v1951
    %1956 = vmatpush.bf16.msra.mxu0 0
    %1957 = vmatpush.bf16.msra.mxu0 0
    %1958 = vmatpush.bf16.msra.mxu0 0
    %1959 = vmatpush.bf16.msra.mxu0 0
    %1960 = vmatpush.bf16.msra.mxu0 %v939
    %1961 = vmatpush.bf16.msra.mxu0 %v938
    %1962 = vmatpush.bf16.msra.mxu0 %v937
    %1963 = vmatpush.bf16.msra.mxu0 %v936
    %1964 = vmatmul.bf16.gmra.mxu0 %v1894
    %v1965 = vpop.f32.mrf.mxu0
    %v1966 = vadd.f32 0.0, %v1965
    %v1967 = vpop.f32.mrf.mxu0
    %v1968 = vadd.f32 0.0, %v1967
    %1969 = vdwg.mxu0
    %v1970 = vpack.c.bf16 %v1968, %v1966
    %1971 = vmatpush.bf16.msra.mxu0 0
    %1972 = vmatpush.bf16.msra.mxu0 0
    %1973 = vmatpush.bf16.msra.mxu0 0
    %1974 = vmatpush.bf16.msra.mxu0 0
    %1975 = vmatpush.bf16.msra.mxu0 %v986
    %1976 = vmatpush.bf16.msra.mxu0 %v985
    %1977 = vmatpush.bf16.msra.mxu0 %v984
    %1978 = vmatpush.bf16.msra.mxu0 %v983
    %1979 = vmatmul.bf16.gmra.mxu0 %v1894
    %v1980 = vpop.f32.mrf.mxu0
    %v1981 = vadd.f32 0.0, %v1980
    %v1982 = vpop.f32.mrf.mxu0
    %v1983 = vadd.f32 0.0, %v1982
    %1984 = vdwg.mxu0
    %v1985 = vpack.c.bf16 %v1983, %v1981
    %1986 = vmatpush.bf16.msra.mxu0 0
    %1987 = vmatpush.bf16.msra.mxu0 0
    %1988 = vmatpush.bf16.msra.mxu0 0
    %1989 = vmatpush.bf16.msra.mxu0 0
    %1990 = vmatpush.bf16.msra.mxu0 %v1033
    %1991 = vmatpush.bf16.msra.mxu0 %v1032
    %1992 = vmatpush.bf16.msra.mxu0 %v1031
    %1993 = vmatpush.bf16.msra.mxu0 %v1030
    %1994 = vmatmul.bf16.gmra.mxu0 %v1894
    %v1995 = vpop.f32.mrf.mxu0
    %v1996 = vadd.f32 0.0, %v1995
    %v1997 = vpop.f32.mrf.mxu0
    %v1998 = vadd.f32 0.0, %v1997
    %1999 = vdwg.mxu0
    %v2000 = vpack.c.bf16 %v1998, %v1996
    %2001 = vmatpush.bf16.msra.mxu0 0
    %2002 = vmatpush.bf16.msra.mxu0 0
    %2003 = vmatpush.bf16.msra.mxu0 0
    %2004 = vmatpush.bf16.msra.mxu0 0
    %2005 = vmatpush.bf16.msra.mxu0 %v1080
    %2006 = vmatpush.bf16.msra.mxu0 %v1079
    %2007 = vmatpush.bf16.msra.mxu0 %v1078
    %2008 = vmatpush.bf16.msra.mxu0 %v1077
    %2009 = vmatmul.bf16.gmra.mxu0 %v1894
    %v2010 = vpop.f32.mrf.mxu0
    %v2011 = vadd.f32 0.0, %v2010
    %v2012 = vpop.f32.mrf.mxu0
    %v2013 = vadd.f32 0.0, %v2012
    %2014 = vdwg.mxu0
    %v2015 = vpack.c.bf16 %v2013, %v2011
    %v2016 = vld [vmem:[%s7] sm:$0xf]
    %s2017 = scalar_lea.vmem %s7, 4
    %v2018 = vld [vmem:[%s2017] sm:$0xf]
    %v2020 = vsel %vm1425, %v2018, 0
    %2022 = vmatpush.bf16.msra.mxu0 0
    %2023 = vmatpush.bf16.msra.mxu0 0
    %2024 = vmatpush.bf16.msra.mxu0 0
    %2025 = vmatpush.bf16.msra.mxu0 0
    %2026 = vmatpush.bf16.msra.mxu0 0
    %2027 = vmatpush.bf16.msra.mxu0 0
    %2028 = vmatpush.bf16.msra.mxu0 0
    %2029 = vmatpush.bf16.msra.mxu0 %v1925
    %2030 = vmatmul.bf16.gmra.mxu0 %v2020
    %v2031 = vpop.f32.mrf.mxu0
    %v2032 = vadd.f32 0.0, %v2031
    %v2033 = vpop.f32.mrf.mxu0
    %2034 = vdwg.mxu0
    %v2036 = vsel %vm1425, %v2016, 0
    %2038 = vmatpush.bf16.msra.mxu0 0
    %2039 = vmatpush.bf16.msra.mxu0 0
    %2040 = vmatpush.bf16.msra.mxu0 0
    %2041 = vmatpush.bf16.msra.mxu0 0
    %2042 = vmatpush.bf16.msra.mxu0 0
    %2043 = vmatpush.bf16.msra.mxu0 0
    %2044 = vmatpush.bf16.msra.mxu0 0
    %2045 = vmatpush.bf16.msra.mxu0 %v1910
    %2046 = vmatmul.bf16.gmra.mxu0 %v2036
    %v2047 = vpop.f32.mrf.mxu0
    %v2048 = vadd.f32 %v2032, %v2047
    %v2049 = vpop.f32.mrf.mxu0
    %2050 = vdwg.mxu0
    %s2051 = scalar_lea.vmem %s7, 8
    %v2052 = vld [vmem:[%s2051] sm:$0xf]
    %v2054 = vsel %vm1425, %v2052, 0
    %2056 = vmatpush.bf16.msra.mxu0 0
    %2057 = vmatpush.bf16.msra.mxu0 0
    %2058 = vmatpush.bf16.msra.mxu0 0
    %2059 = vmatpush.bf16.msra.mxu0 0
    %2060 = vmatpush.bf16.msra.mxu0 0
    %2061 = vmatpush.bf16.msra.mxu0 0
    %2062 = vmatpush.bf16.msra.mxu0 0
    %2063 = vmatpush.bf16.msra.mxu0 %v1940
    %2064 = vmatmul.bf16.gmra.mxu0 %v2054
    %v2065 = vpop.f32.mrf.mxu0
    %v2066 = vadd.f32 0.0, %v2065
    %v2067 = vpop.f32.mrf.mxu0
    %2068 = vdwg.mxu0
    %v2069 = vadd.f32 %v2048, %v2066
    %s2070 = scalar_lea.vmem %s7, 12
    %v2071 = vld [vmem:[%s2070] sm:$0xf]
    %v2073 = vsel %vm1425, %v2071, 0
    %2075 = vmatpush.bf16.msra.mxu0 0
    %2076 = vmatpush.bf16.msra.mxu0 0
    %2077 = vmatpush.bf16.msra.mxu0 0
    %2078 = vmatpush.bf16.msra.mxu0 0
    %2079 = vmatpush.bf16.msra.mxu0 0
    %2080 = vmatpush.bf16.msra.mxu0 0
    %2081 = vmatpush.bf16.msra.mxu0 0
    %2082 = vmatpush.bf16.msra.mxu0 %v1955
    %2083 = vmatmul.bf16.gmra.mxu0 %v2073
    %v2084 = vpop.f32.mrf.mxu0
    %v2085 = vadd.f32 0.0, %v2084
    %v2086 = vpop.f32.mrf.mxu0
    %2087 = vdwg.mxu0
    %v2088 = vadd.f32 %v2069, %v2085
    %s2089 = scalar_lea.vmem %s7, 16
    %v2090 = vld [vmem:[%s2089] sm:$0xf]
    %v2092 = vsel %vm1425, %v2090, 0
    %2094 = vmatpush.bf16.msra.mxu0 0
    %2095 = vmatpush.bf16.msra.mxu0 0
    %2096 = vmatpush.bf16.msra.mxu0 0
    %2097 = vmatpush.bf16.msra.mxu0 0
    %2098 = vmatpush.bf16.msra.mxu0 0
    %2099 = vmatpush.bf16.msra.mxu0 0
    %2100 = vmatpush.bf16.msra.mxu0 0
    %2101 = vmatpush.bf16.msra.mxu0 %v1892
    %2102 = vmatmul.bf16.gmra.mxu0 %v2092
    %v2103 = vpop.f32.mrf.mxu0
    %v2104 = vadd.f32 0.0, %v2103
    %v2105 = vpop.f32.mrf.mxu0
    %2106 = vdwg.mxu0
    %v2107 = vadd.f32 %v2088, %v2104
    %s2108 = scalar_lea.vmem %s7, 20
    %v2109 = vld [vmem:[%s2108] sm:$0xf]
    %v2111 = vsel %vm1425, %v2109, 0
    %2113 = vmatpush.bf16.msra.mxu0 0
    %2114 = vmatpush.bf16.msra.mxu0 0
    %2115 = vmatpush.bf16.msra.mxu0 0
    %2116 = vmatpush.bf16.msra.mxu0 0
    %2117 = vmatpush.bf16.msra.mxu0 0
    %2118 = vmatpush.bf16.msra.mxu0 0
    %2119 = vmatpush.bf16.msra.mxu0 0
    %2120 = vmatpush.bf16.msra.mxu0 %v1970
    %2121 = vmatmul.bf16.gmra.mxu0 %v2111
    %v2122 = vpop.f32.mrf.mxu0
    %v2123 = vadd.f32 0.0, %v2122
    %v2124 = vpop.f32.mrf.mxu0
    %2125 = vdwg.mxu0
    %v2126 = vadd.f32 %v2107, %v2123
    %s2127 = scalar_lea.vmem %s7, 24
    %v2128 = vld [vmem:[%s2127] sm:$0xf]
    %v2130 = vsel %vm1425, %v2128, 0
    %2132 = vmatpush.bf16.msra.mxu0 0
    %2133 = vmatpush.bf16.msra.mxu0 0
    %2134 = vmatpush.bf16.msra.mxu0 0
    %2135 = vmatpush.bf16.msra.mxu0 0
    %2136 = vmatpush.bf16.msra.mxu0 0
    %2137 = vmatpush.bf16.msra.mxu0 0
    %2138 = vmatpush.bf16.msra.mxu0 0
    %2139 = vmatpush.bf16.msra.mxu0 %v1985
    %2140 = vmatmul.bf16.gmra.mxu0 %v2130
    %v2141 = vpop.f32.mrf.mxu0
    %v2142 = vadd.f32 0.0, %v2141
    %v2143 = vpop.f32.mrf.mxu0
    %2144 = vdwg.mxu0
    %v2145 = vadd.f32 %v2126, %v2142
    %s2146 = scalar_lea.vmem %s7, 28
    %v2147 = vld [vmem:[%s2146] sm:$0xf]
    %v2149 = vsel %vm1425, %v2147, 0
    %2151 = vmatpush.bf16.msra.mxu0 0
    %2152 = vmatpush.bf16.msra.mxu0 0
    %2153 = vmatpush.bf16.msra.mxu0 0
    %2154 = vmatpush.bf16.msra.mxu0 0
    %2155 = vmatpush.bf16.msra.mxu0 0
    %2156 = vmatpush.bf16.msra.mxu0 0
    %2157 = vmatpush.bf16.msra.mxu0 0
    %2158 = vmatpush.bf16.msra.mxu0 %v2000
    %2159 = vmatmul.bf16.gmra.mxu0 %v2149
    %v2160 = vpop.f32.mrf.mxu0
    %v2161 = vadd.f32 0.0, %v2160
    %v2162 = vpop.f32.mrf.mxu0
    %2163 = vdwg.mxu0
    %v2164 = vadd.f32 %v2145, %v2161
    %s2165 = scalar_lea.vmem %s7, 32
    %v2166 = vld [vmem:[%s2165] sm:$0xf]
    %v2168 = vsel %vm1425, %v2166, 0
    %2170 = vmatpush.bf16.msra.mxu0 0
    %2171 = vmatpush.bf16.msra.mxu0 0
    %2172 = vmatpush.bf16.msra.mxu0 0
    %2173 = vmatpush.bf16.msra.mxu0 0
    %2174 = vmatpush.bf16.msra.mxu0 0
    %2175 = vmatpush.bf16.msra.mxu0 0
    %2176 = vmatpush.bf16.msra.mxu0 0
    %2177 = vmatpush.bf16.msra.mxu0 %v2015
    %2178 = vmatmul.bf16.gmra.mxu0 %v2168
    %v2179 = vpop.f32.mrf.mxu0
    %v2180 = vadd.f32 0.0, %v2179
    %v2181 = vpop.f32.mrf.mxu0
    %2182 = vdwg.mxu0
    %v2183 = vadd.f32 %v2164, %v2180
    %v2184 = vld [vmem:[%s8] sm:$0xf]
    %s2185 = scalar_lea.vmem %s8, 4
    %v2186 = vld [vmem:[%s2185] sm:$0xf]
    %v2188 = vsel %vm1109, %v2186, 0
    %2190 = vmatpush.bf16.msra.mxu0 0
    %2191 = vmatpush.bf16.msra.mxu0 0
    %2192 = vmatpush.bf16.msra.mxu0 0
    %2193 = vmatpush.bf16.msra.mxu0 0
    %2194 = vmatpush.bf16.msra.mxu0 0
    %2195 = vmatpush.bf16.msra.mxu0 0
    %2196 = vmatpush.bf16.msra.mxu0 0
    %2197 = vmatpush.bf16.msra.mxu0 %v1115
    %2198 = vmatmul.bf16.gmra.mxu0 %v2188
    %v2199 = vpop.f32.mrf.mxu0
    %v2200 = vadd.f32 0.0, %v2199
    %v2201 = vpop.f32.mrf.mxu0
    %2202 = vdwg.mxu0
    %v2204 = vsel %vm1109, %v2184, 0
    %2206 = vmatpush.bf16.msra.mxu0 0
    %2207 = vmatpush.bf16.msra.mxu0 0
    %2208 = vmatpush.bf16.msra.mxu0 0
    %2209 = vmatpush.bf16.msra.mxu0 0
    %2210 = vmatpush.bf16.msra.mxu0 0
    %2211 = vmatpush.bf16.msra.mxu0 0
    %2212 = vmatpush.bf16.msra.mxu0 0
    %2213 = vmatpush.bf16.msra.mxu0 %v1140
    %2214 = vmatmul.bf16.gmra.mxu0 %v2204
    %v2215 = vpop.f32.mrf.mxu0
    %v2216 = vadd.f32 %v2200, %v2215
    %v2217 = vpop.f32.mrf.mxu0
    %2218 = vdwg.mxu0
    %s2219 = scalar_lea.vmem %s8, 8
    %v2220 = vld [vmem:[%s2219] sm:$0xf]
    %v2222 = vsel %vm1109, %v2220, 0
    %2224 = vmatpush.bf16.msra.mxu0 0
    %2225 = vmatpush.bf16.msra.mxu0 0
    %2226 = vmatpush.bf16.msra.mxu0 0
    %2227 = vmatpush.bf16.msra.mxu0 0
    %2228 = vmatpush.bf16.msra.mxu0 0
    %2229 = vmatpush.bf16.msra.mxu0 0
    %2230 = vmatpush.bf16.msra.mxu0 0
    %2231 = vmatpush.bf16.msra.mxu0 %v1168
    %2232 = vmatmul.bf16.gmra.mxu0 %v2222
    %v2233 = vpop.f32.mrf.mxu0
    %v2234 = vadd.f32 0.0, %v2233
    %v2235 = vpop.f32.mrf.mxu0
    %2236 = vdwg.mxu0
    %v2237 = vadd.f32 %v2216, %v2234
    %s2238 = scalar_lea.vmem %s8, 12
    %v2239 = vld [vmem:[%s2238] sm:$0xf]
    %v2241 = vsel %vm1109, %v2239, 0
    %2243 = vmatpush.bf16.msra.mxu0 0
    %2244 = vmatpush.bf16.msra.mxu0 0
    %2245 = vmatpush.bf16.msra.mxu0 0
    %2246 = vmatpush.bf16.msra.mxu0 0
    %2247 = vmatpush.bf16.msra.mxu0 0
    %2248 = vmatpush.bf16.msra.mxu0 0
    %2249 = vmatpush.bf16.msra.mxu0 0
    %2250 = vmatpush.bf16.msra.mxu0 %v1198
    %2251 = vmatmul.bf16.gmra.mxu0 %v2241
    %v2252 = vpop.f32.mrf.mxu0
    %v2253 = vadd.f32 0.0, %v2252
    %v2254 = vpop.f32.mrf.mxu0
    %2255 = vdwg.mxu0
    %v2256 = vadd.f32 %v2237, %v2253
    %s2257 = scalar_lea.vmem %s8, 16
    %v2258 = vld [vmem:[%s2257] sm:$0xf]
    %v2260 = vsel %vm1109, %v2258, 0
    %2262 = vmatpush.bf16.msra.mxu0 0
    %2263 = vmatpush.bf16.msra.mxu0 0
    %2264 = vmatpush.bf16.msra.mxu0 0
    %2265 = vmatpush.bf16.msra.mxu0 0
    %2266 = vmatpush.bf16.msra.mxu0 0
    %2267 = vmatpush.bf16.msra.mxu0 0
    %2268 = vmatpush.bf16.msra.mxu0 0
    %2269 = vmatpush.bf16.msra.mxu0 %v1227
    %2270 = vmatmul.bf16.gmra.mxu0 %v2260
    %v2271 = vpop.f32.mrf.mxu0
    %v2272 = vadd.f32 0.0, %v2271
    %v2273 = vpop.f32.mrf.mxu0
    %2274 = vdwg.mxu0
    %v2275 = vadd.f32 %v2256, %v2272
    %s2276 = scalar_lea.vmem %s8, 20
    %v2277 = vld [vmem:[%s2276] sm:$0xf]
    %v2279 = vsel %vm1109, %v2277, 0
    %2281 = vmatpush.bf16.msra.mxu0 0
    %2282 = vmatpush.bf16.msra.mxu0 0
    %2283 = vmatpush.bf16.msra.mxu0 0
    %2284 = vmatpush.bf16.msra.mxu0 0
    %2285 = vmatpush.bf16.msra.mxu0 0
    %2286 = vmatpush.bf16.msra.mxu0 0
    %2287 = vmatpush.bf16.msra.mxu0 0
    %2288 = vmatpush.bf16.msra.mxu0 %v1257
    %2289 = vmatmul.bf16.gmra.mxu0 %v2279
    %v2290 = vpop.f32.mrf.mxu0
    %v2291 = vadd.f32 0.0, %v2290
    %v2292 = vpop.f32.mrf.mxu0
    %2293 = vdwg.mxu0
    %v2294 = vadd.f32 %v2275, %v2291
    %s2295 = scalar_lea.vmem %s8, 24
    %v2296 = vld [vmem:[%s2295] sm:$0xf]
    %v2298 = vsel %vm1109, %v2296, 0
    %2300 = vmatpush.bf16.msra.mxu0 0
    %2301 = vmatpush.bf16.msra.mxu0 0
    %2302 = vmatpush.bf16.msra.mxu0 0
    %2303 = vmatpush.bf16.msra.mxu0 0
    %2304 = vmatpush.bf16.msra.mxu0 0
    %2305 = vmatpush.bf16.msra.mxu0 0
    %2306 = vmatpush.bf16.msra.mxu0 0
    %2307 = vmatpush.bf16.msra.mxu0 %v1287
    %2308 = vmatmul.bf16.gmra.mxu0 %v2298
    %v2309 = vpop.f32.mrf.mxu0
    %v2310 = vadd.f32 0.0, %v2309
    %v2311 = vpop.f32.mrf.mxu0
    %2312 = vdwg.mxu0
    %v2313 = vadd.f32 %v2294, %v2310
    %s2314 = scalar_lea.vmem %s8, 28
    %v2315 = vld [vmem:[%s2314] sm:$0xf]
    %v2317 = vsel %vm1109, %v2315, 0
    %2319 = vmatpush.bf16.msra.mxu0 0
    %2320 = vmatpush.bf16.msra.mxu0 0
    %2321 = vmatpush.bf16.msra.mxu0 0
    %2322 = vmatpush.bf16.msra.mxu0 0
    %2323 = vmatpush.bf16.msra.mxu0 0
    %2324 = vmatpush.bf16.msra.mxu0 0
    %2325 = vmatpush.bf16.msra.mxu0 0
    %2326 = vmatpush.bf16.msra.mxu0 %v1317
    %2327 = vmatmul.bf16.gmra.mxu0 %v2317
    %v2328 = vpop.f32.mrf.mxu0
    %v2329 = vadd.f32 0.0, %v2328
    %v2330 = vpop.f32.mrf.mxu0
    %2331 = vdwg.mxu0
    %v2332 = vadd.f32 %v2313, %v2329
    %s2333 = scalar_lea.vmem %s8, 32
    %v2334 = vld [vmem:[%s2333] sm:$0xf]
    %v2336 = vsel %vm1109, %v2334, 0
    %2338 = vmatpush.bf16.msra.mxu0 0
    %2339 = vmatpush.bf16.msra.mxu0 0
    %2340 = vmatpush.bf16.msra.mxu0 0
    %2341 = vmatpush.bf16.msra.mxu0 0
    %2342 = vmatpush.bf16.msra.mxu0 0
    %2343 = vmatpush.bf16.msra.mxu0 0
    %2344 = vmatpush.bf16.msra.mxu0 0
    %2345 = vmatpush.bf16.msra.mxu0 %v1347
    %2346 = vmatmul.bf16.gmra.mxu0 %v2336
    %v2347 = vpop.f32.mrf.mxu0
    %v2348 = vadd.f32 0.0, %v2347
    %v2349 = vpop.f32.mrf.mxu0
    %2350 = vdwg.mxu0
    %v2351 = vadd.f32 %v2332, %v2348
    %v2352 = vadd.f32 %v2183, %v2351
    %v2353 = vld [vmem:[%s9] sm:$0xff]
    %2355 = vset.pattern.permute.xlu0 0
    %2356 = vperm.xlu0 %2355, %v2353
    %v2357 = vpop.permute.xlu0 %2356
    %v2359 = vadd.f32 %v2352, %v2357
    %v2360 = vmax.f32 %v2359, 0.0
    %v2361 = vpack.c.bf16 %v2360, %v2360
    %v2362 = vld [vmem:[%s18] sm:$0xff]
    %v2363 = vld [vmem:[%s18 + $0x8] sm:$0xff]
    %v2364 = vld [vmem:[%s18 + $0x10] sm:$0xff]
    %v2365 = vld [vmem:[%s18 + $0x18] sm:$0xff]
    %v2366 = vld [vmem:[%s18 + $0x20] sm:$0xff]
    %v2367 = vld [vmem:[%s18 + $0x28] sm:$0xff]
    %v2368 = vld [vmem:[%s18 + $0x30] sm:$0xff]
    %v2369 = vld [vmem:[%s18 + $0x38] sm:$0xff]
    %v2378 = vunpack.c.l.b16 %v2362
    %v2379 = vunpack.c.h.b16 %v2362
    %v2380 = vunpack.c.l.b16 %v2363
    %v2381 = vunpack.c.h.b16 %v2363
    %v2382 = vunpack.c.l.b16 %v2364
    %v2383 = vunpack.c.h.b16 %v2364
    %v2384 = vunpack.c.l.b16 %v2365
    %v2385 = vunpack.c.h.b16 %v2365
    %v2386 = vunpack.c.l.b16 %v2366
    %v2387 = vunpack.c.h.b16 %v2366
    %v2388 = vunpack.c.l.b16 %v2367
    %v2389 = vunpack.c.h.b16 %v2367
    %v2390 = vunpack.c.l.b16 %v2368
    %v2391 = vunpack.c.h.b16 %v2368
    %v2392 = vunpack.c.l.b16 %v2369
    %v2393 = vunpack.c.h.b16 %v2369
    %v2394 = vpack.c.b16 %v2380, %v2378
    %v2395 = vpack.c.b16 %v2381, %v2379
    %v2396 = vpack.c.b16 %v2384, %v2382
    %v2397 = vpack.c.b16 %v2385, %v2383
    %v2398 = vpack.c.b16 %v2388, %v2386
    %v2399 = vpack.c.b16 %v2389, %v2387
    %v2400 = vpack.c.b16 %v2392, %v2390
    %v2401 = vpack.c.b16 %v2393, %v2391
    %v2411 = vsel %vm752, %v2361, 0
    %2413 = vmatpush.bf16.msra.mxu0 0
    %2414 = vmatpush.bf16.msra.mxu0 0
    %2415 = vmatpush.bf16.msra.mxu0 0
    %2416 = vmatpush.bf16.msra.mxu0 0
    %2417 = vmatpush.bf16.msra.mxu0 %v2400
    %2418 = vmatpush.bf16.msra.mxu0 %v2398
    %2419 = vmatpush.bf16.msra.mxu0 %v2396
    %2420 = vmatpush.bf16.msra.mxu0 %v2394
    %2421 = vmatmul.bf16.gmra.mxu0 %v2411
    %v2422 = vpop.f32.mrf.mxu0
    %v2423 = vadd.f32 0.0, %v2422
    %v2424 = vpop.f32.mrf.mxu0
    %2425 = vdwg.mxu0
    %2426 = vmatpush.bf16.msra.mxu0 0
    %2427 = vmatpush.bf16.msra.mxu0 0
    %2428 = vmatpush.bf16.msra.mxu0 0
    %2429 = vmatpush.bf16.msra.mxu0 0
    %2430 = vmatpush.bf16.msra.mxu0 %v2401
    %2431 = vmatpush.bf16.msra.mxu0 %v2399
    %2432 = vmatpush.bf16.msra.mxu0 %v2397
    %2433 = vmatpush.bf16.msra.mxu0 %v2395
    %2434 = vmatmul.bf16.gmra.mxu0 %v2411
    %v2435 = vpop.f32.mrf.mxu0
    %v2436 = vadd.f32 0.0, %v2435
    %v2437 = vpop.f32.mrf.mxu0
    %2438 = vdwg.mxu0
    %2439 = vrot.lane.b32.xlu0 %v2423, 17
    %v2440 = vpop.permute.xlu0 %2439
    %2441 = vrot.lane.b32.xlu0 %v2436, 17
    %v2442 = vpop.permute.xlu0 %2441
    %v2443 = vsel %vm111, %v2440, %v2442
    %v2444 = vsel %vm111, %v2442, %v2440
    %v2445 = vmul.f32 %v2444, %v116
    %v2446 = vmul.f32 %v2443, %v117
    %v2447 = vpack.c.bf16 %v2445, %v2445
    %v2448 = vpack.c.bf16 %v2446, %v2446
    %2449 = vrot.lane.b32.xlu0 %v2423, 16
    %v2450 = vpop.permute.xlu0 %2449
    %2451 = vrot.lane.b32.xlu0 %v2436, 16
    %v2452 = vpop.permute.xlu0 %2451
    %v2453 = vsel %vm133, %v2450, %v2452
    %v2454 = vsel %vm133, %v2452, %v2450
    %v2455 = vmul.f32 %v2454, %v139
    %v2456 = vmul.f32 %v2453, %v140
    %v2457 = vpack.c.bf16 %v2455, %v2455
    %v2458 = vpack.c.bf16 %v2456, %v2456
    %2459 = vrot.lane.b32.xlu0 %v2423, 15
    %v2460 = vpop.permute.xlu0 %2459
    %2461 = vrot.lane.b32.xlu0 %v2436, 15
    %v2462 = vpop.permute.xlu0 %2461
    %v2463 = vsel %vm156, %v2460, %v2462
    %v2464 = vsel %vm156, %v2462, %v2460
    %v2465 = vmul.f32 %v2464, %v162
    %v2466 = vmul.f32 %v2463, %v163
    %v2467 = vpack.c.bf16 %v2465, %v2465
    %v2468 = vpack.c.bf16 %v2466, %v2466
    %2469 = vrot.lane.b32.xlu0 %v2423, 1
    %v2470 = vpop.permute.xlu0 %2469
    %2471 = vrot.lane.b32.xlu0 %v2436, 1
    %v2472 = vpop.permute.xlu0 %2471
    %v2473 = vsel %vm179, %v2470, %v2472
    %v2474 = vsel %vm179, %v2472, %v2470
    %v2475 = vmul.f32 %v2474, %v185
    %v2476 = vmul.f32 %v2473, %v186
    %v2477 = vpack.c.bf16 %v2475, %v2475
    %v2478 = vpack.c.bf16 %v2476, %v2476
    %v2479 = vpack.c.bf16 %v2423, %v2423
    %v2480 = vpack.c.bf16 %v2436, %v2436
    %2481 = vrot.lane.b32.xlu0 %v2423, 127
    %v2482 = vpop.permute.xlu0 %2481
    %2483 = vrot.lane.b32.xlu0 %v2436, 127
    %v2484 = vpop.permute.xlu0 %2483
    %v2485 = vsel %vm209, %v2482, %v2484
    %v2486 = vsel %vm209, %v2484, %v2482
    %v2487 = vmul.f32 %v2485, %v215
    %v2488 = vmul.f32 %v2486, %v216
    %v2489 = vpack.c.bf16 %v2487, %v2487
    %v2490 = vpack.c.bf16 %v2488, %v2488
    %2491 = vrot.lane.b32.xlu0 %v2423, 113
    %v2492 = vpop.permute.xlu0 %2491
    %2493 = vrot.lane.b32.xlu0 %v2436, 113
    %v2494 = vpop.permute.xlu0 %2493
    %v2495 = vsel %vm232, %v2492, %v2494
    %v2496 = vsel %vm232, %v2494, %v2492
    %v2497 = vmul.f32 %v2495, %v238
    %v2498 = vmul.f32 %v2496, %v239
    %v2499 = vpack.c.bf16 %v2497, %v2497
    %v2500 = vpack.c.bf16 %v2498, %v2498
    %2501 = vrot.lane.b32.xlu0 %v2423, 112
    %v2502 = vpop.permute.xlu0 %2501
    %2503 = vrot.lane.b32.xlu0 %v2436, 112
    %v2504 = vpop.permute.xlu0 %2503
    %v2505 = vsel %vm255, %v2502, %v2504
    %v2506 = vsel %vm255, %v2504, %v2502
    %v2507 = vmul.f32 %v2505, %v261
    %v2508 = vmul.f32 %v2506, %v262
    %v2509 = vpack.c.bf16 %v2507, %v2507
    %v2510 = vpack.c.bf16 %v2508, %v2508
    %2511 = vrot.lane.b32.xlu0 %v2423, 111
    %v2512 = vpop.permute.xlu0 %2511
    %2513 = vrot.lane.b32.xlu0 %v2436, 111
    %v2514 = vpop.permute.xlu0 %2513
    %v2515 = vsel %vm278, %v2512, %v2514
    %v2516 = vsel %vm278, %v2514, %v2512
    %v2517 = vmul.f32 %v2515, %v284
    %v2518 = vmul.f32 %v2516, %v285
    %v2519 = vpack.c.bf16 %v2517, %v2517
    %v2520 = vpack.c.bf16 %v2518, %v2518
    %v2521 = vld [vmem:[%s10] sm:$0x3]
    %s2522 = scalar_lea.vmem %s10, 2
    %v2523 = vld [vmem:[%s2522] sm:$0x3]
    %v2525 = vsel %vm1109, %v2523, 0
    %v2528 = vsel %vm1113, %v2457, 0
    %v2531 = vsel %vm1113, %v2458, 0
    %2533 = vmatpush.bf16.msra.mxu0 0
    %2534 = vmatpush.bf16.msra.mxu0 0
    %2535 = vmatpush.bf16.msra.mxu0 0
    %2536 = vmatpush.bf16.msra.mxu0 0
    %2537 = vmatpush.bf16.msra.mxu0 0
    %2538 = vmatpush.bf16.msra.mxu0 0
    %2539 = vmatpush.bf16.msra.mxu0 0
    %2540 = vmatpush.bf16.msra.mxu0 %v2528
    %2541 = vmatmul.bf16.gmra.mxu0 %v2525
    %v2542 = vpop.f32.mrf.mxu0
    %v2543 = vadd.f32 0.0, %v2542
    %v2544 = vpop.f32.mrf.mxu0
    %2545 = vdwg.mxu0
    %2546 = vmatpush.bf16.msra.mxu0 0
    %2547 = vmatpush.bf16.msra.mxu0 0
    %2548 = vmatpush.bf16.msra.mxu0 0
    %2549 = vmatpush.bf16.msra.mxu0 0
    %2550 = vmatpush.bf16.msra.mxu0 0
    %2551 = vmatpush.bf16.msra.mxu0 0
    %2552 = vmatpush.bf16.msra.mxu0 0
    %2553 = vmatpush.bf16.msra.mxu0 %v2531
    %2554 = vmatmul.bf16.gmra.mxu0 %v2525
    %v2555 = vpop.f32.mrf.mxu0
    %v2556 = vadd.f32 0.0, %v2555
    %v2557 = vpop.f32.mrf.mxu0
    %2558 = vdwg.mxu0
    %v2560 = vsel %vm1109, %v2521, 0
    %v2563 = vsel %vm1113, %v2447, 0
    %v2566 = vsel %vm1113, %v2448, 0
    %2568 = vmatpush.bf16.msra.mxu0 0
    %2569 = vmatpush.bf16.msra.mxu0 0
    %2570 = vmatpush.bf16.msra.mxu0 0
    %2571 = vmatpush.bf16.msra.mxu0 0
    %2572 = vmatpush.bf16.msra.mxu0 0
    %2573 = vmatpush.bf16.msra.mxu0 0
    %2574 = vmatpush.bf16.msra.mxu0 0
    %2575 = vmatpush.bf16.msra.mxu0 %v2563
    %2576 = vmatmul.bf16.gmra.mxu0 %v2560
    %v2577 = vpop.f32.mrf.mxu0
    %v2578 = vadd.f32 %v2543, %v2577
    %v2579 = vpop.f32.mrf.mxu0
    %2580 = vdwg.mxu0
    %2581 = vmatpush.bf16.msra.mxu0 0
    %2582 = vmatpush.bf16.msra.mxu0 0
    %2583 = vmatpush.bf16.msra.mxu0 0
    %2584 = vmatpush.bf16.msra.mxu0 0
    %2585 = vmatpush.bf16.msra.mxu0 0
    %2586 = vmatpush.bf16.msra.mxu0 0
    %2587 = vmatpush.bf16.msra.mxu0 0
    %2588 = vmatpush.bf16.msra.mxu0 %v2566
    %2589 = vmatmul.bf16.gmra.mxu0 %v2560
    %v2590 = vpop.f32.mrf.mxu0
    %v2591 = vadd.f32 %v2556, %v2590
    %v2592 = vpop.f32.mrf.mxu0
    %2593 = vdwg.mxu0
    %s2594 = scalar_lea.vmem %s10, 4
    %v2595 = vld [vmem:[%s2594] sm:$0x3]
    %v2597 = vsel %vm1109, %v2595, 0
    %v2600 = vsel %vm1113, %v2467, 0
    %v2603 = vsel %vm1113, %v2468, 0
    %2605 = vmatpush.bf16.msra.mxu0 0
    %2606 = vmatpush.bf16.msra.mxu0 0
    %2607 = vmatpush.bf16.msra.mxu0 0
    %2608 = vmatpush.bf16.msra.mxu0 0
    %2609 = vmatpush.bf16.msra.mxu0 0
    %2610 = vmatpush.bf16.msra.mxu0 0
    %2611 = vmatpush.bf16.msra.mxu0 0
    %2612 = vmatpush.bf16.msra.mxu0 %v2600
    %2613 = vmatmul.bf16.gmra.mxu0 %v2597
    %v2614 = vpop.f32.mrf.mxu0
    %v2615 = vadd.f32 0.0, %v2614
    %v2616 = vpop.f32.mrf.mxu0
    %2617 = vdwg.mxu0
    %2618 = vmatpush.bf16.msra.mxu0 0
    %2619 = vmatpush.bf16.msra.mxu0 0
    %2620 = vmatpush.bf16.msra.mxu0 0
    %2621 = vmatpush.bf16.msra.mxu0 0
    %2622 = vmatpush.bf16.msra.mxu0 0
    %2623 = vmatpush.bf16.msra.mxu0 0
    %2624 = vmatpush.bf16.msra.mxu0 0
    %2625 = vmatpush.bf16.msra.mxu0 %v2603
    %2626 = vmatmul.bf16.gmra.mxu0 %v2597
    %v2627 = vpop.f32.mrf.mxu0
    %v2628 = vadd.f32 0.0, %v2627
    %v2629 = vpop.f32.mrf.mxu0
    %2630 = vdwg.mxu0
    %v2631 = vadd.f32 %v2578, %v2615
    %v2632 = vadd.f32 %v2591, %v2628
    %s2633 = scalar_lea.vmem %s10, 6
    %v2634 = vld [vmem:[%s2633] sm:$0x3]
    %v2636 = vsel %vm1109, %v2634, 0
    %v2639 = vsel %vm1113, %v2477, 0
    %v2642 = vsel %vm1113, %v2478, 0
    %2644 = vmatpush.bf16.msra.mxu0 0
    %2645 = vmatpush.bf16.msra.mxu0 0
    %2646 = vmatpush.bf16.msra.mxu0 0
    %2647 = vmatpush.bf16.msra.mxu0 0
    %2648 = vmatpush.bf16.msra.mxu0 0
    %2649 = vmatpush.bf16.msra.mxu0 0
    %2650 = vmatpush.bf16.msra.mxu0 0
    %2651 = vmatpush.bf16.msra.mxu0 %v2639
    %2652 = vmatmul.bf16.gmra.mxu0 %v2636
    %v2653 = vpop.f32.mrf.mxu0
    %v2654 = vadd.f32 0.0, %v2653
    %v2655 = vpop.f32.mrf.mxu0
    %2656 = vdwg.mxu0
    %2657 = vmatpush.bf16.msra.mxu0 0
    %2658 = vmatpush.bf16.msra.mxu0 0
    %2659 = vmatpush.bf16.msra.mxu0 0
    %2660 = vmatpush.bf16.msra.mxu0 0
    %2661 = vmatpush.bf16.msra.mxu0 0
    %2662 = vmatpush.bf16.msra.mxu0 0
    %2663 = vmatpush.bf16.msra.mxu0 0
    %2664 = vmatpush.bf16.msra.mxu0 %v2642
    %2665 = vmatmul.bf16.gmra.mxu0 %v2636
    %v2666 = vpop.f32.mrf.mxu0
    %v2667 = vadd.f32 0.0, %v2666
    %v2668 = vpop.f32.mrf.mxu0
    %2669 = vdwg.mxu0
    %v2670 = vadd.f32 %v2631, %v2654
    %v2671 = vadd.f32 %v2632, %v2667
    %s2672 = scalar_lea.vmem %s10, 8
    %v2673 = vld [vmem:[%s2672] sm:$0x3]
    %v2675 = vsel %vm1109, %v2673, 0
    %v2678 = vsel %vm1113, %v2479, 0
    %v2681 = vsel %vm1113, %v2480, 0
    %2683 = vmatpush.bf16.msra.mxu0 0
    %2684 = vmatpush.bf16.msra.mxu0 0
    %2685 = vmatpush.bf16.msra.mxu0 0
    %2686 = vmatpush.bf16.msra.mxu0 0
    %2687 = vmatpush.bf16.msra.mxu0 0
    %2688 = vmatpush.bf16.msra.mxu0 0
    %2689 = vmatpush.bf16.msra.mxu0 0
    %2690 = vmatpush.bf16.msra.mxu0 %v2678
    %2691 = vmatmul.bf16.gmra.mxu0 %v2675
    %v2692 = vpop.f32.mrf.mxu0
    %v2693 = vadd.f32 0.0, %v2692
    %v2694 = vpop.f32.mrf.mxu0
    %2695 = vdwg.mxu0
    %2696 = vmatpush.bf16.msra.mxu0 0
    %2697 = vmatpush.bf16.msra.mxu0 0
    %2698 = vmatpush.bf16.msra.mxu0 0
    %2699 = vmatpush.bf16.msra.mxu0 0
    %2700 = vmatpush.bf16.msra.mxu0 0
    %2701 = vmatpush.bf16.msra.mxu0 0
    %2702 = vmatpush.bf16.msra.mxu0 0
    %2703 = vmatpush.bf16.msra.mxu0 %v2681
    %2704 = vmatmul.bf16.gmra.mxu0 %v2675
    %v2705 = vpop.f32.mrf.mxu0
    %v2706 = vadd.f32 0.0, %v2705
    %v2707 = vpop.f32.mrf.mxu0
    %2708 = vdwg.mxu0
    %v2709 = vadd.f32 %v2670, %v2693
    %v2710 = vadd.f32 %v2671, %v2706
    %s2711 = scalar_lea.vmem %s10, 10
    %v2712 = vld [vmem:[%s2711] sm:$0x3]
    %v2714 = vsel %vm1109, %v2712, 0
    %v2717 = vsel %vm1113, %v2489, 0
    %v2720 = vsel %vm1113, %v2490, 0
    %2722 = vmatpush.bf16.msra.mxu0 0
    %2723 = vmatpush.bf16.msra.mxu0 0
    %2724 = vmatpush.bf16.msra.mxu0 0
    %2725 = vmatpush.bf16.msra.mxu0 0
    %2726 = vmatpush.bf16.msra.mxu0 0
    %2727 = vmatpush.bf16.msra.mxu0 0
    %2728 = vmatpush.bf16.msra.mxu0 0
    %2729 = vmatpush.bf16.msra.mxu0 %v2717
    %2730 = vmatmul.bf16.gmra.mxu0 %v2714
    %v2731 = vpop.f32.mrf.mxu0
    %v2732 = vadd.f32 0.0, %v2731
    %v2733 = vpop.f32.mrf.mxu0
    %2734 = vdwg.mxu0
    %2735 = vmatpush.bf16.msra.mxu0 0
    %2736 = vmatpush.bf16.msra.mxu0 0
    %2737 = vmatpush.bf16.msra.mxu0 0
    %2738 = vmatpush.bf16.msra.mxu0 0
    %2739 = vmatpush.bf16.msra.mxu0 0
    %2740 = vmatpush.bf16.msra.mxu0 0
    %2741 = vmatpush.bf16.msra.mxu0 0
    %2742 = vmatpush.bf16.msra.mxu0 %v2720
    %2743 = vmatmul.bf16.gmra.mxu0 %v2714
    %v2744 = vpop.f32.mrf.mxu0
    %v2745 = vadd.f32 0.0, %v2744
    %v2746 = vpop.f32.mrf.mxu0
    %2747 = vdwg.mxu0
    %v2748 = vadd.f32 %v2709, %v2732
    %v2749 = vadd.f32 %v2710, %v2745
    %s2750 = scalar_lea.vmem %s10, 12
    %v2751 = vld [vmem:[%s2750] sm:$0x3]
    %v2753 = vsel %vm1109, %v2751, 0
    %v2756 = vsel %vm1113, %v2499, 0
    %v2759 = vsel %vm1113, %v2500, 0
    %2761 = vmatpush.bf16.msra.mxu0 0
    %2762 = vmatpush.bf16.msra.mxu0 0
    %2763 = vmatpush.bf16.msra.mxu0 0
    %2764 = vmatpush.bf16.msra.mxu0 0
    %2765 = vmatpush.bf16.msra.mxu0 0
    %2766 = vmatpush.bf16.msra.mxu0 0
    %2767 = vmatpush.bf16.msra.mxu0 0
    %2768 = vmatpush.bf16.msra.mxu0 %v2756
    %2769 = vmatmul.bf16.gmra.mxu0 %v2753
    %v2770 = vpop.f32.mrf.mxu0
    %v2771 = vadd.f32 0.0, %v2770
    %v2772 = vpop.f32.mrf.mxu0
    %2773 = vdwg.mxu0
    %2774 = vmatpush.bf16.msra.mxu0 0
    %2775 = vmatpush.bf16.msra.mxu0 0
    %2776 = vmatpush.bf16.msra.mxu0 0
    %2777 = vmatpush.bf16.msra.mxu0 0
    %2778 = vmatpush.bf16.msra.mxu0 0
    %2779 = vmatpush.bf16.msra.mxu0 0
    %2780 = vmatpush.bf16.msra.mxu0 0
    %2781 = vmatpush.bf16.msra.mxu0 %v2759
    %2782 = vmatmul.bf16.gmra.mxu0 %v2753
    %v2783 = vpop.f32.mrf.mxu0
    %v2784 = vadd.f32 0.0, %v2783
    %v2785 = vpop.f32.mrf.mxu0
    %2786 = vdwg.mxu0
    %v2787 = vadd.f32 %v2748, %v2771
    %v2788 = vadd.f32 %v2749, %v2784
    %s2789 = scalar_lea.vmem %s10, 14
    %v2790 = vld [vmem:[%s2789] sm:$0x3]
    %v2792 = vsel %vm1109, %v2790, 0
    %v2795 = vsel %vm1113, %v2509, 0
    %v2798 = vsel %vm1113, %v2510, 0
    %2800 = vmatpush.bf16.msra.mxu0 0
    %2801 = vmatpush.bf16.msra.mxu0 0
    %2802 = vmatpush.bf16.msra.mxu0 0
    %2803 = vmatpush.bf16.msra.mxu0 0
    %2804 = vmatpush.bf16.msra.mxu0 0
    %2805 = vmatpush.bf16.msra.mxu0 0
    %2806 = vmatpush.bf16.msra.mxu0 0
    %2807 = vmatpush.bf16.msra.mxu0 %v2795
    %2808 = vmatmul.bf16.gmra.mxu0 %v2792
    %v2809 = vpop.f32.mrf.mxu0
    %v2810 = vadd.f32 0.0, %v2809
    %v2811 = vpop.f32.mrf.mxu0
    %2812 = vdwg.mxu0
    %2813 = vmatpush.bf16.msra.mxu0 0
    %2814 = vmatpush.bf16.msra.mxu0 0
    %2815 = vmatpush.bf16.msra.mxu0 0
    %2816 = vmatpush.bf16.msra.mxu0 0
    %2817 = vmatpush.bf16.msra.mxu0 0
    %2818 = vmatpush.bf16.msra.mxu0 0
    %2819 = vmatpush.bf16.msra.mxu0 0
    %2820 = vmatpush.bf16.msra.mxu0 %v2798
    %2821 = vmatmul.bf16.gmra.mxu0 %v2792
    %v2822 = vpop.f32.mrf.mxu0
    %v2823 = vadd.f32 0.0, %v2822
    %v2824 = vpop.f32.mrf.mxu0
    %2825 = vdwg.mxu0
    %v2826 = vadd.f32 %v2787, %v2810
    %v2827 = vadd.f32 %v2788, %v2823
    %s2828 = scalar_lea.vmem %s10, 16
    %v2829 = vld [vmem:[%s2828] sm:$0x3]
    %v2831 = vsel %vm1109, %v2829, 0
    %v2834 = vsel %vm1113, %v2519, 0
    %v2837 = vsel %vm1113, %v2520, 0
    %2839 = vmatpush.bf16.msra.mxu0 0
    %2840 = vmatpush.bf16.msra.mxu0 0
    %2841 = vmatpush.bf16.msra.mxu0 0
    %2842 = vmatpush.bf16.msra.mxu0 0
    %2843 = vmatpush.bf16.msra.mxu0 0
    %2844 = vmatpush.bf16.msra.mxu0 0
    %2845 = vmatpush.bf16.msra.mxu0 0
    %2846 = vmatpush.bf16.msra.mxu0 %v2834
    %2847 = vmatmul.bf16.gmra.mxu0 %v2831
    %v2848 = vpop.f32.mrf.mxu0
    %v2849 = vadd.f32 0.0, %v2848
    %v2850 = vpop.f32.mrf.mxu0
    %2851 = vdwg.mxu0
    %2852 = vmatpush.bf16.msra.mxu0 0
    %2853 = vmatpush.bf16.msra.mxu0 0
    %2854 = vmatpush.bf16.msra.mxu0 0
    %2855 = vmatpush.bf16.msra.mxu0 0
    %2856 = vmatpush.bf16.msra.mxu0 0
    %2857 = vmatpush.bf16.msra.mxu0 0
    %2858 = vmatpush.bf16.msra.mxu0 0
    %2859 = vmatpush.bf16.msra.mxu0 %v2837
    %2860 = vmatmul.bf16.gmra.mxu0 %v2831
    %v2861 = vpop.f32.mrf.mxu0
    %v2862 = vadd.f32 0.0, %v2861
    %v2863 = vpop.f32.mrf.mxu0
    %2864 = vdwg.mxu0
    %v2865 = vadd.f32 %v2826, %v2849
    %v2866 = vadd.f32 %v2827, %v2862
    %v2867 = vld [vmem:[%s11] sm:$0x3]
    %s2868 = scalar_lea.vmem %s11, 2
    %v2869 = vld [vmem:[%s2868] sm:$0x3]
    %v2871 = vsel %vm295, %v2869, 0
    %2873 = vmatpush.bf16.msra.mxu0 0
    %2874 = vmatpush.bf16.msra.mxu0 0
    %2875 = vmatpush.bf16.msra.mxu0 0
    %2876 = vmatpush.bf16.msra.mxu0 0
    %2877 = vmatpush.bf16.msra.mxu0 0
    %2878 = vmatpush.bf16.msra.mxu0 0
    %2879 = vmatpush.bf16.msra.mxu0 0
    %2880 = vmatpush.bf16.msra.mxu0 %v301
    %2881 = vmatmul.bf16.gmra.mxu0 %v2871
    %v2882 = vpop.f32.mrf.mxu0
    %v2883 = vadd.f32 0.0, %v2882
    %v2884 = vpop.f32.mrf.mxu0
    %2885 = vdwg.mxu0
    %2886 = vmatpush.bf16.msra.mxu0 0
    %2887 = vmatpush.bf16.msra.mxu0 0
    %2888 = vmatpush.bf16.msra.mxu0 0
    %2889 = vmatpush.bf16.msra.mxu0 0
    %2890 = vmatpush.bf16.msra.mxu0 0
    %2891 = vmatpush.bf16.msra.mxu0 0
    %2892 = vmatpush.bf16.msra.mxu0 0
    %2893 = vmatpush.bf16.msra.mxu0 %v304
    %2894 = vmatmul.bf16.gmra.mxu0 %v2871
    %v2895 = vpop.f32.mrf.mxu0
    %v2896 = vadd.f32 0.0, %v2895
    %v2897 = vpop.f32.mrf.mxu0
    %2898 = vdwg.mxu0
    %v2900 = vsel %vm295, %v2867, 0
    %2902 = vmatpush.bf16.msra.mxu0 0
    %2903 = vmatpush.bf16.msra.mxu0 0
    %2904 = vmatpush.bf16.msra.mxu0 0
    %2905 = vmatpush.bf16.msra.mxu0 0
    %2906 = vmatpush.bf16.msra.mxu0 0
    %2907 = vmatpush.bf16.msra.mxu0 0
    %2908 = vmatpush.bf16.msra.mxu0 0
    %2909 = vmatpush.bf16.msra.mxu0 %v336
    %2910 = vmatmul.bf16.gmra.mxu0 %v2900
    %v2911 = vpop.f32.mrf.mxu0
    %v2912 = vadd.f32 %v2883, %v2911
    %v2913 = vpop.f32.mrf.mxu0
    %2914 = vdwg.mxu0
    %2915 = vmatpush.bf16.msra.mxu0 0
    %2916 = vmatpush.bf16.msra.mxu0 0
    %2917 = vmatpush.bf16.msra.mxu0 0
    %2918 = vmatpush.bf16.msra.mxu0 0
    %2919 = vmatpush.bf16.msra.mxu0 0
    %2920 = vmatpush.bf16.msra.mxu0 0
    %2921 = vmatpush.bf16.msra.mxu0 0
    %2922 = vmatpush.bf16.msra.mxu0 %v339
    %2923 = vmatmul.bf16.gmra.mxu0 %v2900
    %v2924 = vpop.f32.mrf.mxu0
    %v2925 = vadd.f32 %v2896, %v2924
    %v2926 = vpop.f32.mrf.mxu0
    %2927 = vdwg.mxu0
    %s2928 = scalar_lea.vmem %s11, 4
    %v2929 = vld [vmem:[%s2928] sm:$0x3]
    %v2931 = vsel %vm295, %v2929, 0
    %2933 = vmatpush.bf16.msra.mxu0 0
    %2934 = vmatpush.bf16.msra.mxu0 0
    %2935 = vmatpush.bf16.msra.mxu0 0
    %2936 = vmatpush.bf16.msra.mxu0 0
    %2937 = vmatpush.bf16.msra.mxu0 0
    %2938 = vmatpush.bf16.msra.mxu0 0
    %2939 = vmatpush.bf16.msra.mxu0 0
    %2940 = vmatpush.bf16.msra.mxu0 %v373
    %2941 = vmatmul.bf16.gmra.mxu0 %v2931
    %v2942 = vpop.f32.mrf.mxu0
    %v2943 = vadd.f32 0.0, %v2942
    %v2944 = vpop.f32.mrf.mxu0
    %2945 = vdwg.mxu0
    %2946 = vmatpush.bf16.msra.mxu0 0
    %2947 = vmatpush.bf16.msra.mxu0 0
    %2948 = vmatpush.bf16.msra.mxu0 0
    %2949 = vmatpush.bf16.msra.mxu0 0
    %2950 = vmatpush.bf16.msra.mxu0 0
    %2951 = vmatpush.bf16.msra.mxu0 0
    %2952 = vmatpush.bf16.msra.mxu0 0
    %2953 = vmatpush.bf16.msra.mxu0 %v376
    %2954 = vmatmul.bf16.gmra.mxu0 %v2931
    %v2955 = vpop.f32.mrf.mxu0
    %v2956 = vadd.f32 0.0, %v2955
    %v2957 = vpop.f32.mrf.mxu0
    %2958 = vdwg.mxu0
    %v2959 = vadd.f32 %v2912, %v2943
    %v2960 = vadd.f32 %v2925, %v2956
    %s2961 = scalar_lea.vmem %s11, 6
    %v2962 = vld [vmem:[%s2961] sm:$0x3]
    %v2964 = vsel %vm295, %v2962, 0
    %2966 = vmatpush.bf16.msra.mxu0 0
    %2967 = vmatpush.bf16.msra.mxu0 0
    %2968 = vmatpush.bf16.msra.mxu0 0
    %2969 = vmatpush.bf16.msra.mxu0 0
    %2970 = vmatpush.bf16.msra.mxu0 0
    %2971 = vmatpush.bf16.msra.mxu0 0
    %2972 = vmatpush.bf16.msra.mxu0 0
    %2973 = vmatpush.bf16.msra.mxu0 %v412
    %2974 = vmatmul.bf16.gmra.mxu0 %v2964
    %v2975 = vpop.f32.mrf.mxu0
    %v2976 = vadd.f32 0.0, %v2975
    %v2977 = vpop.f32.mrf.mxu0
    %2978 = vdwg.mxu0
    %2979 = vmatpush.bf16.msra.mxu0 0
    %2980 = vmatpush.bf16.msra.mxu0 0
    %2981 = vmatpush.bf16.msra.mxu0 0
    %2982 = vmatpush.bf16.msra.mxu0 0
    %2983 = vmatpush.bf16.msra.mxu0 0
    %2984 = vmatpush.bf16.msra.mxu0 0
    %2985 = vmatpush.bf16.msra.mxu0 0
    %2986 = vmatpush.bf16.msra.mxu0 %v415
    %2987 = vmatmul.bf16.gmra.mxu0 %v2964
    %v2988 = vpop.f32.mrf.mxu0
    %v2989 = vadd.f32 0.0, %v2988
    %v2990 = vpop.f32.mrf.mxu0
    %2991 = vdwg.mxu0
    %v2992 = vadd.f32 %v2959, %v2976
    %v2993 = vadd.f32 %v2960, %v2989
    %s2994 = scalar_lea.vmem %s11, 8
    %v2995 = vld [vmem:[%s2994] sm:$0x3]
    %v2997 = vsel %vm295, %v2995, 0
    %2999 = vmatpush.bf16.msra.mxu0 0
    %3000 = vmatpush.bf16.msra.mxu0 0
    %3001 = vmatpush.bf16.msra.mxu0 0
    %3002 = vmatpush.bf16.msra.mxu0 0
    %3003 = vmatpush.bf16.msra.mxu0 0
    %3004 = vmatpush.bf16.msra.mxu0 0
    %3005 = vmatpush.bf16.msra.mxu0 0
    %3006 = vmatpush.bf16.msra.mxu0 %v451
    %3007 = vmatmul.bf16.gmra.mxu0 %v2997
    %v3008 = vpop.f32.mrf.mxu0
    %v3009 = vadd.f32 0.0, %v3008
    %v3010 = vpop.f32.mrf.mxu0
    %3011 = vdwg.mxu0
    %3012 = vmatpush.bf16.msra.mxu0 0
    %3013 = vmatpush.bf16.msra.mxu0 0
    %3014 = vmatpush.bf16.msra.mxu0 0
    %3015 = vmatpush.bf16.msra.mxu0 0
    %3016 = vmatpush.bf16.msra.mxu0 0
    %3017 = vmatpush.bf16.msra.mxu0 0
    %3018 = vmatpush.bf16.msra.mxu0 0
    %3019 = vmatpush.bf16.msra.mxu0 %v454
    %3020 = vmatmul.bf16.gmra.mxu0 %v2997
    %v3021 = vpop.f32.mrf.mxu0
    %v3022 = vadd.f32 0.0, %v3021
    %v3023 = vpop.f32.mrf.mxu0
    %3024 = vdwg.mxu0
    %v3025 = vadd.f32 %v2992, %v3009
    %v3026 = vadd.f32 %v2993, %v3022
    %s3027 = scalar_lea.vmem %s11, 10
    %v3028 = vld [vmem:[%s3027] sm:$0x3]
    %v3030 = vsel %vm295, %v3028, 0
    %3032 = vmatpush.bf16.msra.mxu0 0
    %3033 = vmatpush.bf16.msra.mxu0 0
    %3034 = vmatpush.bf16.msra.mxu0 0
    %3035 = vmatpush.bf16.msra.mxu0 0
    %3036 = vmatpush.bf16.msra.mxu0 0
    %3037 = vmatpush.bf16.msra.mxu0 0
    %3038 = vmatpush.bf16.msra.mxu0 0
    %3039 = vmatpush.bf16.msra.mxu0 %v490
    %3040 = vmatmul.bf16.gmra.mxu0 %v3030
    %v3041 = vpop.f32.mrf.mxu0
    %v3042 = vadd.f32 0.0, %v3041
    %v3043 = vpop.f32.mrf.mxu0
    %3044 = vdwg.mxu0
    %3045 = vmatpush.bf16.msra.mxu0 0
    %3046 = vmatpush.bf16.msra.mxu0 0
    %3047 = vmatpush.bf16.msra.mxu0 0
    %3048 = vmatpush.bf16.msra.mxu0 0
    %3049 = vmatpush.bf16.msra.mxu0 0
    %3050 = vmatpush.bf16.msra.mxu0 0
    %3051 = vmatpush.bf16.msra.mxu0 0
    %3052 = vmatpush.bf16.msra.mxu0 %v493
    %3053 = vmatmul.bf16.gmra.mxu0 %v3030
    %v3054 = vpop.f32.mrf.mxu0
    %v3055 = vadd.f32 0.0, %v3054
    %v3056 = vpop.f32.mrf.mxu0
    %3057 = vdwg.mxu0
    %v3058 = vadd.f32 %v3025, %v3042
    %v3059 = vadd.f32 %v3026, %v3055
    %s3060 = scalar_lea.vmem %s11, 12
    %v3061 = vld [vmem:[%s3060] sm:$0x3]
    %v3063 = vsel %vm295, %v3061, 0
    %3065 = vmatpush.bf16.msra.mxu0 0
    %3066 = vmatpush.bf16.msra.mxu0 0
    %3067 = vmatpush.bf16.msra.mxu0 0
    %3068 = vmatpush.bf16.msra.mxu0 0
    %3069 = vmatpush.bf16.msra.mxu0 0
    %3070 = vmatpush.bf16.msra.mxu0 0
    %3071 = vmatpush.bf16.msra.mxu0 0
    %3072 = vmatpush.bf16.msra.mxu0 %v529
    %3073 = vmatmul.bf16.gmra.mxu0 %v3063
    %v3074 = vpop.f32.mrf.mxu0
    %v3075 = vadd.f32 0.0, %v3074
    %v3076 = vpop.f32.mrf.mxu0
    %3077 = vdwg.mxu0
    %3078 = vmatpush.bf16.msra.mxu0 0
    %3079 = vmatpush.bf16.msra.mxu0 0
    %3080 = vmatpush.bf16.msra.mxu0 0
    %3081 = vmatpush.bf16.msra.mxu0 0
    %3082 = vmatpush.bf16.msra.mxu0 0
    %3083 = vmatpush.bf16.msra.mxu0 0
    %3084 = vmatpush.bf16.msra.mxu0 0
    %3085 = vmatpush.bf16.msra.mxu0 %v532
    %3086 = vmatmul.bf16.gmra.mxu0 %v3063
    %v3087 = vpop.f32.mrf.mxu0
    %v3088 = vadd.f32 0.0, %v3087
    %v3089 = vpop.f32.mrf.mxu0
    %3090 = vdwg.mxu0
    %v3091 = vadd.f32 %v3058, %v3075
    %v3092 = vadd.f32 %v3059, %v3088
    %s3093 = scalar_lea.vmem %s11, 14
    %v3094 = vld [vmem:[%s3093] sm:$0x3]
    %v3096 = vsel %vm295, %v3094, 0
    %3098 = vmatpush.bf16.msra.mxu0 0
    %3099 = vmatpush.bf16.msra.mxu0 0
    %3100 = vmatpush.bf16.msra.mxu0 0
    %3101 = vmatpush.bf16.msra.mxu0 0
    %3102 = vmatpush.bf16.msra.mxu0 0
    %3103 = vmatpush.bf16.msra.mxu0 0
    %3104 = vmatpush.bf16.msra.mxu0 0
    %3105 = vmatpush.bf16.msra.mxu0 %v568
    %3106 = vmatmul.bf16.gmra.mxu0 %v3096
    %v3107 = vpop.f32.mrf.mxu0
    %v3108 = vadd.f32 0.0, %v3107
    %v3109 = vpop.f32.mrf.mxu0
    %3110 = vdwg.mxu0
    %3111 = vmatpush.bf16.msra.mxu0 0
    %3112 = vmatpush.bf16.msra.mxu0 0
    %3113 = vmatpush.bf16.msra.mxu0 0
    %3114 = vmatpush.bf16.msra.mxu0 0
    %3115 = vmatpush.bf16.msra.mxu0 0
    %3116 = vmatpush.bf16.msra.mxu0 0
    %3117 = vmatpush.bf16.msra.mxu0 0
    %3118 = vmatpush.bf16.msra.mxu0 %v571
    %3119 = vmatmul.bf16.gmra.mxu0 %v3096
    %v3120 = vpop.f32.mrf.mxu0
    %v3121 = vadd.f32 0.0, %v3120
    %v3122 = vpop.f32.mrf.mxu0
    %3123 = vdwg.mxu0
    %v3124 = vadd.f32 %v3091, %v3108
    %v3125 = vadd.f32 %v3092, %v3121
    %s3126 = scalar_lea.vmem %s11, 16
    %v3127 = vld [vmem:[%s3126] sm:$0x3]
    %v3129 = vsel %vm295, %v3127, 0
    %3131 = vmatpush.bf16.msra.mxu0 0
    %3132 = vmatpush.bf16.msra.mxu0 0
    %3133 = vmatpush.bf16.msra.mxu0 0
    %3134 = vmatpush.bf16.msra.mxu0 0
    %3135 = vmatpush.bf16.msra.mxu0 0
    %3136 = vmatpush.bf16.msra.mxu0 0
    %3137 = vmatpush.bf16.msra.mxu0 0
    %3138 = vmatpush.bf16.msra.mxu0 %v607
    %3139 = vmatmul.bf16.gmra.mxu0 %v3129
    %v3140 = vpop.f32.mrf.mxu0
    %v3141 = vadd.f32 0.0, %v3140
    %v3142 = vpop.f32.mrf.mxu0
    %3143 = vdwg.mxu0
    %3144 = vmatpush.bf16.msra.mxu0 0
    %3145 = vmatpush.bf16.msra.mxu0 0
    %3146 = vmatpush.bf16.msra.mxu0 0
    %3147 = vmatpush.bf16.msra.mxu0 0
    %3148 = vmatpush.bf16.msra.mxu0 0
    %3149 = vmatpush.bf16.msra.mxu0 0
    %3150 = vmatpush.bf16.msra.mxu0 0
    %3151 = vmatpush.bf16.msra.mxu0 %v610
    %3152 = vmatmul.bf16.gmra.mxu0 %v3129
    %v3153 = vpop.f32.mrf.mxu0
    %v3154 = vadd.f32 0.0, %v3153
    %v3155 = vpop.f32.mrf.mxu0
    %3156 = vdwg.mxu0
    %v3157 = vadd.f32 %v3124, %v3141
    %v3158 = vadd.f32 %v3125, %v3154
    %v3159 = vadd.f32 %v2865, %v3157
    %v3160 = vadd.f32 %v2866, %v3158
    %v3161 = vld [vmem:[%s12] sm:$0xf]
    %3163 = vset.pattern.permute.xlu0 0
    %3164 = vperm.xlu0 %3163, %v3161
    %v3165 = vpop.permute.xlu0 %3164
    %v3167 = vadd.f32 %v3159, %v3165
    %v3168 = vadd.f32 %v3160, %v3165
    %v3169 = vmax.f32 %v3167, 0.0
    %v3170 = vmax.f32 %v3168, 0.0
    %v3173 = vrot.slane %v3170, 4
    %v3174 = vsel %vm1113, %v3169, %v3173
    %3176 = vst [vmem:[%s20] sm:$0xff] %v3174
    %s3177 = scalar_lea.vmem %s0, 8
    %v3178 = vld [vmem:[%s3177] sm:$0xff]
    %3180 = vst [vmem:[#allocation1] ss:$2 sm:$0xff] %v3178
    %v3181 = vld.sshfl [vmem:[#allocation1] sm:$0xff pattern:$0x75316420]
    %v3182 = vld.sshfl [vmem:[#allocation1 + $0x8] sm:$0xff pattern:$0x75316420]
    %3185 = vrot.lane.b32.xlu0 %v3181, 17
    %v3186 = vpop.permute.xlu0 %3185
    %3187 = vrot.lane.b32.xlu0 %v3182, 17
    %v3188 = vpop.permute.xlu0 %3187
    %v3189 = vsel %vm111, %v3186, %v3188
    %v3190 = vsel %vm111, %v3188, %v3186
    %v3191 = vld [vmem:[#allocation4] sm:$0x3]
    %v3193 = vperm.slane %v3191, 0
    %v3194 = vperm.slane %v3191, 1
    %v3197 = vmul.f32 %v3190, %v3193
    %v3198 = vmul.f32 %v3189, %v3194
    %v3199 = vpack.c.bf16 %v3197, %v3197
    %v3200 = vpack.c.bf16 %v3198, %v3198
    %3201 = vst [vmem:[#allocation1] ss:$2 sm:$0xff] %v3178
    %v3202 = vld.sshfl [vmem:[#allocation1] sm:$0xff pattern:$0x75316420]
    %v3203 = vld.sshfl [vmem:[#allocation1 + $0x8] sm:$0xff pattern:$0x75316420]
    %3206 = vrot.lane.b32.xlu0 %v3202, 16
    %v3207 = vpop.permute.xlu0 %3206
    %3208 = vrot.lane.b32.xlu0 %v3203, 16
    %v3209 = vpop.permute.xlu0 %3208
    %v3210 = vsel %vm133, %v3207, %v3209
    %v3211 = vsel %vm133, %v3209, %v3207
    %v3212 = vld [vmem:[%s136] sm:$0x3]
    %v3214 = vperm.slane %v3212, 0
    %v3215 = vperm.slane %v3212, 1
    %v3218 = vmul.f32 %v3211, %v3214
    %v3219 = vmul.f32 %v3210, %v3215
    %v3220 = vpack.c.bf16 %v3218, %v3218
    %v3221 = vpack.c.bf16 %v3219, %v3219
    %3222 = vst [vmem:[#allocation1] ss:$2 sm:$0xff] %v3178
    %v3223 = vld.sshfl [vmem:[#allocation1] sm:$0xff pattern:$0x75316420]
    %v3224 = vld.sshfl [vmem:[#allocation1 + $0x8] sm:$0xff pattern:$0x75316420]
    %3227 = vrot.lane.b32.xlu0 %v3223, 15
    %v3228 = vpop.permute.xlu0 %3227
    %3229 = vrot.lane.b32.xlu0 %v3224, 15
    %v3230 = vpop.permute.xlu0 %3229
    %v3231 = vsel %vm156, %v3228, %v3230
    %v3232 = vsel %vm156, %v3230, %v3228
    %v3233 = vld [vmem:[%s159] sm:$0x3]
    %v3235 = vperm.slane %v3233, 0
    %v3236 = vperm.slane %v3233, 1
    %v3239 = vmul.f32 %v3232, %v3235
    %v3240 = vmul.f32 %v3231, %v3236
    %v3241 = vpack.c.bf16 %v3239, %v3239
    %v3242 = vpack.c.bf16 %v3240, %v3240
    %3243 = vst [vmem:[#allocation1] ss:$2 sm:$0xff] %v3178
    %v3244 = vld.sshfl [vmem:[#allocation1] sm:$0xff pattern:$0x75316420]
    %v3245 = vld.sshfl [vmem:[#allocation1 + $0x8] sm:$0xff pattern:$0x75316420]
    %3248 = vrot.lane.b32.xlu0 %v3244, 1
    %v3249 = vpop.permute.xlu0 %3248
    %3250 = vrot.lane.b32.xlu0 %v3245, 1
    %v3251 = vpop.permute.xlu0 %3250
    %v3252 = vsel %vm179, %v3249, %v3251
    %v3253 = vsel %vm179, %v3251, %v3249
    %v3254 = vld [vmem:[%s182] sm:$0x3]
    %v3256 = vperm.slane %v3254, 0
    %v3257 = vperm.slane %v3254, 1
    %v3260 = vmul.f32 %v3253, %v3256
    %v3261 = vmul.f32 %v3252, %v3257
    %v3262 = vpack.c.bf16 %v3260, %v3260
    %v3263 = vpack.c.bf16 %v3261, %v3261
    %3264 = vst [vmem:[#allocation1] ss:$2 sm:$0xff] %v3178
    %v3265 = vld.sshfl [vmem:[#allocation1] sm:$0xff pattern:$0x75316420]
    %v3266 = vld.sshfl [vmem:[#allocation1 + $0x8] sm:$0xff pattern:$0x75316420]
    %v3269 = vpack.c.bf16 %v3265, %v3265
    %v3270 = vpack.c.bf16 %v3266, %v3266
    %3271 = vst [vmem:[#allocation1] ss:$2 sm:$0xff] %v3178
    %v3272 = vld.sshfl [vmem:[#allocation1] sm:$0xff pattern:$0x75316420]
    %v3273 = vld.sshfl [vmem:[#allocation1 + $0x8] sm:$0xff pattern:$0x75316420]
    %3276 = vrot.lane.b32.xlu0 %v3272, 127
    %v3277 = vpop.permute.xlu0 %3276
    %3278 = vrot.lane.b32.xlu0 %v3273, 127
    %v3279 = vpop.permute.xlu0 %3278
    %v3280 = vsel %vm209, %v3277, %v3279
    %v3281 = vsel %vm209, %v3279, %v3277
    %v3282 = vld [vmem:[%s212] sm:$0x3]
    %v3284 = vperm.slane %v3282, 0
    %v3285 = vperm.slane %v3282, 1
    %v3288 = vmul.f32 %v3280, %v3284
    %v3289 = vmul.f32 %v3281, %v3285
    %v3290 = vpack.c.bf16 %v3288, %v3288
    %v3291 = vpack.c.bf16 %v3289, %v3289
    %3292 = vst [vmem:[#allocation1] ss:$2 sm:$0xff] %v3178
    %v3293 = vld.sshfl [vmem:[#allocation1] sm:$0xff pattern:$0x75316420]
    %v3294 = vld.sshfl [vmem:[#allocation1 + $0x8] sm:$0xff pattern:$0x75316420]
    %3297 = vrot.lane.b32.xlu0 %v3293, 113
    %v3298 = vpop.permute.xlu0 %3297
    %3299 = vrot.lane.b32.xlu0 %v3294, 113
    %v3300 = vpop.permute.xlu0 %3299
    %v3301 = vsel %vm232, %v3298, %v3300
    %v3302 = vsel %vm232, %v3300, %v3298
    %v3303 = vld [vmem:[%s235] sm:$0x3]
    %v3305 = vperm.slane %v3303, 0
    %v3306 = vperm.slane %v3303, 1
    %v3309 = vmul.f32 %v3301, %v3305
    %v3310 = vmul.f32 %v3302, %v3306
    %v3311 = vpack.c.bf16 %v3309, %v3309
    %v3312 = vpack.c.bf16 %v3310, %v3310
    %3313 = vst [vmem:[#allocation1] ss:$2 sm:$0xff] %v3178
    %v3314 = vld.sshfl [vmem:[#allocation1] sm:$0xff pattern:$0x75316420]
    %v3315 = vld.sshfl [vmem:[#allocation1 + $0x8] sm:$0xff pattern:$0x75316420]
    %3318 = vrot.lane.b32.xlu0 %v3314, 112
    %v3319 = vpop.permute.xlu0 %3318
    %3320 = vrot.lane.b32.xlu0 %v3315, 112
    %v3321 = vpop.permute.xlu0 %3320
    %v3322 = vsel %vm255, %v3319, %v3321
    %v3323 = vsel %vm255, %v3321, %v3319
    %v3324 = vld [vmem:[%s258] sm:$0x3]
    %v3326 = vperm.slane %v3324, 0
    %v3327 = vperm.slane %v3324, 1
    %v3330 = vmul.f32 %v3322, %v3326
    %v3331 = vmul.f32 %v3323, %v3327
    %v3332 = vpack.c.bf16 %v3330, %v3330
    %v3333 = vpack.c.bf16 %v3331, %v3331
    %3334 = vst [vmem:[#allocation1] ss:$2 sm:$0xff] %v3178
    %v3335 = vld.sshfl [vmem:[#allocation1] sm:$0xff pattern:$0x75316420]
    %v3336 = vld.sshfl [vmem:[#allocation1 + $0x8] sm:$0xff pattern:$0x75316420]
    %3339 = vrot.lane.b32.xlu0 %v3335, 111
    %v3340 = vpop.permute.xlu0 %3339
    %3341 = vrot.lane.b32.xlu0 %v3336, 111
    %v3342 = vpop.permute.xlu0 %3341
    %v3343 = vsel %vm278, %v3340, %v3342
    %v3344 = vsel %vm278, %v3342, %v3340
    %v3345 = vld [vmem:[%s281] sm:$0x3]
    %v3347 = vperm.slane %v3345, 0
    %v3348 = vperm.slane %v3345, 1
    %v3351 = vmul.f32 %v3343, %v3347
    %v3352 = vmul.f32 %v3344, %v3348
    %v3353 = vpack.c.bf16 %v3351, %v3351
    %v3354 = vpack.c.bf16 %v3352, %v3352
    %v3355 = vld [vmem:[%s1] sm:$0xf]
    %v3356 = vld [vmem:[%s293] sm:$0xf]
    %v3358 = vsel %vm295, %v3356, 0
    %v3361 = vsel %vm299, %v3220, 0
    %v3364 = vsel %vm299, %v3221, 0
    %3366 = vmatpush.bf16.msra.mxu0 0
    %3367 = vmatpush.bf16.msra.mxu0 0
    %3368 = vmatpush.bf16.msra.mxu0 0
    %3369 = vmatpush.bf16.msra.mxu0 0
    %3370 = vmatpush.bf16.msra.mxu0 0
    %3371 = vmatpush.bf16.msra.mxu0 0
    %3372 = vmatpush.bf16.msra.mxu0 0
    %3373 = vmatpush.bf16.msra.mxu0 %v3361
    %3374 = vmatmul.bf16.gmra.mxu0 %v3358
    %v3375 = vpop.f32.mrf.mxu0
    %v3376 = vadd.f32 0.0, %v3375
    %v3377 = vpop.f32.mrf.mxu0
    %3378 = vdwg.mxu0
    %3379 = vmatpush.bf16.msra.mxu0 0
    %3380 = vmatpush.bf16.msra.mxu0 0
    %3381 = vmatpush.bf16.msra.mxu0 0
    %3382 = vmatpush.bf16.msra.mxu0 0
    %3383 = vmatpush.bf16.msra.mxu0 0
    %3384 = vmatpush.bf16.msra.mxu0 0
    %3385 = vmatpush.bf16.msra.mxu0 0
    %3386 = vmatpush.bf16.msra.mxu0 %v3364
    %3387 = vmatmul.bf16.gmra.mxu0 %v3358
    %v3388 = vpop.f32.mrf.mxu0
    %v3389 = vadd.f32 0.0, %v3388
    %v3390 = vpop.f32.mrf.mxu0
    %3391 = vdwg.mxu0
    %v3393 = vsel %vm295, %v3355, 0
    %v3396 = vsel %vm299, %v3199, 0
    %v3399 = vsel %vm299, %v3200, 0
    %3401 = vmatpush.bf16.msra.mxu0 0
    %3402 = vmatpush.bf16.msra.mxu0 0
    %3403 = vmatpush.bf16.msra.mxu0 0
    %3404 = vmatpush.bf16.msra.mxu0 0
    %3405 = vmatpush.bf16.msra.mxu0 0
    %3406 = vmatpush.bf16.msra.mxu0 0
    %3407 = vmatpush.bf16.msra.mxu0 0
    %3408 = vmatpush.bf16.msra.mxu0 %v3396
    %3409 = vmatmul.bf16.gmra.mxu0 %v3393
    %v3410 = vpop.f32.mrf.mxu0
    %v3411 = vadd.f32 %v3376, %v3410
    %v3412 = vpop.f32.mrf.mxu0
    %3413 = vdwg.mxu0
    %3414 = vmatpush.bf16.msra.mxu0 0
    %3415 = vmatpush.bf16.msra.mxu0 0
    %3416 = vmatpush.bf16.msra.mxu0 0
    %3417 = vmatpush.bf16.msra.mxu0 0
    %3418 = vmatpush.bf16.msra.mxu0 0
    %3419 = vmatpush.bf16.msra.mxu0 0
    %3420 = vmatpush.bf16.msra.mxu0 0
    %3421 = vmatpush.bf16.msra.mxu0 %v3399
    %3422 = vmatmul.bf16.gmra.mxu0 %v3393
    %v3423 = vpop.f32.mrf.mxu0
    %v3424 = vadd.f32 %v3389, %v3423
    %v3425 = vpop.f32.mrf.mxu0
    %3426 = vdwg.mxu0
    %v3427 = vld [vmem:[%s367] sm:$0xf]
    %v3429 = vsel %vm295, %v3427, 0
    %v3432 = vsel %vm299, %v3241, 0
    %v3435 = vsel %vm299, %v3242, 0
    %3437 = vmatpush.bf16.msra.mxu0 0
    %3438 = vmatpush.bf16.msra.mxu0 0
    %3439 = vmatpush.bf16.msra.mxu0 0
    %3440 = vmatpush.bf16.msra.mxu0 0
    %3441 = vmatpush.bf16.msra.mxu0 0
    %3442 = vmatpush.bf16.msra.mxu0 0
    %3443 = vmatpush.bf16.msra.mxu0 0
    %3444 = vmatpush.bf16.msra.mxu0 %v3432
    %3445 = vmatmul.bf16.gmra.mxu0 %v3429
    %v3446 = vpop.f32.mrf.mxu0
    %v3447 = vadd.f32 0.0, %v3446
    %v3448 = vpop.f32.mrf.mxu0
    %3449 = vdwg.mxu0
    %3450 = vmatpush.bf16.msra.mxu0 0
    %3451 = vmatpush.bf16.msra.mxu0 0
    %3452 = vmatpush.bf16.msra.mxu0 0
    %3453 = vmatpush.bf16.msra.mxu0 0
    %3454 = vmatpush.bf16.msra.mxu0 0
    %3455 = vmatpush.bf16.msra.mxu0 0
    %3456 = vmatpush.bf16.msra.mxu0 0
    %3457 = vmatpush.bf16.msra.mxu0 %v3435
    %3458 = vmatmul.bf16.gmra.mxu0 %v3429
    %v3459 = vpop.f32.mrf.mxu0
    %v3460 = vadd.f32 0.0, %v3459
    %v3461 = vpop.f32.mrf.mxu0
    %3462 = vdwg.mxu0
    %v3463 = vadd.f32 %v3411, %v3447
    %v3464 = vadd.f32 %v3424, %v3460
    %v3465 = vld [vmem:[%s406] sm:$0xf]
    %v3467 = vsel %vm295, %v3465, 0
    %v3470 = vsel %vm299, %v3262, 0
    %v3473 = vsel %vm299, %v3263, 0
    %3475 = vmatpush.bf16.msra.mxu0 0
    %3476 = vmatpush.bf16.msra.mxu0 0
    %3477 = vmatpush.bf16.msra.mxu0 0
    %3478 = vmatpush.bf16.msra.mxu0 0
    %3479 = vmatpush.bf16.msra.mxu0 0
    %3480 = vmatpush.bf16.msra.mxu0 0
    %3481 = vmatpush.bf16.msra.mxu0 0
    %3482 = vmatpush.bf16.msra.mxu0 %v3470
    %3483 = vmatmul.bf16.gmra.mxu0 %v3467
    %v3484 = vpop.f32.mrf.mxu0
    %v3485 = vadd.f32 0.0, %v3484
    %v3486 = vpop.f32.mrf.mxu0
    %3487 = vdwg.mxu0
    %3488 = vmatpush.bf16.msra.mxu0 0
    %3489 = vmatpush.bf16.msra.mxu0 0
    %3490 = vmatpush.bf16.msra.mxu0 0
    %3491 = vmatpush.bf16.msra.mxu0 0
    %3492 = vmatpush.bf16.msra.mxu0 0
    %3493 = vmatpush.bf16.msra.mxu0 0
    %3494 = vmatpush.bf16.msra.mxu0 0
    %3495 = vmatpush.bf16.msra.mxu0 %v3473
    %3496 = vmatmul.bf16.gmra.mxu0 %v3467
    %v3497 = vpop.f32.mrf.mxu0
    %v3498 = vadd.f32 0.0, %v3497
    %v3499 = vpop.f32.mrf.mxu0
    %3500 = vdwg.mxu0
    %v3501 = vadd.f32 %v3463, %v3485
    %v3502 = vadd.f32 %v3464, %v3498
    %v3503 = vld [vmem:[%s445] sm:$0xf]
    %v3505 = vsel %vm295, %v3503, 0
    %v3508 = vsel %vm299, %v3269, 0
    %v3511 = vsel %vm299, %v3270, 0
    %3513 = vmatpush.bf16.msra.mxu0 0
    %3514 = vmatpush.bf16.msra.mxu0 0
    %3515 = vmatpush.bf16.msra.mxu0 0
    %3516 = vmatpush.bf16.msra.mxu0 0
    %3517 = vmatpush.bf16.msra.mxu0 0
    %3518 = vmatpush.bf16.msra.mxu0 0
    %3519 = vmatpush.bf16.msra.mxu0 0
    %3520 = vmatpush.bf16.msra.mxu0 %v3508
    %3521 = vmatmul.bf16.gmra.mxu0 %v3505
    %v3522 = vpop.f32.mrf.mxu0
    %v3523 = vadd.f32 0.0, %v3522
    %v3524 = vpop.f32.mrf.mxu0
    %3525 = vdwg.mxu0
    %3526 = vmatpush.bf16.msra.mxu0 0
    %3527 = vmatpush.bf16.msra.mxu0 0
    %3528 = vmatpush.bf16.msra.mxu0 0
    %3529 = vmatpush.bf16.msra.mxu0 0
    %3530 = vmatpush.bf16.msra.mxu0 0
    %3531 = vmatpush.bf16.msra.mxu0 0
    %3532 = vmatpush.bf16.msra.mxu0 0
    %3533 = vmatpush.bf16.msra.mxu0 %v3511
    %3534 = vmatmul.bf16.gmra.mxu0 %v3505
    %v3535 = vpop.f32.mrf.mxu0
    %v3536 = vadd.f32 0.0, %v3535
    %v3537 = vpop.f32.mrf.mxu0
    %3538 = vdwg.mxu0
    %v3539 = vadd.f32 %v3501, %v3523
    %v3540 = vadd.f32 %v3502, %v3536
    %v3541 = vld [vmem:[%s484] sm:$0xf]
    %v3543 = vsel %vm295, %v3541, 0
    %v3546 = vsel %vm299, %v3290, 0
    %v3549 = vsel %vm299, %v3291, 0
    %3551 = vmatpush.bf16.msra.mxu0 0
    %3552 = vmatpush.bf16.msra.mxu0 0
    %3553 = vmatpush.bf16.msra.mxu0 0
    %3554 = vmatpush.bf16.msra.mxu0 0
    %3555 = vmatpush.bf16.msra.mxu0 0
    %3556 = vmatpush.bf16.msra.mxu0 0
    %3557 = vmatpush.bf16.msra.mxu0 0
    %3558 = vmatpush.bf16.msra.mxu0 %v3546
    %3559 = vmatmul.bf16.gmra.mxu0 %v3543
    %v3560 = vpop.f32.mrf.mxu0
    %v3561 = vadd.f32 0.0, %v3560
    %v3562 = vpop.f32.mrf.mxu0
    %3563 = vdwg.mxu0
    %3564 = vmatpush.bf16.msra.mxu0 0
    %3565 = vmatpush.bf16.msra.mxu0 0
    %3566 = vmatpush.bf16.msra.mxu0 0
    %3567 = vmatpush.bf16.msra.mxu0 0
    %3568 = vmatpush.bf16.msra.mxu0 0
    %3569 = vmatpush.bf16.msra.mxu0 0
    %3570 = vmatpush.bf16.msra.mxu0 0
    %3571 = vmatpush.bf16.msra.mxu0 %v3549
    %3572 = vmatmul.bf16.gmra.mxu0 %v3543
    %v3573 = vpop.f32.mrf.mxu0
    %v3574 = vadd.f32 0.0, %v3573
    %v3575 = vpop.f32.mrf.mxu0
    %3576 = vdwg.mxu0
    %v3577 = vadd.f32 %v3539, %v3561
    %v3578 = vadd.f32 %v3540, %v3574
    %v3579 = vld [vmem:[%s523] sm:$0xf]
    %v3581 = vsel %vm295, %v3579, 0
    %v3584 = vsel %vm299, %v3311, 0
    %v3587 = vsel %vm299, %v3312, 0
    %3589 = vmatpush.bf16.msra.mxu0 0
    %3590 = vmatpush.bf16.msra.mxu0 0
    %3591 = vmatpush.bf16.msra.mxu0 0
    %3592 = vmatpush.bf16.msra.mxu0 0
    %3593 = vmatpush.bf16.msra.mxu0 0
    %3594 = vmatpush.bf16.msra.mxu0 0
    %3595 = vmatpush.bf16.msra.mxu0 0
    %3596 = vmatpush.bf16.msra.mxu0 %v3584
    %3597 = vmatmul.bf16.gmra.mxu0 %v3581
    %v3598 = vpop.f32.mrf.mxu0
    %v3599 = vadd.f32 0.0, %v3598
    %v3600 = vpop.f32.mrf.mxu0
    %3601 = vdwg.mxu0
    %3602 = vmatpush.bf16.msra.mxu0 0
    %3603 = vmatpush.bf16.msra.mxu0 0
    %3604 = vmatpush.bf16.msra.mxu0 0
    %3605 = vmatpush.bf16.msra.mxu0 0
    %3606 = vmatpush.bf16.msra.mxu0 0
    %3607 = vmatpush.bf16.msra.mxu0 0
    %3608 = vmatpush.bf16.msra.mxu0 0
    %3609 = vmatpush.bf16.msra.mxu0 %v3587
    %3610 = vmatmul.bf16.gmra.mxu0 %v3581
    %v3611 = vpop.f32.mrf.mxu0
    %v3612 = vadd.f32 0.0, %v3611
    %v3613 = vpop.f32.mrf.mxu0
    %3614 = vdwg.mxu0
    %v3615 = vadd.f32 %v3577, %v3599
    %v3616 = vadd.f32 %v3578, %v3612
    %v3617 = vld [vmem:[%s562] sm:$0xf]
    %v3619 = vsel %vm295, %v3617, 0
    %v3622 = vsel %vm299, %v3332, 0
    %v3625 = vsel %vm299, %v3333, 0
    %3627 = vmatpush.bf16.msra.mxu0 0
    %3628 = vmatpush.bf16.msra.mxu0 0
    %3629 = vmatpush.bf16.msra.mxu0 0
    %3630 = vmatpush.bf16.msra.mxu0 0
    %3631 = vmatpush.bf16.msra.mxu0 0
    %3632 = vmatpush.bf16.msra.mxu0 0
    %3633 = vmatpush.bf16.msra.mxu0 0
    %3634 = vmatpush.bf16.msra.mxu0 %v3622
    %3635 = vmatmul.bf16.gmra.mxu0 %v3619
    %v3636 = vpop.f32.mrf.mxu0
    %v3637 = vadd.f32 0.0, %v3636
    %v3638 = vpop.f32.mrf.mxu0
    %3639 = vdwg.mxu0
    %3640 = vmatpush.bf16.msra.mxu0 0
    %3641 = vmatpush.bf16.msra.mxu0 0
    %3642 = vmatpush.bf16.msra.mxu0 0
    %3643 = vmatpush.bf16.msra.mxu0 0
    %3644 = vmatpush.bf16.msra.mxu0 0
    %3645 = vmatpush.bf16.msra.mxu0 0
    %3646 = vmatpush.bf16.msra.mxu0 0
    %3647 = vmatpush.bf16.msra.mxu0 %v3625
    %3648 = vmatmul.bf16.gmra.mxu0 %v3619
    %v3649 = vpop.f32.mrf.mxu0
    %v3650 = vadd.f32 0.0, %v3649
    %v3651 = vpop.f32.mrf.mxu0
    %3652 = vdwg.mxu0
    %v3653 = vadd.f32 %v3615, %v3637
    %v3654 = vadd.f32 %v3616, %v3650
    %v3655 = vld [vmem:[%s601] sm:$0xf]
    %v3657 = vsel %vm295, %v3655, 0
    %v3660 = vsel %vm299, %v3353, 0
    %v3663 = vsel %vm299, %v3354, 0
    %3665 = vmatpush.bf16.msra.mxu0 0
    %3666 = vmatpush.bf16.msra.mxu0 0
    %3667 = vmatpush.bf16.msra.mxu0 0
    %3668 = vmatpush.bf16.msra.mxu0 0
    %3669 = vmatpush.bf16.msra.mxu0 0
    %3670 = vmatpush.bf16.msra.mxu0 0
    %3671 = vmatpush.bf16.msra.mxu0 0
    %3672 = vmatpush.bf16.msra.mxu0 %v3660
    %3673 = vmatmul.bf16.gmra.mxu0 %v3657
    %v3674 = vpop.f32.mrf.mxu0
    %v3675 = vadd.f32 0.0, %v3674
    %v3676 = vpop.f32.mrf.mxu0
    %3677 = vdwg.mxu0
    %3678 = vmatpush.bf16.msra.mxu0 0
    %3679 = vmatpush.bf16.msra.mxu0 0
    %3680 = vmatpush.bf16.msra.mxu0 0
    %3681 = vmatpush.bf16.msra.mxu0 0
    %3682 = vmatpush.bf16.msra.mxu0 0
    %3683 = vmatpush.bf16.msra.mxu0 0
    %3684 = vmatpush.bf16.msra.mxu0 0
    %3685 = vmatpush.bf16.msra.mxu0 %v3663
    %3686 = vmatmul.bf16.gmra.mxu0 %v3657
    %v3687 = vpop.f32.mrf.mxu0
    %v3688 = vadd.f32 0.0, %v3687
    %v3689 = vpop.f32.mrf.mxu0
    %3690 = vdwg.mxu0
    %v3691 = vadd.f32 %v3653, %v3675
    %v3692 = vadd.f32 %v3654, %v3688
    %v3693 = vld [vmem:[%s15] sm:$0xff]
    %v3694 = vld [vmem:[%s15 + $0x8] sm:$0xff]
    %v3695 = vld [vmem:[%s15 + $0x10] sm:$0xff]
    %v3696 = vld [vmem:[%s15 + $0x18] sm:$0xff]
    %v3697 = vld [vmem:[%s15 + $0x20] sm:$0xff]
    %v3698 = vld [vmem:[%s15 + $0x28] sm:$0xff]
    %v3699 = vld [vmem:[%s15 + $0x30] sm:$0xff]
    %v3700 = vld [vmem:[%s15 + $0x38] sm:$0xff]
    %v3701 = vld [vmem:[%s15 + $0x40] sm:$0xff]
    %v3702 = vld [vmem:[%s15 + $0x48] sm:$0xff]
    %v3703 = vld [vmem:[%s15 + $0x50] sm:$0xff]
    %v3704 = vld [vmem:[%s15 + $0x58] sm:$0xff]
    %v3705 = vld [vmem:[%s15 + $0x60] sm:$0xff]
    %v3706 = vld [vmem:[%s15 + $0x68] sm:$0xff]
    %v3707 = vld [vmem:[%s15 + $0x70] sm:$0xff]
    %v3708 = vld [vmem:[%s15 + $0x78] sm:$0xff]
    %v3709 = vld [vmem:[%s15 + $0x80] sm:$0xff]
    %v3710 = vld [vmem:[%s15 + $0x88] sm:$0xff]
    %v3711 = vld [vmem:[%s15 + $0x90] sm:$0xff]
    %v3712 = vld [vmem:[%s15 + $0x98] sm:$0xff]
    %v3713 = vld [vmem:[%s15 + $0xa0] sm:$0xff]
    %v3714 = vld [vmem:[%s15 + $0xa8] sm:$0xff]
    %v3715 = vld [vmem:[%s15 + $0xb0] sm:$0xff]
    %v3716 = vld [vmem:[%s15 + $0xb8] sm:$0xff]
    %v3717 = vld [vmem:[%s15 + $0xc0] sm:$0xff]
    %v3718 = vld [vmem:[%s15 + $0xc8] sm:$0xff]
    %v3719 = vld [vmem:[%s15 + $0xd0] sm:$0xff]
    %v3720 = vld [vmem:[%s15 + $0xd8] sm:$0xff]
    %v3721 = vld [vmem:[%s15 + $0xe0] sm:$0xff]
    %v3722 = vld [vmem:[%s15 + $0xe8] sm:$0xff]
    %v3723 = vld [vmem:[%s15 + $0xf0] sm:$0xff]
    %v3724 = vld [vmem:[%s15 + $0xf8] sm:$0xff]
    %v3725 = vld [vmem:[%s2] sm:$0xff]
    %3727 = vset.pattern.permute.xlu0 0
    %3728 = vperm.xlu0 %3727, %v3725
    %v3729 = vpop.permute.xlu0 %3728
    %3731 = vmatpush.msra.mxu0 %v3708
    %3732 = vmatpush.msra.mxu0 %v3707
    %3733 = vmatpush.msra.mxu0 %v3706
    %3734 = vmatpush.msra.mxu0 %v3705
    %3735 = vmatpush.msra.mxu0 %v3704
    %3736 = vmatpush.msra.mxu0 %v3703
    %3737 = vmatpush.msra.mxu0 %v3702
    %3738 = vmatpush.msra.mxu0 %v3701
    %3739 = vmatpush.msra.mxu0 %v3700
    %3740 = vmatpush.msra.mxu0 %v3699
    %3741 = vmatpush.msra.mxu0 %v3698
    %3742 = vmatpush.msra.mxu0 %v3697
    %3743 = vmatpush.msra.mxu0 %v3696
    %3744 = vmatpush.msra.mxu0 %v3695
    %3745 = vmatpush.msra.mxu0 %v3694
    %3746 = vmatpush.msra.mxu0 %v3693
    %3747 = vmatmul.f32.gmra.mxu0 %v3691
    %v3748 = vpop.f32.mrf.mxu0
    %v3749 = vadd.f32 %v3729, %v3748
    %3750 = vdwg.mxu0
    %3751 = vmatpush.msra.mxu0 %v3724
    %3752 = vmatpush.msra.mxu0 %v3723
    %3753 = vmatpush.msra.mxu0 %v3722
    %3754 = vmatpush.msra.mxu0 %v3721
    %3755 = vmatpush.msra.mxu0 %v3720
    %3756 = vmatpush.msra.mxu0 %v3719
    %3757 = vmatpush.msra.mxu0 %v3718
    %3758 = vmatpush.msra.mxu0 %v3717
    %3759 = vmatpush.msra.mxu0 %v3716
    %3760 = vmatpush.msra.mxu0 %v3715
    %3761 = vmatpush.msra.mxu0 %v3714
    %3762 = vmatpush.msra.mxu0 %v3713
    %3763 = vmatpush.msra.mxu0 %v3712
    %3764 = vmatpush.msra.mxu0 %v3711
    %3765 = vmatpush.msra.mxu0 %v3710
    %3766 = vmatpush.msra.mxu0 %v3709
    %3767 = vmatmul.f32.gmra.mxu0 %v3692
    %v3768 = vpop.f32.mrf.mxu0
    %v3769 = vadd.f32 %v3749, %v3768
    %3770 = vdwg.mxu0
    %v3771 = vmax.f32 %v3769, 0.0
    %v3772 = vpack.c.bf16 %v3771, %v3771
    %v3773 = vld [vmem:[%s13] sm:$0xf]
    %v3774 = vld [vmem:[%s13 + $0x4] sm:$0xf]
    %v3775 = vld [vmem:[%s13 + $0x8] sm:$0xf]
    %v3776 = vld [vmem:[%s13 + $0xc] sm:$0xf]
    %v3777 = vld [vmem:[%s13 + $0x10] sm:$0xf]
    %v3778 = vld [vmem:[%s13 + $0x14] sm:$0xf]
    %v3779 = vld [vmem:[%s13 + $0x18] sm:$0xf]
    %v3780 = vld [vmem:[%s13 + $0x1c] sm:$0xf]
    %v3789 = vunpack.c.l.b16 %v3773
    %v3790 = vunpack.c.l.b16 %v3774
    %v3791 = vunpack.c.l.b16 %v3775
    %v3792 = vunpack.c.l.b16 %v3776
    %v3793 = vunpack.c.l.b16 %v3777
    %v3794 = vunpack.c.l.b16 %v3778
    %v3795 = vunpack.c.l.b16 %v3779
    %v3796 = vunpack.c.l.b16 %v3780
    %v3797 = vpack.c.b16 %v3790, %v3789
    %v3798 = vpack.c.b16 %v3792, %v3791
    %v3799 = vpack.c.b16 %v3794, %v3793
    %v3800 = vpack.c.b16 %v3796, %v3795
    %v3806 = vsel %vm752, %v3772, 0
    %3808 = vmatpush.bf16.msra.mxu0 0
    %3809 = vmatpush.bf16.msra.mxu0 0
    %3810 = vmatpush.bf16.msra.mxu0 0
    %3811 = vmatpush.bf16.msra.mxu0 0
    %3812 = vmatpush.bf16.msra.mxu0 %v3800
    %3813 = vmatpush.bf16.msra.mxu0 %v3799
    %3814 = vmatpush.bf16.msra.mxu0 %v3798
    %3815 = vmatpush.bf16.msra.mxu0 %v3797
    %3816 = vmatmul.bf16.gmra.mxu0 %v3806
    %v3817 = vpop.f32.mrf.mxu0
    %v3818 = vadd.f32 0.0, %v3817
    %v3819 = vpop.f32.mrf.mxu0
    %3820 = vdwg.mxu0
    %v3821 = vpack.c.bf16 %v3818, %v3818
    %v3822 = vld [vmem:[%s770] sm:$0xf]
    %v3823 = vld [vmem:[%s770 + $0x4] sm:$0xf]
    %v3824 = vld [vmem:[%s770 + $0x8] sm:$0xf]
    %v3825 = vld [vmem:[%s770 + $0xc] sm:$0xf]
    %v3826 = vld [vmem:[%s770 + $0x10] sm:$0xf]
    %v3827 = vld [vmem:[%s770 + $0x14] sm:$0xf]
    %v3828 = vld [vmem:[%s770 + $0x18] sm:$0xf]
    %v3829 = vld [vmem:[%s770 + $0x1c] sm:$0xf]
    %v3838 = vunpack.c.l.b16 %v3822
    %v3839 = vunpack.c.l.b16 %v3823
    %v3840 = vunpack.c.l.b16 %v3824
    %v3841 = vunpack.c.l.b16 %v3825
    %v3842 = vunpack.c.l.b16 %v3826
    %v3843 = vunpack.c.l.b16 %v3827
    %v3844 = vunpack.c.l.b16 %v3828
    %v3845 = vunpack.c.l.b16 %v3829
    %v3846 = vpack.c.b16 %v3839, %v3838
    %v3847 = vpack.c.b16 %v3841, %v3840
    %v3848 = vpack.c.b16 %v3843, %v3842
    %v3849 = vpack.c.b16 %v3845, %v3844
    %3854 = vmatpush.bf16.msra.mxu0 0
    %3855 = vmatpush.bf16.msra.mxu0 0
    %3856 = vmatpush.bf16.msra.mxu0 0
    %3857 = vmatpush.bf16.msra.mxu0 0
    %3858 = vmatpush.bf16.msra.mxu0 %v3849
    %3859 = vmatpush.bf16.msra.mxu0 %v3848
    %3860 = vmatpush.bf16.msra.mxu0 %v3847
    %3861 = vmatpush.bf16.msra.mxu0 %v3846
    %3862 = vmatmul.bf16.gmra.mxu0 %v3806
    %v3863 = vpop.f32.mrf.mxu0
    %v3864 = vadd.f32 0.0, %v3863
    %v3865 = vpop.f32.mrf.mxu0
    %3866 = vdwg.mxu0
    %v3867 = vpack.c.bf16 %v3864, %v3864
    %v3868 = vld [vmem:[%s817] sm:$0xf]
    %v3869 = vld [vmem:[%s817 + $0x4] sm:$0xf]
    %v3870 = vld [vmem:[%s817 + $0x8] sm:$0xf]
    %v3871 = vld [vmem:[%s817 + $0xc] sm:$0xf]
    %v3872 = vld [vmem:[%s817 + $0x10] sm:$0xf]
    %v3873 = vld [vmem:[%s817 + $0x14] sm:$0xf]
    %v3874 = vld [vmem:[%s817 + $0x18] sm:$0xf]
    %v3875 = vld [vmem:[%s817 + $0x1c] sm:$0xf]
    %v3884 = vunpack.c.l.b16 %v3868
    %v3885 = vunpack.c.l.b16 %v3869
    %v3886 = vunpack.c.l.b16 %v3870
    %v3887 = vunpack.c.l.b16 %v3871
    %v3888 = vunpack.c.l.b16 %v3872
    %v3889 = vunpack.c.l.b16 %v3873
    %v3890 = vunpack.c.l.b16 %v3874
    %v3891 = vunpack.c.l.b16 %v3875
    %v3892 = vpack.c.b16 %v3885, %v3884
    %v3893 = vpack.c.b16 %v3887, %v3886
    %v3894 = vpack.c.b16 %v3889, %v3888
    %v3895 = vpack.c.b16 %v3891, %v3890
    %3900 = vmatpush.bf16.msra.mxu0 0
    %3901 = vmatpush.bf16.msra.mxu0 0
    %3902 = vmatpush.bf16.msra.mxu0 0
    %3903 = vmatpush.bf16.msra.mxu0 0
    %3904 = vmatpush.bf16.msra.mxu0 %v3895
    %3905 = vmatpush.bf16.msra.mxu0 %v3894
    %3906 = vmatpush.bf16.msra.mxu0 %v3893
    %3907 = vmatpush.bf16.msra.mxu0 %v3892
    %3908 = vmatmul.bf16.gmra.mxu0 %v3806
    %v3909 = vpop.f32.mrf.mxu0
    %v3910 = vadd.f32 0.0, %v3909
    %v3911 = vpop.f32.mrf.mxu0
    %3912 = vdwg.mxu0
    %v3913 = vpack.c.bf16 %v3910, %v3910
    %v3914 = vld [vmem:[%s864] sm:$0xf]
    %v3915 = vld [vmem:[%s864 + $0x4] sm:$0xf]
    %v3916 = vld [vmem:[%s864 + $0x8] sm:$0xf]
    %v3917 = vld [vmem:[%s864 + $0xc] sm:$0xf]
    %v3918 = vld [vmem:[%s864 + $0x10] sm:$0xf]
    %v3919 = vld [vmem:[%s864 + $0x14] sm:$0xf]
    %v3920 = vld [vmem:[%s864 + $0x18] sm:$0xf]
    %v3921 = vld [vmem:[%s864 + $0x1c] sm:$0xf]
    %v3930 = vunpack.c.l.b16 %v3914
    %v3931 = vunpack.c.l.b16 %v3915
    %v3932 = vunpack.c.l.b16 %v3916
    %v3933 = vunpack.c.l.b16 %v3917
    %v3934 = vunpack.c.l.b16 %v3918
    %v3935 = vunpack.c.l.b16 %v3919
    %v3936 = vunpack.c.l.b16 %v3920
    %v3937 = vunpack.c.l.b16 %v3921
    %v3938 = vpack.c.b16 %v3931, %v3930
    %v3939 = vpack.c.b16 %v3933, %v3932
    %v3940 = vpack.c.b16 %v3935, %v3934
    %v3941 = vpack.c.b16 %v3937, %v3936
    %3946 = vmatpush.bf16.msra.mxu0 0
    %3947 = vmatpush.bf16.msra.mxu0 0
    %3948 = vmatpush.bf16.msra.mxu0 0
    %3949 = vmatpush.bf16.msra.mxu0 0
    %3950 = vmatpush.bf16.msra.mxu0 %v3941
    %3951 = vmatpush.bf16.msra.mxu0 %v3940
    %3952 = vmatpush.bf16.msra.mxu0 %v3939
    %3953 = vmatpush.bf16.msra.mxu0 %v3938
    %3954 = vmatmul.bf16.gmra.mxu0 %v3806
    %v3955 = vpop.f32.mrf.mxu0
    %v3956 = vadd.f32 0.0, %v3955
    %v3957 = vpop.f32.mrf.mxu0
    %3958 = vdwg.mxu0
    %v3959 = vpack.c.bf16 %v3956, %v3956
    %v3960 = vld [vmem:[%s911] sm:$0xf]
    %v3961 = vld [vmem:[%s911 + $0x4] sm:$0xf]
    %v3962 = vld [vmem:[%s911 + $0x8] sm:$0xf]
    %v3963 = vld [vmem:[%s911 + $0xc] sm:$0xf]
    %v3964 = vld [vmem:[%s911 + $0x10] sm:$0xf]
    %v3965 = vld [vmem:[%s911 + $0x14] sm:$0xf]
    %v3966 = vld [vmem:[%s911 + $0x18] sm:$0xf]
    %v3967 = vld [vmem:[%s911 + $0x1c] sm:$0xf]
    %v3976 = vunpack.c.l.b16 %v3960
    %v3977 = vunpack.c.l.b16 %v3961
    %v3978 = vunpack.c.l.b16 %v3962
    %v3979 = vunpack.c.l.b16 %v3963
    %v3980 = vunpack.c.l.b16 %v3964
    %v3981 = vunpack.c.l.b16 %v3965
    %v3982 = vunpack.c.l.b16 %v3966
    %v3983 = vunpack.c.l.b16 %v3967
    %v3984 = vpack.c.b16 %v3977, %v3976
    %v3985 = vpack.c.b16 %v3979, %v3978
    %v3986 = vpack.c.b16 %v3981, %v3980
    %v3987 = vpack.c.b16 %v3983, %v3982
    %3992 = vmatpush.bf16.msra.mxu0 0
    %3993 = vmatpush.bf16.msra.mxu0 0
    %3994 = vmatpush.bf16.msra.mxu0 0
    %3995 = vmatpush.bf16.msra.mxu0 0
    %3996 = vmatpush.bf16.msra.mxu0 %v3987
    %3997 = vmatpush.bf16.msra.mxu0 %v3986
    %3998 = vmatpush.bf16.msra.mxu0 %v3985
    %3999 = vmatpush.bf16.msra.mxu0 %v3984
    %4000 = vmatmul.bf16.gmra.mxu0 %v3806
    %v4001 = vpop.f32.mrf.mxu0
    %v4002 = vadd.f32 0.0, %v4001
    %v4003 = vpop.f32.mrf.mxu0
    %4004 = vdwg.mxu0
    %v4005 = vpack.c.bf16 %v4002, %v4002
    %v4006 = vld [vmem:[%s958] sm:$0xf]
    %v4007 = vld [vmem:[%s958 + $0x4] sm:$0xf]
    %v4008 = vld [vmem:[%s958 + $0x8] sm:$0xf]
    %v4009 = vld [vmem:[%s958 + $0xc] sm:$0xf]
    %v4010 = vld [vmem:[%s958 + $0x10] sm:$0xf]
    %v4011 = vld [vmem:[%s958 + $0x14] sm:$0xf]
    %v4012 = vld [vmem:[%s958 + $0x18] sm:$0xf]
    %v4013 = vld [vmem:[%s958 + $0x1c] sm:$0xf]
    %v4022 = vunpack.c.l.b16 %v4006
    %v4023 = vunpack.c.l.b16 %v4007
    %v4024 = vunpack.c.l.b16 %v4008
    %v4025 = vunpack.c.l.b16 %v4009
    %v4026 = vunpack.c.l.b16 %v4010
    %v4027 = vunpack.c.l.b16 %v4011
    %v4028 = vunpack.c.l.b16 %v4012
    %v4029 = vunpack.c.l.b16 %v4013
    %v4030 = vpack.c.b16 %v4023, %v4022
    %v4031 = vpack.c.b16 %v4025, %v4024
    %v4032 = vpack.c.b16 %v4027, %v4026
    %v4033 = vpack.c.b16 %v4029, %v4028
    %4038 = vmatpush.bf16.msra.mxu0 0
    %4039 = vmatpush.bf16.msra.mxu0 0
    %4040 = vmatpush.bf16.msra.mxu0 0
    %4041 = vmatpush.bf16.msra.mxu0 0
    %4042 = vmatpush.bf16.msra.mxu0 %v4033
    %4043 = vmatpush.bf16.msra.mxu0 %v4032
    %4044 = vmatpush.bf16.msra.mxu0 %v4031
    %4045 = vmatpush.bf16.msra.mxu0 %v4030
    %4046 = vmatmul.bf16.gmra.mxu0 %v3806
    %v4047 = vpop.f32.mrf.mxu0
    %v4048 = vadd.f32 0.0, %v4047
    %v4049 = vpop.f32.mrf.mxu0
    %4050 = vdwg.mxu0
    %v4051 = vpack.c.bf16 %v4048, %v4048
    %v4052 = vld [vmem:[%s1005] sm:$0xf]
    %v4053 = vld [vmem:[%s1005 + $0x4] sm:$0xf]
    %v4054 = vld [vmem:[%s1005 + $0x8] sm:$0xf]
    %v4055 = vld [vmem:[%s1005 + $0xc] sm:$0xf]
    %v4056 = vld [vmem:[%s1005 + $0x10] sm:$0xf]
    %v4057 = vld [vmem:[%s1005 + $0x14] sm:$0xf]
    %v4058 = vld [vmem:[%s1005 + $0x18] sm:$0xf]
    %v4059 = vld [vmem:[%s1005 + $0x1c] sm:$0xf]
    %v4068 = vunpack.c.l.b16 %v4052
    %v4069 = vunpack.c.l.b16 %v4053
    %v4070 = vunpack.c.l.b16 %v4054
    %v4071 = vunpack.c.l.b16 %v4055
    %v4072 = vunpack.c.l.b16 %v4056
    %v4073 = vunpack.c.l.b16 %v4057
    %v4074 = vunpack.c.l.b16 %v4058
    %v4075 = vunpack.c.l.b16 %v4059
    %v4076 = vpack.c.b16 %v4069, %v4068
    %v4077 = vpack.c.b16 %v4071, %v4070
    %v4078 = vpack.c.b16 %v4073, %v4072
    %v4079 = vpack.c.b16 %v4075, %v4074
    %4084 = vmatpush.bf16.msra.mxu0 0
    %4085 = vmatpush.bf16.msra.mxu0 0
    %4086 = vmatpush.bf16.msra.mxu0 0
    %4087 = vmatpush.bf16.msra.mxu0 0
    %4088 = vmatpush.bf16.msra.mxu0 %v4079
    %4089 = vmatpush.bf16.msra.mxu0 %v4078
    %4090 = vmatpush.bf16.msra.mxu0 %v4077
    %4091 = vmatpush.bf16.msra.mxu0 %v4076
    %4092 = vmatmul.bf16.gmra.mxu0 %v3806
    %v4093 = vpop.f32.mrf.mxu0
    %v4094 = vadd.f32 0.0, %v4093
    %v4095 = vpop.f32.mrf.mxu0
    %4096 = vdwg.mxu0
    %v4097 = vpack.c.bf16 %v4094, %v4094
    %v4098 = vld [vmem:[%s1052] sm:$0xf]
    %v4099 = vld [vmem:[%s1052 + $0x4] sm:$0xf]
    %v4100 = vld [vmem:[%s1052 + $0x8] sm:$0xf]
    %v4101 = vld [vmem:[%s1052 + $0xc] sm:$0xf]
    %v4102 = vld [vmem:[%s1052 + $0x10] sm:$0xf]
    %v4103 = vld [vmem:[%s1052 + $0x14] sm:$0xf]
    %v4104 = vld [vmem:[%s1052 + $0x18] sm:$0xf]
    %v4105 = vld [vmem:[%s1052 + $0x1c] sm:$0xf]
    %v4114 = vunpack.c.l.b16 %v4098
    %v4115 = vunpack.c.l.b16 %v4099
    %v4116 = vunpack.c.l.b16 %v4100
    %v4117 = vunpack.c.l.b16 %v4101
    %v4118 = vunpack.c.l.b16 %v4102
    %v4119 = vunpack.c.l.b16 %v4103
    %v4120 = vunpack.c.l.b16 %v4104
    %v4121 = vunpack.c.l.b16 %v4105
    %v4122 = vpack.c.b16 %v4115, %v4114
    %v4123 = vpack.c.b16 %v4117, %v4116
    %v4124 = vpack.c.b16 %v4119, %v4118
    %v4125 = vpack.c.b16 %v4121, %v4120
    %4130 = vmatpush.bf16.msra.mxu0 0
    %4131 = vmatpush.bf16.msra.mxu0 0
    %4132 = vmatpush.bf16.msra.mxu0 0
    %4133 = vmatpush.bf16.msra.mxu0 0
    %4134 = vmatpush.bf16.msra.mxu0 %v4125
    %4135 = vmatpush.bf16.msra.mxu0 %v4124
    %4136 = vmatpush.bf16.msra.mxu0 %v4123
    %4137 = vmatpush.bf16.msra.mxu0 %v4122
    %4138 = vmatmul.bf16.gmra.mxu0 %v3806
    %v4139 = vpop.f32.mrf.mxu0
    %v4140 = vadd.f32 0.0, %v4139
    %v4141 = vpop.f32.mrf.mxu0
    %4142 = vdwg.mxu0
    %v4143 = vpack.c.bf16 %v4140, %v4140
    %v4144 = vld [vmem:[%s3] sm:$0xf]
    %v4145 = vld [vmem:[%s3 + $0x4] sm:$0xf]
    %v4146 = vld [vmem:[%s1101] sm:$0xf]
    %v4147 = vld [vmem:[%s1101 + $0x4] sm:$0xf]
    %v4150 = vunpack.c.l.b16 %v4146
    %v4151 = vunpack.c.l.b16 %v4147
    %v4152 = vpack.c.b16 %v4151, %v4150
    %v4154 = vsel %vm1109, %v4152, 0
    %v4157 = vsel %vm1113, %v3867, 0
    %4159 = vmatpush.bf16.msra.mxu0 0
    %4160 = vmatpush.bf16.msra.mxu0 0
    %4161 = vmatpush.bf16.msra.mxu0 0
    %4162 = vmatpush.bf16.msra.mxu0 0
    %4163 = vmatpush.bf16.msra.mxu0 0
    %4164 = vmatpush.bf16.msra.mxu0 0
    %4165 = vmatpush.bf16.msra.mxu0 0
    %4166 = vmatpush.bf16.msra.mxu0 %v4157
    %4167 = vmatmul.bf16.gmra.mxu0 %v4154
    %v4168 = vpop.f32.mrf.mxu0
    %v4169 = vadd.f32 0.0, %v4168
    %v4170 = vpop.f32.mrf.mxu0
    %v4171 = vadd.f32 0.0, %v4170
    %4172 = vdwg.mxu0
    %v4175 = vunpack.c.l.b16 %v4144
    %v4176 = vunpack.c.l.b16 %v4145
    %v4177 = vpack.c.b16 %v4176, %v4175
    %v4179 = vsel %vm1109, %v4177, 0
    %v4182 = vsel %vm1113, %v3821, 0
    %4184 = vmatpush.bf16.msra.mxu0 0
    %4185 = vmatpush.bf16.msra.mxu0 0
    %4186 = vmatpush.bf16.msra.mxu0 0
    %4187 = vmatpush.bf16.msra.mxu0 0
    %4188 = vmatpush.bf16.msra.mxu0 0
    %4189 = vmatpush.bf16.msra.mxu0 0
    %4190 = vmatpush.bf16.msra.mxu0 0
    %4191 = vmatpush.bf16.msra.mxu0 %v4182
    %4192 = vmatmul.bf16.gmra.mxu0 %v4179
    %v4193 = vpop.f32.mrf.mxu0
    %v4194 = vadd.f32 %v4169, %v4193
    %v4195 = vpop.f32.mrf.mxu0
    %v4196 = vadd.f32 %v4171, %v4195
    %4197 = vdwg.mxu0
    %v4198 = vld [vmem:[%s1156] sm:$0xf]
    %v4199 = vld [vmem:[%s1156 + $0x4] sm:$0xf]
    %v4202 = vunpack.c.l.b16 %v4198
    %v4203 = vunpack.c.l.b16 %v4199
    %v4204 = vpack.c.b16 %v4203, %v4202
    %v4206 = vsel %vm1109, %v4204, 0
    %v4209 = vsel %vm1113, %v3913, 0
    %4211 = vmatpush.bf16.msra.mxu0 0
    %4212 = vmatpush.bf16.msra.mxu0 0
    %4213 = vmatpush.bf16.msra.mxu0 0
    %4214 = vmatpush.bf16.msra.mxu0 0
    %4215 = vmatpush.bf16.msra.mxu0 0
    %4216 = vmatpush.bf16.msra.mxu0 0
    %4217 = vmatpush.bf16.msra.mxu0 0
    %4218 = vmatpush.bf16.msra.mxu0 %v4209
    %4219 = vmatmul.bf16.gmra.mxu0 %v4206
    %v4220 = vpop.f32.mrf.mxu0
    %v4221 = vadd.f32 0.0, %v4220
    %v4222 = vpop.f32.mrf.mxu0
    %v4223 = vadd.f32 0.0, %v4222
    %4224 = vdwg.mxu0
    %v4225 = vadd.f32 %v4194, %v4221
    %v4226 = vadd.f32 %v4196, %v4223
    %v4227 = vld [vmem:[%s1186] sm:$0xf]
    %v4228 = vld [vmem:[%s1186 + $0x4] sm:$0xf]
    %v4231 = vunpack.c.l.b16 %v4227
    %v4232 = vunpack.c.l.b16 %v4228
    %v4233 = vpack.c.b16 %v4232, %v4231
    %v4235 = vsel %vm1109, %v4233, 0
    %v4238 = vsel %vm1113, %v3959, 0
    %4240 = vmatpush.bf16.msra.mxu0 0
    %4241 = vmatpush.bf16.msra.mxu0 0
    %4242 = vmatpush.bf16.msra.mxu0 0
    %4243 = vmatpush.bf16.msra.mxu0 0
    %4244 = vmatpush.bf16.msra.mxu0 0
    %4245 = vmatpush.bf16.msra.mxu0 0
    %4246 = vmatpush.bf16.msra.mxu0 0
    %4247 = vmatpush.bf16.msra.mxu0 %v4238
    %4248 = vmatmul.bf16.gmra.mxu0 %v4235
    %v4249 = vpop.f32.mrf.mxu0
    %v4250 = vadd.f32 0.0, %v4249
    %v4251 = vpop.f32.mrf.mxu0
    %v4252 = vadd.f32 0.0, %v4251
    %4253 = vdwg.mxu0
    %v4254 = vadd.f32 %v4225, %v4250
    %v4255 = vadd.f32 %v4226, %v4252
    %v4256 = vld [vmem:[%s1216] sm:$0xf]
    %v4257 = vld [vmem:[%s1216 + $0x4] sm:$0xf]
    %v4260 = vunpack.c.l.b16 %v4256
    %v4261 = vunpack.c.l.b16 %v4257
    %v4262 = vpack.c.b16 %v4261, %v4260
    %v4264 = vsel %vm1109, %v4262, 0
    %v4266 = vsel %vm1113, %v3772, 0
    %4268 = vmatpush.bf16.msra.mxu0 0
    %4269 = vmatpush.bf16.msra.mxu0 0
    %4270 = vmatpush.bf16.msra.mxu0 0
    %4271 = vmatpush.bf16.msra.mxu0 0
    %4272 = vmatpush.bf16.msra.mxu0 0
    %4273 = vmatpush.bf16.msra.mxu0 0
    %4274 = vmatpush.bf16.msra.mxu0 0
    %4275 = vmatpush.bf16.msra.mxu0 %v4266
    %4276 = vmatmul.bf16.gmra.mxu0 %v4264
    %v4277 = vpop.f32.mrf.mxu0
    %v4278 = vadd.f32 0.0, %v4277
    %v4279 = vpop.f32.mrf.mxu0
    %v4280 = vadd.f32 0.0, %v4279
    %4281 = vdwg.mxu0
    %v4282 = vadd.f32 %v4254, %v4278
    %v4283 = vadd.f32 %v4255, %v4280
    %v4284 = vld [vmem:[%s1245] sm:$0xf]
    %v4285 = vld [vmem:[%s1245 + $0x4] sm:$0xf]
    %v4288 = vunpack.c.l.b16 %v4284
    %v4289 = vunpack.c.l.b16 %v4285
    %v4290 = vpack.c.b16 %v4289, %v4288
    %v4292 = vsel %vm1109, %v4290, 0
    %v4295 = vsel %vm1113, %v4005, 0
    %4297 = vmatpush.bf16.msra.mxu0 0
    %4298 = vmatpush.bf16.msra.mxu0 0
    %4299 = vmatpush.bf16.msra.mxu0 0
    %4300 = vmatpush.bf16.msra.mxu0 0
    %4301 = vmatpush.bf16.msra.mxu0 0
    %4302 = vmatpush.bf16.msra.mxu0 0
    %4303 = vmatpush.bf16.msra.mxu0 0
    %4304 = vmatpush.bf16.msra.mxu0 %v4295
    %4305 = vmatmul.bf16.gmra.mxu0 %v4292
    %v4306 = vpop.f32.mrf.mxu0
    %v4307 = vadd.f32 0.0, %v4306
    %v4308 = vpop.f32.mrf.mxu0
    %v4309 = vadd.f32 0.0, %v4308
    %4310 = vdwg.mxu0
    %v4311 = vadd.f32 %v4282, %v4307
    %v4312 = vadd.f32 %v4283, %v4309
    %v4313 = vld [vmem:[%s1275] sm:$0xf]
    %v4314 = vld [vmem:[%s1275 + $0x4] sm:$0xf]
    %v4317 = vunpack.c.l.b16 %v4313
    %v4318 = vunpack.c.l.b16 %v4314
    %v4319 = vpack.c.b16 %v4318, %v4317
    %v4321 = vsel %vm1109, %v4319, 0
    %v4324 = vsel %vm1113, %v4051, 0
    %4326 = vmatpush.bf16.msra.mxu0 0
    %4327 = vmatpush.bf16.msra.mxu0 0
    %4328 = vmatpush.bf16.msra.mxu0 0
    %4329 = vmatpush.bf16.msra.mxu0 0
    %4330 = vmatpush.bf16.msra.mxu0 0
    %4331 = vmatpush.bf16.msra.mxu0 0
    %4332 = vmatpush.bf16.msra.mxu0 0
    %4333 = vmatpush.bf16.msra.mxu0 %v4324
    %4334 = vmatmul.bf16.gmra.mxu0 %v4321
    %v4335 = vpop.f32.mrf.mxu0
    %v4336 = vadd.f32 0.0, %v4335
    %v4337 = vpop.f32.mrf.mxu0
    %v4338 = vadd.f32 0.0, %v4337
    %4339 = vdwg.mxu0
    %v4340 = vadd.f32 %v4311, %v4336
    %v4341 = vadd.f32 %v4312, %v4338
    %v4342 = vld [vmem:[%s1305] sm:$0xf]
    %v4343 = vld [vmem:[%s1305 + $0x4] sm:$0xf]
    %v4346 = vunpack.c.l.b16 %v4342
    %v4347 = vunpack.c.l.b16 %v4343
    %v4348 = vpack.c.b16 %v4347, %v4346
    %v4350 = vsel %vm1109, %v4348, 0
    %v4353 = vsel %vm1113, %v4097, 0
    %4355 = vmatpush.bf16.msra.mxu0 0
    %4356 = vmatpush.bf16.msra.mxu0 0
    %4357 = vmatpush.bf16.msra.mxu0 0
    %4358 = vmatpush.bf16.msra.mxu0 0
    %4359 = vmatpush.bf16.msra.mxu0 0
    %4360 = vmatpush.bf16.msra.mxu0 0
    %4361 = vmatpush.bf16.msra.mxu0 0
    %4362 = vmatpush.bf16.msra.mxu0 %v4353
    %4363 = vmatmul.bf16.gmra.mxu0 %v4350
    %v4364 = vpop.f32.mrf.mxu0
    %v4365 = vadd.f32 0.0, %v4364
    %v4366 = vpop.f32.mrf.mxu0
    %v4367 = vadd.f32 0.0, %v4366
    %4368 = vdwg.mxu0
    %v4369 = vadd.f32 %v4340, %v4365
    %v4370 = vadd.f32 %v4341, %v4367
    %v4371 = vld [vmem:[%s1335] sm:$0xf]
    %v4372 = vld [vmem:[%s1335 + $0x4] sm:$0xf]
    %v4375 = vunpack.c.l.b16 %v4371
    %v4376 = vunpack.c.l.b16 %v4372
    %v4377 = vpack.c.b16 %v4376, %v4375
    %v4379 = vsel %vm1109, %v4377, 0
    %v4382 = vsel %vm1113, %v4143, 0
    %4384 = vmatpush.bf16.msra.mxu0 0
    %4385 = vmatpush.bf16.msra.mxu0 0
    %4386 = vmatpush.bf16.msra.mxu0 0
    %4387 = vmatpush.bf16.msra.mxu0 0
    %4388 = vmatpush.bf16.msra.mxu0 0
    %4389 = vmatpush.bf16.msra.mxu0 0
    %4390 = vmatpush.bf16.msra.mxu0 0
    %4391 = vmatpush.bf16.msra.mxu0 %v4382
    %4392 = vmatmul.bf16.gmra.mxu0 %v4379
    %v4393 = vpop.f32.mrf.mxu0
    %v4394 = vadd.f32 0.0, %v4393
    %v4395 = vpop.f32.mrf.mxu0
    %v4396 = vadd.f32 0.0, %v4395
    %4397 = vdwg.mxu0
    %v4398 = vadd.f32 %v4369, %v4394
    %v4399 = vadd.f32 %v4370, %v4396
    %v4400 = vld [vmem:[%s16] sm:$0xff]
    %v4401 = vld [vmem:[%s16 + $0x8] sm:$0xff]
    %v4402 = vld [vmem:[%s16 + $0x10] sm:$0xff]
    %v4403 = vld [vmem:[%s16 + $0x18] sm:$0xff]
    %v4404 = vld [vmem:[%s16 + $0x20] sm:$0xff]
    %v4405 = vld [vmem:[%s16 + $0x28] sm:$0xff]
    %v4406 = vld [vmem:[%s16 + $0x30] sm:$0xff]
    %v4407 = vld [vmem:[%s16 + $0x38] sm:$0xff]
    %v4408 = vld [vmem:[%s4] sm:$0xff]
    %v4409 = vld [vmem:[%s4 + $0x8] sm:$0xff]
    %4411 = vset.pattern.permute.xlu0 0
    %4412 = vperm.xlu0 %4411, %v4408
    %v4413 = vpop.permute.xlu0 %4412
    %4416 = vset.pattern.permute.xlu0 0
    %4417 = vperm.xlu0 %4416, %v4409
    %v4418 = vpop.permute.xlu0 %4417
    %v4421 = vsel %vm752, %v4398, 0
    %v4424 = vsel %vm752, %v4399, 0
    %4426 = vmatpush.msra.mxu0 0.0
    %4427 = vmatpush.msra.mxu0 0.0
    %4428 = vmatpush.msra.mxu0 0.0
    %4429 = vmatpush.msra.mxu0 0.0
    %4430 = vmatpush.msra.mxu0 0.0
    %4431 = vmatpush.msra.mxu0 0.0
    %4432 = vmatpush.msra.mxu0 0.0
    %4433 = vmatpush.msra.mxu0 0.0
    %4434 = vmatpush.msra.mxu0 %v4407
    %4435 = vmatpush.msra.mxu0 %v4406
    %4436 = vmatpush.msra.mxu0 %v4405
    %4437 = vmatpush.msra.mxu0 %v4404
    %4438 = vmatpush.msra.mxu0 %v4403
    %4439 = vmatpush.msra.mxu0 %v4402
    %4440 = vmatpush.msra.mxu0 %v4401
    %4441 = vmatpush.msra.mxu0 %v4400
    %4442 = vmatmul.f32.gmra.mxu0 %v4421
    %v4443 = vpop.f32.mrf.mxu0
    %v4444 = vadd.f32 %v4413, %v4443
    %4445 = vmatmul.f32.gmra.mxu0 %v4424
    %v4446 = vpop.f32.mrf.mxu0
    %v4447 = vadd.f32 %v4418, %v4446
    %4448 = vdwg.mxu0
    %v4449 = vmax.f32 %v4444, 0.0
    %v4450 = vmax.f32 %v4447, 0.0
    %v4451 = vpack.c.bf16 %v4450, %v4449
    %v4452 = vld [vmem:[%s14] sm:$0xf]
    %v4453 = vld [vmem:[%s14 + $0x4] sm:$0xf]
    %v4456 = vunpack.c.l.b16 %v4452
    %v4457 = vunpack.c.l.b16 %v4453
    %v4458 = vpack.c.b16 %v4457, %v4456
    %v4461 = vsel %vm1425, %v4451, 0
    %4463 = vmatpush.bf16.msra.mxu0 0
    %4464 = vmatpush.bf16.msra.mxu0 0
    %4465 = vmatpush.bf16.msra.mxu0 0
    %4466 = vmatpush.bf16.msra.mxu0 0
    %4467 = vmatpush.bf16.msra.mxu0 0
    %4468 = vmatpush.bf16.msra.mxu0 0
    %4469 = vmatpush.bf16.msra.mxu0 0
    %4470 = vmatpush.bf16.msra.mxu0 %v4458
    %4471 = vmatmul.bf16.gmra.mxu0 %v4461
    %v4472 = vpop.f32.mrf.mxu0
    %v4473 = vadd.f32 0.0, %v4472
    %v4474 = vpop.f32.mrf.mxu0
    %v4475 = vadd.f32 0.0, %v4474
    %4476 = vdwg.mxu0
    %v4477 = vpack.c.bf16 %v4475, %v4473
    %v4478 = vld [vmem:[%s1444] sm:$0xf]
    %v4479 = vld [vmem:[%s1444 + $0x4] sm:$0xf]
    %v4482 = vunpack.c.l.b16 %v4478
    %v4483 = vunpack.c.l.b16 %v4479
    %v4484 = vpack.c.b16 %v4483, %v4482
    %4486 = vmatpush.bf16.msra.mxu0 0
    %4487 = vmatpush.bf16.msra.mxu0 0
    %4488 = vmatpush.bf16.msra.mxu0 0
    %4489 = vmatpush.bf16.msra.mxu0 0
    %4490 = vmatpush.bf16.msra.mxu0 0
    %4491 = vmatpush.bf16.msra.mxu0 0
    %4492 = vmatpush.bf16.msra.mxu0 0
    %4493 = vmatpush.bf16.msra.mxu0 %v4484
    %4494 = vmatmul.bf16.gmra.mxu0 %v4461
    %v4495 = vpop.f32.mrf.mxu0
    %v4496 = vadd.f32 0.0, %v4495
    %v4497 = vpop.f32.mrf.mxu0
    %v4498 = vadd.f32 0.0, %v4497
    %4499 = vdwg.mxu0
    %v4500 = vpack.c.bf16 %v4498, %v4496
    %v4501 = vld [vmem:[%s1468] sm:$0xf]
    %v4502 = vld [vmem:[%s1468 + $0x4] sm:$0xf]
    %v4505 = vunpack.c.l.b16 %v4501
    %v4506 = vunpack.c.l.b16 %v4502
    %v4507 = vpack.c.b16 %v4506, %v4505
    %4509 = vmatpush.bf16.msra.mxu0 0
    %4510 = vmatpush.bf16.msra.mxu0 0
    %4511 = vmatpush.bf16.msra.mxu0 0
    %4512 = vmatpush.bf16.msra.mxu0 0
    %4513 = vmatpush.bf16.msra.mxu0 0
    %4514 = vmatpush.bf16.msra.mxu0 0
    %4515 = vmatpush.bf16.msra.mxu0 0
    %4516 = vmatpush.bf16.msra.mxu0 %v4507
    %4517 = vmatmul.bf16.gmra.mxu0 %v4461
    %v4518 = vpop.f32.mrf.mxu0
    %v4519 = vadd.f32 0.0, %v4518
    %v4520 = vpop.f32.mrf.mxu0
    %v4521 = vadd.f32 0.0, %v4520
    %4522 = vdwg.mxu0
    %v4523 = vpack.c.bf16 %v4521, %v4519
    %v4524 = vld [vmem:[%s1492] sm:$0xf]
    %v4525 = vld [vmem:[%s1492 + $0x4] sm:$0xf]
    %v4528 = vunpack.c.l.b16 %v4524
    %v4529 = vunpack.c.l.b16 %v4525
    %v4530 = vpack.c.b16 %v4529, %v4528
    %4532 = vmatpush.bf16.msra.mxu0 0
    %4533 = vmatpush.bf16.msra.mxu0 0
    %4534 = vmatpush.bf16.msra.mxu0 0
    %4535 = vmatpush.bf16.msra.mxu0 0
    %4536 = vmatpush.bf16.msra.mxu0 0
    %4537 = vmatpush.bf16.msra.mxu0 0
    %4538 = vmatpush.bf16.msra.mxu0 0
    %4539 = vmatpush.bf16.msra.mxu0 %v4530
    %4540 = vmatmul.bf16.gmra.mxu0 %v4461
    %v4541 = vpop.f32.mrf.mxu0
    %v4542 = vadd.f32 0.0, %v4541
    %v4543 = vpop.f32.mrf.mxu0
    %v4544 = vadd.f32 0.0, %v4543
    %4545 = vdwg.mxu0
    %v4546 = vpack.c.bf16 %v4544, %v4542
    %v4547 = vld [vmem:[%s1516] sm:$0xf]
    %v4548 = vld [vmem:[%s1516 + $0x4] sm:$0xf]
    %v4551 = vunpack.c.l.b16 %v4547
    %v4552 = vunpack.c.l.b16 %v4548
    %v4553 = vpack.c.b16 %v4552, %v4551
    %4555 = vmatpush.bf16.msra.mxu0 0
    %4556 = vmatpush.bf16.msra.mxu0 0
    %4557 = vmatpush.bf16.msra.mxu0 0
    %4558 = vmatpush.bf16.msra.mxu0 0
    %4559 = vmatpush.bf16.msra.mxu0 0
    %4560 = vmatpush.bf16.msra.mxu0 0
    %4561 = vmatpush.bf16.msra.mxu0 0
    %4562 = vmatpush.bf16.msra.mxu0 %v4553
    %4563 = vmatmul.bf16.gmra.mxu0 %v4461
    %v4564 = vpop.f32.mrf.mxu0
    %v4565 = vadd.f32 0.0, %v4564
    %v4566 = vpop.f32.mrf.mxu0
    %v4567 = vadd.f32 0.0, %v4566
    %4568 = vdwg.mxu0
    %v4569 = vpack.c.bf16 %v4567, %v4565
    %v4570 = vld [vmem:[%s1540] sm:$0xf]
    %v4571 = vld [vmem:[%s1540 + $0x4] sm:$0xf]
    %v4574 = vunpack.c.l.b16 %v4570
    %v4575 = vunpack.c.l.b16 %v4571
    %v4576 = vpack.c.b16 %v4575, %v4574
    %4578 = vmatpush.bf16.msra.mxu0 0
    %4579 = vmatpush.bf16.msra.mxu0 0
    %4580 = vmatpush.bf16.msra.mxu0 0
    %4581 = vmatpush.bf16.msra.mxu0 0
    %4582 = vmatpush.bf16.msra.mxu0 0
    %4583 = vmatpush.bf16.msra.mxu0 0
    %4584 = vmatpush.bf16.msra.mxu0 0
    %4585 = vmatpush.bf16.msra.mxu0 %v4576
    %4586 = vmatmul.bf16.gmra.mxu0 %v4461
    %v4587 = vpop.f32.mrf.mxu0
    %v4588 = vadd.f32 0.0, %v4587
    %v4589 = vpop.f32.mrf.mxu0
    %v4590 = vadd.f32 0.0, %v4589
    %4591 = vdwg.mxu0
    %v4592 = vpack.c.bf16 %v4590, %v4588
    %v4593 = vld [vmem:[%s1564] sm:$0xf]
    %v4594 = vld [vmem:[%s1564 + $0x4] sm:$0xf]
    %v4597 = vunpack.c.l.b16 %v4593
    %v4598 = vunpack.c.l.b16 %v4594
    %v4599 = vpack.c.b16 %v4598, %v4597
    %4601 = vmatpush.bf16.msra.mxu0 0
    %4602 = vmatpush.bf16.msra.mxu0 0
    %4603 = vmatpush.bf16.msra.mxu0 0
    %4604 = vmatpush.bf16.msra.mxu0 0
    %4605 = vmatpush.bf16.msra.mxu0 0
    %4606 = vmatpush.bf16.msra.mxu0 0
    %4607 = vmatpush.bf16.msra.mxu0 0
    %4608 = vmatpush.bf16.msra.mxu0 %v4599
    %4609 = vmatmul.bf16.gmra.mxu0 %v4461
    %v4610 = vpop.f32.mrf.mxu0
    %v4611 = vadd.f32 0.0, %v4610
    %v4612 = vpop.f32.mrf.mxu0
    %v4613 = vadd.f32 0.0, %v4612
    %4614 = vdwg.mxu0
    %v4615 = vpack.c.bf16 %v4613, %v4611
    %v4616 = vld [vmem:[%s1588] sm:$0xf]
    %v4617 = vld [vmem:[%s1588 + $0x4] sm:$0xf]
    %v4620 = vunpack.c.l.b16 %v4616
    %v4621 = vunpack.c.l.b16 %v4617
    %v4622 = vpack.c.b16 %v4621, %v4620
    %4624 = vmatpush.bf16.msra.mxu0 0
    %4625 = vmatpush.bf16.msra.mxu0 0
    %4626 = vmatpush.bf16.msra.mxu0 0
    %4627 = vmatpush.bf16.msra.mxu0 0
    %4628 = vmatpush.bf16.msra.mxu0 0
    %4629 = vmatpush.bf16.msra.mxu0 0
    %4630 = vmatpush.bf16.msra.mxu0 0
    %4631 = vmatpush.bf16.msra.mxu0 %v4622
    %4632 = vmatmul.bf16.gmra.mxu0 %v4461
    %v4633 = vpop.f32.mrf.mxu0
    %v4634 = vadd.f32 0.0, %v4633
    %v4635 = vpop.f32.mrf.mxu0
    %v4636 = vadd.f32 0.0, %v4635
    %4637 = vdwg.mxu0
    %v4638 = vpack.c.bf16 %v4636, %v4634
    %v4639 = vld [vmem:[%s5] sm:$0xf]
    %v4640 = vld [vmem:[%s5 + $0x4] sm:$0xf]
    %v4641 = vld [vmem:[%s1614] sm:$0xf]
    %v4642 = vld [vmem:[%s1614 + $0x4] sm:$0xf]
    %v4645 = vunpack.c.l.b16 %v4641
    %v4646 = vunpack.c.l.b16 %v4642
    %v4647 = vpack.c.b16 %v4646, %v4645
    %v4649 = vsel %vm1425, %v4647, 0
    %4651 = vmatpush.bf16.msra.mxu0 0
    %4652 = vmatpush.bf16.msra.mxu0 0
    %4653 = vmatpush.bf16.msra.mxu0 0
    %4654 = vmatpush.bf16.msra.mxu0 0
    %4655 = vmatpush.bf16.msra.mxu0 0
    %4656 = vmatpush.bf16.msra.mxu0 0
    %4657 = vmatpush.bf16.msra.mxu0 0
    %4658 = vmatpush.bf16.msra.mxu0 %v4500
    %4659 = vmatmul.bf16.gmra.mxu0 %v4649
    %v4660 = vpop.f32.mrf.mxu0
    %v4661 = vadd.f32 0.0, %v4660
    %v4662 = vpop.f32.mrf.mxu0
    %v4663 = vadd.f32 0.0, %v4662
    %4664 = vdwg.mxu0
    %v4667 = vunpack.c.l.b16 %v4639
    %v4668 = vunpack.c.l.b16 %v4640
    %v4669 = vpack.c.b16 %v4668, %v4667
    %v4671 = vsel %vm1425, %v4669, 0
    %4673 = vmatpush.bf16.msra.mxu0 0
    %4674 = vmatpush.bf16.msra.mxu0 0
    %4675 = vmatpush.bf16.msra.mxu0 0
    %4676 = vmatpush.bf16.msra.mxu0 0
    %4677 = vmatpush.bf16.msra.mxu0 0
    %4678 = vmatpush.bf16.msra.mxu0 0
    %4679 = vmatpush.bf16.msra.mxu0 0
    %4680 = vmatpush.bf16.msra.mxu0 %v4477
    %4681 = vmatmul.bf16.gmra.mxu0 %v4671
    %v4682 = vpop.f32.mrf.mxu0
    %v4683 = vadd.f32 %v4661, %v4682
    %v4684 = vpop.f32.mrf.mxu0
    %v4685 = vadd.f32 %v4663, %v4684
    %4686 = vdwg.mxu0
    %v4687 = vld [vmem:[%s1661] sm:$0xf]
    %v4688 = vld [vmem:[%s1661 + $0x4] sm:$0xf]
    %v4691 = vunpack.c.l.b16 %v4687
    %v4692 = vunpack.c.l.b16 %v4688
    %v4693 = vpack.c.b16 %v4692, %v4691
    %v4695 = vsel %vm1425, %v4693, 0
    %4697 = vmatpush.bf16.msra.mxu0 0
    %4698 = vmatpush.bf16.msra.mxu0 0
    %4699 = vmatpush.bf16.msra.mxu0 0
    %4700 = vmatpush.bf16.msra.mxu0 0
    %4701 = vmatpush.bf16.msra.mxu0 0
    %4702 = vmatpush.bf16.msra.mxu0 0
    %4703 = vmatpush.bf16.msra.mxu0 0
    %4704 = vmatpush.bf16.msra.mxu0 %v4523
    %4705 = vmatmul.bf16.gmra.mxu0 %v4695
    %v4706 = vpop.f32.mrf.mxu0
    %v4707 = vadd.f32 0.0, %v4706
    %v4708 = vpop.f32.mrf.mxu0
    %v4709 = vadd.f32 0.0, %v4708
    %4710 = vdwg.mxu0
    %v4711 = vadd.f32 %v4683, %v4707
    %v4712 = vadd.f32 %v4685, %v4709
    %v4713 = vld [vmem:[%s1688] sm:$0xf]
    %v4714 = vld [vmem:[%s1688 + $0x4] sm:$0xf]
    %v4717 = vunpack.c.l.b16 %v4713
    %v4718 = vunpack.c.l.b16 %v4714
    %v4719 = vpack.c.b16 %v4718, %v4717
    %v4721 = vsel %vm1425, %v4719, 0
    %4723 = vmatpush.bf16.msra.mxu0 0
    %4724 = vmatpush.bf16.msra.mxu0 0
    %4725 = vmatpush.bf16.msra.mxu0 0
    %4726 = vmatpush.bf16.msra.mxu0 0
    %4727 = vmatpush.bf16.msra.mxu0 0
    %4728 = vmatpush.bf16.msra.mxu0 0
    %4729 = vmatpush.bf16.msra.mxu0 0
    %4730 = vmatpush.bf16.msra.mxu0 %v4546
    %4731 = vmatmul.bf16.gmra.mxu0 %v4721
    %v4732 = vpop.f32.mrf.mxu0
    %v4733 = vadd.f32 0.0, %v4732
    %v4734 = vpop.f32.mrf.mxu0
    %v4735 = vadd.f32 0.0, %v4734
    %4736 = vdwg.mxu0
    %v4737 = vadd.f32 %v4711, %v4733
    %v4738 = vadd.f32 %v4712, %v4735
    %v4739 = vld [vmem:[%s1715] sm:$0xf]
    %v4740 = vld [vmem:[%s1715 + $0x4] sm:$0xf]
    %v4743 = vunpack.c.l.b16 %v4739
    %v4744 = vunpack.c.l.b16 %v4740
    %v4745 = vpack.c.b16 %v4744, %v4743
    %v4747 = vsel %vm1425, %v4745, 0
    %4749 = vmatpush.bf16.msra.mxu0 0
    %4750 = vmatpush.bf16.msra.mxu0 0
    %4751 = vmatpush.bf16.msra.mxu0 0
    %4752 = vmatpush.bf16.msra.mxu0 0
    %4753 = vmatpush.bf16.msra.mxu0 0
    %4754 = vmatpush.bf16.msra.mxu0 0
    %4755 = vmatpush.bf16.msra.mxu0 0
    %4756 = vmatpush.bf16.msra.mxu0 %v4451
    %4757 = vmatmul.bf16.gmra.mxu0 %v4747
    %v4758 = vpop.f32.mrf.mxu0
    %v4759 = vadd.f32 0.0, %v4758
    %v4760 = vpop.f32.mrf.mxu0
    %v4761 = vadd.f32 0.0, %v4760
    %4762 = vdwg.mxu0
    %v4763 = vadd.f32 %v4737, %v4759
    %v4764 = vadd.f32 %v4738, %v4761
    %v4765 = vld [vmem:[%s1742] sm:$0xf]
    %v4766 = vld [vmem:[%s1742 + $0x4] sm:$0xf]
    %v4769 = vunpack.c.l.b16 %v4765
    %v4770 = vunpack.c.l.b16 %v4766
    %v4771 = vpack.c.b16 %v4770, %v4769
    %v4773 = vsel %vm1425, %v4771, 0
    %4775 = vmatpush.bf16.msra.mxu0 0
    %4776 = vmatpush.bf16.msra.mxu0 0
    %4777 = vmatpush.bf16.msra.mxu0 0
    %4778 = vmatpush.bf16.msra.mxu0 0
    %4779 = vmatpush.bf16.msra.mxu0 0
    %4780 = vmatpush.bf16.msra.mxu0 0
    %4781 = vmatpush.bf16.msra.mxu0 0
    %4782 = vmatpush.bf16.msra.mxu0 %v4569
    %4783 = vmatmul.bf16.gmra.mxu0 %v4773
    %v4784 = vpop.f32.mrf.mxu0
    %v4785 = vadd.f32 0.0, %v4784
    %v4786 = vpop.f32.mrf.mxu0
    %v4787 = vadd.f32 0.0, %v4786
    %4788 = vdwg.mxu0
    %v4789 = vadd.f32 %v4763, %v4785
    %v4790 = vadd.f32 %v4764, %v4787
    %v4791 = vld [vmem:[%s1769] sm:$0xf]
    %v4792 = vld [vmem:[%s1769 + $0x4] sm:$0xf]
    %v4795 = vunpack.c.l.b16 %v4791
    %v4796 = vunpack.c.l.b16 %v4792
    %v4797 = vpack.c.b16 %v4796, %v4795
    %v4799 = vsel %vm1425, %v4797, 0
    %4801 = vmatpush.bf16.msra.mxu0 0
    %4802 = vmatpush.bf16.msra.mxu0 0
    %4803 = vmatpush.bf16.msra.mxu0 0
    %4804 = vmatpush.bf16.msra.mxu0 0
    %4805 = vmatpush.bf16.msra.mxu0 0
    %4806 = vmatpush.bf16.msra.mxu0 0
    %4807 = vmatpush.bf16.msra.mxu0 0
    %4808 = vmatpush.bf16.msra.mxu0 %v4592
    %4809 = vmatmul.bf16.gmra.mxu0 %v4799
    %v4810 = vpop.f32.mrf.mxu0
    %v4811 = vadd.f32 0.0, %v4810
    %v4812 = vpop.f32.mrf.mxu0
    %v4813 = vadd.f32 0.0, %v4812
    %4814 = vdwg.mxu0
    %v4815 = vadd.f32 %v4789, %v4811
    %v4816 = vadd.f32 %v4790, %v4813
    %v4817 = vld [vmem:[%s1796] sm:$0xf]
    %v4818 = vld [vmem:[%s1796 + $0x4] sm:$0xf]
    %v4821 = vunpack.c.l.b16 %v4817
    %v4822 = vunpack.c.l.b16 %v4818
    %v4823 = vpack.c.b16 %v4822, %v4821
    %v4825 = vsel %vm1425, %v4823, 0
    %4827 = vmatpush.bf16.msra.mxu0 0
    %4828 = vmatpush.bf16.msra.mxu0 0
    %4829 = vmatpush.bf16.msra.mxu0 0
    %4830 = vmatpush.bf16.msra.mxu0 0
    %4831 = vmatpush.bf16.msra.mxu0 0
    %4832 = vmatpush.bf16.msra.mxu0 0
    %4833 = vmatpush.bf16.msra.mxu0 0
    %4834 = vmatpush.bf16.msra.mxu0 %v4615
    %4835 = vmatmul.bf16.gmra.mxu0 %v4825
    %v4836 = vpop.f32.mrf.mxu0
    %v4837 = vadd.f32 0.0, %v4836
    %v4838 = vpop.f32.mrf.mxu0
    %v4839 = vadd.f32 0.0, %v4838
    %4840 = vdwg.mxu0
    %v4841 = vadd.f32 %v4815, %v4837
    %v4842 = vadd.f32 %v4816, %v4839
    %v4843 = vld [vmem:[%s1823] sm:$0xf]
    %v4844 = vld [vmem:[%s1823 + $0x4] sm:$0xf]
    %v4847 = vunpack.c.l.b16 %v4843
    %v4848 = vunpack.c.l.b16 %v4844
    %v4849 = vpack.c.b16 %v4848, %v4847
    %v4851 = vsel %vm1425, %v4849, 0
    %4853 = vmatpush.bf16.msra.mxu0 0
    %4854 = vmatpush.bf16.msra.mxu0 0
    %4855 = vmatpush.bf16.msra.mxu0 0
    %4856 = vmatpush.bf16.msra.mxu0 0
    %4857 = vmatpush.bf16.msra.mxu0 0
    %4858 = vmatpush.bf16.msra.mxu0 0
    %4859 = vmatpush.bf16.msra.mxu0 0
    %4860 = vmatpush.bf16.msra.mxu0 %v4638
    %4861 = vmatmul.bf16.gmra.mxu0 %v4851
    %v4862 = vpop.f32.mrf.mxu0
    %v4863 = vadd.f32 0.0, %v4862
    %v4864 = vpop.f32.mrf.mxu0
    %v4865 = vadd.f32 0.0, %v4864
    %4866 = vdwg.mxu0
    %v4867 = vadd.f32 %v4841, %v4863
    %v4868 = vadd.f32 %v4842, %v4865
    %v4869 = vld [vmem:[%s6] sm:$0xff]
    %v4870 = vld [vmem:[%s6 + $0x8] sm:$0xff]
    %4872 = vset.pattern.permute.xlu0 0
    %4873 = vperm.xlu0 %4872, %v4869
    %v4874 = vpop.permute.xlu0 %4873
    %4877 = vset.pattern.permute.xlu0 0
    %4878 = vperm.xlu0 %4877, %v4870
    %v4879 = vpop.permute.xlu0 %4878
    %v4881 = vadd.f32 %v4867, %v4874
    %v4882 = vadd.f32 %v4868, %v4879
    %v4883 = vmax.f32 %v4881, 0.0
    %v4884 = vmax.f32 %v4882, 0.0
    %v4885 = vpack.c.bf16 %v4884, %v4883
    %v4886 = vld [vmem:[#allocation2] sm:$0xf]
    %v4887 = vld [vmem:[#allocation2 + $0x4] sm:$0xf]
    %v4890 = vunpack.c.l.b16 %v4886
    %v4891 = vunpack.c.l.b16 %v4887
    %v4892 = vpack.c.b16 %v4891, %v4890
    %v4895 = vsel %vm1425, %v4885, 0
    %4897 = vmatpush.bf16.msra.mxu0 0
    %4898 = vmatpush.bf16.msra.mxu0 0
    %4899 = vmatpush.bf16.msra.mxu0 0
    %4900 = vmatpush.bf16.msra.mxu0 0
    %4901 = vmatpush.bf16.msra.mxu0 0
    %4902 = vmatpush.bf16.msra.mxu0 0
    %4903 = vmatpush.bf16.msra.mxu0 0
    %4904 = vmatpush.bf16.msra.mxu0 %v4892
    %4905 = vmatmul.bf16.gmra.mxu0 %v4895
    %v4906 = vpop.f32.mrf.mxu0
    %v4907 = vadd.f32 0.0, %v4906
    %v4908 = vpop.f32.mrf.mxu0
    %v4909 = vadd.f32 0.0, %v4908
    %4910 = vdwg.mxu0
    %v4911 = vpack.c.bf16 %v4909, %v4907
    %v4913 = vsel %vm752, %v4911, 0
    %4915 = vmatpush.bf16.msra.mxu0 0
    %4916 = vmatpush.bf16.msra.mxu0 0
    %4917 = vmatpush.bf16.msra.mxu0 0
    %4918 = vmatpush.bf16.msra.mxu0 0
    %4919 = vmatpush.bf16.msra.mxu0 %v3800
    %4920 = vmatpush.bf16.msra.mxu0 %v3799
    %4921 = vmatpush.bf16.msra.mxu0 %v3798
    %4922 = vmatpush.bf16.msra.mxu0 %v3797
    %4923 = vmatmul.bf16.gmra.mxu0 %v4913
    %v4924 = vpop.f32.mrf.mxu0
    %v4925 = vadd.f32 0.0, %v4924
    %v4926 = vpop.f32.mrf.mxu0
    %v4927 = vadd.f32 0.0, %v4926
    %4928 = vdwg.mxu0
    %v4929 = vpack.c.bf16 %v4927, %v4925
    %4930 = vmatpush.bf16.msra.mxu0 0
    %4931 = vmatpush.bf16.msra.mxu0 0
    %4932 = vmatpush.bf16.msra.mxu0 0
    %4933 = vmatpush.bf16.msra.mxu0 0
    %4934 = vmatpush.bf16.msra.mxu0 %v3849
    %4935 = vmatpush.bf16.msra.mxu0 %v3848
    %4936 = vmatpush.bf16.msra.mxu0 %v3847
    %4937 = vmatpush.bf16.msra.mxu0 %v3846
    %4938 = vmatmul.bf16.gmra.mxu0 %v4913
    %v4939 = vpop.f32.mrf.mxu0
    %v4940 = vadd.f32 0.0, %v4939
    %v4941 = vpop.f32.mrf.mxu0
    %v4942 = vadd.f32 0.0, %v4941
    %4943 = vdwg.mxu0
    %v4944 = vpack.c.bf16 %v4942, %v4940
    %4945 = vmatpush.bf16.msra.mxu0 0
    %4946 = vmatpush.bf16.msra.mxu0 0
    %4947 = vmatpush.bf16.msra.mxu0 0
    %4948 = vmatpush.bf16.msra.mxu0 0
    %4949 = vmatpush.bf16.msra.mxu0 %v3895
    %4950 = vmatpush.bf16.msra.mxu0 %v3894
    %4951 = vmatpush.bf16.msra.mxu0 %v3893
    %4952 = vmatpush.bf16.msra.mxu0 %v3892
    %4953 = vmatmul.bf16.gmra.mxu0 %v4913
    %v4954 = vpop.f32.mrf.mxu0
    %v4955 = vadd.f32 0.0, %v4954
    %v4956 = vpop.f32.mrf.mxu0
    %v4957 = vadd.f32 0.0, %v4956
    %4958 = vdwg.mxu0
    %v4959 = vpack.c.bf16 %v4957, %v4955
    %4960 = vmatpush.bf16.msra.mxu0 0
    %4961 = vmatpush.bf16.msra.mxu0 0
    %4962 = vmatpush.bf16.msra.mxu0 0
    %4963 = vmatpush.bf16.msra.mxu0 0
    %4964 = vmatpush.bf16.msra.mxu0 %v3941
    %4965 = vmatpush.bf16.msra.mxu0 %v3940
    %4966 = vmatpush.bf16.msra.mxu0 %v3939
    %4967 = vmatpush.bf16.msra.mxu0 %v3938
    %4968 = vmatmul.bf16.gmra.mxu0 %v4913
    %v4969 = vpop.f32.mrf.mxu0
    %v4970 = vadd.f32 0.0, %v4969
    %v4971 = vpop.f32.mrf.mxu0
    %v4972 = vadd.f32 0.0, %v4971
    %4973 = vdwg.mxu0
    %v4974 = vpack.c.bf16 %v4972, %v4970
    %4975 = vmatpush.bf16.msra.mxu0 0
    %4976 = vmatpush.bf16.msra.mxu0 0
    %4977 = vmatpush.bf16.msra.mxu0 0
    %4978 = vmatpush.bf16.msra.mxu0 0
    %4979 = vmatpush.bf16.msra.mxu0 %v3987
    %4980 = vmatpush.bf16.msra.mxu0 %v3986
    %4981 = vmatpush.bf16.msra.mxu0 %v3985
    %4982 = vmatpush.bf16.msra.mxu0 %v3984
    %4983 = vmatmul.bf16.gmra.mxu0 %v4913
    %v4984 = vpop.f32.mrf.mxu0
    %v4985 = vadd.f32 0.0, %v4984
    %v4986 = vpop.f32.mrf.mxu0
    %v4987 = vadd.f32 0.0, %v4986
    %4988 = vdwg.mxu0
    %v4989 = vpack.c.bf16 %v4987, %v4985
    %4990 = vmatpush.bf16.msra.mxu0 0
    %4991 = vmatpush.bf16.msra.mxu0 0
    %4992 = vmatpush.bf16.msra.mxu0 0
    %4993 = vmatpush.bf16.msra.mxu0 0
    %4994 = vmatpush.bf16.msra.mxu0 %v4033
    %4995 = vmatpush.bf16.msra.mxu0 %v4032
    %4996 = vmatpush.bf16.msra.mxu0 %v4031
    %4997 = vmatpush.bf16.msra.mxu0 %v4030
    %4998 = vmatmul.bf16.gmra.mxu0 %v4913
    %v4999 = vpop.f32.mrf.mxu0
    %v5000 = vadd.f32 0.0, %v4999
    %v5001 = vpop.f32.mrf.mxu0
    %v5002 = vadd.f32 0.0, %v5001
    %5003 = vdwg.mxu0
    %v5004 = vpack.c.bf16 %v5002, %v5000
    %5005 = vmatpush.bf16.msra.mxu0 0
    %5006 = vmatpush.bf16.msra.mxu0 0
    %5007 = vmatpush.bf16.msra.mxu0 0
    %5008 = vmatpush.bf16.msra.mxu0 0
    %5009 = vmatpush.bf16.msra.mxu0 %v4079
    %5010 = vmatpush.bf16.msra.mxu0 %v4078
    %5011 = vmatpush.bf16.msra.mxu0 %v4077
    %5012 = vmatpush.bf16.msra.mxu0 %v4076
    %5013 = vmatmul.bf16.gmra.mxu0 %v4913
    %v5014 = vpop.f32.mrf.mxu0
    %v5015 = vadd.f32 0.0, %v5014
    %v5016 = vpop.f32.mrf.mxu0
    %v5017 = vadd.f32 0.0, %v5016
    %5018 = vdwg.mxu0
    %v5019 = vpack.c.bf16 %v5017, %v5015
    %5020 = vmatpush.bf16.msra.mxu0 0
    %5021 = vmatpush.bf16.msra.mxu0 0
    %5022 = vmatpush.bf16.msra.mxu0 0
    %5023 = vmatpush.bf16.msra.mxu0 0
    %5024 = vmatpush.bf16.msra.mxu0 %v4125
    %5025 = vmatpush.bf16.msra.mxu0 %v4124
    %5026 = vmatpush.bf16.msra.mxu0 %v4123
    %5027 = vmatpush.bf16.msra.mxu0 %v4122
    %5028 = vmatmul.bf16.gmra.mxu0 %v4913
    %v5029 = vpop.f32.mrf.mxu0
    %v5030 = vadd.f32 0.0, %v5029
    %v5031 = vpop.f32.mrf.mxu0
    %v5032 = vadd.f32 0.0, %v5031
    %5033 = vdwg.mxu0
    %v5034 = vpack.c.bf16 %v5032, %v5030
    %v5035 = vld [vmem:[%s7] sm:$0xf]
    %v5036 = vld [vmem:[%s2017] sm:$0xf]
    %v5038 = vsel %vm1425, %v5036, 0
    %5040 = vmatpush.bf16.msra.mxu0 0
    %5041 = vmatpush.bf16.msra.mxu0 0
    %5042 = vmatpush.bf16.msra.mxu0 0
    %5043 = vmatpush.bf16.msra.mxu0 0
    %5044 = vmatpush.bf16.msra.mxu0 0
    %5045 = vmatpush.bf16.msra.mxu0 0
    %5046 = vmatpush.bf16.msra.mxu0 0
    %5047 = vmatpush.bf16.msra.mxu0 %v4944
    %5048 = vmatmul.bf16.gmra.mxu0 %v5038
    %v5049 = vpop.f32.mrf.mxu0
    %v5050 = vadd.f32 0.0, %v5049
    %v5051 = vpop.f32.mrf.mxu0
    %5052 = vdwg.mxu0
    %v5054 = vsel %vm1425, %v5035, 0
    %5056 = vmatpush.bf16.msra.mxu0 0
    %5057 = vmatpush.bf16.msra.mxu0 0
    %5058 = vmatpush.bf16.msra.mxu0 0
    %5059 = vmatpush.bf16.msra.mxu0 0
    %5060 = vmatpush.bf16.msra.mxu0 0
    %5061 = vmatpush.bf16.msra.mxu0 0
    %5062 = vmatpush.bf16.msra.mxu0 0
    %5063 = vmatpush.bf16.msra.mxu0 %v4929
    %5064 = vmatmul.bf16.gmra.mxu0 %v5054
    %v5065 = vpop.f32.mrf.mxu0
    %v5066 = vadd.f32 %v5050, %v5065
    %v5067 = vpop.f32.mrf.mxu0
    %5068 = vdwg.mxu0
    %v5069 = vld [vmem:[%s2051] sm:$0xf]
    %v5071 = vsel %vm1425, %v5069, 0
    %5073 = vmatpush.bf16.msra.mxu0 0
    %5074 = vmatpush.bf16.msra.mxu0 0
    %5075 = vmatpush.bf16.msra.mxu0 0
    %5076 = vmatpush.bf16.msra.mxu0 0
    %5077 = vmatpush.bf16.msra.mxu0 0
    %5078 = vmatpush.bf16.msra.mxu0 0
    %5079 = vmatpush.bf16.msra.mxu0 0
    %5080 = vmatpush.bf16.msra.mxu0 %v4959
    %5081 = vmatmul.bf16.gmra.mxu0 %v5071
    %v5082 = vpop.f32.mrf.mxu0
    %v5083 = vadd.f32 0.0, %v5082
    %v5084 = vpop.f32.mrf.mxu0
    %5085 = vdwg.mxu0
    %v5086 = vadd.f32 %v5066, %v5083
    %v5087 = vld [vmem:[%s2070] sm:$0xf]
    %v5089 = vsel %vm1425, %v5087, 0
    %5091 = vmatpush.bf16.msra.mxu0 0
    %5092 = vmatpush.bf16.msra.mxu0 0
    %5093 = vmatpush.bf16.msra.mxu0 0
    %5094 = vmatpush.bf16.msra.mxu0 0
    %5095 = vmatpush.bf16.msra.mxu0 0
    %5096 = vmatpush.bf16.msra.mxu0 0
    %5097 = vmatpush.bf16.msra.mxu0 0
    %5098 = vmatpush.bf16.msra.mxu0 %v4974
    %5099 = vmatmul.bf16.gmra.mxu0 %v5089
    %v5100 = vpop.f32.mrf.mxu0
    %v5101 = vadd.f32 0.0, %v5100
    %v5102 = vpop.f32.mrf.mxu0
    %5103 = vdwg.mxu0
    %v5104 = vadd.f32 %v5086, %v5101
    %v5105 = vld [vmem:[%s2089] sm:$0xf]
    %v5107 = vsel %vm1425, %v5105, 0
    %5109 = vmatpush.bf16.msra.mxu0 0
    %5110 = vmatpush.bf16.msra.mxu0 0
    %5111 = vmatpush.bf16.msra.mxu0 0
    %5112 = vmatpush.bf16.msra.mxu0 0
    %5113 = vmatpush.bf16.msra.mxu0 0
    %5114 = vmatpush.bf16.msra.mxu0 0
    %5115 = vmatpush.bf16.msra.mxu0 0
    %5116 = vmatpush.bf16.msra.mxu0 %v4911
    %5117 = vmatmul.bf16.gmra.mxu0 %v5107
    %v5118 = vpop.f32.mrf.mxu0
    %v5119 = vadd.f32 0.0, %v5118
    %v5120 = vpop.f32.mrf.mxu0
    %5121 = vdwg.mxu0
    %v5122 = vadd.f32 %v5104, %v5119
    %v5123 = vld [vmem:[%s2108] sm:$0xf]
    %v5125 = vsel %vm1425, %v5123, 0
    %5127 = vmatpush.bf16.msra.mxu0 0
    %5128 = vmatpush.bf16.msra.mxu0 0
    %5129 = vmatpush.bf16.msra.mxu0 0
    %5130 = vmatpush.bf16.msra.mxu0 0
    %5131 = vmatpush.bf16.msra.mxu0 0
    %5132 = vmatpush.bf16.msra.mxu0 0
    %5133 = vmatpush.bf16.msra.mxu0 0
    %5134 = vmatpush.bf16.msra.mxu0 %v4989
    %5135 = vmatmul.bf16.gmra.mxu0 %v5125
    %v5136 = vpop.f32.mrf.mxu0
    %v5137 = vadd.f32 0.0, %v5136
    %v5138 = vpop.f32.mrf.mxu0
    %5139 = vdwg.mxu0
    %v5140 = vadd.f32 %v5122, %v5137
    %v5141 = vld [vmem:[%s2127] sm:$0xf]
    %v5143 = vsel %vm1425, %v5141, 0
    %5145 = vmatpush.bf16.msra.mxu0 0
    %5146 = vmatpush.bf16.msra.mxu0 0
    %5147 = vmatpush.bf16.msra.mxu0 0
    %5148 = vmatpush.bf16.msra.mxu0 0
    %5149 = vmatpush.bf16.msra.mxu0 0
    %5150 = vmatpush.bf16.msra.mxu0 0
    %5151 = vmatpush.bf16.msra.mxu0 0
    %5152 = vmatpush.bf16.msra.mxu0 %v5004
    %5153 = vmatmul.bf16.gmra.mxu0 %v5143
    %v5154 = vpop.f32.mrf.mxu0
    %v5155 = vadd.f32 0.0, %v5154
    %v5156 = vpop.f32.mrf.mxu0
    %5157 = vdwg.mxu0
    %v5158 = vadd.f32 %v5140, %v5155
    %v5159 = vld [vmem:[%s2146] sm:$0xf]
    %v5161 = vsel %vm1425, %v5159, 0
    %5163 = vmatpush.bf16.msra.mxu0 0
    %5164 = vmatpush.bf16.msra.mxu0 0
    %5165 = vmatpush.bf16.msra.mxu0 0
    %5166 = vmatpush.bf16.msra.mxu0 0
    %5167 = vmatpush.bf16.msra.mxu0 0
    %5168 = vmatpush.bf16.msra.mxu0 0
    %5169 = vmatpush.bf16.msra.mxu0 0
    %5170 = vmatpush.bf16.msra.mxu0 %v5019
    %5171 = vmatmul.bf16.gmra.mxu0 %v5161
    %v5172 = vpop.f32.mrf.mxu0
    %v5173 = vadd.f32 0.0, %v5172
    %v5174 = vpop.f32.mrf.mxu0
    %5175 = vdwg.mxu0
    %v5176 = vadd.f32 %v5158, %v5173
    %v5177 = vld [vmem:[%s2165] sm:$0xf]
    %v5179 = vsel %vm1425, %v5177, 0
    %5181 = vmatpush.bf16.msra.mxu0 0
    %5182 = vmatpush.bf16.msra.mxu0 0
    %5183 = vmatpush.bf16.msra.mxu0 0
    %5184 = vmatpush.bf16.msra.mxu0 0
    %5185 = vmatpush.bf16.msra.mxu0 0
    %5186 = vmatpush.bf16.msra.mxu0 0
    %5187 = vmatpush.bf16.msra.mxu0 0
    %5188 = vmatpush.bf16.msra.mxu0 %v5034
    %5189 = vmatmul.bf16.gmra.mxu0 %v5179
    %v5190 = vpop.f32.mrf.mxu0
    %v5191 = vadd.f32 0.0, %v5190
    %v5192 = vpop.f32.mrf.mxu0
    %5193 = vdwg.mxu0
    %v5194 = vadd.f32 %v5176, %v5191
    %v5195 = vld [vmem:[%s8] sm:$0xf]
    %v5196 = vld [vmem:[%s2185] sm:$0xf]
    %v5198 = vsel %vm1109, %v5196, 0
    %5200 = vmatpush.bf16.msra.mxu0 0
    %5201 = vmatpush.bf16.msra.mxu0 0
    %5202 = vmatpush.bf16.msra.mxu0 0
    %5203 = vmatpush.bf16.msra.mxu0 0
    %5204 = vmatpush.bf16.msra.mxu0 0
    %5205 = vmatpush.bf16.msra.mxu0 0
    %5206 = vmatpush.bf16.msra.mxu0 0
    %5207 = vmatpush.bf16.msra.mxu0 %v4157
    %5208 = vmatmul.bf16.gmra.mxu0 %v5198
    %v5209 = vpop.f32.mrf.mxu0
    %v5210 = vadd.f32 0.0, %v5209
    %v5211 = vpop.f32.mrf.mxu0
    %5212 = vdwg.mxu0
    %v5214 = vsel %vm1109, %v5195, 0
    %5216 = vmatpush.bf16.msra.mxu0 0
    %5217 = vmatpush.bf16.msra.mxu0 0
    %5218 = vmatpush.bf16.msra.mxu0 0
    %5219 = vmatpush.bf16.msra.mxu0 0
    %5220 = vmatpush.bf16.msra.mxu0 0
    %5221 = vmatpush.bf16.msra.mxu0 0
    %5222 = vmatpush.bf16.msra.mxu0 0
    %5223 = vmatpush.bf16.msra.mxu0 %v4182
    %5224 = vmatmul.bf16.gmra.mxu0 %v5214
    %v5225 = vpop.f32.mrf.mxu0
    %v5226 = vadd.f32 %v5210, %v5225
    %v5227 = vpop.f32.mrf.mxu0
    %5228 = vdwg.mxu0
    %v5229 = vld [vmem:[%s2219] sm:$0xf]
    %v5231 = vsel %vm1109, %v5229, 0
    %5233 = vmatpush.bf16.msra.mxu0 0
    %5234 = vmatpush.bf16.msra.mxu0 0
    %5235 = vmatpush.bf16.msra.mxu0 0
    %5236 = vmatpush.bf16.msra.mxu0 0
    %5237 = vmatpush.bf16.msra.mxu0 0
    %5238 = vmatpush.bf16.msra.mxu0 0
    %5239 = vmatpush.bf16.msra.mxu0 0
    %5240 = vmatpush.bf16.msra.mxu0 %v4209
    %5241 = vmatmul.bf16.gmra.mxu0 %v5231
    %v5242 = vpop.f32.mrf.mxu0
    %v5243 = vadd.f32 0.0, %v5242
    %v5244 = vpop.f32.mrf.mxu0
    %5245 = vdwg.mxu0
    %v5246 = vadd.f32 %v5226, %v5243
    %v5247 = vld [vmem:[%s2238] sm:$0xf]
    %v5249 = vsel %vm1109, %v5247, 0
    %5251 = vmatpush.bf16.msra.mxu0 0
    %5252 = vmatpush.bf16.msra.mxu0 0
    %5253 = vmatpush.bf16.msra.mxu0 0
    %5254 = vmatpush.bf16.msra.mxu0 0
    %5255 = vmatpush.bf16.msra.mxu0 0
    %5256 = vmatpush.bf16.msra.mxu0 0
    %5257 = vmatpush.bf16.msra.mxu0 0
    %5258 = vmatpush.bf16.msra.mxu0 %v4238
    %5259 = vmatmul.bf16.gmra.mxu0 %v5249
    %v5260 = vpop.f32.mrf.mxu0
    %v5261 = vadd.f32 0.0, %v5260
    %v5262 = vpop.f32.mrf.mxu0
    %5263 = vdwg.mxu0
    %v5264 = vadd.f32 %v5246, %v5261
    %v5265 = vld [vmem:[%s2257] sm:$0xf]
    %v5267 = vsel %vm1109, %v5265, 0
    %5269 = vmatpush.bf16.msra.mxu0 0
    %5270 = vmatpush.bf16.msra.mxu0 0
    %5271 = vmatpush.bf16.msra.mxu0 0
    %5272 = vmatpush.bf16.msra.mxu0 0
    %5273 = vmatpush.bf16.msra.mxu0 0
    %5274 = vmatpush.bf16.msra.mxu0 0
    %5275 = vmatpush.bf16.msra.mxu0 0
    %5276 = vmatpush.bf16.msra.mxu0 %v4266
    %5277 = vmatmul.bf16.gmra.mxu0 %v5267
    %v5278 = vpop.f32.mrf.mxu0
    %v5279 = vadd.f32 0.0, %v5278
    %v5280 = vpop.f32.mrf.mxu0
    %5281 = vdwg.mxu0
    %v5282 = vadd.f32 %v5264, %v5279
    %v5283 = vld [vmem:[%s2276] sm:$0xf]
    %v5285 = vsel %vm1109, %v5283, 0
    %5287 = vmatpush.bf16.msra.mxu0 0
    %5288 = vmatpush.bf16.msra.mxu0 0
    %5289 = vmatpush.bf16.msra.mxu0 0
    %5290 = vmatpush.bf16.msra.mxu0 0
    %5291 = vmatpush.bf16.msra.mxu0 0
    %5292 = vmatpush.bf16.msra.mxu0 0
    %5293 = vmatpush.bf16.msra.mxu0 0
    %5294 = vmatpush.bf16.msra.mxu0 %v4295
    %5295 = vmatmul.bf16.gmra.mxu0 %v5285
    %v5296 = vpop.f32.mrf.mxu0
    %v5297 = vadd.f32 0.0, %v5296
    %v5298 = vpop.f32.mrf.mxu0
    %5299 = vdwg.mxu0
    %v5300 = vadd.f32 %v5282, %v5297
    %v5301 = vld [vmem:[%s2295] sm:$0xf]
    %v5303 = vsel %vm1109, %v5301, 0
    %5305 = vmatpush.bf16.msra.mxu0 0
    %5306 = vmatpush.bf16.msra.mxu0 0
    %5307 = vmatpush.bf16.msra.mxu0 0
    %5308 = vmatpush.bf16.msra.mxu0 0
    %5309 = vmatpush.bf16.msra.mxu0 0
    %5310 = vmatpush.bf16.msra.mxu0 0
    %5311 = vmatpush.bf16.msra.mxu0 0
    %5312 = vmatpush.bf16.msra.mxu0 %v4324
    %5313 = vmatmul.bf16.gmra.mxu0 %v5303
    %v5314 = vpop.f32.mrf.mxu0
    %v5315 = vadd.f32 0.0, %v5314
    %v5316 = vpop.f32.mrf.mxu0
    %5317 = vdwg.mxu0
    %v5318 = vadd.f32 %v5300, %v5315
    %v5319 = vld [vmem:[%s2314] sm:$0xf]
    %v5321 = vsel %vm1109, %v5319, 0
    %5323 = vmatpush.bf16.msra.mxu0 0
    %5324 = vmatpush.bf16.msra.mxu0 0
    %5325 = vmatpush.bf16.msra.mxu0 0
    %5326 = vmatpush.bf16.msra.mxu0 0
    %5327 = vmatpush.bf16.msra.mxu0 0
    %5328 = vmatpush.bf16.msra.mxu0 0
    %5329 = vmatpush.bf16.msra.mxu0 0
    %5330 = vmatpush.bf16.msra.mxu0 %v4353
    %5331 = vmatmul.bf16.gmra.mxu0 %v5321
    %v5332 = vpop.f32.mrf.mxu0
    %v5333 = vadd.f32 0.0, %v5332
    %v5334 = vpop.f32.mrf.mxu0
    %5335 = vdwg.mxu0
    %v5336 = vadd.f32 %v5318, %v5333
    %v5337 = vld [vmem:[%s2333] sm:$0xf]
    %v5339 = vsel %vm1109, %v5337, 0
    %5341 = vmatpush.bf16.msra.mxu0 0
    %5342 = vmatpush.bf16.msra.mxu0 0
    %5343 = vmatpush.bf16.msra.mxu0 0
    %5344 = vmatpush.bf16.msra.mxu0 0
    %5345 = vmatpush.bf16.msra.mxu0 0
    %5346 = vmatpush.bf16.msra.mxu0 0
    %5347 = vmatpush.bf16.msra.mxu0 0
    %5348 = vmatpush.bf16.msra.mxu0 %v4382
    %5349 = vmatmul.bf16.gmra.mxu0 %v5339
    %v5350 = vpop.f32.mrf.mxu0
    %v5351 = vadd.f32 0.0, %v5350
    %v5352 = vpop.f32.mrf.mxu0
    %5353 = vdwg.mxu0
    %v5354 = vadd.f32 %v5336, %v5351
    %v5355 = vadd.f32 %v5194, %v5354
    %v5356 = vld [vmem:[%s9] sm:$0xff]
    %5358 = vset.pattern.permute.xlu0 0
    %5359 = vperm.xlu0 %5358, %v5356
    %v5360 = vpop.permute.xlu0 %5359
    %v5362 = vadd.f32 %v5355, %v5360
    %v5363 = vmax.f32 %v5362, 0.0
    %v5364 = vpack.c.bf16 %v5363, %v5363
    %v5365 = vld [vmem:[%s18] sm:$0xff]
    %v5366 = vld [vmem:[%s18 + $0x8] sm:$0xff]
    %v5367 = vld [vmem:[%s18 + $0x10] sm:$0xff]
    %v5368 = vld [vmem:[%s18 + $0x18] sm:$0xff]
    %v5369 = vld [vmem:[%s18 + $0x20] sm:$0xff]
    %v5370 = vld [vmem:[%s18 + $0x28] sm:$0xff]
    %v5371 = vld [vmem:[%s18 + $0x30] sm:$0xff]
    %v5372 = vld [vmem:[%s18 + $0x38] sm:$0xff]
    %v5381 = vunpack.c.l.b16 %v5365
    %v5382 = vunpack.c.h.b16 %v5365
    %v5383 = vunpack.c.l.b16 %v5366
    %v5384 = vunpack.c.h.b16 %v5366
    %v5385 = vunpack.c.l.b16 %v5367
    %v5386 = vunpack.c.h.b16 %v5367
    %v5387 = vunpack.c.l.b16 %v5368
    %v5388 = vunpack.c.h.b16 %v5368
    %v5389 = vunpack.c.l.b16 %v5369
    %v5390 = vunpack.c.h.b16 %v5369
    %v5391 = vunpack.c.l.b16 %v5370
    %v5392 = vunpack.c.h.b16 %v5370
    %v5393 = vunpack.c.l.b16 %v5371
    %v5394 = vunpack.c.h.b16 %v5371
    %v5395 = vunpack.c.l.b16 %v5372
    %v5396 = vunpack.c.h.b16 %v5372
    %v5397 = vpack.c.b16 %v5383, %v5381
    %v5398 = vpack.c.b16 %v5384, %v5382
    %v5399 = vpack.c.b16 %v5387, %v5385
    %v5400 = vpack.c.b16 %v5388, %v5386
    %v5401 = vpack.c.b16 %v5391, %v5389
    %v5402 = vpack.c.b16 %v5392, %v5390
    %v5403 = vpack.c.b16 %v5395, %v5393
    %v5404 = vpack.c.b16 %v5396, %v5394
    %v5414 = vsel %vm752, %v5364, 0
    %5416 = vmatpush.bf16.msra.mxu0 0
    %5417 = vmatpush.bf16.msra.mxu0 0
    %5418 = vmatpush.bf16.msra.mxu0 0
    %5419 = vmatpush.bf16.msra.mxu0 0
    %5420 = vmatpush.bf16.msra.mxu0 %v5403
    %5421 = vmatpush.bf16.msra.mxu0 %v5401
    %5422 = vmatpush.bf16.msra.mxu0 %v5399
    %5423 = vmatpush.bf16.msra.mxu0 %v5397
    %5424 = vmatmul.bf16.gmra.mxu0 %v5414
    %v5425 = vpop.f32.mrf.mxu0
    %v5426 = vadd.f32 0.0, %v5425
    %v5427 = vpop.f32.mrf.mxu0
    %5428 = vdwg.mxu0
    %5429 = vmatpush.bf16.msra.mxu0 0
    %5430 = vmatpush.bf16.msra.mxu0 0
    %5431 = vmatpush.bf16.msra.mxu0 0
    %5432 = vmatpush.bf16.msra.mxu0 0
    %5433 = vmatpush.bf16.msra.mxu0 %v5404
    %5434 = vmatpush.bf16.msra.mxu0 %v5402
    %5435 = vmatpush.bf16.msra.mxu0 %v5400
    %5436 = vmatpush.bf16.msra.mxu0 %v5398
    %5437 = vmatmul.bf16.gmra.mxu0 %v5414
    %v5438 = vpop.f32.mrf.mxu0
    %v5439 = vadd.f32 0.0, %v5438
    %v5440 = vpop.f32.mrf.mxu0
    %5441 = vdwg.mxu0
    %5442 = vrot.lane.b32.xlu0 %v5426, 17
    %v5443 = vpop.permute.xlu0 %5442
    %5444 = vrot.lane.b32.xlu0 %v5439, 17
    %v5445 = vpop.permute.xlu0 %5444
    %v5446 = vsel %vm111, %v5443, %v5445
    %v5447 = vsel %vm111, %v5445, %v5443
    %v5448 = vmul.f32 %v5447, %v3193
    %v5449 = vmul.f32 %v5446, %v3194
    %v5450 = vpack.c.bf16 %v5448, %v5448
    %v5451 = vpack.c.bf16 %v5449, %v5449
    %5452 = vrot.lane.b32.xlu0 %v5426, 16
    %v5453 = vpop.permute.xlu0 %5452
    %5454 = vrot.lane.b32.xlu0 %v5439, 16
    %v5455 = vpop.permute.xlu0 %5454
    %v5456 = vsel %vm133, %v5453, %v5455
    %v5457 = vsel %vm133, %v5455, %v5453
    %v5458 = vmul.f32 %v5457, %v3214
    %v5459 = vmul.f32 %v5456, %v3215
    %v5460 = vpack.c.bf16 %v5458, %v5458
    %v5461 = vpack.c.bf16 %v5459, %v5459
    %5462 = vrot.lane.b32.xlu0 %v5426, 15
    %v5463 = vpop.permute.xlu0 %5462
    %5464 = vrot.lane.b32.xlu0 %v5439, 15
    %v5465 = vpop.permute.xlu0 %5464
    %v5466 = vsel %vm156, %v5463, %v5465
    %v5467 = vsel %vm156, %v5465, %v5463
    %v5468 = vmul.f32 %v5467, %v3235
    %v5469 = vmul.f32 %v5466, %v3236
    %v5470 = vpack.c.bf16 %v5468, %v5468
    %v5471 = vpack.c.bf16 %v5469, %v5469
    %5472 = vrot.lane.b32.xlu0 %v5426, 1
    %v5473 = vpop.permute.xlu0 %5472
    %5474 = vrot.lane.b32.xlu0 %v5439, 1
    %v5475 = vpop.permute.xlu0 %5474
    %v5476 = vsel %vm179, %v5473, %v5475
    %v5477 = vsel %vm179, %v5475, %v5473
    %v5478 = vmul.f32 %v5477, %v3256
    %v5479 = vmul.f32 %v5476, %v3257
    %v5480 = vpack.c.bf16 %v5478, %v5478
    %v5481 = vpack.c.bf16 %v5479, %v5479
    %v5482 = vpack.c.bf16 %v5426, %v5426
    %v5483 = vpack.c.bf16 %v5439, %v5439
    %5484 = vrot.lane.b32.xlu0 %v5426, 127
    %v5485 = vpop.permute.xlu0 %5484
    %5486 = vrot.lane.b32.xlu0 %v5439, 127
    %v5487 = vpop.permute.xlu0 %5486
    %v5488 = vsel %vm209, %v5485, %v5487
    %v5489 = vsel %vm209, %v5487, %v5485
    %v5490 = vmul.f32 %v5488, %v3284
    %v5491 = vmul.f32 %v5489, %v3285
    %v5492 = vpack.c.bf16 %v5490, %v5490
    %v5493 = vpack.c.bf16 %v5491, %v5491
    %5494 = vrot.lane.b32.xlu0 %v5426, 113
    %v5495 = vpop.permute.xlu0 %5494
    %5496 = vrot.lane.b32.xlu0 %v5439, 113
    %v5497 = vpop.permute.xlu0 %5496
    %v5498 = vsel %vm232, %v5495, %v5497
    %v5499 = vsel %vm232, %v5497, %v5495
    %v5500 = vmul.f32 %v5498, %v3305
    %v5501 = vmul.f32 %v5499, %v3306
    %v5502 = vpack.c.bf16 %v5500, %v5500
    %v5503 = vpack.c.bf16 %v5501, %v5501
    %5504 = vrot.lane.b32.xlu0 %v5426, 112
    %v5505 = vpop.permute.xlu0 %5504
    %5506 = vrot.lane.b32.xlu0 %v5439, 112
    %v5507 = vpop.permute.xlu0 %5506
    %v5508 = vsel %vm255, %v5505, %v5507
    %v5509 = vsel %vm255, %v5507, %v5505
    %v5510 = vmul.f32 %v5508, %v3326
    %v5511 = vmul.f32 %v5509, %v3327
    %v5512 = vpack.c.bf16 %v5510, %v5510
    %v5513 = vpack.c.bf16 %v5511, %v5511
    %5514 = vrot.lane.b32.xlu0 %v5426, 111
    %v5515 = vpop.permute.xlu0 %5514
    %5516 = vrot.lane.b32.xlu0 %v5439, 111
    %v5517 = vpop.permute.xlu0 %5516
    %v5518 = vsel %vm278, %v5515, %v5517
    %v5519 = vsel %vm278, %v5517, %v5515
    %v5520 = vmul.f32 %v5518, %v3347
    %v5521 = vmul.f32 %v5519, %v3348
    %v5522 = vpack.c.bf16 %v5520, %v5520
    %v5523 = vpack.c.bf16 %v5521, %v5521
    %v5524 = vld [vmem:[%s10] sm:$0x3]
    %v5525 = vld [vmem:[%s2522] sm:$0x3]
    %v5527 = vsel %vm1109, %v5525, 0
    %v5530 = vsel %vm1113, %v5460, 0
    %v5533 = vsel %vm1113, %v5461, 0
    %5535 = vmatpush.bf16.msra.mxu0 0
    %5536 = vmatpush.bf16.msra.mxu0 0
    %5537 = vmatpush.bf16.msra.mxu0 0
    %5538 = vmatpush.bf16.msra.mxu0 0
    %5539 = vmatpush.bf16.msra.mxu0 0
    %5540 = vmatpush.bf16.msra.mxu0 0
    %5541 = vmatpush.bf16.msra.mxu0 0
    %5542 = vmatpush.bf16.msra.mxu0 %v5530
    %5543 = vmatmul.bf16.gmra.mxu0 %v5527
    %v5544 = vpop.f32.mrf.mxu0
    %v5545 = vadd.f32 0.0, %v5544
    %v5546 = vpop.f32.mrf.mxu0
    %5547 = vdwg.mxu0
    %5548 = vmatpush.bf16.msra.mxu0 0
    %5549 = vmatpush.bf16.msra.mxu0 0
    %5550 = vmatpush.bf16.msra.mxu0 0
    %5551 = vmatpush.bf16.msra.mxu0 0
    %5552 = vmatpush.bf16.msra.mxu0 0
    %5553 = vmatpush.bf16.msra.mxu0 0
    %5554 = vmatpush.bf16.msra.mxu0 0
    %5555 = vmatpush.bf16.msra.mxu0 %v5533
    %5556 = vmatmul.bf16.gmra.mxu0 %v5527
    %v5557 = vpop.f32.mrf.mxu0
    %v5558 = vadd.f32 0.0, %v5557
    %v5559 = vpop.f32.mrf.mxu0
    %5560 = vdwg.mxu0
    %v5562 = vsel %vm1109, %v5524, 0
    %v5565 = vsel %vm1113, %v5450, 0
    %v5568 = vsel %vm1113, %v5451, 0
    %5570 = vmatpush.bf16.msra.mxu0 0
    %5571 = vmatpush.bf16.msra.mxu0 0
    %5572 = vmatpush.bf16.msra.mxu0 0
    %5573 = vmatpush.bf16.msra.mxu0 0
    %5574 = vmatpush.bf16.msra.mxu0 0
    %5575 = vmatpush.bf16.msra.mxu0 0
    %5576 = vmatpush.bf16.msra.mxu0 0
    %5577 = vmatpush.bf16.msra.mxu0 %v5565
    %5578 = vmatmul.bf16.gmra.mxu0 %v5562
    %v5579 = vpop.f32.mrf.mxu0
    %v5580 = vadd.f32 %v5545, %v5579
    %v5581 = vpop.f32.mrf.mxu0
    %5582 = vdwg.mxu0
    %5583 = vmatpush.bf16.msra.mxu0 0
    %5584 = vmatpush.bf16.msra.mxu0 0
    %5585 = vmatpush.bf16.msra.mxu0 0
    %5586 = vmatpush.bf16.msra.mxu0 0
    %5587 = vmatpush.bf16.msra.mxu0 0
    %5588 = vmatpush.bf16.msra.mxu0 0
    %5589 = vmatpush.bf16.msra.mxu0 0
    %5590 = vmatpush.bf16.msra.mxu0 %v5568
    %5591 = vmatmul.bf16.gmra.mxu0 %v5562
    %v5592 = vpop.f32.mrf.mxu0
    %v5593 = vadd.f32 %v5558, %v5592
    %v5594 = vpop.f32.mrf.mxu0
    %5595 = vdwg.mxu0
    %v5596 = vld [vmem:[%s2594] sm:$0x3]
    %v5598 = vsel %vm1109, %v5596, 0
    %v5601 = vsel %vm1113, %v5470, 0
    %v5604 = vsel %vm1113, %v5471, 0
    %5606 = vmatpush.bf16.msra.mxu0 0
    %5607 = vmatpush.bf16.msra.mxu0 0
    %5608 = vmatpush.bf16.msra.mxu0 0
    %5609 = vmatpush.bf16.msra.mxu0 0
    %5610 = vmatpush.bf16.msra.mxu0 0
    %5611 = vmatpush.bf16.msra.mxu0 0
    %5612 = vmatpush.bf16.msra.mxu0 0
    %5613 = vmatpush.bf16.msra.mxu0 %v5601
    %5614 = vmatmul.bf16.gmra.mxu0 %v5598
    %v5615 = vpop.f32.mrf.mxu0
    %v5616 = vadd.f32 0.0, %v5615
    %v5617 = vpop.f32.mrf.mxu0
    %5618 = vdwg.mxu0
    %5619 = vmatpush.bf16.msra.mxu0 0
    %5620 = vmatpush.bf16.msra.mxu0 0
    %5621 = vmatpush.bf16.msra.mxu0 0
    %5622 = vmatpush.bf16.msra.mxu0 0
    %5623 = vmatpush.bf16.msra.mxu0 0
    %5624 = vmatpush.bf16.msra.mxu0 0
    %5625 = vmatpush.bf16.msra.mxu0 0
    %5626 = vmatpush.bf16.msra.mxu0 %v5604
    %5627 = vmatmul.bf16.gmra.mxu0 %v5598
    %v5628 = vpop.f32.mrf.mxu0
    %v5629 = vadd.f32 0.0, %v5628
    %v5630 = vpop.f32.mrf.mxu0
    %5631 = vdwg.mxu0
    %v5632 = vadd.f32 %v5580, %v5616
    %v5633 = vadd.f32 %v5593, %v5629
    %v5634 = vld [vmem:[%s2633] sm:$0x3]
    %v5636 = vsel %vm1109, %v5634, 0
    %v5639 = vsel %vm1113, %v5480, 0
    %v5642 = vsel %vm1113, %v5481, 0
    %5644 = vmatpush.bf16.msra.mxu0 0
    %5645 = vmatpush.bf16.msra.mxu0 0
    %5646 = vmatpush.bf16.msra.mxu0 0
    %5647 = vmatpush.bf16.msra.mxu0 0
    %5648 = vmatpush.bf16.msra.mxu0 0
    %5649 = vmatpush.bf16.msra.mxu0 0
    %5650 = vmatpush.bf16.msra.mxu0 0
    %5651 = vmatpush.bf16.msra.mxu0 %v5639
    %5652 = vmatmul.bf16.gmra.mxu0 %v5636
    %v5653 = vpop.f32.mrf.mxu0
    %v5654 = vadd.f32 0.0, %v5653
    %v5655 = vpop.f32.mrf.mxu0
    %5656 = vdwg.mxu0
    %5657 = vmatpush.bf16.msra.mxu0 0
    %5658 = vmatpush.bf16.msra.mxu0 0
    %5659 = vmatpush.bf16.msra.mxu0 0
    %5660 = vmatpush.bf16.msra.mxu0 0
    %5661 = vmatpush.bf16.msra.mxu0 0
    %5662 = vmatpush.bf16.msra.mxu0 0
    %5663 = vmatpush.bf16.msra.mxu0 0
    %5664 = vmatpush.bf16.msra.mxu0 %v5642
    %5665 = vmatmul.bf16.gmra.mxu0 %v5636
    %v5666 = vpop.f32.mrf.mxu0
    %v5667 = vadd.f32 0.0, %v5666
    %v5668 = vpop.f32.mrf.mxu0
    %5669 = vdwg.mxu0
    %v5670 = vadd.f32 %v5632, %v5654
    %v5671 = vadd.f32 %v5633, %v5667
    %v5672 = vld [vmem:[%s2672] sm:$0x3]
    %v5674 = vsel %vm1109, %v5672, 0
    %v5677 = vsel %vm1113, %v5482, 0
    %v5680 = vsel %vm1113, %v5483, 0
    %5682 = vmatpush.bf16.msra.mxu0 0
    %5683 = vmatpush.bf16.msra.mxu0 0
    %5684 = vmatpush.bf16.msra.mxu0 0
    %5685 = vmatpush.bf16.msra.mxu0 0
    %5686 = vmatpush.bf16.msra.mxu0 0
    %5687 = vmatpush.bf16.msra.mxu0 0
    %5688 = vmatpush.bf16.msra.mxu0 0
    %5689 = vmatpush.bf16.msra.mxu0 %v5677
    %5690 = vmatmul.bf16.gmra.mxu0 %v5674
    %v5691 = vpop.f32.mrf.mxu0
    %v5692 = vadd.f32 0.0, %v5691
    %v5693 = vpop.f32.mrf.mxu0
    %5694 = vdwg.mxu0
    %5695 = vmatpush.bf16.msra.mxu0 0
    %5696 = vmatpush.bf16.msra.mxu0 0
    %5697 = vmatpush.bf16.msra.mxu0 0
    %5698 = vmatpush.bf16.msra.mxu0 0
    %5699 = vmatpush.bf16.msra.mxu0 0
    %5700 = vmatpush.bf16.msra.mxu0 0
    %5701 = vmatpush.bf16.msra.mxu0 0
    %5702 = vmatpush.bf16.msra.mxu0 %v5680
    %5703 = vmatmul.bf16.gmra.mxu0 %v5674
    %v5704 = vpop.f32.mrf.mxu0
    %v5705 = vadd.f32 0.0, %v5704
    %v5706 = vpop.f32.mrf.mxu0
    %5707 = vdwg.mxu0
    %v5708 = vadd.f32 %v5670, %v5692
    %v5709 = vadd.f32 %v5671, %v5705
    %v5710 = vld [vmem:[%s2711] sm:$0x3]
    %v5712 = vsel %vm1109, %v5710, 0
    %v5715 = vsel %vm1113, %v5492, 0
    %v5718 = vsel %vm1113, %v5493, 0
    %5720 = vmatpush.bf16.msra.mxu0 0
    %5721 = vmatpush.bf16.msra.mxu0 0
    %5722 = vmatpush.bf16.msra.mxu0 0
    %5723 = vmatpush.bf16.msra.mxu0 0
    %5724 = vmatpush.bf16.msra.mxu0 0
    %5725 = vmatpush.bf16.msra.mxu0 0
    %5726 = vmatpush.bf16.msra.mxu0 0
    %5727 = vmatpush.bf16.msra.mxu0 %v5715
    %5728 = vmatmul.bf16.gmra.mxu0 %v5712
    %v5729 = vpop.f32.mrf.mxu0
    %v5730 = vadd.f32 0.0, %v5729
    %v5731 = vpop.f32.mrf.mxu0
    %5732 = vdwg.mxu0
    %5733 = vmatpush.bf16.msra.mxu0 0
    %5734 = vmatpush.bf16.msra.mxu0 0
    %5735 = vmatpush.bf16.msra.mxu0 0
    %5736 = vmatpush.bf16.msra.mxu0 0
    %5737 = vmatpush.bf16.msra.mxu0 0
    %5738 = vmatpush.bf16.msra.mxu0 0
    %5739 = vmatpush.bf16.msra.mxu0 0
    %5740 = vmatpush.bf16.msra.mxu0 %v5718
    %5741 = vmatmul.bf16.gmra.mxu0 %v5712
    %v5742 = vpop.f32.mrf.mxu0
    %v5743 = vadd.f32 0.0, %v5742
    %v5744 = vpop.f32.mrf.mxu0
    %5745 = vdwg.mxu0
    %v5746 = vadd.f32 %v5708, %v5730
    %v5747 = vadd.f32 %v5709, %v5743
    %v5748 = vld [vmem:[%s2750] sm:$0x3]
    %v5750 = vsel %vm1109, %v5748, 0
    %v5753 = vsel %vm1113, %v5502, 0
    %v5756 = vsel %vm1113, %v5503, 0
    %5758 = vmatpush.bf16.msra.mxu0 0
    %5759 = vmatpush.bf16.msra.mxu0 0
    %5760 = vmatpush.bf16.msra.mxu0 0
    %5761 = vmatpush.bf16.msra.mxu0 0
    %5762 = vmatpush.bf16.msra.mxu0 0
    %5763 = vmatpush.bf16.msra.mxu0 0
    %5764 = vmatpush.bf16.msra.mxu0 0
    %5765 = vmatpush.bf16.msra.mxu0 %v5753
    %5766 = vmatmul.bf16.gmra.mxu0 %v5750
    %v5767 = vpop.f32.mrf.mxu0
    %v5768 = vadd.f32 0.0, %v5767
    %v5769 = vpop.f32.mrf.mxu0
    %5770 = vdwg.mxu0
    %5771 = vmatpush.bf16.msra.mxu0 0
    %5772 = vmatpush.bf16.msra.mxu0 0
    %5773 = vmatpush.bf16.msra.mxu0 0
    %5774 = vmatpush.bf16.msra.mxu0 0
    %5775 = vmatpush.bf16.msra.mxu0 0
    %5776 = vmatpush.bf16.msra.mxu0 0
    %5777 = vmatpush.bf16.msra.mxu0 0
    %5778 = vmatpush.bf16.msra.mxu0 %v5756
    %5779 = vmatmul.bf16.gmra.mxu0 %v5750
    %v5780 = vpop.f32.mrf.mxu0
    %v5781 = vadd.f32 0.0, %v5780
    %v5782 = vpop.f32.mrf.mxu0
    %5783 = vdwg.mxu0
    %v5784 = vadd.f32 %v5746, %v5768
    %v5785 = vadd.f32 %v5747, %v5781
    %v5786 = vld [vmem:[%s2789] sm:$0x3]
    %v5788 = vsel %vm1109, %v5786, 0
    %v5791 = vsel %vm1113, %v5512, 0
    %v5794 = vsel %vm1113, %v5513, 0
    %5796 = vmatpush.bf16.msra.mxu0 0
    %5797 = vmatpush.bf16.msra.mxu0 0
    %5798 = vmatpush.bf16.msra.mxu0 0
    %5799 = vmatpush.bf16.msra.mxu0 0
    %5800 = vmatpush.bf16.msra.mxu0 0
    %5801 = vmatpush.bf16.msra.mxu0 0
    %5802 = vmatpush.bf16.msra.mxu0 0
    %5803 = vmatpush.bf16.msra.mxu0 %v5791
    %5804 = vmatmul.bf16.gmra.mxu0 %v5788
    %v5805 = vpop.f32.mrf.mxu0
    %v5806 = vadd.f32 0.0, %v5805
    %v5807 = vpop.f32.mrf.mxu0
    %5808 = vdwg.mxu0
    %5809 = vmatpush.bf16.msra.mxu0 0
    %5810 = vmatpush.bf16.msra.mxu0 0
    %5811 = vmatpush.bf16.msra.mxu0 0
    %5812 = vmatpush.bf16.msra.mxu0 0
    %5813 = vmatpush.bf16.msra.mxu0 0
    %5814 = vmatpush.bf16.msra.mxu0 0
    %5815 = vmatpush.bf16.msra.mxu0 0
    %5816 = vmatpush.bf16.msra.mxu0 %v5794
    %5817 = vmatmul.bf16.gmra.mxu0 %v5788
    %v5818 = vpop.f32.mrf.mxu0
    %v5819 = vadd.f32 0.0, %v5818
    %v5820 = vpop.f32.mrf.mxu0
    %5821 = vdwg.mxu0
    %v5822 = vadd.f32 %v5784, %v5806
    %v5823 = vadd.f32 %v5785, %v5819
    %v5824 = vld [vmem:[%s2828] sm:$0x3]
    %v5826 = vsel %vm1109, %v5824, 0
    %v5829 = vsel %vm1113, %v5522, 0
    %v5832 = vsel %vm1113, %v5523, 0
    %5834 = vmatpush.bf16.msra.mxu0 0
    %5835 = vmatpush.bf16.msra.mxu0 0
    %5836 = vmatpush.bf16.msra.mxu0 0
    %5837 = vmatpush.bf16.msra.mxu0 0
    %5838 = vmatpush.bf16.msra.mxu0 0
    %5839 = vmatpush.bf16.msra.mxu0 0
    %5840 = vmatpush.bf16.msra.mxu0 0
    %5841 = vmatpush.bf16.msra.mxu0 %v5829
    %5842 = vmatmul.bf16.gmra.mxu0 %v5826
    %v5843 = vpop.f32.mrf.mxu0
    %v5844 = vadd.f32 0.0, %v5843
    %v5845 = vpop.f32.mrf.mxu0
    %5846 = vdwg.mxu0
    %5847 = vmatpush.bf16.msra.mxu0 0
    %5848 = vmatpush.bf16.msra.mxu0 0
    %5849 = vmatpush.bf16.msra.mxu0 0
    %5850 = vmatpush.bf16.msra.mxu0 0
    %5851 = vmatpush.bf16.msra.mxu0 0
    %5852 = vmatpush.bf16.msra.mxu0 0
    %5853 = vmatpush.bf16.msra.mxu0 0
    %5854 = vmatpush.bf16.msra.mxu0 %v5832
    %5855 = vmatmul.bf16.gmra.mxu0 %v5826
    %v5856 = vpop.f32.mrf.mxu0
    %v5857 = vadd.f32 0.0, %v5856
    %v5858 = vpop.f32.mrf.mxu0
    %5859 = vdwg.mxu0
    %v5860 = vadd.f32 %v5822, %v5844
    %v5861 = vadd.f32 %v5823, %v5857
    %v5862 = vld [vmem:[%s11] sm:$0x3]
    %v5863 = vld [vmem:[%s2868] sm:$0x3]
    %v5865 = vsel %vm295, %v5863, 0
    %5867 = vmatpush.bf16.msra.mxu0 0
    %5868 = vmatpush.bf16.msra.mxu0 0
    %5869 = vmatpush.bf16.msra.mxu0 0
    %5870 = vmatpush.bf16.msra.mxu0 0
    %5871 = vmatpush.bf16.msra.mxu0 0
    %5872 = vmatpush.bf16.msra.mxu0 0
    %5873 = vmatpush.bf16.msra.mxu0 0
    %5874 = vmatpush.bf16.msra.mxu0 %v3361
    %5875 = vmatmul.bf16.gmra.mxu0 %v5865
    %v5876 = vpop.f32.mrf.mxu0
    %v5877 = vadd.f32 0.0, %v5876
    %v5878 = vpop.f32.mrf.mxu0
    %5879 = vdwg.mxu0
    %5880 = vmatpush.bf16.msra.mxu0 0
    %5881 = vmatpush.bf16.msra.mxu0 0
    %5882 = vmatpush.bf16.msra.mxu0 0
    %5883 = vmatpush.bf16.msra.mxu0 0
    %5884 = vmatpush.bf16.msra.mxu0 0
    %5885 = vmatpush.bf16.msra.mxu0 0
    %5886 = vmatpush.bf16.msra.mxu0 0
    %5887 = vmatpush.bf16.msra.mxu0 %v3364
    %5888 = vmatmul.bf16.gmra.mxu0 %v5865
    %v5889 = vpop.f32.mrf.mxu0
    %v5890 = vadd.f32 0.0, %v5889
    %v5891 = vpop.f32.mrf.mxu0
    %5892 = vdwg.mxu0
    %v5894 = vsel %vm295, %v5862, 0
    %5896 = vmatpush.bf16.msra.mxu0 0
    %5897 = vmatpush.bf16.msra.mxu0 0
    %5898 = vmatpush.bf16.msra.mxu0 0
    %5899 = vmatpush.bf16.msra.mxu0 0
    %5900 = vmatpush.bf16.msra.mxu0 0
    %5901 = vmatpush.bf16.msra.mxu0 0
    %5902 = vmatpush.bf16.msra.mxu0 0
    %5903 = vmatpush.bf16.msra.mxu0 %v3396
    %5904 = vmatmul.bf16.gmra.mxu0 %v5894
    %v5905 = vpop.f32.mrf.mxu0
    %v5906 = vadd.f32 %v5877, %v5905
    %v5907 = vpop.f32.mrf.mxu0
    %5908 = vdwg.mxu0
    %5909 = vmatpush.bf16.msra.mxu0 0
    %5910 = vmatpush.bf16.msra.mxu0 0
    %5911 = vmatpush.bf16.msra.mxu0 0
    %5912 = vmatpush.bf16.msra.mxu0 0
    %5913 = vmatpush.bf16.msra.mxu0 0
    %5914 = vmatpush.bf16.msra.mxu0 0
    %5915 = vmatpush.bf16.msra.mxu0 0
    %5916 = vmatpush.bf16.msra.mxu0 %v3399
    %5917 = vmatmul.bf16.gmra.mxu0 %v5894
    %v5918 = vpop.f32.mrf.mxu0
    %v5919 = vadd.f32 %v5890, %v5918
    %v5920 = vpop.f32.mrf.mxu0
    %5921 = vdwg.mxu0
    %v5922 = vld [vmem:[%s2928] sm:$0x3]
    %v5924 = vsel %vm295, %v5922, 0
    %5926 = vmatpush.bf16.msra.mxu0 0
    %5927 = vmatpush.bf16.msra.mxu0 0
    %5928 = vmatpush.bf16.msra.mxu0 0
    %5929 = vmatpush.bf16.msra.mxu0 0
    %5930 = vmatpush.bf16.msra.mxu0 0
    %5931 = vmatpush.bf16.msra.mxu0 0
    %5932 = vmatpush.bf16.msra.mxu0 0
    %5933 = vmatpush.bf16.msra.mxu0 %v3432
    %5934 = vmatmul.bf16.gmra.mxu0 %v5924
    %v5935 = vpop.f32.mrf.mxu0
    %v5936 = vadd.f32 0.0, %v5935
    %v5937 = vpop.f32.mrf.mxu0
    %5938 = vdwg.mxu0
    %5939 = vmatpush.bf16.msra.mxu0 0
    %5940 = vmatpush.bf16.msra.mxu0 0
    %5941 = vmatpush.bf16.msra.mxu0 0
    %5942 = vmatpush.bf16.msra.mxu0 0
    %5943 = vmatpush.bf16.msra.mxu0 0
    %5944 = vmatpush.bf16.msra.mxu0 0
    %5945 = vmatpush.bf16.msra.mxu0 0
    %5946 = vmatpush.bf16.msra.mxu0 %v3435
    %5947 = vmatmul.bf16.gmra.mxu0 %v5924
    %v5948 = vpop.f32.mrf.mxu0
    %v5949 = vadd.f32 0.0, %v5948
    %v5950 = vpop.f32.mrf.mxu0
    %5951 = vdwg.mxu0
    %v5952 = vadd.f32 %v5906, %v5936
    %v5953 = vadd.f32 %v5919, %v5949
    %v5954 = vld [vmem:[%s2961] sm:$0x3]
    %v5956 = vsel %vm295, %v5954, 0
    %5958 = vmatpush.bf16.msra.mxu0 0
    %5959 = vmatpush.bf16.msra.mxu0 0
    %5960 = vmatpush.bf16.msra.mxu0 0
    %5961 = vmatpush.bf16.msra.mxu0 0
    %5962 = vmatpush.bf16.msra.mxu0 0
    %5963 = vmatpush.bf16.msra.mxu0 0
    %5964 = vmatpush.bf16.msra.mxu0 0
    %5965 = vmatpush.bf16.msra.mxu0 %v3470
    %5966 = vmatmul.bf16.gmra.mxu0 %v5956
    %v5967 = vpop.f32.mrf.mxu0
    %v5968 = vadd.f32 0.0, %v5967
    %v5969 = vpop.f32.mrf.mxu0
    %5970 = vdwg.mxu0
    %5971 = vmatpush.bf16.msra.mxu0 0
    %5972 = vmatpush.bf16.msra.mxu0 0
    %5973 = vmatpush.bf16.msra.mxu0 0
    %5974 = vmatpush.bf16.msra.mxu0 0
    %5975 = vmatpush.bf16.msra.mxu0 0
    %5976 = vmatpush.bf16.msra.mxu0 0
    %5977 = vmatpush.bf16.msra.mxu0 0
    %5978 = vmatpush.bf16.msra.mxu0 %v3473
    %5979 = vmatmul.bf16.gmra.mxu0 %v5956
    %v5980 = vpop.f32.mrf.mxu0
    %v5981 = vadd.f32 0.0, %v5980
    %v5982 = vpop.f32.mrf.mxu0
    %5983 = vdwg.mxu0
    %v5984 = vadd.f32 %v5952, %v5968
    %v5985 = vadd.f32 %v5953, %v5981
    %v5986 = vld [vmem:[%s2994] sm:$0x3]
    %v5988 = vsel %vm295, %v5986, 0
    %5990 = vmatpush.bf16.msra.mxu0 0
    %5991 = vmatpush.bf16.msra.mxu0 0
    %5992 = vmatpush.bf16.msra.mxu0 0
    %5993 = vmatpush.bf16.msra.mxu0 0
    %5994 = vmatpush.bf16.msra.mxu0 0
    %5995 = vmatpush.bf16.msra.mxu0 0
    %5996 = vmatpush.bf16.msra.mxu0 0
    %5997 = vmatpush.bf16.msra.mxu0 %v3508
    %5998 = vmatmul.bf16.gmra.mxu0 %v5988
    %v5999 = vpop.f32.mrf.mxu0
    %v6000 = vadd.f32 0.0, %v5999
    %v6001 = vpop.f32.mrf.mxu0
    %6002 = vdwg.mxu0
    %6003 = vmatpush.bf16.msra.mxu0 0
    %6004 = vmatpush.bf16.msra.mxu0 0
    %6005 = vmatpush.bf16.msra.mxu0 0
    %6006 = vmatpush.bf16.msra.mxu0 0
    %6007 = vmatpush.bf16.msra.mxu0 0
    %6008 = vmatpush.bf16.msra.mxu0 0
    %6009 = vmatpush.bf16.msra.mxu0 0
    %6010 = vmatpush.bf16.msra.mxu0 %v3511
    %6011 = vmatmul.bf16.gmra.mxu0 %v5988
    %v6012 = vpop.f32.mrf.mxu0
    %v6013 = vadd.f32 0.0, %v6012
    %v6014 = vpop.f32.mrf.mxu0
    %6015 = vdwg.mxu0
    %v6016 = vadd.f32 %v5984, %v6000
    %v6017 = vadd.f32 %v5985, %v6013
    %v6018 = vld [vmem:[%s3027] sm:$0x3]
    %v6020 = vsel %vm295, %v6018, 0
    %6022 = vmatpush.bf16.msra.mxu0 0
    %6023 = vmatpush.bf16.msra.mxu0 0
    %6024 = vmatpush.bf16.msra.mxu0 0
    %6025 = vmatpush.bf16.msra.mxu0 0
    %6026 = vmatpush.bf16.msra.mxu0 0
    %6027 = vmatpush.bf16.msra.mxu0 0
    %6028 = vmatpush.bf16.msra.mxu0 0
    %6029 = vmatpush.bf16.msra.mxu0 %v3546
    %6030 = vmatmul.bf16.gmra.mxu0 %v6020
    %v6031 = vpop.f32.mrf.mxu0
    %v6032 = vadd.f32 0.0, %v6031
    %v6033 = vpop.f32.mrf.mxu0
    %6034 = vdwg.mxu0
    %6035 = vmatpush.bf16.msra.mxu0 0
    %6036 = vmatpush.bf16.msra.mxu0 0
    %6037 = vmatpush.bf16.msra.mxu0 0
    %6038 = vmatpush.bf16.msra.mxu0 0
    %6039 = vmatpush.bf16.msra.mxu0 0
    %6040 = vmatpush.bf16.msra.mxu0 0
    %6041 = vmatpush.bf16.msra.mxu0 0
    %6042 = vmatpush.bf16.msra.mxu0 %v3549
    %6043 = vmatmul.bf16.gmra.mxu0 %v6020
    %v6044 = vpop.f32.mrf.mxu0
    %v6045 = vadd.f32 0.0, %v6044
    %v6046 = vpop.f32.mrf.mxu0
    %6047 = vdwg.mxu0
    %v6048 = vadd.f32 %v6016, %v6032
    %v6049 = vadd.f32 %v6017, %v6045
    %v6050 = vld [vmem:[%s3060] sm:$0x3]
    %v6052 = vsel %vm295, %v6050, 0
    %6054 = vmatpush.bf16.msra.mxu0 0
    %6055 = vmatpush.bf16.msra.mxu0 0
    %6056 = vmatpush.bf16.msra.mxu0 0
    %6057 = vmatpush.bf16.msra.mxu0 0
    %6058 = vmatpush.bf16.msra.mxu0 0
    %6059 = vmatpush.bf16.msra.mxu0 0
    %6060 = vmatpush.bf16.msra.mxu0 0
    %6061 = vmatpush.bf16.msra.mxu0 %v3584
    %6062 = vmatmul.bf16.gmra.mxu0 %v6052
    %v6063 = vpop.f32.mrf.mxu0
    %v6064 = vadd.f32 0.0, %v6063
    %v6065 = vpop.f32.mrf.mxu0
    %6066 = vdwg.mxu0
    %6067 = vmatpush.bf16.msra.mxu0 0
    %6068 = vmatpush.bf16.msra.mxu0 0
    %6069 = vmatpush.bf16.msra.mxu0 0
    %6070 = vmatpush.bf16.msra.mxu0 0
    %6071 = vmatpush.bf16.msra.mxu0 0
    %6072 = vmatpush.bf16.msra.mxu0 0
    %6073 = vmatpush.bf16.msra.mxu0 0
    %6074 = vmatpush.bf16.msra.mxu0 %v3587
    %6075 = vmatmul.bf16.gmra.mxu0 %v6052
    %v6076 = vpop.f32.mrf.mxu0
    %v6077 = vadd.f32 0.0, %v6076
    %v6078 = vpop.f32.mrf.mxu0
    %6079 = vdwg.mxu0
    %v6080 = vadd.f32 %v6048, %v6064
    %v6081 = vadd.f32 %v6049, %v6077
    %v6082 = vld [vmem:[%s3093] sm:$0x3]
    %v6084 = vsel %vm295, %v6082, 0
    %6086 = vmatpush.bf16.msra.mxu0 0
    %6087 = vmatpush.bf16.msra.mxu0 0
    %6088 = vmatpush.bf16.msra.mxu0 0
    %6089 = vmatpush.bf16.msra.mxu0 0
    %6090 = vmatpush.bf16.msra.mxu0 0
    %6091 = vmatpush.bf16.msra.mxu0 0
    %6092 = vmatpush.bf16.msra.mxu0 0
    %6093 = vmatpush.bf16.msra.mxu0 %v3622
    %6094 = vmatmul.bf16.gmra.mxu0 %v6084
    %v6095 = vpop.f32.mrf.mxu0
    %v6096 = vadd.f32 0.0, %v6095
    %v6097 = vpop.f32.mrf.mxu0
    %6098 = vdwg.mxu0
    %6099 = vmatpush.bf16.msra.mxu0 0
    %6100 = vmatpush.bf16.msra.mxu0 0
    %6101 = vmatpush.bf16.msra.mxu0 0
    %6102 = vmatpush.bf16.msra.mxu0 0
    %6103 = vmatpush.bf16.msra.mxu0 0
    %6104 = vmatpush.bf16.msra.mxu0 0
    %6105 = vmatpush.bf16.msra.mxu0 0
    %6106 = vmatpush.bf16.msra.mxu0 %v3625
    %6107 = vmatmul.bf16.gmra.mxu0 %v6084
    %v6108 = vpop.f32.mrf.mxu0
    %v6109 = vadd.f32 0.0, %v6108
    %v6110 = vpop.f32.mrf.mxu0
    %6111 = vdwg.mxu0
    %v6112 = vadd.f32 %v6080, %v6096
    %v6113 = vadd.f32 %v6081, %v6109
    %v6114 = vld [vmem:[%s3126] sm:$0x3]
    %v6116 = vsel %vm295, %v6114, 0
    %6118 = vmatpush.bf16.msra.mxu0 0
    %6119 = vmatpush.bf16.msra.mxu0 0
    %6120 = vmatpush.bf16.msra.mxu0 0
    %6121 = vmatpush.bf16.msra.mxu0 0
    %6122 = vmatpush.bf16.msra.mxu0 0
    %6123 = vmatpush.bf16.msra.mxu0 0
    %6124 = vmatpush.bf16.msra.mxu0 0
    %6125 = vmatpush.bf16.msra.mxu0 %v3660
    %6126 = vmatmul.bf16.gmra.mxu0 %v6116
    %v6127 = vpop.f32.mrf.mxu0
    %v6128 = vadd.f32 0.0, %v6127
    %v6129 = vpop.f32.mrf.mxu0
    %6130 = vdwg.mxu0
    %6131 = vmatpush.bf16.msra.mxu0 0
    %6132 = vmatpush.bf16.msra.mxu0 0
    %6133 = vmatpush.bf16.msra.mxu0 0
    %6134 = vmatpush.bf16.msra.mxu0 0
    %6135 = vmatpush.bf16.msra.mxu0 0
    %6136 = vmatpush.bf16.msra.mxu0 0
    %6137 = vmatpush.bf16.msra.mxu0 0
    %6138 = vmatpush.bf16.msra.mxu0 %v3663
    %6139 = vmatmul.bf16.gmra.mxu0 %v6116
    %v6140 = vpop.f32.mrf.mxu0
    %v6141 = vadd.f32 0.0, %v6140
    %v6142 = vpop.f32.mrf.mxu0
    %6143 = vdwg.mxu0
    %v6144 = vadd.f32 %v6112, %v6128
    %v6145 = vadd.f32 %v6113, %v6141
    %v6146 = vadd.f32 %v5860, %v6144
    %v6147 = vadd.f32 %v5861, %v6145
    %v6148 = vld [vmem:[%s12] sm:$0xf]
    %6150 = vset.pattern.permute.xlu0 0
    %6151 = vperm.xlu0 %6150, %v6148
    %v6152 = vpop.permute.xlu0 %6151
    %v6154 = vadd.f32 %v6146, %v6152
    %v6155 = vadd.f32 %v6147, %v6152
    %v6156 = vmax.f32 %v6154, 0.0
    %v6157 = vmax.f32 %v6155, 0.0
    %v6160 = vrot.slane %v6157, 4
    %v6161 = vsel %vm1113, %v6156, %v6160
    %s6163 = scalar_lea.vmem %s20, 8
    %6164 = vst [vmem:[%s6163] sm:$0xff] %v6161
    // Predicated region
    $region90: #{base_unet_forward.1} parent=1 // pred_check
      _
    $region91: #{base_unet_forward.1} parent=1 // pred_check_branch
      %6166 = sbr.rel (0) target = $region93
    $region92: #{base_unet_forward.1} parent=1 // pred_region
      _
    $region93: #{base_unet_forward.1} parent=1 // pred_fallthru
      _
    // Predicated region
    $region94: #{base_unet_forward.1} parent=1 // pred_check
      _
    $region95: #{base_unet_forward.1} parent=1 // pred_check_branch
      %6168 = sbr.rel (0) target = $region97
    $region96: #{base_unet_forward.1} parent=1 // pred_region
      _
    $region97: #{base_unet_forward.1} parent=1 // pred_fallthru
      _
    %6169 = vsyncpa [#allocation3], 1
    %6170 = vsyncpa [#allocation5], 1

</llo_original>
